<compile_context>
chip_gen: v7x
topology: tpu7x:2x2x1
jax: 0.10.0
libtpu: 0.0.40
codegen_flags: <defaults>
</compile_context>

<pallas_src>
import jax
import jax.numpy as jnp
from jax.experimental import pallas as pl
from jax.experimental.pallas import tpu as pltpu


_DILATIONS = (2, 4, 6)  # fixed by the module (brc1 / brc2 / brc3)


def _make_caspp_kernel(H, W, Cin, Cout, kernel_size, padding, stride):
    """Builds the fused caspp-for-transformer kernel for static shapes."""
    K = kernel_size
    Ho = (H + 2 * padding - K) // stride + 1
    Wo = (W + 2 * padding - K) // stride + 1

    def zero_halo(buf, m, Hs, Ws, C):
        # Zero only the thin halo frame of a (Hs+2m, Ws+2m, C) padded scratch.
        if m == 0:
            return
        Wd = Ws + 2 * m
        row = jnp.zeros((m, Wd, C), jnp.float32)
        col = jnp.zeros((Hs, m, C), jnp.float32)
        buf[0:m, :, :] = row
        buf[Hs + m:Hs + 2 * m, :, :] = row
        buf[m:m + Hs, 0:m, :] = col
        buf[m:m + Hs, Ws + m:Ws + 2 * m, :] = col

    def kernel(x_ref, br_s_ref, br_t_ref, br_w_ref, br_b_ref,
               f_s_ref, f_t_ref, f_w_ref, f_b_ref,
               o_ref,
               pad_a, pad_b, pad_c, pad_f, patch_buf, fpatch_buf):
        pads = (pad_a, pad_b, pad_c)

        # Re-zero halo frames every step (megacore-safe; interiors are fully
        # overwritten below, so only the frame needs refreshing).
        for br, d in enumerate(_DILATIONS):
            zero_halo(pads[br], d, H, W, Cin)
        zero_halo(pad_f, padding, H, W, Cin)

        accf = jnp.zeros((Ho * Wo, Cout), jnp.float32)

        for br, d in enumerate(_DILATIONS):
            pad_d = pads[br]

            # --- BRC_caspp branch: eval-mode BN (scale/shift) + ReLU, written
            #     straight into this dilation's padded scratch buffer.
            s = br_s_ref[br:br + 1, :]                          # (1, Cin)
            t = br_t_ref[br:br + 1, :]                          # (1, Cin)
            pad_d[d:d + H, d:d + W, :] = jnp.maximum(
                x_ref[0].astype(jnp.float32) * s + t, 0.0)

            # --- dilated 3x3 conv as ONE im2col matmul on the MXU.
            for kh in range(3):
                for kw in range(3):
                    tap = kh * 3 + kw
                    patch_buf[:, :, tap * Cin:(tap + 1) * Cin] = (
                        pad_d[kh * d:kh * d + H, kw * d:kw * d + W, :])
            y = jnp.dot(patch_buf[...].reshape(H * W, 9 * Cin),
                        br_w_ref[br], preferred_element_type=jnp.float32)
            y = y + br_b_ref[br:br + 1, :]                      # conv bias

            # --- final BRC's BN + ReLU on this branch's channel slice
            #     (the channel concat is never materialized).
            z = jnp.maximum(
                y * f_s_ref[br:br + 1, :] + f_t_ref[br:br + 1, :], 0.0)
            pad_f[padding:padding + H, padding:padding + W, :] = (
                z.reshape(H, W, Cin))

            # --- this branch's slice of the final KxK conv with the stride
            #     folded into the window reads; ONE im2col matmul per branch,
            #     accumulated (== conv on the concatenated feature map).
            for kh in range(K):
                for kw in range(K):
                    tap = kh * K + kw
                    if stride == 1:
                        win = pad_f[kh:kh + Ho, kw:kw + Wo, :]
                    else:
                        win = pad_f[pl.ds(kh, Ho, stride),
                                    pl.ds(kw, Wo, stride), :]
                    fpatch_buf[:, :, tap * Cin:(tap + 1) * Cin] = win
            accf = accf + jnp.dot(
                fpatch_buf[...].reshape(Ho * Wo, K * K * Cin),
                f_w_ref[br], preferred_element_type=jnp.float32)

        accf = accf + f_b_ref[...]                              # (1, Cout) bcast
        o_ref[0] = accf.reshape(Ho, Wo, Cout).astype(o_ref.dtype)

    return kernel, Ho, Wo


def casppfortransformer_forward(x_nchw, params, *, kernel_size, padding, stride):
    """Pallas TPU forward of casppfortransformer.

    x_nchw: (B, Cin, H, W) float32 (PyTorch layout); returns (B, Cout, Ho, Wo).
    params: folded (eval-mode) BN + conv parameters, see __main__.
    """
    B, Cin, H, W = x_nchw.shape
    Cout = params["f_bias"].shape[0]
    K = kernel_size

    # NCHW -> NHWC (channels on the lane dim) -- layout plumbing only.
    x = jnp.transpose(x_nchw, (0, 2, 3, 1))

    # im2col weight layouts (host-side, free):
    #   branch conv:  (3, 9*Cin, Cin)   with (kh, kw, ci) flattened row-major
    #   final conv :  (3, K*K*Cin, Cout) per-branch input-channel slice
    br_w = params["br_weight"].reshape(3, 9 * Cin, Cin)
    f_w = (params["f_weight"]
           .reshape(K, K, 3, Cin, Cout)
           .transpose(2, 0, 1, 3, 4)
           .reshape(3, K * K * Cin, Cout))
    f_s = params["f_scale"].reshape(3, Cin)
    f_t = params["f_shift"].reshape(3, Cin)
    f_b = params["f_bias"].reshape(1, Cout)

    kernel, Ho, Wo = _make_caspp_kernel(H, W, Cin, Cout, K, padding, stride)

    out = pl.pallas_call(
        kernel,
        out_shape=jax.ShapeDtypeStruct((B, Ho, Wo, Cout), x.dtype),
        grid_spec=pltpu.PrefetchScalarGridSpec(
            num_scalar_prefetch=0,
            grid=(B,),
            in_specs=[
                pl.BlockSpec((1, H, W, Cin), lambda b: (b, 0, 0, 0)),
                pl.BlockSpec((3, Cin), lambda b: (0, 0)),
                pl.BlockSpec((3, Cin), lambda b: (0, 0)),
                pl.BlockSpec((3, 9 * Cin, Cin), lambda b: (0, 0, 0)),
                pl.BlockSpec((3, Cin), lambda b: (0, 0)),
                pl.BlockSpec((3, Cin), lambda b: (0, 0)),
                pl.BlockSpec((3, Cin), lambda b: (0, 0)),
                pl.BlockSpec((3, K * K * Cin, Cout), lambda b: (0, 0, 0)),
                pl.BlockSpec((1, Cout), lambda b: (0, 0)),
            ],
            out_specs=pl.BlockSpec((1, Ho, Wo, Cout), lambda b: (b, 0, 0, 0)),
            scratch_shapes=[
                pltpu.VMEM((H + 2 * d, W + 2 * d, Cin), jnp.float32)
                for d in _DILATIONS
            ] + [
                pltpu.VMEM((H + 2 * padding, W + 2 * padding, Cin), jnp.float32),
                pltpu.VMEM((H, W, 9 * Cin), jnp.float32),
                pltpu.VMEM((Ho, Wo, K * K * Cin), jnp.float32),
            ],
        ),
        compiler_params=pltpu.CompilerParams(
            dimension_semantics=("parallel",),
        ),
    )(x, params["br_scale"], params["br_shift"], br_w, params["br_bias"],
      f_s, f_t, f_w, f_b)

    return jnp.transpose(out, (0, 3, 1, 2))


# ----------------------------- reference & test -----------------------------

def _fold_bn(gamma, beta, mean, var, eps=1e-5):
    s = gamma / jnp.sqrt(var + eps)
    return s, beta - mean * s


def _ref_forward(x_nchw, p, *, kernel_size, padding, stride):
    """Plain-JAX reference using lax.conv_general_dilated."""
    x = jnp.transpose(x_nchw, (0, 2, 3, 1))

    def brc(a_in, s, t, w_hwio, b, dil, strd, pad):
        a = jnp.maximum(a_in * s[None, None, None, :] + t[None, None, None, :], 0.0)
        y = jax.lax.conv_general_dilated(
            a, w_hwio, window_strides=(strd, strd),
            padding=((pad, pad), (pad, pad)),
            rhs_dilation=(dil, dil),
            dimension_numbers=("NHWC", "HWIO", "NHWC"))
        return y + b[None, None, None, :]

    outs = []
    for i, d in enumerate(_DILATIONS):
        outs.append(brc(x, p["br_scale"][i], p["br_shift"][i],
                        p["br_weight"][i], p["br_bias"][i], d, 1, d))
    cat = jnp.concatenate(outs, axis=-1)
    y = brc(cat, p["f_scale"], p["f_shift"], p["f_weight"], p["f_bias"],
            1, stride, padding)
    return jnp.transpose(y, (0, 3, 1, 2))


if __name__ == "__main__":
    # Module config: casppfortransformer(in_channels, out_channels, scale, kernel_size, padding)
    in_channels = 8
    scale, kernel_size, padding = 2, 3, 1
    B, H, W = 2, 16, 16
    Cin, Cout = in_channels, in_channels      # final BRC maps 3*in -> in channels

    key = jax.random.PRNGKey(0)
    keys = iter(jax.random.split(key, 20))

    x = jax.random.normal(next(keys), (B, Cin, H, W), dtype=jnp.float32)

    def bn_params(kk, c):
        k1, k2, k3, k4 = jax.random.split(kk, 4)
        gamma = 1.0 + 0.1 * jax.random.normal(k1, (c,), jnp.float32)
        beta = 0.1 * jax.random.normal(k2, (c,), jnp.float32)
        mean = 0.1 * jax.random.normal(k3, (c,), jnp.float32)
        var = 0.5 + jax.random.uniform(k4, (c,), jnp.float32)
        return _fold_bn(gamma, beta, mean, var)

    br_s, br_t, br_w, br_b = [], [], [], []
    for _ in range(3):
        s, t = bn_params(next(keys), Cin)
        br_s.append(s)
        br_t.append(t)
        w_oihw = 0.1 * jax.random.normal(next(keys), (Cin, Cin, 3, 3), jnp.float32)
        br_w.append(jnp.transpose(w_oihw, (2, 3, 1, 0)))        # OIHW -> HWIO
        br_b.append(0.1 * jax.random.normal(next(keys), (Cin,), jnp.float32))

    f_s, f_t = bn_params(next(keys), 3 * Cin)
    fw_oihw = 0.1 * jax.random.normal(
        next(keys), (Cout, 3 * Cin, kernel_size, kernel_size), jnp.float32)
    f_w = jnp.transpose(fw_oihw, (2, 3, 1, 0))                   # OIHW -> HWIO
    f_b = 0.1 * jax.random.normal(next(keys), (Cout,), jnp.float32)

    params = {
        "br_scale": jnp.stack(br_s), "br_shift": jnp.stack(br_t),
        "br_weight": jnp.stack(br_w), "br_bias": jnp.stack(br_b),
        "f_scale": f_s, "f_shift": f_t, "f_weight": f_w, "f_bias": f_b,
    }

    out = casppfortransformer_forward(
        x, params, kernel_size=kernel_size, padding=padding, stride=scale)
    out = jax.block_until_ready(out)

    ref = _ref_forward(
        x, params, kernel_size=kernel_size, padding=padding, stride=scale)

    Ho = (H + 2 * padding - kernel_size) // scale + 1
    Wo = (W + 2 * padding - kernel_size) // scale + 1
    assert out.shape == (B, Cout, Ho, Wo), (out.shape, (B, Cout, Ho, Wo))
    max_err = float(jnp.max(jnp.abs(out - ref)))
    assert jnp.allclose(out, ref, atol=1e-3, rtol=1e-3), max_err

    print("KERNEL_OK")
</pallas_src>

<mosaic_0001>
module attributes {stable_mosaic.version = 11 : i64} {
  func.func @kernel(%arg0: i32, %arg1: memref<1x16x16x8xf32, #tpu.memory_space<vmem>>, %arg2: memref<3x8xf32, #tpu.memory_space<vmem>>, %arg3: memref<3x8xf32, #tpu.memory_space<vmem>>, %arg4: memref<3x72x8xf32, #tpu.memory_space<vmem>>, %arg5: memref<3x8xf32, #tpu.memory_space<vmem>>, %arg6: memref<3x8xf32, #tpu.memory_space<vmem>>, %arg7: memref<3x8xf32, #tpu.memory_space<vmem>>, %arg8: memref<3x72x8xf32, #tpu.memory_space<vmem>>, %arg9: memref<1x8xf32, #tpu.memory_space<vmem>>, %arg10: memref<1x8x8x8xf32, #tpu.memory_space<vmem>>, %arg11: memref<20x20x8xf32, #tpu.memory_space<vmem>>, %arg12: memref<24x24x8xf32, #tpu.memory_space<vmem>>, %arg13: memref<28x28x8xf32, #tpu.memory_space<vmem>>, %arg14: memref<18x18x8xf32, #tpu.memory_space<vmem>>, %arg15: memref<16x16x72xf32, #tpu.memory_space<vmem>>, %arg16: memref<8x8x72xf32, #tpu.memory_space<vmem>>) attributes {dimension_semantics = [#tpu.dimension_semantics<parallel>], iteration_bounds = array<i64: 2>, scalar_prefetch = 0 : i64, scratch_operands = 6 : i64, tpu.core_type = #tpu.core_type<tc>, window_params = [{transform_indices = @transform_0, window_bounds = array<i64: 1, 16, 16, 8>}, {pipeline_mode = #tpu.pipeline_mode<synchronous>, transform_indices = @transform_1, window_bounds = array<i64: 3, 8>}, {pipeline_mode = #tpu.pipeline_mode<synchronous>, transform_indices = @transform_2, window_bounds = array<i64: 3, 8>}, {pipeline_mode = #tpu.pipeline_mode<synchronous>, transform_indices = @transform_3, window_bounds = array<i64: 3, 72, 8>}, {pipeline_mode = #tpu.pipeline_mode<synchronous>, transform_indices = @transform_4, window_bounds = array<i64: 3, 8>}, {pipeline_mode = #tpu.pipeline_mode<synchronous>, transform_indices = @transform_5, window_bounds = array<i64: 3, 8>}, {pipeline_mode = #tpu.pipeline_mode<synchronous>, transform_indices = @transform_6, window_bounds = array<i64: 3, 8>}, {pipeline_mode = #tpu.pipeline_mode<synchronous>, transform_indices = @transform_7, window_bounds = array<i64: 3, 72, 8>}, {pipeline_mode = #tpu.pipeline_mode<synchronous>, transform_indices = @transform_8, window_bounds = array<i64: 1, 8>}, {transform_indices = @transform_9, window_bounds = array<i64: 1, 8, 8, 8>}]} {
    %cst = arith.constant 0.000000e+00 : f32
    %0 = vector.broadcast %cst : f32 to vector<2x20x8xf32>
    %cst_0 = arith.constant 0.000000e+00 : f32
    %1 = vector.broadcast %cst_0 : f32 to vector<16x2x8xf32>
    %c0 = arith.constant 0 : index
    %c0_1 = arith.constant 0 : index
    %c0_2 = arith.constant 0 : index
    %2 = vector.load %arg11[%c0, %c0_1, %c0_2] : memref<20x20x8xf32, #tpu.memory_space<vmem>>, vector<2x20x8xf32>
    tpu.vector_store %arg11[%c0, %c0_1, %c0_2], %0 {strides = array<i32>} : memref<20x20x8xf32, #tpu.memory_space<vmem>>, vector<2x20x8xf32>,
    %c18 = arith.constant 18 : index
    %c0_3 = arith.constant 0 : index
    %c0_4 = arith.constant 0 : index
    %3 = vector.load %arg11[%c18, %c0_3, %c0_4] : memref<20x20x8xf32, #tpu.memory_space<vmem>>, vector<2x20x8xf32>
    tpu.vector_store %arg11[%c18, %c0_3, %c0_4], %0 {strides = array<i32>} : memref<20x20x8xf32, #tpu.memory_space<vmem>>, vector<2x20x8xf32>,
    %c2 = arith.constant 2 : index
    %c0_5 = arith.constant 0 : index
    %c0_6 = arith.constant 0 : index
    %4 = vector.load %arg11[%c2, %c0_5, %c0_6] : memref<20x20x8xf32, #tpu.memory_space<vmem>>, vector<16x2x8xf32>
    tpu.vector_store %arg11[%c2, %c0_5, %c0_6], %1 {strides = array<i32>} : memref<20x20x8xf32, #tpu.memory_space<vmem>>, vector<16x2x8xf32>,
    %c2_7 = arith.constant 2 : index
    %c18_8 = arith.constant 18 : index
    %c0_9 = arith.constant 0 : index
    %5 = vector.load %arg11[%c2_7, %c18_8, %c0_9] : memref<20x20x8xf32, #tpu.memory_space<vmem>>, vector<16x2x8xf32>
    tpu.vector_store %arg11[%c2_7, %c18_8, %c0_9], %1 {strides = array<i32>} : memref<20x20x8xf32, #tpu.memory_space<vmem>>, vector<16x2x8xf32>,
    %cst_10 = arith.constant 0.000000e+00 : f32
    %6 = vector.broadcast %cst_10 : f32 to vector<4x24x8xf32>
    %cst_11 = arith.constant 0.000000e+00 : f32
    %7 = vector.broadcast %cst_11 : f32 to vector<16x4x8xf32>
    %c0_12 = arith.constant 0 : index
    %c0_13 = arith.constant 0 : index
    %c0_14 = arith.constant 0 : index
    %8 = vector.load %arg12[%c0_12, %c0_13, %c0_14] : memref<24x24x8xf32, #tpu.memory_space<vmem>>, vector<4x24x8xf32>
    tpu.vector_store %arg12[%c0_12, %c0_13, %c0_14], %6 {strides = array<i32>} : memref<24x24x8xf32, #tpu.memory_space<vmem>>, vector<4x24x8xf32>,
    %c20 = arith.constant 20 : index
    %c0_15 = arith.constant 0 : index
    %c0_16 = arith.constant 0 : index
    %9 = vector.load %arg12[%c20, %c0_15, %c0_16] : memref<24x24x8xf32, #tpu.memory_space<vmem>>, vector<4x24x8xf32>
    tpu.vector_store %arg12[%c20, %c0_15, %c0_16], %6 {strides = array<i32>} : memref<24x24x8xf32, #tpu.memory_space<vmem>>, vector<4x24x8xf32>,
    %c4 = arith.constant 4 : index
    %c0_17 = arith.constant 0 : index
    %c0_18 = arith.constant 0 : index
    %10 = vector.load %arg12[%c4, %c0_17, %c0_18] : memref<24x24x8xf32, #tpu.memory_space<vmem>>, vector<16x4x8xf32>
    tpu.vector_store %arg12[%c4, %c0_17, %c0_18], %7 {strides = array<i32>} : memref<24x24x8xf32, #tpu.memory_space<vmem>>, vector<16x4x8xf32>,
    %c4_19 = arith.constant 4 : index
    %c20_20 = arith.constant 20 : index
    %c0_21 = arith.constant 0 : index
    %11 = vector.load %arg12[%c4_19, %c20_20, %c0_21] : memref<24x24x8xf32, #tpu.memory_space<vmem>>, vector<16x4x8xf32>
    tpu.vector_store %arg12[%c4_19, %c20_20, %c0_21], %7 {strides = array<i32>} : memref<24x24x8xf32, #tpu.memory_space<vmem>>, vector<16x4x8xf32>,
    %cst_22 = arith.constant 0.000000e+00 : f32
    %12 = vector.broadcast %cst_22 : f32 to vector<6x28x8xf32>
    %cst_23 = arith.constant 0.000000e+00 : f32
    %13 = vector.broadcast %cst_23 : f32 to vector<16x6x8xf32>
    %c0_24 = arith.constant 0 : index
    %c0_25 = arith.constant 0 : index
    %c0_26 = arith.constant 0 : index
    %14 = vector.load %arg13[%c0_24, %c0_25, %c0_26] : memref<28x28x8xf32, #tpu.memory_space<vmem>>, vector<6x28x8xf32>
    tpu.vector_store %arg13[%c0_24, %c0_25, %c0_26], %12 {strides = array<i32>} : memref<28x28x8xf32, #tpu.memory_space<vmem>>, vector<6x28x8xf32>,
    %c22 = arith.constant 22 : index
    %c0_27 = arith.constant 0 : index
    %c0_28 = arith.constant 0 : index
    %15 = vector.load %arg13[%c22, %c0_27, %c0_28] : memref<28x28x8xf32, #tpu.memory_space<vmem>>, vector<6x28x8xf32>
    tpu.vector_store %arg13[%c22, %c0_27, %c0_28], %12 {strides = array<i32>} : memref<28x28x8xf32, #tpu.memory_space<vmem>>, vector<6x28x8xf32>,
    %c6 = arith.constant 6 : index
    %c0_29 = arith.constant 0 : index
    %c0_30 = arith.constant 0 : index
    %16 = vector.load %arg13[%c6, %c0_29, %c0_30] : memref<28x28x8xf32, #tpu.memory_space<vmem>>, vector<16x6x8xf32>
    tpu.vector_store %arg13[%c6, %c0_29, %c0_30], %13 {strides = array<i32>} : memref<28x28x8xf32, #tpu.memory_space<vmem>>, vector<16x6x8xf32>,
    %c6_31 = arith.constant 6 : index
    %c22_32 = arith.constant 22 : index
    %c0_33 = arith.constant 0 : index
    %17 = vector.load %arg13[%c6_31, %c22_32, %c0_33] : memref<28x28x8xf32, #tpu.memory_space<vmem>>, vector<16x6x8xf32>
    tpu.vector_store %arg13[%c6_31, %c22_32, %c0_33], %13 {strides = array<i32>} : memref<28x28x8xf32, #tpu.memory_space<vmem>>, vector<16x6x8xf32>,
    %cst_34 = arith.constant 0.000000e+00 : f32
    %18 = vector.broadcast %cst_34 : f32 to vector<1x18x8xf32>
    %cst_35 = arith.constant 0.000000e+00 : f32
    %19 = vector.broadcast %cst_35 : f32 to vector<16x1x8xf32>
    %c0_36 = arith.constant 0 : index
    %c0_37 = arith.constant 0 : index
    %c0_38 = arith.constant 0 : index
    %20 = vector.load %arg14[%c0_36, %c0_37, %c0_38] : memref<18x18x8xf32, #tpu.memory_space<vmem>>, vector<1x18x8xf32>
    tpu.vector_store %arg14[%c0_36, %c0_37, %c0_38], %18 {strides = array<i32>} : memref<18x18x8xf32, #tpu.memory_space<vmem>>, vector<1x18x8xf32>,
    %c17 = arith.constant 17 : index
    %c0_39 = arith.constant 0 : index
    %c0_40 = arith.constant 0 : index
    %21 = vector.load %arg14[%c17, %c0_39, %c0_40] : memref<18x18x8xf32, #tpu.memory_space<vmem>>, vector<1x18x8xf32>
    tpu.vector_store %arg14[%c17, %c0_39, %c0_40], %18 {strides = array<i32>} : memref<18x18x8xf32, #tpu.memory_space<vmem>>, vector<1x18x8xf32>,
    %c1 = arith.constant 1 : index
    %c0_41 = arith.constant 0 : index
    %c0_42 = arith.constant 0 : index
    %22 = vector.load %arg14[%c1, %c0_41, %c0_42] : memref<18x18x8xf32, #tpu.memory_space<vmem>>, vector<16x1x8xf32>
    tpu.vector_store %arg14[%c1, %c0_41, %c0_42], %19 {strides = array<i32>} : memref<18x18x8xf32, #tpu.memory_space<vmem>>, vector<16x1x8xf32>,
    %c1_43 = arith.constant 1 : index
    %c17_44 = arith.constant 17 : index
    %c0_45 = arith.constant 0 : index
    %23 = vector.load %arg14[%c1_43, %c17_44, %c0_45] : memref<18x18x8xf32, #tpu.memory_space<vmem>>, vector<16x1x8xf32>
    tpu.vector_store %arg14[%c1_43, %c17_44, %c0_45], %19 {strides = array<i32>} : memref<18x18x8xf32, #tpu.memory_space<vmem>>, vector<16x1x8xf32>,
    %cst_46 = arith.constant 0.000000e+00 : f32
    %24 = vector.broadcast %cst_46 : f32 to vector<64x8xf32>
    %c0_47 = arith.constant 0 : index
    %c0_48 = arith.constant 0 : index
    %25 = vector.load %arg2[%c0_47, %c0_48] : memref<3x8xf32, #tpu.memory_space<vmem>>, vector<1x8xf32>
    %c0_49 = arith.constant 0 : index
    %c0_50 = arith.constant 0 : index
    %26 = vector.load %arg3[%c0_49, %c0_50] : memref<3x8xf32, #tpu.memory_space<vmem>>, vector<1x8xf32>
    %c0_51 = arith.constant 0 : index
    %c0_52 = arith.constant 0 : index
    %c0_53 = arith.constant 0 : index
    %c0_54 = arith.constant 0 : index
    %27 = vector.load %arg1[%c0_51, %c0_52, %c0_53, %c0_54] : memref<1x16x16x8xf32, #tpu.memory_space<vmem>>, vector<1x16x16x8xf32>
    %28 = vector.shape_cast %27 : vector<1x16x16x8xf32> to vector<16x16x8xf32>
    %29 = vector.shape_cast %25 : vector<1x8xf32> to vector<1x1x8xf32>
    %30 = vector.broadcast %29 : vector<1x1x8xf32> to vector<16x16x8xf32>
    %31 = arith.mulf %28, %30 : vector<16x16x8xf32>
    %32 = vector.shape_cast %26 : vector<1x8xf32> to vector<1x1x8xf32>
    %33 = vector.broadcast %32 : vector<1x1x8xf32> to vector<16x16x8xf32>
    %34 = arith.addf %31, %33 : vector<16x16x8xf32>
    %cst_55 = arith.constant 0.000000e+00 : f32
    %35 = vector.broadcast %cst_55 : f32 to vector<16x16x8xf32>
    %36 = arith.maximumf %34, %35 : vector<16x16x8xf32>
    %c2_56 = arith.constant 2 : index
    %c2_57 = arith.constant 2 : index
    %c0_58 = arith.constant 0 : index
    %37 = vector.load %arg11[%c2_56, %c2_57, %c0_58] : memref<20x20x8xf32, #tpu.memory_space<vmem>>, vector<16x16x8xf32>
    tpu.vector_store %arg11[%c2_56, %c2_57, %c0_58], %36 {strides = array<i32>} : memref<20x20x8xf32, #tpu.memory_space<vmem>>, vector<16x16x8xf32>,
    %c0_59 = arith.constant 0 : index
    %c0_60 = arith.constant 0 : index
    %c0_61 = arith.constant 0 : index
    %38 = vector.load %arg11[%c0_59, %c0_60, %c0_61] : memref<20x20x8xf32, #tpu.memory_space<vmem>>, vector<16x16x8xf32>
    %c0_62 = arith.constant 0 : index
    %c0_63 = arith.constant 0 : index
    %c0_64 = arith.constant 0 : index
    %39 = vector.load %arg15[%c0_62, %c0_63, %c0_64] : memref<16x16x72xf32, #tpu.memory_space<vmem>>, vector<16x16x8xf32>
    tpu.vector_store %arg15[%c0_62, %c0_63, %c0_64], %38 {strides = array<i32>} : memref<16x16x72xf32, #tpu.memory_space<vmem>>, vector<16x16x8xf32>,
    %c0_65 = arith.constant 0 : index
    %c2_66 = arith.constant 2 : index
    %c0_67 = arith.constant 0 : index
    %40 = vector.load %arg11[%c0_65, %c2_66, %c0_67] : memref<20x20x8xf32, #tpu.memory_space<vmem>>, vector<16x16x8xf32>
    %c0_68 = arith.constant 0 : index
    %c0_69 = arith.constant 0 : index
    %c8 = arith.constant 8 : index
    %41 = vector.load %arg15[%c0_68, %c0_69, %c8] : memref<16x16x72xf32, #tpu.memory_space<vmem>>, vector<16x16x8xf32>
    tpu.vector_store %arg15[%c0_68, %c0_69, %c8], %40 {strides = array<i32>} : memref<16x16x72xf32, #tpu.memory_space<vmem>>, vector<16x16x8xf32>,
    %c0_70 = arith.constant 0 : index
    %c4_71 = arith.constant 4 : index
    %c0_72 = arith.constant 0 : index
    %42 = vector.load %arg11[%c0_70, %c4_71, %c0_72] : memref<20x20x8xf32, #tpu.memory_space<vmem>>, vector<16x16x8xf32>
    %c0_73 = arith.constant 0 : index
    %c0_74 = arith.constant 0 : index
    %c16 = arith.constant 16 : index
    %43 = vector.load %arg15[%c0_73, %c0_74, %c16] : memref<16x16x72xf32, #tpu.memory_space<vmem>>, vector<16x16x8xf32>
    tpu.vector_store %arg15[%c0_73, %c0_74, %c16], %42 {strides = array<i32>} : memref<16x16x72xf32, #tpu.memory_space<vmem>>, vector<16x16x8xf32>,
    %c2_75 = arith.constant 2 : index
    %c0_76 = arith.constant 0 : index
    %c0_77 = arith.constant 0 : index
    %44 = vector.load %arg11[%c2_75, %c0_76, %c0_77] : memref<20x20x8xf32, #tpu.memory_space<vmem>>, vector<16x16x8xf32>
    %c0_78 = arith.constant 0 : index
    %c0_79 = arith.constant 0 : index
    %c24 = arith.constant 24 : index
    %45 = vector.load %arg15[%c0_78, %c0_79, %c24] : memref<16x16x72xf32, #tpu.memory_space<vmem>>, vector<16x16x8xf32>
    tpu.vector_store %arg15[%c0_78, %c0_79, %c24], %44 {strides = array<i32>} : memref<16x16x72xf32, #tpu.memory_space<vmem>>, vector<16x16x8xf32>,
    %c2_80 = arith.constant 2 : index
    %c2_81 = arith.constant 2 : index
    %c0_82 = arith.constant 0 : index
    %46 = vector.load %arg11[%c2_80, %c2_81, %c0_82] : memref<20x20x8xf32, #tpu.memory_space<vmem>>, vector<16x16x8xf32>
    %c0_83 = arith.constant 0 : index
    %c0_84 = arith.constant 0 : index
    %c32 = arith.constant 32 : index
    %47 = vector.load %arg15[%c0_83, %c0_84, %c32] : memref<16x16x72xf32, #tpu.memory_space<vmem>>, vector<16x16x8xf32>
    tpu.vector_store %arg15[%c0_83, %c0_84, %c32], %46 {strides = array<i32>} : memref<16x16x72xf32, #tpu.memory_space<vmem>>, vector<16x16x8xf32>,
    %c2_85 = arith.constant 2 : index
    %c4_86 = arith.constant 4 : index
    %c0_87 = arith.constant 0 : index
    %48 = vector.load %arg11[%c2_85, %c4_86, %c0_87] : memref<20x20x8xf32, #tpu.memory_space<vmem>>, vector<16x16x8xf32>
    %c0_88 = arith.constant 0 : index
    %c0_89 = arith.constant 0 : index
    %c40 = arith.constant 40 : index
    %49 = vector.load %arg15[%c0_88, %c0_89, %c40] : memref<16x16x72xf32, #tpu.memory_space<vmem>>, vector<16x16x8xf32>
    tpu.vector_store %arg15[%c0_88, %c0_89, %c40], %48 {strides = array<i32>} : memref<16x16x72xf32, #tpu.memory_space<vmem>>, vector<16x16x8xf32>,
    %c4_90 = arith.constant 4 : index
    %c0_91 = arith.constant 0 : index
    %c0_92 = arith.constant 0 : index
    %50 = vector.load %arg11[%c4_90, %c0_91, %c0_92] : memref<20x20x8xf32, #tpu.memory_space<vmem>>, vector<16x16x8xf32>
    %c0_93 = arith.constant 0 : index
    %c0_94 = arith.constant 0 : index
    %c48 = arith.constant 48 : index
    %51 = vector.load %arg15[%c0_93, %c0_94, %c48] : memref<16x16x72xf32, #tpu.memory_space<vmem>>, vector<16x16x8xf32>
    tpu.vector_store %arg15[%c0_93, %c0_94, %c48], %50 {strides = array<i32>} : memref<16x16x72xf32, #tpu.memory_space<vmem>>, vector<16x16x8xf32>,
    %c4_95 = arith.constant 4 : index
    %c2_96 = arith.constant 2 : index
    %c0_97 = arith.constant 0 : index
    %52 = vector.load %arg11[%c4_95, %c2_96, %c0_97] : memref<20x20x8xf32, #tpu.memory_space<vmem>>, vector<16x16x8xf32>
    %c0_98 = arith.constant 0 : index
    %c0_99 = arith.constant 0 : index
    %c56 = arith.constant 56 : index
    %53 = vector.load %arg15[%c0_98, %c0_99, %c56] : memref<16x16x72xf32, #tpu.memory_space<vmem>>, vector<16x16x8xf32>
    tpu.vector_store %arg15[%c0_98, %c0_99, %c56], %52 {strides = array<i32>} : memref<16x16x72xf32, #tpu.memory_space<vmem>>, vector<16x16x8xf32>,
    %c4_100 = arith.constant 4 : index
    %c4_101 = arith.constant 4 : index
    %c0_102 = arith.constant 0 : index
    %54 = vector.load %arg11[%c4_100, %c4_101, %c0_102] : memref<20x20x8xf32, #tpu.memory_space<vmem>>, vector<16x16x8xf32>
    %c0_103 = arith.constant 0 : index
    %c0_104 = arith.constant 0 : index
    %c64 = arith.constant 64 : index
    %55 = vector.load %arg15[%c0_103, %c0_104, %c64] : memref<16x16x72xf32, #tpu.memory_space<vmem>>, vector<16x16x8xf32>
    tpu.vector_store %arg15[%c0_103, %c0_104, %c64], %54 {strides = array<i32>} : memref<16x16x72xf32, #tpu.memory_space<vmem>>, vector<16x16x8xf32>,
    %c0_105 = arith.constant 0 : index
    %c0_106 = arith.constant 0 : index
    %c0_107 = arith.constant 0 : index
    %56 = vector.load %arg15[%c0_105, %c0_106, %c0_107] : memref<16x16x72xf32, #tpu.memory_space<vmem>>, vector<16x16x72xf32>
    %57 = vector.shape_cast %56 : vector<16x16x72xf32> to vector<256x72xf32>
    %c0_108 = arith.constant 0 : index
    %c0_109 = arith.constant 0 : index
    %c0_110 = arith.constant 0 : index
    %58 = vector.load %arg4[%c0_108, %c0_109, %c0_110] : memref<3x72x8xf32, #tpu.memory_space<vmem>>, vector<1x72x8xf32>
    %59 = vector.shape_cast %58 : vector<1x72x8xf32> to vector<72x8xf32>
    %cst_111 = arith.constant dense<0.000000e+00> : vector<256x8xf32>
    %60 = tpu.matmul %57, %59, %cst_111 {dimension_numbers = #tpu.dot_dimension_numbers<[1], [0], [0], [1], [0, 0, 1, 1], [], []>} : vector<256x72xf32>, vector<72x8xf32>, vector<256x8xf32> -> vector<256x8xf32>
    %c0_112 = arith.constant 0 : index
    %c0_113 = arith.constant 0 : index
    %61 = vector.load %arg5[%c0_112, %c0_113] : memref<3x8xf32, #tpu.memory_space<vmem>>, vector<1x8xf32>
    %62 = vector.broadcast %61 : vector<1x8xf32> to vector<256x8xf32>
    %63 = arith.addf %60, %62 : vector<256x8xf32>
    %c0_114 = arith.constant 0 : index
    %c0_115 = arith.constant 0 : index
    %64 = vector.load %arg6[%c0_114, %c0_115] : memref<3x8xf32, #tpu.memory_space<vmem>>, vector<1x8xf32>
    %65 = vector.broadcast %64 : vector<1x8xf32> to vector<256x8xf32>
    %66 = arith.mulf %63, %65 : vector<256x8xf32>
    %c0_116 = arith.constant 0 : index
    %c0_117 = arith.constant 0 : index
    %67 = vector.load %arg7[%c0_116, %c0_117] : memref<3x8xf32, #tpu.memory_space<vmem>>, vector<1x8xf32>
    %68 = vector.broadcast %67 : vector<1x8xf32> to vector<256x8xf32>
    %69 = arith.addf %66, %68 : vector<256x8xf32>
    %cst_118 = arith.constant 0.000000e+00 : f32
    %70 = vector.broadcast %cst_118 : f32 to vector<256x8xf32>
    %71 = arith.maximumf %69, %70 : vector<256x8xf32>
    %72 = vector.shape_cast %71 : vector<256x8xf32> to vector<16x16x8xf32>
    %c1_119 = arith.constant 1 : index
    %c1_120 = arith.constant 1 : index
    %c0_121 = arith.constant 0 : index
    %73 = vector.load %arg14[%c1_119, %c1_120, %c0_121] : memref<18x18x8xf32, #tpu.memory_space<vmem>>, vector<16x16x8xf32>
    tpu.vector_store %arg14[%c1_119, %c1_120, %c0_121], %72 {strides = array<i32>} : memref<18x18x8xf32, #tpu.memory_space<vmem>>, vector<16x16x8xf32>,
    %c0_122 = arith.constant 0 : index
    %c0_123 = arith.constant 0 : index
    %c0_124 = arith.constant 0 : index
    %74 = tpu.strided_load %arg14[%c0_122, %c0_123, %c0_124] {strides = array<i32: 2, 2, 1>} : memref<18x18x8xf32, #tpu.memory_space<vmem>>, vector<8x8x8xf32>
    %c0_125 = arith.constant 0 : index
    %c0_126 = arith.constant 0 : index
    %c0_127 = arith.constant 0 : index
    %75 = vector.load %arg16[%c0_125, %c0_126, %c0_127] : memref<8x8x72xf32, #tpu.memory_space<vmem>>, vector<8x8x8xf32>
    tpu.vector_store %arg16[%c0_125, %c0_126, %c0_127], %74 {strides = array<i32>} : memref<8x8x72xf32, #tpu.memory_space<vmem>>, vector<8x8x8xf32>,
    %c0_128 = arith.constant 0 : index
    %c1_129 = arith.constant 1 : index
    %c0_130 = arith.constant 0 : index
    %76 = tpu.strided_load %arg14[%c0_128, %c1_129, %c0_130] {strides = array<i32: 2, 2, 1>} : memref<18x18x8xf32, #tpu.memory_space<vmem>>, vector<8x8x8xf32>
    %c0_131 = arith.constant 0 : index
    %c0_132 = arith.constant 0 : index
    %c8_133 = arith.constant 8 : index
    %77 = vector.load %arg16[%c0_131, %c0_132, %c8_133] : memref<8x8x72xf32, #tpu.memory_space<vmem>>, vector<8x8x8xf32>
    tpu.vector_store %arg16[%c0_131, %c0_132, %c8_133], %76 {strides = array<i32>} : memref<8x8x72xf32, #tpu.memory_space<vmem>>, vector<8x8x8xf32>,
    %c0_134 = arith.constant 0 : index
    %c2_135 = arith.constant 2 : index
    %c0_136 = arith.constant 0 : index
    %78 = tpu.strided_load %arg14[%c0_134, %c2_135, %c0_136] {strides = array<i32: 2, 2, 1>} : memref<18x18x8xf32, #tpu.memory_space<vmem>>, vector<8x8x8xf32>
    %c0_137 = arith.constant 0 : index
    %c0_138 = arith.constant 0 : index
    %c16_139 = arith.constant 16 : index
    %79 = vector.load %arg16[%c0_137, %c0_138, %c16_139] : memref<8x8x72xf32, #tpu.memory_space<vmem>>, vector<8x8x8xf32>
    tpu.vector_store %arg16[%c0_137, %c0_138, %c16_139], %78 {strides = array<i32>} : memref<8x8x72xf32, #tpu.memory_space<vmem>>, vector<8x8x8xf32>,
    %c1_140 = arith.constant 1 : index
    %c0_141 = arith.constant 0 : index
    %c0_142 = arith.constant 0 : index
    %80 = tpu.strided_load %arg14[%c1_140, %c0_141, %c0_142] {strides = array<i32: 2, 2, 1>} : memref<18x18x8xf32, #tpu.memory_space<vmem>>, vector<8x8x8xf32>
    %c0_143 = arith.constant 0 : index
    %c0_144 = arith.constant 0 : index
    %c24_145 = arith.constant 24 : index
    %81 = vector.load %arg16[%c0_143, %c0_144, %c24_145] : memref<8x8x72xf32, #tpu.memory_space<vmem>>, vector<8x8x8xf32>
    tpu.vector_store %arg16[%c0_143, %c0_144, %c24_145], %80 {strides = array<i32>} : memref<8x8x72xf32, #tpu.memory_space<vmem>>, vector<8x8x8xf32>,
    %c1_146 = arith.constant 1 : index
    %c1_147 = arith.constant 1 : index
    %c0_148 = arith.constant 0 : index
    %82 = tpu.strided_load %arg14[%c1_146, %c1_147, %c0_148] {strides = array<i32: 2, 2, 1>} : memref<18x18x8xf32, #tpu.memory_space<vmem>>, vector<8x8x8xf32>
    %c0_149 = arith.constant 0 : index
    %c0_150 = arith.constant 0 : index
    %c32_151 = arith.constant 32 : index
    %83 = vector.load %arg16[%c0_149, %c0_150, %c32_151] : memref<8x8x72xf32, #tpu.memory_space<vmem>>, vector<8x8x8xf32>
    tpu.vector_store %arg16[%c0_149, %c0_150, %c32_151], %82 {strides = array<i32>} : memref<8x8x72xf32, #tpu.memory_space<vmem>>, vector<8x8x8xf32>,
    %c1_152 = arith.constant 1 : index
    %c2_153 = arith.constant 2 : index
    %c0_154 = arith.constant 0 : index
    %84 = tpu.strided_load %arg14[%c1_152, %c2_153, %c0_154] {strides = array<i32: 2, 2, 1>} : memref<18x18x8xf32, #tpu.memory_space<vmem>>, vector<8x8x8xf32>
    %c0_155 = arith.constant 0 : index
    %c0_156 = arith.constant 0 : index
    %c40_157 = arith.constant 40 : index
    %85 = vector.load %arg16[%c0_155, %c0_156, %c40_157] : memref<8x8x72xf32, #tpu.memory_space<vmem>>, vector<8x8x8xf32>
    tpu.vector_store %arg16[%c0_155, %c0_156, %c40_157], %84 {strides = array<i32>} : memref<8x8x72xf32, #tpu.memory_space<vmem>>, vector<8x8x8xf32>,
    %c2_158 = arith.constant 2 : index
    %c0_159 = arith.constant 0 : index
    %c0_160 = arith.constant 0 : index
    %86 = tpu.strided_load %arg14[%c2_158, %c0_159, %c0_160] {strides = array<i32: 2, 2, 1>} : memref<18x18x8xf32, #tpu.memory_space<vmem>>, vector<8x8x8xf32>
    %c0_161 = arith.constant 0 : index
    %c0_162 = arith.constant 0 : index
    %c48_163 = arith.constant 48 : index
    %87 = vector.load %arg16[%c0_161, %c0_162, %c48_163] : memref<8x8x72xf32, #tpu.memory_space<vmem>>, vector<8x8x8xf32>
    tpu.vector_store %arg16[%c0_161, %c0_162, %c48_163], %86 {strides = array<i32>} : memref<8x8x72xf32, #tpu.memory_space<vmem>>, vector<8x8x8xf32>,
    %c2_164 = arith.constant 2 : index
    %c1_165 = arith.constant 1 : index
    %c0_166 = arith.constant 0 : index
    %88 = tpu.strided_load %arg14[%c2_164, %c1_165, %c0_166] {strides = array<i32: 2, 2, 1>} : memref<18x18x8xf32, #tpu.memory_space<vmem>>, vector<8x8x8xf32>
    %c0_167 = arith.constant 0 : index
    %c0_168 = arith.constant 0 : index
    %c56_169 = arith.constant 56 : index
    %89 = vector.load %arg16[%c0_167, %c0_168, %c56_169] : memref<8x8x72xf32, #tpu.memory_space<vmem>>, vector<8x8x8xf32>
    tpu.vector_store %arg16[%c0_167, %c0_168, %c56_169], %88 {strides = array<i32>} : memref<8x8x72xf32, #tpu.memory_space<vmem>>, vector<8x8x8xf32>,
    %c2_170 = arith.constant 2 : index
    %c2_171 = arith.constant 2 : index
    %c0_172 = arith.constant 0 : index
    %90 = tpu.strided_load %arg14[%c2_170, %c2_171, %c0_172] {strides = array<i32: 2, 2, 1>} : memref<18x18x8xf32, #tpu.memory_space<vmem>>, vector<8x8x8xf32>
    %c0_173 = arith.constant 0 : index
    %c0_174 = arith.constant 0 : index
    %c64_175 = arith.constant 64 : index
    %91 = vector.load %arg16[%c0_173, %c0_174, %c64_175] : memref<8x8x72xf32, #tpu.memory_space<vmem>>, vector<8x8x8xf32>
    tpu.vector_store %arg16[%c0_173, %c0_174, %c64_175], %90 {strides = array<i32>} : memref<8x8x72xf32, #tpu.memory_space<vmem>>, vector<8x8x8xf32>,
    %c0_176 = arith.constant 0 : index
    %c0_177 = arith.constant 0 : index
    %c0_178 = arith.constant 0 : index
    %92 = vector.load %arg16[%c0_176, %c0_177, %c0_178] : memref<8x8x72xf32, #tpu.memory_space<vmem>>, vector<8x8x72xf32>
    %93 = vector.shape_cast %92 : vector<8x8x72xf32> to vector<64x72xf32>
    %c0_179 = arith.constant 0 : index
    %c0_180 = arith.constant 0 : index
    %c0_181 = arith.constant 0 : index
    %94 = vector.load %arg8[%c0_179, %c0_180, %c0_181] : memref<3x72x8xf32, #tpu.memory_space<vmem>>, vector<1x72x8xf32>
    %95 = vector.shape_cast %94 : vector<1x72x8xf32> to vector<72x8xf32>
    %cst_182 = arith.constant dense<0.000000e+00> : vector<64x8xf32>
    %96 = tpu.matmul %93, %95, %cst_182 {dimension_numbers = #tpu.dot_dimension_numbers<[1], [0], [0], [1], [0, 0, 1, 1], [], []>} : vector<64x72xf32>, vector<72x8xf32>, vector<64x8xf32> -> vector<64x8xf32>
    %97 = arith.addf %24, %96 : vector<64x8xf32>
    %c1_183 = arith.constant 1 : index
    %c0_184 = arith.constant 0 : index
    %98 = vector.load %arg2[%c1_183, %c0_184] : memref<3x8xf32, #tpu.memory_space<vmem>>, vector<1x8xf32>
    %c1_185 = arith.constant 1 : index
    %c0_186 = arith.constant 0 : index
    %99 = vector.load %arg3[%c1_185, %c0_186] : memref<3x8xf32, #tpu.memory_space<vmem>>, vector<1x8xf32>
    %c0_187 = arith.constant 0 : index
    %c0_188 = arith.constant 0 : index
    %c0_189 = arith.constant 0 : index
    %c0_190 = arith.constant 0 : index
    %100 = vector.load %arg1[%c0_187, %c0_188, %c0_189, %c0_190] : memref<1x16x16x8xf32, #tpu.memory_space<vmem>>, vector<1x16x16x8xf32>
    %101 = vector.shape_cast %100 : vector<1x16x16x8xf32> to vector<16x16x8xf32>
    %102 = vector.shape_cast %98 : vector<1x8xf32> to vector<1x1x8xf32>
    %103 = vector.broadcast %102 : vector<1x1x8xf32> to vector<16x16x8xf32>
    %104 = arith.mulf %101, %103 : vector<16x16x8xf32>
    %105 = vector.shape_cast %99 : vector<1x8xf32> to vector<1x1x8xf32>
    %106 = vector.broadcast %105 : vector<1x1x8xf32> to vector<16x16x8xf32>
    %107 = arith.addf %104, %106 : vector<16x16x8xf32>
    %cst_191 = arith.constant 0.000000e+00 : f32
    %108 = vector.broadcast %cst_191 : f32 to vector<16x16x8xf32>
    %109 = arith.maximumf %107, %108 : vector<16x16x8xf32>
    %c4_192 = arith.constant 4 : index
    %c4_193 = arith.constant 4 : index
    %c0_194 = arith.constant 0 : index
    %110 = vector.load %arg12[%c4_192, %c4_193, %c0_194] : memref<24x24x8xf32, #tpu.memory_space<vmem>>, vector<16x16x8xf32>
    tpu.vector_store %arg12[%c4_192, %c4_193, %c0_194], %109 {strides = array<i32>} : memref<24x24x8xf32, #tpu.memory_space<vmem>>, vector<16x16x8xf32>,
    %c0_195 = arith.constant 0 : index
    %c0_196 = arith.constant 0 : index
    %c0_197 = arith.constant 0 : index
    %111 = vector.load %arg12[%c0_195, %c0_196, %c0_197] : memref<24x24x8xf32, #tpu.memory_space<vmem>>, vector<16x16x8xf32>
    %c0_198 = arith.constant 0 : index
    %c0_199 = arith.constant 0 : index
    %c0_200 = arith.constant 0 : index
    %112 = vector.load %arg15[%c0_198, %c0_199, %c0_200] : memref<16x16x72xf32, #tpu.memory_space<vmem>>, vector<16x16x8xf32>
    tpu.vector_store %arg15[%c0_198, %c0_199, %c0_200], %111 {strides = array<i32>} : memref<16x16x72xf32, #tpu.memory_space<vmem>>, vector<16x16x8xf32>,
    %c0_201 = arith.constant 0 : index
    %c4_202 = arith.constant 4 : index
    %c0_203 = arith.constant 0 : index
    %113 = vector.load %arg12[%c0_201, %c4_202, %c0_203] : memref<24x24x8xf32, #tpu.memory_space<vmem>>, vector<16x16x8xf32>
    %c0_204 = arith.constant 0 : index
    %c0_205 = arith.constant 0 : index
    %c8_206 = arith.constant 8 : index
    %114 = vector.load %arg15[%c0_204, %c0_205, %c8_206] : memref<16x16x72xf32, #tpu.memory_space<vmem>>, vector<16x16x8xf32>
    tpu.vector_store %arg15[%c0_204, %c0_205, %c8_206], %113 {strides = array<i32>} : memref<16x16x72xf32, #tpu.memory_space<vmem>>, vector<16x16x8xf32>,
    %c0_207 = arith.constant 0 : index
    %c8_208 = arith.constant 8 : index
    %c0_209 = arith.constant 0 : index
    %115 = vector.load %arg12[%c0_207, %c8_208, %c0_209] : memref<24x24x8xf32, #tpu.memory_space<vmem>>, vector<16x16x8xf32>
    %c0_210 = arith.constant 0 : index
    %c0_211 = arith.constant 0 : index
    %c16_212 = arith.constant 16 : index
    %116 = vector.load %arg15[%c0_210, %c0_211, %c16_212] : memref<16x16x72xf32, #tpu.memory_space<vmem>>, vector<16x16x8xf32>
    tpu.vector_store %arg15[%c0_210, %c0_211, %c16_212], %115 {strides = array<i32>} : memref<16x16x72xf32, #tpu.memory_space<vmem>>, vector<16x16x8xf32>,
    %c4_213 = arith.constant 4 : index
    %c0_214 = arith.constant 0 : index
    %c0_215 = arith.constant 0 : index
    %117 = vector.load %arg12[%c4_213, %c0_214, %c0_215] : memref<24x24x8xf32, #tpu.memory_space<vmem>>, vector<16x16x8xf32>
    %c0_216 = arith.constant 0 : index
    %c0_217 = arith.constant 0 : index
    %c24_218 = arith.constant 24 : index
    %118 = vector.load %arg15[%c0_216, %c0_217, %c24_218] : memref<16x16x72xf32, #tpu.memory_space<vmem>>, vector<16x16x8xf32>
    tpu.vector_store %arg15[%c0_216, %c0_217, %c24_218], %117 {strides = array<i32>} : memref<16x16x72xf32, #tpu.memory_space<vmem>>, vector<16x16x8xf32>,
    %c4_219 = arith.constant 4 : index
    %c4_220 = arith.constant 4 : index
    %c0_221 = arith.constant 0 : index
    %119 = vector.load %arg12[%c4_219, %c4_220, %c0_221] : memref<24x24x8xf32, #tpu.memory_space<vmem>>, vector<16x16x8xf32>
    %c0_222 = arith.constant 0 : index
    %c0_223 = arith.constant 0 : index
    %c32_224 = arith.constant 32 : index
    %120 = vector.load %arg15[%c0_222, %c0_223, %c32_224] : memref<16x16x72xf32, #tpu.memory_space<vmem>>, vector<16x16x8xf32>
    tpu.vector_store %arg15[%c0_222, %c0_223, %c32_224], %119 {strides = array<i32>} : memref<16x16x72xf32, #tpu.memory_space<vmem>>, vector<16x16x8xf32>,
    %c4_225 = arith.constant 4 : index
    %c8_226 = arith.constant 8 : index
    %c0_227 = arith.constant 0 : index
    %121 = vector.load %arg12[%c4_225, %c8_226, %c0_227] : memref<24x24x8xf32, #tpu.memory_space<vmem>>, vector<16x16x8xf32>
    %c0_228 = arith.constant 0 : index
    %c0_229 = arith.constant 0 : index
    %c40_230 = arith.constant 40 : index
    %122 = vector.load %arg15[%c0_228, %c0_229, %c40_230] : memref<16x16x72xf32, #tpu.memory_space<vmem>>, vector<16x16x8xf32>
    tpu.vector_store %arg15[%c0_228, %c0_229, %c40_230], %121 {strides = array<i32>} : memref<16x16x72xf32, #tpu.memory_space<vmem>>, vector<16x16x8xf32>,
    %c8_231 = arith.constant 8 : index
    %c0_232 = arith.constant 0 : index
    %c0_233 = arith.constant 0 : index
    %123 = vector.load %arg12[%c8_231, %c0_232, %c0_233] : memref<24x24x8xf32, #tpu.memory_space<vmem>>, vector<16x16x8xf32>
    %c0_234 = arith.constant 0 : index
    %c0_235 = arith.constant 0 : index
    %c48_236 = arith.constant 48 : index
    %124 = vector.load %arg15[%c0_234, %c0_235, %c48_236] : memref<16x16x72xf32, #tpu.memory_space<vmem>>, vector<16x16x8xf32>
    tpu.vector_store %arg15[%c0_234, %c0_235, %c48_236], %123 {strides = array<i32>} : memref<16x16x72xf32, #tpu.memory_space<vmem>>, vector<16x16x8xf32>,
    %c8_237 = arith.constant 8 : index
    %c4_238 = arith.constant 4 : index
    %c0_239 = arith.constant 0 : index
    %125 = vector.load %arg12[%c8_237, %c4_238, %c0_239] : memref<24x24x8xf32, #tpu.memory_space<vmem>>, vector<16x16x8xf32>
    %c0_240 = arith.constant 0 : index
    %c0_241 = arith.constant 0 : index
    %c56_242 = arith.constant 56 : index
    %126 = vector.load %arg15[%c0_240, %c0_241, %c56_242] : memref<16x16x72xf32, #tpu.memory_space<vmem>>, vector<16x16x8xf32>
    tpu.vector_store %arg15[%c0_240, %c0_241, %c56_242], %125 {strides = array<i32>} : memref<16x16x72xf32, #tpu.memory_space<vmem>>, vector<16x16x8xf32>,
    %c8_243 = arith.constant 8 : index
    %c8_244 = arith.constant 8 : index
    %c0_245 = arith.constant 0 : index
    %127 = vector.load %arg12[%c8_243, %c8_244, %c0_245] : memref<24x24x8xf32, #tpu.memory_space<vmem>>, vector<16x16x8xf32>
    %c0_246 = arith.constant 0 : index
    %c0_247 = arith.constant 0 : index
    %c64_248 = arith.constant 64 : index
    %128 = vector.load %arg15[%c0_246, %c0_247, %c64_248] : memref<16x16x72xf32, #tpu.memory_space<vmem>>, vector<16x16x8xf32>
    tpu.vector_store %arg15[%c0_246, %c0_247, %c64_248], %127 {strides = array<i32>} : memref<16x16x72xf32, #tpu.memory_space<vmem>>, vector<16x16x8xf32>,
    %c0_249 = arith.constant 0 : index
    %c0_250 = arith.constant 0 : index
    %c0_251 = arith.constant 0 : index
    %129 = vector.load %arg15[%c0_249, %c0_250, %c0_251] : memref<16x16x72xf32, #tpu.memory_space<vmem>>, vector<16x16x72xf32>
    %130 = vector.shape_cast %129 : vector<16x16x72xf32> to vector<256x72xf32>
    %c1_252 = arith.constant 1 : index
    %c0_253 = arith.constant 0 : index
    %c0_254 = arith.constant 0 : index
    %131 = vector.load %arg4[%c1_252, %c0_253, %c0_254] : memref<3x72x8xf32, #tpu.memory_space<vmem>>, vector<1x72x8xf32>
    %132 = vector.shape_cast %131 : vector<1x72x8xf32> to vector<72x8xf32>
    %cst_255 = arith.constant dense<0.000000e+00> : vector<256x8xf32>
    %133 = tpu.matmul %130, %132, %cst_255 {dimension_numbers = #tpu.dot_dimension_numbers<[1], [0], [0], [1], [0, 0, 1, 1], [], []>} : vector<256x72xf32>, vector<72x8xf32>, vector<256x8xf32> -> vector<256x8xf32>
    %c1_256 = arith.constant 1 : index
    %c0_257 = arith.constant 0 : index
    %134 = vector.load %arg5[%c1_256, %c0_257] : memref<3x8xf32, #tpu.memory_space<vmem>>, vector<1x8xf32>
    %135 = vector.broadcast %134 : vector<1x8xf32> to vector<256x8xf32>
    %136 = arith.addf %133, %135 : vector<256x8xf32>
    %c1_258 = arith.constant 1 : index
    %c0_259 = arith.constant 0 : index
    %137 = vector.load %arg6[%c1_258, %c0_259] : memref<3x8xf32, #tpu.memory_space<vmem>>, vector<1x8xf32>
    %138 = vector.broadcast %137 : vector<1x8xf32> to vector<256x8xf32>
    %139 = arith.mulf %136, %138 : vector<256x8xf32>
    %c1_260 = arith.constant 1 : index
    %c0_261 = arith.constant 0 : index
    %140 = vector.load %arg7[%c1_260, %c0_261] : memref<3x8xf32, #tpu.memory_space<vmem>>, vector<1x8xf32>
    %141 = vector.broadcast %140 : vector<1x8xf32> to vector<256x8xf32>
    %142 = arith.addf %139, %141 : vector<256x8xf32>
    %cst_262 = arith.constant 0.000000e+00 : f32
    %143 = vector.broadcast %cst_262 : f32 to vector<256x8xf32>
    %144 = arith.maximumf %142, %143 : vector<256x8xf32>
    %145 = vector.shape_cast %144 : vector<256x8xf32> to vector<16x16x8xf32>
    %c1_263 = arith.constant 1 : index
    %c1_264 = arith.constant 1 : index
    %c0_265 = arith.constant 0 : index
    %146 = vector.load %arg14[%c1_263, %c1_264, %c0_265] : memref<18x18x8xf32, #tpu.memory_space<vmem>>, vector<16x16x8xf32>
    tpu.vector_store %arg14[%c1_263, %c1_264, %c0_265], %145 {strides = array<i32>} : memref<18x18x8xf32, #tpu.memory_space<vmem>>, vector<16x16x8xf32>,
    %c0_266 = arith.constant 0 : index
    %c0_267 = arith.constant 0 : index
    %c0_268 = arith.constant 0 : index
    %147 = tpu.strided_load %arg14[%c0_266, %c0_267, %c0_268] {strides = array<i32: 2, 2, 1>} : memref<18x18x8xf32, #tpu.memory_space<vmem>>, vector<8x8x8xf32>
    %c0_269 = arith.constant 0 : index
    %c0_270 = arith.constant 0 : index
    %c0_271 = arith.constant 0 : index
    %148 = vector.load %arg16[%c0_269, %c0_270, %c0_271] : memref<8x8x72xf32, #tpu.memory_space<vmem>>, vector<8x8x8xf32>
    tpu.vector_store %arg16[%c0_269, %c0_270, %c0_271], %147 {strides = array<i32>} : memref<8x8x72xf32, #tpu.memory_space<vmem>>, vector<8x8x8xf32>,
    %c0_272 = arith.constant 0 : index
    %c1_273 = arith.constant 1 : index
    %c0_274 = arith.constant 0 : index
    %149 = tpu.strided_load %arg14[%c0_272, %c1_273, %c0_274] {strides = array<i32: 2, 2, 1>} : memref<18x18x8xf32, #tpu.memory_space<vmem>>, vector<8x8x8xf32>
    %c0_275 = arith.constant 0 : index
    %c0_276 = arith.constant 0 : index
    %c8_277 = arith.constant 8 : index
    %150 = vector.load %arg16[%c0_275, %c0_276, %c8_277] : memref<8x8x72xf32, #tpu.memory_space<vmem>>, vector<8x8x8xf32>
    tpu.vector_store %arg16[%c0_275, %c0_276, %c8_277], %149 {strides = array<i32>} : memref<8x8x72xf32, #tpu.memory_space<vmem>>, vector<8x8x8xf32>,
    %c0_278 = arith.constant 0 : index
    %c2_279 = arith.constant 2 : index
    %c0_280 = arith.constant 0 : index
    %151 = tpu.strided_load %arg14[%c0_278, %c2_279, %c0_280] {strides = array<i32: 2, 2, 1>} : memref<18x18x8xf32, #tpu.memory_space<vmem>>, vector<8x8x8xf32>
    %c0_281 = arith.constant 0 : index
    %c0_282 = arith.constant 0 : index
    %c16_283 = arith.constant 16 : index
    %152 = vector.load %arg16[%c0_281, %c0_282, %c16_283] : memref<8x8x72xf32, #tpu.memory_space<vmem>>, vector<8x8x8xf32>
    tpu.vector_store %arg16[%c0_281, %c0_282, %c16_283], %151 {strides = array<i32>} : memref<8x8x72xf32, #tpu.memory_space<vmem>>, vector<8x8x8xf32>,
    %c1_284 = arith.constant 1 : index
    %c0_285 = arith.constant 0 : index
    %c0_286 = arith.constant 0 : index
    %153 = tpu.strided_load %arg14[%c1_284, %c0_285, %c0_286] {strides = array<i32: 2, 2, 1>} : memref<18x18x8xf32, #tpu.memory_space<vmem>>, vector<8x8x8xf32>
    %c0_287 = arith.constant 0 : index
    %c0_288 = arith.constant 0 : index
    %c24_289 = arith.constant 24 : index
    %154 = vector.load %arg16[%c0_287, %c0_288, %c24_289] : memref<8x8x72xf32, #tpu.memory_space<vmem>>, vector<8x8x8xf32>
    tpu.vector_store %arg16[%c0_287, %c0_288, %c24_289], %153 {strides = array<i32>} : memref<8x8x72xf32, #tpu.memory_space<vmem>>, vector<8x8x8xf32>,
    %c1_290 = arith.constant 1 : index
    %c1_291 = arith.constant 1 : index
    %c0_292 = arith.constant 0 : index
    %155 = tpu.strided_load %arg14[%c1_290, %c1_291, %c0_292] {strides = array<i32: 2, 2, 1>} : memref<18x18x8xf32, #tpu.memory_space<vmem>>, vector<8x8x8xf32>
    %c0_293 = arith.constant 0 : index
    %c0_294 = arith.constant 0 : index
    %c32_295 = arith.constant 32 : index
    %156 = vector.load %arg16[%c0_293, %c0_294, %c32_295] : memref<8x8x72xf32, #tpu.memory_space<vmem>>, vector<8x8x8xf32>
    tpu.vector_store %arg16[%c0_293, %c0_294, %c32_295], %155 {strides = array<i32>} : memref<8x8x72xf32, #tpu.memory_space<vmem>>, vector<8x8x8xf32>,
    %c1_296 = arith.constant 1 : index
    %c2_297 = arith.constant 2 : index
    %c0_298 = arith.constant 0 : index
    %157 = tpu.strided_load %arg14[%c1_296, %c2_297, %c0_298] {strides = array<i32: 2, 2, 1>} : memref<18x18x8xf32, #tpu.memory_space<vmem>>, vector<8x8x8xf32>
    %c0_299 = arith.constant 0 : index
    %c0_300 = arith.constant 0 : index
    %c40_301 = arith.constant 40 : index
    %158 = vector.load %arg16[%c0_299, %c0_300, %c40_301] : memref<8x8x72xf32, #tpu.memory_space<vmem>>, vector<8x8x8xf32>
    tpu.vector_store %arg16[%c0_299, %c0_300, %c40_301], %157 {strides = array<i32>} : memref<8x8x72xf32, #tpu.memory_space<vmem>>, vector<8x8x8xf32>,
    %c2_302 = arith.constant 2 : index
    %c0_303 = arith.constant 0 : index
    %c0_304 = arith.constant 0 : index
    %159 = tpu.strided_load %arg14[%c2_302, %c0_303, %c0_304] {strides = array<i32: 2, 2, 1>} : memref<18x18x8xf32, #tpu.memory_space<vmem>>, vector<8x8x8xf32>
    %c0_305 = arith.constant 0 : index
    %c0_306 = arith.constant 0 : index
    %c48_307 = arith.constant 48 : index
    %160 = vector.load %arg16[%c0_305, %c0_306, %c48_307] : memref<8x8x72xf32, #tpu.memory_space<vmem>>, vector<8x8x8xf32>
    tpu.vector_store %arg16[%c0_305, %c0_306, %c48_307], %159 {strides = array<i32>} : memref<8x8x72xf32, #tpu.memory_space<vmem>>, vector<8x8x8xf32>,
    %c2_308 = arith.constant 2 : index
    %c1_309 = arith.constant 1 : index
    %c0_310 = arith.constant 0 : index
    %161 = tpu.strided_load %arg14[%c2_308, %c1_309, %c0_310] {strides = array<i32: 2, 2, 1>} : memref<18x18x8xf32, #tpu.memory_space<vmem>>, vector<8x8x8xf32>
    %c0_311 = arith.constant 0 : index
    %c0_312 = arith.constant 0 : index
    %c56_313 = arith.constant 56 : index
    %162 = vector.load %arg16[%c0_311, %c0_312, %c56_313] : memref<8x8x72xf32, #tpu.memory_space<vmem>>, vector<8x8x8xf32>
    tpu.vector_store %arg16[%c0_311, %c0_312, %c56_313], %161 {strides = array<i32>} : memref<8x8x72xf32, #tpu.memory_space<vmem>>, vector<8x8x8xf32>,
    %c2_314 = arith.constant 2 : index
    %c2_315 = arith.constant 2 : index
    %c0_316 = arith.constant 0 : index
    %163 = tpu.strided_load %arg14[%c2_314, %c2_315, %c0_316] {strides = array<i32: 2, 2, 1>} : memref<18x18x8xf32, #tpu.memory_space<vmem>>, vector<8x8x8xf32>
    %c0_317 = arith.constant 0 : index
    %c0_318 = arith.constant 0 : index
    %c64_319 = arith.constant 64 : index
    %164 = vector.load %arg16[%c0_317, %c0_318, %c64_319] : memref<8x8x72xf32, #tpu.memory_space<vmem>>, vector<8x8x8xf32>
    tpu.vector_store %arg16[%c0_317, %c0_318, %c64_319], %163 {strides = array<i32>} : memref<8x8x72xf32, #tpu.memory_space<vmem>>, vector<8x8x8xf32>,
    %c0_320 = arith.constant 0 : index
    %c0_321 = arith.constant 0 : index
    %c0_322 = arith.constant 0 : index
    %165 = vector.load %arg16[%c0_320, %c0_321, %c0_322] : memref<8x8x72xf32, #tpu.memory_space<vmem>>, vector<8x8x72xf32>
    %166 = vector.shape_cast %165 : vector<8x8x72xf32> to vector<64x72xf32>
    %c1_323 = arith.constant 1 : index
    %c0_324 = arith.constant 0 : index
    %c0_325 = arith.constant 0 : index
    %167 = vector.load %arg8[%c1_323, %c0_324, %c0_325] : memref<3x72x8xf32, #tpu.memory_space<vmem>>, vector<1x72x8xf32>
    %168 = vector.shape_cast %167 : vector<1x72x8xf32> to vector<72x8xf32>
    %cst_326 = arith.constant dense<0.000000e+00> : vector<64x8xf32>
    %169 = tpu.matmul %166, %168, %cst_326 {dimension_numbers = #tpu.dot_dimension_numbers<[1], [0], [0], [1], [0, 0, 1, 1], [], []>} : vector<64x72xf32>, vector<72x8xf32>, vector<64x8xf32> -> vector<64x8xf32>
    %170 = arith.addf %97, %169 : vector<64x8xf32>
    %c2_327 = arith.constant 2 : index
    %c0_328 = arith.constant 0 : index
    %171 = vector.load %arg2[%c2_327, %c0_328] : memref<3x8xf32, #tpu.memory_space<vmem>>, vector<1x8xf32>
    %c2_329 = arith.constant 2 : index
    %c0_330 = arith.constant 0 : index
    %172 = vector.load %arg3[%c2_329, %c0_330] : memref<3x8xf32, #tpu.memory_space<vmem>>, vector<1x8xf32>
    %c0_331 = arith.constant 0 : index
    %c0_332 = arith.constant 0 : index
    %c0_333 = arith.constant 0 : index
    %c0_334 = arith.constant 0 : index
    %173 = vector.load %arg1[%c0_331, %c0_332, %c0_333, %c0_334] : memref<1x16x16x8xf32, #tpu.memory_space<vmem>>, vector<1x16x16x8xf32>
    %174 = vector.shape_cast %173 : vector<1x16x16x8xf32> to vector<16x16x8xf32>
    %175 = vector.shape_cast %171 : vector<1x8xf32> to vector<1x1x8xf32>
    %176 = vector.broadcast %175 : vector<1x1x8xf32> to vector<16x16x8xf32>
    %177 = arith.mulf %174, %176 : vector<16x16x8xf32>
    %178 = vector.shape_cast %172 : vector<1x8xf32> to vector<1x1x8xf32>
    %179 = vector.broadcast %178 : vector<1x1x8xf32> to vector<16x16x8xf32>
    %180 = arith.addf %177, %179 : vector<16x16x8xf32>
    %cst_335 = arith.constant 0.000000e+00 : f32
    %181 = vector.broadcast %cst_335 : f32 to vector<16x16x8xf32>
    %182 = arith.maximumf %180, %181 : vector<16x16x8xf32>
    %c6_336 = arith.constant 6 : index
    %c6_337 = arith.constant 6 : index
    %c0_338 = arith.constant 0 : index
    %183 = vector.load %arg13[%c6_336, %c6_337, %c0_338] : memref<28x28x8xf32, #tpu.memory_space<vmem>>, vector<16x16x8xf32>
    tpu.vector_store %arg13[%c6_336, %c6_337, %c0_338], %182 {strides = array<i32>} : memref<28x28x8xf32, #tpu.memory_space<vmem>>, vector<16x16x8xf32>,
    %c0_339 = arith.constant 0 : index
    %c0_340 = arith.constant 0 : index
    %c0_341 = arith.constant 0 : index
    %184 = vector.load %arg13[%c0_339, %c0_340, %c0_341] : memref<28x28x8xf32, #tpu.memory_space<vmem>>, vector<16x16x8xf32>
    %c0_342 = arith.constant 0 : index
    %c0_343 = arith.constant 0 : index
    %c0_344 = arith.constant 0 : index
    %185 = vector.load %arg15[%c0_342, %c0_343, %c0_344] : memref<16x16x72xf32, #tpu.memory_space<vmem>>, vector<16x16x8xf32>
    tpu.vector_store %arg15[%c0_342, %c0_343, %c0_344], %184 {strides = array<i32>} : memref<16x16x72xf32, #tpu.memory_space<vmem>>, vector<16x16x8xf32>,
    %c0_345 = arith.constant 0 : index
    %c6_346 = arith.constant 6 : index
    %c0_347 = arith.constant 0 : index
    %186 = vector.load %arg13[%c0_345, %c6_346, %c0_347] : memref<28x28x8xf32, #tpu.memory_space<vmem>>, vector<16x16x8xf32>
    %c0_348 = arith.constant 0 : index
    %c0_349 = arith.constant 0 : index
    %c8_350 = arith.constant 8 : index
    %187 = vector.load %arg15[%c0_348, %c0_349, %c8_350] : memref<16x16x72xf32, #tpu.memory_space<vmem>>, vector<16x16x8xf32>
    tpu.vector_store %arg15[%c0_348, %c0_349, %c8_350], %186 {strides = array<i32>} : memref<16x16x72xf32, #tpu.memory_space<vmem>>, vector<16x16x8xf32>,
    %c0_351 = arith.constant 0 : index
    %c12 = arith.constant 12 : index
    %c0_352 = arith.constant 0 : index
    %188 = vector.load %arg13[%c0_351, %c12, %c0_352] : memref<28x28x8xf32, #tpu.memory_space<vmem>>, vector<16x16x8xf32>
    %c0_353 = arith.constant 0 : index
    %c0_354 = arith.constant 0 : index
    %c16_355 = arith.constant 16 : index
    %189 = vector.load %arg15[%c0_353, %c0_354, %c16_355] : memref<16x16x72xf32, #tpu.memory_space<vmem>>, vector<16x16x8xf32>
    tpu.vector_store %arg15[%c0_353, %c0_354, %c16_355], %188 {strides = array<i32>} : memref<16x16x72xf32, #tpu.memory_space<vmem>>, vector<16x16x8xf32>,
    %c6_356 = arith.constant 6 : index
    %c0_357 = arith.constant 0 : index
    %c0_358 = arith.constant 0 : index
    %190 = vector.load %arg13[%c6_356, %c0_357, %c0_358] : memref<28x28x8xf32, #tpu.memory_space<vmem>>, vector<16x16x8xf32>
    %c0_359 = arith.constant 0 : index
    %c0_360 = arith.constant 0 : index
    %c24_361 = arith.constant 24 : index
    %191 = vector.load %arg15[%c0_359, %c0_360, %c24_361] : memref<16x16x72xf32, #tpu.memory_space<vmem>>, vector<16x16x8xf32>
    tpu.vector_store %arg15[%c0_359, %c0_360, %c24_361], %190 {strides = array<i32>} : memref<16x16x72xf32, #tpu.memory_space<vmem>>, vector<16x16x8xf32>,
    %c6_362 = arith.constant 6 : index
    %c6_363 = arith.constant 6 : index
    %c0_364 = arith.constant 0 : index
    %192 = vector.load %arg13[%c6_362, %c6_363, %c0_364] : memref<28x28x8xf32, #tpu.memory_space<vmem>>, vector<16x16x8xf32>
    %c0_365 = arith.constant 0 : index
    %c0_366 = arith.constant 0 : index
    %c32_367 = arith.constant 32 : index
    %193 = vector.load %arg15[%c0_365, %c0_366, %c32_367] : memref<16x16x72xf32, #tpu.memory_space<vmem>>, vector<16x16x8xf32>
    tpu.vector_store %arg15[%c0_365, %c0_366, %c32_367], %192 {strides = array<i32>} : memref<16x16x72xf32, #tpu.memory_space<vmem>>, vector<16x16x8xf32>,
    %c6_368 = arith.constant 6 : index
    %c12_369 = arith.constant 12 : index
    %c0_370 = arith.constant 0 : index
    %194 = vector.load %arg13[%c6_368, %c12_369, %c0_370] : memref<28x28x8xf32, #tpu.memory_space<vmem>>, vector<16x16x8xf32>
    %c0_371 = arith.constant 0 : index
    %c0_372 = arith.constant 0 : index
    %c40_373 = arith.constant 40 : index
    %195 = vector.load %arg15[%c0_371, %c0_372, %c40_373] : memref<16x16x72xf32, #tpu.memory_space<vmem>>, vector<16x16x8xf32>
    tpu.vector_store %arg15[%c0_371, %c0_372, %c40_373], %194 {strides = array<i32>} : memref<16x16x72xf32, #tpu.memory_space<vmem>>, vector<16x16x8xf32>,
    %c12_374 = arith.constant 12 : index
    %c0_375 = arith.constant 0 : index
    %c0_376 = arith.constant 0 : index
    %196 = vector.load %arg13[%c12_374, %c0_375, %c0_376] : memref<28x28x8xf32, #tpu.memory_space<vmem>>, vector<16x16x8xf32>
    %c0_377 = arith.constant 0 : index
    %c0_378 = arith.constant 0 : index
    %c48_379 = arith.constant 48 : index
    %197 = vector.load %arg15[%c0_377, %c0_378, %c48_379] : memref<16x16x72xf32, #tpu.memory_space<vmem>>, vector<16x16x8xf32>
    tpu.vector_store %arg15[%c0_377, %c0_378, %c48_379], %196 {strides = array<i32>} : memref<16x16x72xf32, #tpu.memory_space<vmem>>, vector<16x16x8xf32>,
    %c12_380 = arith.constant 12 : index
    %c6_381 = arith.constant 6 : index
    %c0_382 = arith.constant 0 : index
    %198 = vector.load %arg13[%c12_380, %c6_381, %c0_382] : memref<28x28x8xf32, #tpu.memory_space<vmem>>, vector<16x16x8xf32>
    %c0_383 = arith.constant 0 : index
    %c0_384 = arith.constant 0 : index
    %c56_385 = arith.constant 56 : index
    %199 = vector.load %arg15[%c0_383, %c0_384, %c56_385] : memref<16x16x72xf32, #tpu.memory_space<vmem>>, vector<16x16x8xf32>
    tpu.vector_store %arg15[%c0_383, %c0_384, %c56_385], %198 {strides = array<i32>} : memref<16x16x72xf32, #tpu.memory_space<vmem>>, vector<16x16x8xf32>,
    %c12_386 = arith.constant 12 : index
    %c12_387 = arith.constant 12 : index
    %c0_388 = arith.constant 0 : index
    %200 = vector.load %arg13[%c12_386, %c12_387, %c0_388] : memref<28x28x8xf32, #tpu.memory_space<vmem>>, vector<16x16x8xf32>
    %c0_389 = arith.constant 0 : index
    %c0_390 = arith.constant 0 : index
    %c64_391 = arith.constant 64 : index
    %201 = vector.load %arg15[%c0_389, %c0_390, %c64_391] : memref<16x16x72xf32, #tpu.memory_space<vmem>>, vector<16x16x8xf32>
    tpu.vector_store %arg15[%c0_389, %c0_390, %c64_391], %200 {strides = array<i32>} : memref<16x16x72xf32, #tpu.memory_space<vmem>>, vector<16x16x8xf32>,
    %c0_392 = arith.constant 0 : index
    %c0_393 = arith.constant 0 : index
    %c0_394 = arith.constant 0 : index
    %202 = vector.load %arg15[%c0_392, %c0_393, %c0_394] : memref<16x16x72xf32, #tpu.memory_space<vmem>>, vector<16x16x72xf32>
    %203 = vector.shape_cast %202 : vector<16x16x72xf32> to vector<256x72xf32>
    %c2_395 = arith.constant 2 : index
    %c0_396 = arith.constant 0 : index
    %c0_397 = arith.constant 0 : index
    %204 = vector.load %arg4[%c2_395, %c0_396, %c0_397] : memref<3x72x8xf32, #tpu.memory_space<vmem>>, vector<1x72x8xf32>
    %205 = vector.shape_cast %204 : vector<1x72x8xf32> to vector<72x8xf32>
    %cst_398 = arith.constant dense<0.000000e+00> : vector<256x8xf32>
    %206 = tpu.matmul %203, %205, %cst_398 {dimension_numbers = #tpu.dot_dimension_numbers<[1], [0], [0], [1], [0, 0, 1, 1], [], []>} : vector<256x72xf32>, vector<72x8xf32>, vector<256x8xf32> -> vector<256x8xf32>
    %c2_399 = arith.constant 2 : index
    %c0_400 = arith.constant 0 : index
    %207 = vector.load %arg5[%c2_399, %c0_400] : memref<3x8xf32, #tpu.memory_space<vmem>>, vector<1x8xf32>
    %208 = vector.broadcast %207 : vector<1x8xf32> to vector<256x8xf32>
    %209 = arith.addf %206, %208 : vector<256x8xf32>
    %c2_401 = arith.constant 2 : index
    %c0_402 = arith.constant 0 : index
    %210 = vector.load %arg6[%c2_401, %c0_402] : memref<3x8xf32, #tpu.memory_space<vmem>>, vector<1x8xf32>
    %211 = vector.broadcast %210 : vector<1x8xf32> to vector<256x8xf32>
    %212 = arith.mulf %209, %211 : vector<256x8xf32>
    %c2_403 = arith.constant 2 : index
    %c0_404 = arith.constant 0 : index
    %213 = vector.load %arg7[%c2_403, %c0_404] : memref<3x8xf32, #tpu.memory_space<vmem>>, vector<1x8xf32>
    %214 = vector.broadcast %213 : vector<1x8xf32> to vector<256x8xf32>
    %215 = arith.addf %212, %214 : vector<256x8xf32>
    %cst_405 = arith.constant 0.000000e+00 : f32
    %216 = vector.broadcast %cst_405 : f32 to vector<256x8xf32>
    %217 = arith.maximumf %215, %216 : vector<256x8xf32>
    %218 = vector.shape_cast %217 : vector<256x8xf32> to vector<16x16x8xf32>
    %c1_406 = arith.constant 1 : index
    %c1_407 = arith.constant 1 : index
    %c0_408 = arith.constant 0 : index
    %219 = vector.load %arg14[%c1_406, %c1_407, %c0_408] : memref<18x18x8xf32, #tpu.memory_space<vmem>>, vector<16x16x8xf32>
    tpu.vector_store %arg14[%c1_406, %c1_407, %c0_408], %218 {strides = array<i32>} : memref<18x18x8xf32, #tpu.memory_space<vmem>>, vector<16x16x8xf32>,
    %c0_409 = arith.constant 0 : index
    %c0_410 = arith.constant 0 : index
    %c0_411 = arith.constant 0 : index
    %220 = tpu.strided_load %arg14[%c0_409, %c0_410, %c0_411] {strides = array<i32: 2, 2, 1>} : memref<18x18x8xf32, #tpu.memory_space<vmem>>, vector<8x8x8xf32>
    %c0_412 = arith.constant 0 : index
    %c0_413 = arith.constant 0 : index
    %c0_414 = arith.constant 0 : index
    %221 = vector.load %arg16[%c0_412, %c0_413, %c0_414] : memref<8x8x72xf32, #tpu.memory_space<vmem>>, vector<8x8x8xf32>
    tpu.vector_store %arg16[%c0_412, %c0_413, %c0_414], %220 {strides = array<i32>} : memref<8x8x72xf32, #tpu.memory_space<vmem>>, vector<8x8x8xf32>,
    %c0_415 = arith.constant 0 : index
    %c1_416 = arith.constant 1 : index
    %c0_417 = arith.constant 0 : index
    %222 = tpu.strided_load %arg14[%c0_415, %c1_416, %c0_417] {strides = array<i32: 2, 2, 1>} : memref<18x18x8xf32, #tpu.memory_space<vmem>>, vector<8x8x8xf32>
    %c0_418 = arith.constant 0 : index
    %c0_419 = arith.constant 0 : index
    %c8_420 = arith.constant 8 : index
    %223 = vector.load %arg16[%c0_418, %c0_419, %c8_420] : memref<8x8x72xf32, #tpu.memory_space<vmem>>, vector<8x8x8xf32>
    tpu.vector_store %arg16[%c0_418, %c0_419, %c8_420], %222 {strides = array<i32>} : memref<8x8x72xf32, #tpu.memory_space<vmem>>, vector<8x8x8xf32>,
    %c0_421 = arith.constant 0 : index
    %c2_422 = arith.constant 2 : index
    %c0_423 = arith.constant 0 : index
    %224 = tpu.strided_load %arg14[%c0_421, %c2_422, %c0_423] {strides = array<i32: 2, 2, 1>} : memref<18x18x8xf32, #tpu.memory_space<vmem>>, vector<8x8x8xf32>
    %c0_424 = arith.constant 0 : index
    %c0_425 = arith.constant 0 : index
    %c16_426 = arith.constant 16 : index
    %225 = vector.load %arg16[%c0_424, %c0_425, %c16_426] : memref<8x8x72xf32, #tpu.memory_space<vmem>>, vector<8x8x8xf32>
    tpu.vector_store %arg16[%c0_424, %c0_425, %c16_426], %224 {strides = array<i32>} : memref<8x8x72xf32, #tpu.memory_space<vmem>>, vector<8x8x8xf32>,
    %c1_427 = arith.constant 1 : index
    %c0_428 = arith.constant 0 : index
    %c0_429 = arith.constant 0 : index
    %226 = tpu.strided_load %arg14[%c1_427, %c0_428, %c0_429] {strides = array<i32: 2, 2, 1>} : memref<18x18x8xf32, #tpu.memory_space<vmem>>, vector<8x8x8xf32>
    %c0_430 = arith.constant 0 : index
    %c0_431 = arith.constant 0 : index
    %c24_432 = arith.constant 24 : index
    %227 = vector.load %arg16[%c0_430, %c0_431, %c24_432] : memref<8x8x72xf32, #tpu.memory_space<vmem>>, vector<8x8x8xf32>
    tpu.vector_store %arg16[%c0_430, %c0_431, %c24_432], %226 {strides = array<i32>} : memref<8x8x72xf32, #tpu.memory_space<vmem>>, vector<8x8x8xf32>,
    %c1_433 = arith.constant 1 : index
    %c1_434 = arith.constant 1 : index
    %c0_435 = arith.constant 0 : index
    %228 = tpu.strided_load %arg14[%c1_433, %c1_434, %c0_435] {strides = array<i32: 2, 2, 1>} : memref<18x18x8xf32, #tpu.memory_space<vmem>>, vector<8x8x8xf32>
    %c0_436 = arith.constant 0 : index
    %c0_437 = arith.constant 0 : index
    %c32_438 = arith.constant 32 : index
    %229 = vector.load %arg16[%c0_436, %c0_437, %c32_438] : memref<8x8x72xf32, #tpu.memory_space<vmem>>, vector<8x8x8xf32>
    tpu.vector_store %arg16[%c0_436, %c0_437, %c32_438], %228 {strides = array<i32>} : memref<8x8x72xf32, #tpu.memory_space<vmem>>, vector<8x8x8xf32>,
    %c1_439 = arith.constant 1 : index
    %c2_440 = arith.constant 2 : index
    %c0_441 = arith.constant 0 : index
    %230 = tpu.strided_load %arg14[%c1_439, %c2_440, %c0_441] {strides = array<i32: 2, 2, 1>} : memref<18x18x8xf32, #tpu.memory_space<vmem>>, vector<8x8x8xf32>
    %c0_442 = arith.constant 0 : index
    %c0_443 = arith.constant 0 : index
    %c40_444 = arith.constant 40 : index
    %231 = vector.load %arg16[%c0_442, %c0_443, %c40_444] : memref<8x8x72xf32, #tpu.memory_space<vmem>>, vector<8x8x8xf32>
    tpu.vector_store %arg16[%c0_442, %c0_443, %c40_444], %230 {strides = array<i32>} : memref<8x8x72xf32, #tpu.memory_space<vmem>>, vector<8x8x8xf32>,
    %c2_445 = arith.constant 2 : index
    %c0_446 = arith.constant 0 : index
    %c0_447 = arith.constant 0 : index
    %232 = tpu.strided_load %arg14[%c2_445, %c0_446, %c0_447] {strides = array<i32: 2, 2, 1>} : memref<18x18x8xf32, #tpu.memory_space<vmem>>, vector<8x8x8xf32>
    %c0_448 = arith.constant 0 : index
    %c0_449 = arith.constant 0 : index
    %c48_450 = arith.constant 48 : index
    %233 = vector.load %arg16[%c0_448, %c0_449, %c48_450] : memref<8x8x72xf32, #tpu.memory_space<vmem>>, vector<8x8x8xf32>
    tpu.vector_store %arg16[%c0_448, %c0_449, %c48_450], %232 {strides = array<i32>} : memref<8x8x72xf32, #tpu.memory_space<vmem>>, vector<8x8x8xf32>,
    %c2_451 = arith.constant 2 : index
    %c1_452 = arith.constant 1 : index
    %c0_453 = arith.constant 0 : index
    %234 = tpu.strided_load %arg14[%c2_451, %c1_452, %c0_453] {strides = array<i32: 2, 2, 1>} : memref<18x18x8xf32, #tpu.memory_space<vmem>>, vector<8x8x8xf32>
    %c0_454 = arith.constant 0 : index
    %c0_455 = arith.constant 0 : index
    %c56_456 = arith.constant 56 : index
    %235 = vector.load %arg16[%c0_454, %c0_455, %c56_456] : memref<8x8x72xf32, #tpu.memory_space<vmem>>, vector<8x8x8xf32>
    tpu.vector_store %arg16[%c0_454, %c0_455, %c56_456], %234 {strides = array<i32>} : memref<8x8x72xf32, #tpu.memory_space<vmem>>, vector<8x8x8xf32>,
    %c2_457 = arith.constant 2 : index
    %c2_458 = arith.constant 2 : index
    %c0_459 = arith.constant 0 : index
    %236 = tpu.strided_load %arg14[%c2_457, %c2_458, %c0_459] {strides = array<i32: 2, 2, 1>} : memref<18x18x8xf32, #tpu.memory_space<vmem>>, vector<8x8x8xf32>
    %c0_460 = arith.constant 0 : index
    %c0_461 = arith.constant 0 : index
    %c64_462 = arith.constant 64 : index
    %237 = vector.load %arg16[%c0_460, %c0_461, %c64_462] : memref<8x8x72xf32, #tpu.memory_space<vmem>>, vector<8x8x8xf32>
    tpu.vector_store %arg16[%c0_460, %c0_461, %c64_462], %236 {strides = array<i32>} : memref<8x8x72xf32, #tpu.memory_space<vmem>>, vector<8x8x8xf32>,
    %c0_463 = arith.constant 0 : index
    %c0_464 = arith.constant 0 : index
    %c0_465 = arith.constant 0 : index
    %238 = vector.load %arg16[%c0_463, %c0_464, %c0_465] : memref<8x8x72xf32, #tpu.memory_space<vmem>>, vector<8x8x72xf32>
    %239 = vector.shape_cast %238 : vector<8x8x72xf32> to vector<64x72xf32>
    %c2_466 = arith.constant 2 : index
    %c0_467 = arith.constant 0 : index
    %c0_468 = arith.constant 0 : index
    %240 = vector.load %arg8[%c2_466, %c0_467, %c0_468] : memref<3x72x8xf32, #tpu.memory_space<vmem>>, vector<1x72x8xf32>
    %241 = vector.shape_cast %240 : vector<1x72x8xf32> to vector<72x8xf32>
    %cst_469 = arith.constant dense<0.000000e+00> : vector<64x8xf32>
    %242 = tpu.matmul %239, %241, %cst_469 {dimension_numbers = #tpu.dot_dimension_numbers<[1], [0], [0], [1], [0, 0, 1, 1], [], []>} : vector<64x72xf32>, vector<72x8xf32>, vector<64x8xf32> -> vector<64x8xf32>
    %243 = arith.addf %170, %242 : vector<64x8xf32>
    %c0_470 = arith.constant 0 : index
    %c0_471 = arith.constant 0 : index
    %244 = vector.load %arg9[%c0_470, %c0_471] : memref<1x8xf32, #tpu.memory_space<vmem>>, vector<1x8xf32>
    %245 = vector.broadcast %244 : vector<1x8xf32> to vector<64x8xf32>
    %246 = arith.addf %243, %245 : vector<64x8xf32>
    %247 = vector.shape_cast %246 : vector<64x8xf32> to vector<8x8x8xf32>
    %c0_472 = arith.constant 0 : index
    %c0_473 = arith.constant 0 : index
    %c0_474 = arith.constant 0 : index
    %c0_475 = arith.constant 0 : index
    %248 = vector.load %arg10[%c0_472, %c0_473, %c0_474, %c0_475] : memref<1x8x8x8xf32, #tpu.memory_space<vmem>>, vector<1x8x8x8xf32>
    %249 = vector.shape_cast %248 : vector<1x8x8x8xf32> to vector<8x8x8xf32>
    %250 = vector.shape_cast %247 : vector<8x8x8xf32> to vector<1x8x8x8xf32>
    tpu.vector_store %arg10[%c0_472, %c0_473, %c0_474, %c0_475], %250 {strides = array<i32>} : memref<1x8x8x8xf32, #tpu.memory_space<vmem>>, vector<1x8x8x8xf32>,
    return
  }
  func.func @transform_0(%arg0: i32) -> (i32, i32, i32, i32) {
    %c0_i32 = arith.constant 0 : i32
    %c0_i32_0 = arith.constant 0 : i32
    %c0_i32_1 = arith.constant 0 : i32
    %c0_i32_2 = arith.constant 0 : i32
    return %arg0, %c0_i32, %c0_i32_0, %c0_i32_1 : i32, i32, i32, i32
  }
  func.func @transform_1(%arg0: i32) -> (i32, i32) {
    %c0_i32 = arith.constant 0 : i32
    %c0_i32_0 = arith.constant 0 : i32
    %c0_i32_1 = arith.constant 0 : i32
    return %c0_i32, %c0_i32_0 : i32, i32
  }
  func.func @transform_2(%arg0: i32) -> (i32, i32) {
    %c0_i32 = arith.constant 0 : i32
    %c0_i32_0 = arith.constant 0 : i32
    %c0_i32_1 = arith.constant 0 : i32
    return %c0_i32, %c0_i32_0 : i32, i32
  }
  func.func @transform_3(%arg0: i32) -> (i32, i32, i32) {
    %c0_i32 = arith.constant 0 : i32
    %c0_i32_0 = arith.constant 0 : i32
    %c0_i32_1 = arith.constant 0 : i32
    %c0_i32_2 = arith.constant 0 : i32
    return %c0_i32, %c0_i32_0, %c0_i32_1 : i32, i32, i32
  }
  func.func @transform_4(%arg0: i32) -> (i32, i32) {
    %c0_i32 = arith.constant 0 : i32
    %c0_i32_0 = arith.constant 0 : i32
    %c0_i32_1 = arith.constant 0 : i32
    return %c0_i32, %c0_i32_0 : i32, i32
  }
  func.func @transform_5(%arg0: i32) -> (i32, i32) {
    %c0_i32 = arith.constant 0 : i32
    %c0_i32_0 = arith.constant 0 : i32
    %c0_i32_1 = arith.constant 0 : i32
    return %c0_i32, %c0_i32_0 : i32, i32
  }
  func.func @transform_6(%arg0: i32) -> (i32, i32) {
    %c0_i32 = arith.constant 0 : i32
    %c0_i32_0 = arith.constant 0 : i32
    %c0_i32_1 = arith.constant 0 : i32
    return %c0_i32, %c0_i32_0 : i32, i32
  }
  func.func @transform_7(%arg0: i32) -> (i32, i32, i32) {
    %c0_i32 = arith.constant 0 : i32
    %c0_i32_0 = arith.constant 0 : i32
    %c0_i32_1 = arith.constant 0 : i32
    %c0_i32_2 = arith.constant 0 : i32
    return %c0_i32, %c0_i32_0, %c0_i32_1 : i32, i32, i32
  }
  func.func @transform_8(%arg0: i32) -> (i32, i32) {
    %c0_i32 = arith.constant 0 : i32
    %c0_i32_0 = arith.constant 0 : i32
    %c0_i32_1 = arith.constant 0 : i32
    return %c0_i32, %c0_i32_0 : i32, i32
  }
  func.func @transform_9(%arg0: i32) -> (i32, i32, i32, i32) {
    %c0_i32 = arith.constant 0 : i32
    %c0_i32_0 = arith.constant 0 : i32
    %c0_i32_1 = arith.constant 0 : i32
    %c0_i32_2 = arith.constant 0 : i32
    return %arg0, %c0_i32, %c0_i32_0, %c0_i32_1 : i32, i32, i32, i32
  }
}

</mosaic_0001>

<llo_original>
// kernel: tpu_custom_call.1
$region0: #{tpu_custom_call.1}
  #allocation0 [shape = 'u32[]', space=smem, size = 0x4, offset = 0x4, fixed_abs, tag = 'smem constant byte address 0x4 - core index']
  #allocation1 [shape = 'u32[144,128]{1,0:T(1,128)}', space=vmem, size = 0x12000, scoped, tag = 'internal scratch']
  #allocation2 [shape = 'f32[20,20,8]{2,1,0:T(8,128)}', space=vmem, size = 0x3c000, scoped, tag = 'scratch operand']
  #allocation3 [shape = 'f32[24,24,8]{2,1,0:T(8,128)}', space=vmem, size = 0x48000, scoped, tag = 'scratch operand']
  #allocation4 [shape = 'f32[28,28,8]{2,1,0:T(8,128)}', space=vmem, size = 0x70000, scoped, tag = 'scratch operand']
  #allocation5 [shape = 'f32[18,18,8]{2,1,0:T(8,128)}', space=vmem, size = 0x36000, scoped, tag = 'scratch operand']
  #allocation6 [shape = 'f32[16,16,72]{2,1,0:T(8,128)}', space=vmem, size = 0x20000, scoped, tag = 'scratch operand']
  #allocation7 [shape = 'f32[8,8,72]{2,1,0:T(8,128)}', space=vmem, size = 0x8000, scoped, tag = 'scratch operand']
  %s0 = inlined_call_operand.vmem [shape: f32[2,16,16,8], index: 0, kind: input, shape index: {}]
  %s1 = inlined_call_operand.vmem [shape: f32[3,8], index: 1, kind: input, shape index: {}]
  %s2 = inlined_call_operand.vmem [shape: f32[3,8], index: 2, kind: input, shape index: {}]
  %s3 = inlined_call_operand.vmem [shape: f32[3,72,8], index: 3, kind: input, shape index: {}]
  %s4 = inlined_call_operand.vmem [shape: f32[3,8], index: 4, kind: input, shape index: {}]
  %s5 = inlined_call_operand.vmem [shape: f32[3,8], index: 5, kind: input, shape index: {}]
  %s6 = inlined_call_operand.vmem [shape: f32[3,8], index: 6, kind: input, shape index: {}]
  %s7 = inlined_call_operand.vmem [shape: f32[3,72,8], index: 7, kind: input, shape index: {}]
  %s8 = inlined_call_operand.vmem [shape: f32[1,8], index: 8, kind: input, shape index: {}]
  %s9 = inlined_call_operand.hbm [shape: f32[2,8,8,8], index: 9, kind: output, shape index: {}]
  %s10 = sld [smem:[#allocation0]]
  $region69: #{tpu_custom_call.1} parent=0
    _
  %s12 = ssub.s32 1, %s10
  %s13 = scalar_select 0, %s12, %s10
  $region1: #{tpu_custom_call.1} parent=0
    #allocation8 [shape = 'u8[65536]{0}', space=vmem, size = 0x10000, scoped, tag = 'output window, operand 0']
    #allocation9 [shape = 's32[2]{0}', space=sflag, size = 0x8, scoped, tag = 'scoped memory for tpu_custom_call.1']
    %14 = vsyncpa [#allocation9], 0
    %s15 = scalar_lea.sflag [#allocation9], 1
    %16 = vsyncpa %s15, 0
    loop: start=0, step=1, limit=4
    $region2: #{tpu_custom_call.1} parent=1 // loop_pre_header
      _
    $region3: #{tpu_custom_call.1} parent=1 // loop_header
      %s18 = sphi 0, %s22
      %p19 = scmp.ge.s32.totalorder %s18, 4
      %s28 = sphi 0, %s30
      %s31 = sphi 0, %s28
      %s32 = sphi 0, %s31
      %s48 = sphi 0, %s32
      %s52 = sphi 0, %s52
      %s54 = sphi 0, %s52
      %s55 = sphi 0, %s54
      %s69 = sphi 0, %s55
      %s73 = sphi 0, %s73
      %s75 = sphi 0, %s73
      %s76 = sphi 0, %s75
      %s90 = sphi 0, %s76
      %s94 = sphi 0, %s94
      %s96 = sphi 0, %s94
      %s97 = sphi 0, %s96
      %s111 = sphi 0, %s97
      %s115 = sphi 0, %s115
      %s117 = sphi 0, %s115
      %s118 = sphi 0, %s117
      %s132 = sphi 0, %s118
      %s136 = sphi 0, %s136
      %s138 = sphi 0, %s136
      %s139 = sphi 0, %s138
      %s153 = sphi 0, %s139
      %s157 = sphi 0, %s157
      %s159 = sphi 0, %s157
      %s160 = sphi 0, %s159
      %s174 = sphi 0, %s160
      %s178 = sphi 0, %s178
      %s180 = sphi 0, %s178
      %s181 = sphi 0, %s180
      %s195 = sphi 0, %s181
      %s199 = sphi 0, %s199
      %s201 = sphi 0, %s199
      %s202 = sphi 0, %s201
      %s216 = sphi 0, %s202
      %s222 = sphi 0, %s224
      %s225 = sphi 0, %s222
      %s226 = sphi 0, %s225
      %s242 = sphi 0, %s226
    $region4: #{tpu_custom_call.1} parent=1 // loop_header_branch
      %21 = sbr.rel (%p19) target = $region8
    $region5: #{tpu_custom_call.1} parent=1 // loop_body
      %s23 = ssub.s32 %s18, 1
      %s24 = ssub.s32 %s18, 2
      %s25 = sadd.s32 %s18, 1
      %s26 = ssub.s32 %s18, %s25
      %p27 = scmp.eq.s32.totalorder %s26, 0
      %s29 = sadd.s32 %s28, 1
      %s30 = scalar_select %p27, %s28, %s29
      %p33 = pneg %p27
      %p34 = scmp.eq.s32.totalorder %s18, 1
      %p35 = por %p33, %p34
      %p36 = scmp.ne.s32.totalorder %s28, %s31
      %p37 = scmp.eq.s32.totalorder %s18, 0
      %p38 = por %p36, %p37
      %p39 = scmp.ne.s32.totalorder %s28, %s31
      %p40 = scmp.eq.s32.totalorder %s23, 1
      %p41 = por %p39, %p40
      %p42 = scmp.ne.s32.totalorder %s31, %s32
      %p43 = scmp.eq.s32.totalorder %s23, 0
      %p44 = por %p42, %p43
      %p45 = scmp.ne.s32.totalorder %s31, %s32
      %p46 = scmp.eq.s32.totalorder %s24, 1
      %p47 = por %p45, %p46
      %p49 = scmp.ne.s32.totalorder %s32, %s48
      %p50 = scmp.eq.s32.totalorder %s24, 0
      %p51 = por %p49, %p50
      %s53 = sadd.s32 %s52, 1
      %p56 = scmp.eq.s32.totalorder %s18, 1
      %p57 = scmp.ne.s32.totalorder %s52, %s54
      %p58 = scmp.eq.s32.totalorder %s18, 0
      %p59 = por %p57, %p58
      %p60 = scmp.ne.s32.totalorder %s52, %s54
      %p61 = scmp.eq.s32.totalorder %s23, 1
      %p62 = por %p60, %p61
      %p63 = scmp.ne.s32.totalorder %s54, %s55
      %p64 = scmp.eq.s32.totalorder %s23, 0
      %p65 = por %p63, %p64
      %p66 = scmp.ne.s32.totalorder %s54, %s55
      %p67 = scmp.eq.s32.totalorder %s24, 1
      %p68 = por %p66, %p67
      %p70 = scmp.ne.s32.totalorder %s55, %s69
      %p71 = scmp.eq.s32.totalorder %s24, 0
      %p72 = por %p70, %p71
      %s74 = sadd.s32 %s73, 1
      %p77 = scmp.eq.s32.totalorder %s18, 1
      %p78 = scmp.ne.s32.totalorder %s73, %s75
      %p79 = scmp.eq.s32.totalorder %s18, 0
      %p80 = por %p78, %p79
      %p81 = scmp.ne.s32.totalorder %s73, %s75
      %p82 = scmp.eq.s32.totalorder %s23, 1
      %p83 = por %p81, %p82
      %p84 = scmp.ne.s32.totalorder %s75, %s76
      %p85 = scmp.eq.s32.totalorder %s23, 0
      %p86 = por %p84, %p85
      %p87 = scmp.ne.s32.totalorder %s75, %s76
      %p88 = scmp.eq.s32.totalorder %s24, 1
      %p89 = por %p87, %p88
      %p91 = scmp.ne.s32.totalorder %s76, %s90
      %p92 = scmp.eq.s32.totalorder %s24, 0
      %p93 = por %p91, %p92
      %s95 = sadd.s32 %s94, 1
      %p98 = scmp.eq.s32.totalorder %s18, 1
      %p99 = scmp.ne.s32.totalorder %s94, %s96
      %p100 = scmp.eq.s32.totalorder %s18, 0
      %p101 = por %p99, %p100
      %p102 = scmp.ne.s32.totalorder %s94, %s96
      %p103 = scmp.eq.s32.totalorder %s23, 1
      %p104 = por %p102, %p103
      %p105 = scmp.ne.s32.totalorder %s96, %s97
      %p106 = scmp.eq.s32.totalorder %s23, 0
      %p107 = por %p105, %p106
      %p108 = scmp.ne.s32.totalorder %s96, %s97
      %p109 = scmp.eq.s32.totalorder %s24, 1
      %p110 = por %p108, %p109
      %p112 = scmp.ne.s32.totalorder %s97, %s111
      %p113 = scmp.eq.s32.totalorder %s24, 0
      %p114 = por %p112, %p113
      %s116 = sadd.s32 %s115, 1
      %p119 = scmp.eq.s32.totalorder %s18, 1
      %p120 = scmp.ne.s32.totalorder %s115, %s117
      %p121 = scmp.eq.s32.totalorder %s18, 0
      %p122 = por %p120, %p121
      %p123 = scmp.ne.s32.totalorder %s115, %s117
      %p124 = scmp.eq.s32.totalorder %s23, 1
      %p125 = por %p123, %p124
      %p126 = scmp.ne.s32.totalorder %s117, %s118
      %p127 = scmp.eq.s32.totalorder %s23, 0
      %p128 = por %p126, %p127
      %p129 = scmp.ne.s32.totalorder %s117, %s118
      %p130 = scmp.eq.s32.totalorder %s24, 1
      %p131 = por %p129, %p130
      %p133 = scmp.ne.s32.totalorder %s118, %s132
      %p134 = scmp.eq.s32.totalorder %s24, 0
      %p135 = por %p133, %p134
      %s137 = sadd.s32 %s136, 1
      %p140 = scmp.eq.s32.totalorder %s18, 1
      %p141 = scmp.ne.s32.totalorder %s136, %s138
      %p142 = scmp.eq.s32.totalorder %s18, 0
      %p143 = por %p141, %p142
      %p144 = scmp.ne.s32.totalorder %s136, %s138
      %p145 = scmp.eq.s32.totalorder %s23, 1
      %p146 = por %p144, %p145
      %p147 = scmp.ne.s32.totalorder %s138, %s139
      %p148 = scmp.eq.s32.totalorder %s23, 0
      %p149 = por %p147, %p148
      %p150 = scmp.ne.s32.totalorder %s138, %s139
      %p151 = scmp.eq.s32.totalorder %s24, 1
      %p152 = por %p150, %p151
      %p154 = scmp.ne.s32.totalorder %s139, %s153
      %p155 = scmp.eq.s32.totalorder %s24, 0
      %p156 = por %p154, %p155
      %s158 = sadd.s32 %s157, 1
      %p161 = scmp.eq.s32.totalorder %s18, 1
      %p162 = scmp.ne.s32.totalorder %s157, %s159
      %p163 = scmp.eq.s32.totalorder %s18, 0
      %p164 = por %p162, %p163
      %p165 = scmp.ne.s32.totalorder %s157, %s159
      %p166 = scmp.eq.s32.totalorder %s23, 1
      %p167 = por %p165, %p166
      %p168 = scmp.ne.s32.totalorder %s159, %s160
      %p169 = scmp.eq.s32.totalorder %s23, 0
      %p170 = por %p168, %p169
      %p171 = scmp.ne.s32.totalorder %s159, %s160
      %p172 = scmp.eq.s32.totalorder %s24, 1
      %p173 = por %p171, %p172
      %p175 = scmp.ne.s32.totalorder %s160, %s174
      %p176 = scmp.eq.s32.totalorder %s24, 0
      %p177 = por %p175, %p176
      %s179 = sadd.s32 %s178, 1
      %p182 = scmp.eq.s32.totalorder %s18, 1
      %p183 = scmp.ne.s32.totalorder %s178, %s180
      %p184 = scmp.eq.s32.totalorder %s18, 0
      %p185 = por %p183, %p184
      %p186 = scmp.ne.s32.totalorder %s178, %s180
      %p187 = scmp.eq.s32.totalorder %s23, 1
      %p188 = por %p186, %p187
      %p189 = scmp.ne.s32.totalorder %s180, %s181
      %p190 = scmp.eq.s32.totalorder %s23, 0
      %p191 = por %p189, %p190
      %p192 = scmp.ne.s32.totalorder %s180, %s181
      %p193 = scmp.eq.s32.totalorder %s24, 1
      %p194 = por %p192, %p193
      %p196 = scmp.ne.s32.totalorder %s181, %s195
      %p197 = scmp.eq.s32.totalorder %s24, 0
      %p198 = por %p196, %p197
      %s200 = sadd.s32 %s199, 1
      %p203 = scmp.eq.s32.totalorder %s18, 1
      %p204 = scmp.ne.s32.totalorder %s199, %s201
      %p205 = scmp.eq.s32.totalorder %s18, 0
      %p206 = por %p204, %p205
      %p207 = scmp.ne.s32.totalorder %s199, %s201
      %p208 = scmp.eq.s32.totalorder %s23, 1
      %p209 = por %p207, %p208
      %p210 = scmp.ne.s32.totalorder %s201, %s202
      %p211 = scmp.eq.s32.totalorder %s23, 0
      %p212 = por %p210, %p211
      %p213 = scmp.ne.s32.totalorder %s201, %s202
      %p214 = scmp.eq.s32.totalorder %s24, 1
      %p215 = por %p213, %p214
      %p217 = scmp.ne.s32.totalorder %s202, %s216
      %p218 = scmp.eq.s32.totalorder %s24, 0
      %p219 = por %p217, %p218
      %s220 = ssub.s32 %s18, %s25
      %p221 = scmp.eq.s32.totalorder %s220, 0
      %s223 = sadd.s32 %s222, 1
      %s224 = scalar_select %p221, %s222, %s223
      %p227 = pneg %p221
      %p228 = scmp.eq.s32.totalorder %s18, 1
      %p229 = por %p227, %p228
      %p230 = scmp.ne.s32.totalorder %s222, %s225
      %p231 = scmp.eq.s32.totalorder %s18, 0
      %p232 = por %p230, %p231
      %p233 = scmp.ne.s32.totalorder %s222, %s225
      %p234 = scmp.eq.s32.totalorder %s23, 1
      %p235 = por %p233, %p234
      %p236 = scmp.ne.s32.totalorder %s225, %s226
      %p237 = scmp.eq.s32.totalorder %s23, 0
      %p238 = por %p236, %p237
      %p239 = scmp.ne.s32.totalorder %s225, %s226
      %p240 = scmp.eq.s32.totalorder %s24, 1
      %p241 = por %p239, %p240
      %p243 = scmp.ne.s32.totalorder %s226, %s242
      %p244 = scmp.eq.s32.totalorder %s24, 0
      %p245 = por %p243, %p244
      %p246 = scmp.le.s32.totalorder 1, %s18
      %p247 = scmp.lt.s32.totalorder %s18, 3
      %p248 = pnand %p246, %p247
      %p249 = pneg %p248
      // Predicated region
      $region9: #{tpu_custom_call.1} parent=5 // pred_check
        _
      $region10: #{tpu_custom_call.1} parent=5 // pred_check_branch
        %251 = sbr.rel (%p248) target = $region12
      $region11: #{tpu_custom_call.1} parent=5 // pred_region
        %s252 = ssub.s32 %s18, 1
        // Predicated region
        $region13: #{tpu_custom_call.1} parent=11 // pred_check
          %p253 = pneg %p65
        $region14: #{tpu_custom_call.1} parent=11 // pred_check_branch
          %255 = sbr.rel (%p253) target = $region16
        $region15: #{tpu_custom_call.1} parent=11 // pred_region
          _
        $region16: #{tpu_custom_call.1} parent=11 // pred_fallthru
          _
        // Predicated region
        $region17: #{tpu_custom_call.1} parent=11 // pred_check
          %p256 = pneg %p86
        $region18: #{tpu_custom_call.1} parent=11 // pred_check_branch
          %258 = sbr.rel (%p256) target = $region20
        $region19: #{tpu_custom_call.1} parent=11 // pred_region
          _
        $region20: #{tpu_custom_call.1} parent=11 // pred_fallthru
          _
        // Predicated region
        $region21: #{tpu_custom_call.1} parent=11 // pred_check
          %p259 = pneg %p107
        $region22: #{tpu_custom_call.1} parent=11 // pred_check_branch
          %261 = sbr.rel (%p259) target = $region24
        $region23: #{tpu_custom_call.1} parent=11 // pred_region
          _
        $region24: #{tpu_custom_call.1} parent=11 // pred_fallthru
          _
        // Predicated region
        $region25: #{tpu_custom_call.1} parent=11 // pred_check
          %p262 = pneg %p128
        $region26: #{tpu_custom_call.1} parent=11 // pred_check_branch
          %264 = sbr.rel (%p262) target = $region28
        $region27: #{tpu_custom_call.1} parent=11 // pred_region
          _
        $region28: #{tpu_custom_call.1} parent=11 // pred_fallthru
          _
        // Predicated region
        $region29: #{tpu_custom_call.1} parent=11 // pred_check
          %p265 = pneg %p149
        $region30: #{tpu_custom_call.1} parent=11 // pred_check_branch
          %267 = sbr.rel (%p265) target = $region32
        $region31: #{tpu_custom_call.1} parent=11 // pred_region
          _
        $region32: #{tpu_custom_call.1} parent=11 // pred_fallthru
          _
        // Predicated region
        $region33: #{tpu_custom_call.1} parent=11 // pred_check
          %p268 = pneg %p170
        $region34: #{tpu_custom_call.1} parent=11 // pred_check_branch
          %270 = sbr.rel (%p268) target = $region36
        $region35: #{tpu_custom_call.1} parent=11 // pred_region
          _
        $region36: #{tpu_custom_call.1} parent=11 // pred_fallthru
          _
        // Predicated region
        $region37: #{tpu_custom_call.1} parent=11 // pred_check
          %p271 = pneg %p191
        $region38: #{tpu_custom_call.1} parent=11 // pred_check_branch
          %273 = sbr.rel (%p271) target = $region40
        $region39: #{tpu_custom_call.1} parent=11 // pred_region
          _
        $region40: #{tpu_custom_call.1} parent=11 // pred_fallthru
          _
        // Predicated region
        $region41: #{tpu_custom_call.1} parent=11 // pred_check
          %p274 = pneg %p212
        $region42: #{tpu_custom_call.1} parent=11 // pred_check_branch
          %276 = sbr.rel (%p274) target = $region44
        $region43: #{tpu_custom_call.1} parent=11 // pred_region
          _
        $region44: #{tpu_custom_call.1} parent=11 // pred_fallthru
          _
      $region12: #{tpu_custom_call.1} parent=5 // pred_fallthru
        _
      %p277 = scmp.lt.s32.totalorder %s18, 2
      // Predicated region
      $region45: #{tpu_custom_call.1} parent=5 // pred_check
        %p278 = pneg %p277
      $region46: #{tpu_custom_call.1} parent=5 // pred_check_branch
        %280 = sbr.rel (%p278) target = $region48
      $region47: #{tpu_custom_call.1} parent=5 // pred_region
        // Predicated region
        $region49: #{tpu_custom_call.1} parent=47 // pred_check
          %p281 = pneg %p38
        $region50: #{tpu_custom_call.1} parent=47 // pred_check_branch
          %283 = sbr.rel (%p281) target = $region52
        $region51: #{tpu_custom_call.1} parent=47 // pred_region
          %p284 = scmp.lt.s32.totalorder %s18, 1
          %s285 = scalar_select %p284, %s18, 1
          %s286 = smul.addr %s285, 32
          %s287 = smul.addr %s286, 8
          %s288 = scalar_lea.vmem %s0, %s287
        $region52: #{tpu_custom_call.1} parent=47 // pred_fallthru
          _
      $region48: #{tpu_custom_call.1} parent=5 // pred_fallthru
        _
      %p289 = scmp.le.s32.totalorder 1, %s18
      %p290 = scmp.lt.s32.totalorder %s18, 3
      %p291 = pnand %p289, %p290
      %p292 = pneg %p291
      // Predicated region
      $region53: #{tpu_custom_call.1} parent=5 // pred_check
        _
      $region54: #{tpu_custom_call.1} parent=5 // pred_check_branch
        %294 = sbr.rel (%p291) target = $region56
      $region55: #{tpu_custom_call.1} parent=5 // pred_region
        %s295 = ssub.s32 %s18, 1
        %p296 = scmp.lt.s32.totalorder %s23, 1
        %s297 = scalar_select %p296, %s23, 1
        %s298 = smul.addr %s297, 32
        %s299 = smul.addr %s298, 8
        %s300 = scalar_lea.vmem %s0, %s299
        %p301 = pneg %p44
        %p302 = pneg %p41
        %p303 = pneg %p65
        %p304 = pneg %p62
        %p305 = pneg %p86
        %p306 = pneg %p83
        %p307 = pneg %p107
        %p308 = pneg %p104
        %p309 = pneg %p128
        %p310 = pneg %p125
        %p311 = pneg %p149
        %p312 = pneg %p146
        %p313 = pneg %p170
        %p314 = pneg %p167
        %p315 = pneg %p191
        %p316 = pneg %p188
        %p317 = pneg %p212
        %p318 = pneg %p209
        %p319 = pneg %p238
        %p320 = pneg %p235
        %s321 = sand.u32 %s225, 1
        %s322 = scalar_lea.sflag [#allocation9], %s321
        %s323 = sand.u32 %s225, 1
        %s324 = smul.addr %s323, 64
        %s325 = scalar_lea.vmem [#allocation8], %s324
        %p326 = scmp.lt.s32.totalorder %s23, 1
        %s327 = scalar_select %p326, %s23, 1
        %s328 = smul.addr %s327, 32
        %s329 = smul.addr %s328, 8
        %s330 = scalar_lea.vmem %s0, %s329
        %vm331 = vcmask 64512
        %332 = vst.msk [vmem:[#allocation2] sm:$0xff] %vm331, 0.0
        %333 = vst.msk [vmem:[#allocation2 + $0x8] sm:$0xff] %vm331, 0.0
        %vm334 = vcmask 60416
        %335 = vst.msk [vmem:[#allocation2 + $0x10] sm:$0xf] %vm334, 0.0
        %336 = vst.msk [vmem:[#allocation2 + $0x18] sm:$0xff] %vm331, 0.0
        %337 = vst.msk [vmem:[#allocation2 + $0x20] sm:$0xff] %vm331, 0.0
        %338 = vst.msk [vmem:[#allocation2 + $0x28] sm:$0xf] %vm334, 0.0
        %s339 = scalar_lea.vmem [#allocation2], 432
        %340 = vst.msk [vmem:[%s339] sm:$0xff] %vm331, 0.0
        %341 = vst.msk [vmem:[%s339 + $0x8] sm:$0xff] %vm331, 0.0
        %342 = vst.msk [vmem:[%s339 + $0x10] sm:$0xf] %vm334, 0.0
        %343 = vst.msk [vmem:[%s339 + $0x18] sm:$0xff] %vm331, 0.0
        %344 = vst.msk [vmem:[%s339 + $0x20] sm:$0xff] %vm331, 0.0
        %345 = vst.msk [vmem:[%s339 + $0x28] sm:$0xf] %vm334, 0.0
        %s346 = scalar_lea.vmem [#allocation2], 48
        %vm347 = vcmask 58368
        %348 = vst.msk [vmem:[%s346] sm:$0x3] %vm347, 0.0
        %349 = vst.msk [vmem:[%s346 + $0x18] sm:$0x3] %vm347, 0.0
        %350 = vst.msk [vmem:[%s346 + $0x30] sm:$0x3] %vm347, 0.0
        %351 = vst.msk [vmem:[%s346 + $0x48] sm:$0x3] %vm347, 0.0
        %352 = vst.msk [vmem:[%s346 + $0x60] sm:$0x3] %vm347, 0.0
        %353 = vst.msk [vmem:[%s346 + $0x78] sm:$0x3] %vm347, 0.0
        %354 = vst.msk [vmem:[%s346 + $0x90] sm:$0x3] %vm347, 0.0
        %355 = vst.msk [vmem:[%s346 + $0xa8] sm:$0x3] %vm347, 0.0
        %356 = vst.msk [vmem:[%s346 + $0xc0] sm:$0x3] %vm347, 0.0
        %357 = vst.msk [vmem:[%s346 + $0xd8] sm:$0x3] %vm347, 0.0
        %358 = vst.msk [vmem:[%s346 + $0xf0] sm:$0x3] %vm347, 0.0
        %359 = vst.msk [vmem:[%s346 + $0x108] sm:$0x3] %vm347, 0.0
        %360 = vst.msk [vmem:[%s346 + $0x120] sm:$0x3] %vm347, 0.0
        %361 = vst.msk [vmem:[%s346 + $0x138] sm:$0x3] %vm347, 0.0
        %362 = vst.msk [vmem:[%s346 + $0x150] sm:$0x3] %vm347, 0.0
        %363 = vst.msk [vmem:[%s346 + $0x168] sm:$0x3] %vm347, 0.0
        %364 = vst.msk [vmem:[%s346 + $0x12] sm:$0x3] %vm347, 0.0
        %365 = vst.msk [vmem:[%s346 + $0x2a] sm:$0x3] %vm347, 0.0
        %366 = vst.msk [vmem:[%s346 + $0x42] sm:$0x3] %vm347, 0.0
        %367 = vst.msk [vmem:[%s346 + $0x5a] sm:$0x3] %vm347, 0.0
        %368 = vst.msk [vmem:[%s346 + $0x72] sm:$0x3] %vm347, 0.0
        %369 = vst.msk [vmem:[%s346 + $0x8a] sm:$0x3] %vm347, 0.0
        %370 = vst.msk [vmem:[%s346 + $0xa2] sm:$0x3] %vm347, 0.0
        %371 = vst.msk [vmem:[%s346 + $0xba] sm:$0x3] %vm347, 0.0
        %372 = vst.msk [vmem:[%s346 + $0xd2] sm:$0x3] %vm347, 0.0
        %373 = vst.msk [vmem:[%s346 + $0xea] sm:$0x3] %vm347, 0.0
        %374 = vst.msk [vmem:[%s346 + $0x102] sm:$0x3] %vm347, 0.0
        %375 = vst.msk [vmem:[%s346 + $0x11a] sm:$0x3] %vm347, 0.0
        %376 = vst.msk [vmem:[%s346 + $0x132] sm:$0x3] %vm347, 0.0
        %377 = vst.msk [vmem:[%s346 + $0x14a] sm:$0x3] %vm347, 0.0
        %378 = vst.msk [vmem:[%s346 + $0x162] sm:$0x3] %vm347, 0.0
        %379 = vst.msk [vmem:[%s346 + $0x17a] sm:$0x3] %vm347, 0.0
        %380 = vst.msk [vmem:[#allocation3] sm:$0xff] %vm331, 0.0
        %381 = vst.msk [vmem:[#allocation3 + $0x8] sm:$0xff] %vm331, 0.0
        %382 = vst.msk [vmem:[#allocation3 + $0x10] sm:$0xff] %vm331, 0.0
        %383 = vst.msk [vmem:[#allocation3 + $0x18] sm:$0xff] %vm331, 0.0
        %384 = vst.msk [vmem:[#allocation3 + $0x20] sm:$0xff] %vm331, 0.0
        %385 = vst.msk [vmem:[#allocation3 + $0x28] sm:$0xff] %vm331, 0.0
        %386 = vst.msk [vmem:[#allocation3 + $0x30] sm:$0xff] %vm331, 0.0
        %387 = vst.msk [vmem:[#allocation3 + $0x38] sm:$0xff] %vm331, 0.0
        %388 = vst.msk [vmem:[#allocation3 + $0x40] sm:$0xff] %vm331, 0.0
        %389 = vst.msk [vmem:[#allocation3 + $0x48] sm:$0xff] %vm331, 0.0
        %390 = vst.msk [vmem:[#allocation3 + $0x50] sm:$0xff] %vm331, 0.0
        %391 = vst.msk [vmem:[#allocation3 + $0x58] sm:$0xff] %vm331, 0.0
        %s392 = scalar_lea.vmem [#allocation3], 480
        %393 = vst.msk [vmem:[%s392] sm:$0xff] %vm331, 0.0
        %394 = vst.msk [vmem:[%s392 + $0x8] sm:$0xff] %vm331, 0.0
        %395 = vst.msk [vmem:[%s392 + $0x10] sm:$0xff] %vm331, 0.0
        %396 = vst.msk [vmem:[%s392 + $0x18] sm:$0xff] %vm331, 0.0
        %397 = vst.msk [vmem:[%s392 + $0x20] sm:$0xff] %vm331, 0.0
        %398 = vst.msk [vmem:[%s392 + $0x28] sm:$0xff] %vm331, 0.0
        %399 = vst.msk [vmem:[%s392 + $0x30] sm:$0xff] %vm331, 0.0
        %400 = vst.msk [vmem:[%s392 + $0x38] sm:$0xff] %vm331, 0.0
        %401 = vst.msk [vmem:[%s392 + $0x40] sm:$0xff] %vm331, 0.0
        %402 = vst.msk [vmem:[%s392 + $0x48] sm:$0xff] %vm331, 0.0
        %403 = vst.msk [vmem:[%s392 + $0x50] sm:$0xff] %vm331, 0.0
        %404 = vst.msk [vmem:[%s392 + $0x58] sm:$0xff] %vm331, 0.0
        %s405 = scalar_lea.vmem [#allocation3], 96
        %406 = vst.msk [vmem:[%s405] sm:$0xf] %vm334, 0.0
        %407 = vst.msk [vmem:[%s405 + $0x18] sm:$0xf] %vm334, 0.0
        %408 = vst.msk [vmem:[%s405 + $0x30] sm:$0xf] %vm334, 0.0
        %409 = vst.msk [vmem:[%s405 + $0x48] sm:$0xf] %vm334, 0.0
        %410 = vst.msk [vmem:[%s405 + $0x60] sm:$0xf] %vm334, 0.0
        %411 = vst.msk [vmem:[%s405 + $0x78] sm:$0xf] %vm334, 0.0
        %412 = vst.msk [vmem:[%s405 + $0x90] sm:$0xf] %vm334, 0.0
        %413 = vst.msk [vmem:[%s405 + $0xa8] sm:$0xf] %vm334, 0.0
        %414 = vst.msk [vmem:[%s405 + $0xc0] sm:$0xf] %vm334, 0.0
        %415 = vst.msk [vmem:[%s405 + $0xd8] sm:$0xf] %vm334, 0.0
        %416 = vst.msk [vmem:[%s405 + $0xf0] sm:$0xf] %vm334, 0.0
        %417 = vst.msk [vmem:[%s405 + $0x108] sm:$0xf] %vm334, 0.0
        %418 = vst.msk [vmem:[%s405 + $0x120] sm:$0xf] %vm334, 0.0
        %419 = vst.msk [vmem:[%s405 + $0x138] sm:$0xf] %vm334, 0.0
        %420 = vst.msk [vmem:[%s405 + $0x150] sm:$0xf] %vm334, 0.0
        %421 = vst.msk [vmem:[%s405 + $0x168] sm:$0xf] %vm334, 0.0
        %422 = vst.msk [vmem:[%s405 + $0x14] sm:$0xf] %vm334, 0.0
        %423 = vst.msk [vmem:[%s405 + $0x2c] sm:$0xf] %vm334, 0.0
        %424 = vst.msk [vmem:[%s405 + $0x44] sm:$0xf] %vm334, 0.0
        %425 = vst.msk [vmem:[%s405 + $0x5c] sm:$0xf] %vm334, 0.0
        %426 = vst.msk [vmem:[%s405 + $0x74] sm:$0xf] %vm334, 0.0
        %427 = vst.msk [vmem:[%s405 + $0x8c] sm:$0xf] %vm334, 0.0
        %428 = vst.msk [vmem:[%s405 + $0xa4] sm:$0xf] %vm334, 0.0
        %429 = vst.msk [vmem:[%s405 + $0xbc] sm:$0xf] %vm334, 0.0
        %430 = vst.msk [vmem:[%s405 + $0xd4] sm:$0xf] %vm334, 0.0
        %431 = vst.msk [vmem:[%s405 + $0xec] sm:$0xf] %vm334, 0.0
        %432 = vst.msk [vmem:[%s405 + $0x104] sm:$0xf] %vm334, 0.0
        %433 = vst.msk [vmem:[%s405 + $0x11c] sm:$0xf] %vm334, 0.0
        %434 = vst.msk [vmem:[%s405 + $0x134] sm:$0xf] %vm334, 0.0
        %435 = vst.msk [vmem:[%s405 + $0x14c] sm:$0xf] %vm334, 0.0
        %436 = vst.msk [vmem:[%s405 + $0x164] sm:$0xf] %vm334, 0.0
        %437 = vst.msk [vmem:[%s405 + $0x17c] sm:$0xf] %vm334, 0.0
        %438 = vst.msk [vmem:[#allocation4] sm:$0xff] %vm331, 0.0
        %439 = vst.msk [vmem:[#allocation4 + $0x8] sm:$0xff] %vm331, 0.0
        %440 = vst.msk [vmem:[#allocation4 + $0x10] sm:$0xff] %vm331, 0.0
        %441 = vst.msk [vmem:[#allocation4 + $0x18] sm:$0xf] %vm334, 0.0
        %442 = vst.msk [vmem:[#allocation4 + $0x20] sm:$0xff] %vm331, 0.0
        %443 = vst.msk [vmem:[#allocation4 + $0x28] sm:$0xff] %vm331, 0.0
        %444 = vst.msk [vmem:[#allocation4 + $0x30] sm:$0xff] %vm331, 0.0
        %445 = vst.msk [vmem:[#allocation4 + $0x38] sm:$0xf] %vm334, 0.0
        %446 = vst.msk [vmem:[#allocation4 + $0x40] sm:$0xff] %vm331, 0.0
        %447 = vst.msk [vmem:[#allocation4 + $0x48] sm:$0xff] %vm331, 0.0
        %448 = vst.msk [vmem:[#allocation4 + $0x50] sm:$0xff] %vm331, 0.0
        %449 = vst.msk [vmem:[#allocation4 + $0x58] sm:$0xf] %vm334, 0.0
        %450 = vst.msk [vmem:[#allocation4 + $0x60] sm:$0xff] %vm331, 0.0
        %451 = vst.msk [vmem:[#allocation4 + $0x68] sm:$0xff] %vm331, 0.0
        %452 = vst.msk [vmem:[#allocation4 + $0x70] sm:$0xff] %vm331, 0.0
        %453 = vst.msk [vmem:[#allocation4 + $0x78] sm:$0xf] %vm334, 0.0
        %454 = vst.msk [vmem:[#allocation4 + $0x80] sm:$0xff] %vm331, 0.0
        %455 = vst.msk [vmem:[#allocation4 + $0x88] sm:$0xff] %vm331, 0.0
        %456 = vst.msk [vmem:[#allocation4 + $0x90] sm:$0xff] %vm331, 0.0
        %457 = vst.msk [vmem:[#allocation4 + $0x98] sm:$0xf] %vm334, 0.0
        %458 = vst.msk [vmem:[#allocation4 + $0xa0] sm:$0xff] %vm331, 0.0
        %459 = vst.msk [vmem:[#allocation4 + $0xa8] sm:$0xff] %vm331, 0.0
        %460 = vst.msk [vmem:[#allocation4 + $0xb0] sm:$0xff] %vm331, 0.0
        %461 = vst.msk [vmem:[#allocation4 + $0xb8] sm:$0xf] %vm334, 0.0
        %s462 = scalar_lea.vmem [#allocation4], 704
        %463 = vst.msk [vmem:[%s462] sm:$0xff] %vm331, 0.0
        %464 = vst.msk [vmem:[%s462 + $0x8] sm:$0xff] %vm331, 0.0
        %465 = vst.msk [vmem:[%s462 + $0x10] sm:$0xff] %vm331, 0.0
        %466 = vst.msk [vmem:[%s462 + $0x18] sm:$0xf] %vm334, 0.0
        %467 = vst.msk [vmem:[%s462 + $0x20] sm:$0xff] %vm331, 0.0
        %468 = vst.msk [vmem:[%s462 + $0x28] sm:$0xff] %vm331, 0.0
        %469 = vst.msk [vmem:[%s462 + $0x30] sm:$0xff] %vm331, 0.0
        %470 = vst.msk [vmem:[%s462 + $0x38] sm:$0xf] %vm334, 0.0
        %471 = vst.msk [vmem:[%s462 + $0x40] sm:$0xff] %vm331, 0.0
        %472 = vst.msk [vmem:[%s462 + $0x48] sm:$0xff] %vm331, 0.0
        %473 = vst.msk [vmem:[%s462 + $0x50] sm:$0xff] %vm331, 0.0
        %474 = vst.msk [vmem:[%s462 + $0x58] sm:$0xf] %vm334, 0.0
        %475 = vst.msk [vmem:[%s462 + $0x60] sm:$0xff] %vm331, 0.0
        %476 = vst.msk [vmem:[%s462 + $0x68] sm:$0xff] %vm331, 0.0
        %477 = vst.msk [vmem:[%s462 + $0x70] sm:$0xff] %vm331, 0.0
        %478 = vst.msk [vmem:[%s462 + $0x78] sm:$0xf] %vm334, 0.0
        %479 = vst.msk [vmem:[%s462 + $0x80] sm:$0xff] %vm331, 0.0
        %480 = vst.msk [vmem:[%s462 + $0x88] sm:$0xff] %vm331, 0.0
        %481 = vst.msk [vmem:[%s462 + $0x90] sm:$0xff] %vm331, 0.0
        %482 = vst.msk [vmem:[%s462 + $0x98] sm:$0xf] %vm334, 0.0
        %483 = vst.msk [vmem:[%s462 + $0xa0] sm:$0xff] %vm331, 0.0
        %484 = vst.msk [vmem:[%s462 + $0xa8] sm:$0xff] %vm331, 0.0
        %485 = vst.msk [vmem:[%s462 + $0xb0] sm:$0xff] %vm331, 0.0
        %486 = vst.msk [vmem:[%s462 + $0xb8] sm:$0xf] %vm334, 0.0
        %s487 = scalar_lea.vmem [#allocation4], 192
        %vm488 = vcmask 62464
        %489 = vst.msk [vmem:[%s487] sm:$0x3f] %vm488, 0.0
        %490 = vst.msk [vmem:[%s487 + $0x20] sm:$0x3f] %vm488, 0.0
        %491 = vst.msk [vmem:[%s487 + $0x40] sm:$0x3f] %vm488, 0.0
        %492 = vst.msk [vmem:[%s487 + $0x60] sm:$0x3f] %vm488, 0.0
        %493 = vst.msk [vmem:[%s487 + $0x80] sm:$0x3f] %vm488, 0.0
        %494 = vst.msk [vmem:[%s487 + $0xa0] sm:$0x3f] %vm488, 0.0
        %495 = vst.msk [vmem:[%s487 + $0xc0] sm:$0x3f] %vm488, 0.0
        %496 = vst.msk [vmem:[%s487 + $0xe0] sm:$0x3f] %vm488, 0.0
        %497 = vst.msk [vmem:[%s487 + $0x100] sm:$0x3f] %vm488, 0.0
        %498 = vst.msk [vmem:[%s487 + $0x120] sm:$0x3f] %vm488, 0.0
        %499 = vst.msk [vmem:[%s487 + $0x140] sm:$0x3f] %vm488, 0.0
        %500 = vst.msk [vmem:[%s487 + $0x160] sm:$0x3f] %vm488, 0.0
        %501 = vst.msk [vmem:[%s487 + $0x180] sm:$0x3f] %vm488, 0.0
        %502 = vst.msk [vmem:[%s487 + $0x1a0] sm:$0x3f] %vm488, 0.0
        %503 = vst.msk [vmem:[%s487 + $0x1c0] sm:$0x3f] %vm488, 0.0
        %504 = vst.msk [vmem:[%s487 + $0x1e0] sm:$0x3f] %vm488, 0.0
        %505 = vst.msk [vmem:[%s487 + $0x16] sm:$0x3f] %vm488, 0.0
        %506 = vst.msk [vmem:[%s487 + $0x36] sm:$0x3f] %vm488, 0.0
        %507 = vst.msk [vmem:[%s487 + $0x56] sm:$0x3f] %vm488, 0.0
        %508 = vst.msk [vmem:[%s487 + $0x76] sm:$0x3f] %vm488, 0.0
        %509 = vst.msk [vmem:[%s487 + $0x96] sm:$0x3f] %vm488, 0.0
        %510 = vst.msk [vmem:[%s487 + $0xb6] sm:$0x3f] %vm488, 0.0
        %511 = vst.msk [vmem:[%s487 + $0xd6] sm:$0x3f] %vm488, 0.0
        %512 = vst.msk [vmem:[%s487 + $0xf6] sm:$0x3f] %vm488, 0.0
        %513 = vst.msk [vmem:[%s487 + $0x116] sm:$0x3f] %vm488, 0.0
        %514 = vst.msk [vmem:[%s487 + $0x136] sm:$0x3f] %vm488, 0.0
        %515 = vst.msk [vmem:[%s487 + $0x156] sm:$0x3f] %vm488, 0.0
        %516 = vst.msk [vmem:[%s487 + $0x176] sm:$0x3f] %vm488, 0.0
        %517 = vst.msk [vmem:[%s487 + $0x196] sm:$0x3f] %vm488, 0.0
        %518 = vst.msk [vmem:[%s487 + $0x1b6] sm:$0x3f] %vm488, 0.0
        %519 = vst.msk [vmem:[%s487 + $0x1d6] sm:$0x3f] %vm488, 0.0
        %520 = vst.msk [vmem:[%s487 + $0x1f6] sm:$0x3f] %vm488, 0.0
        %521 = vst.msk [vmem:[#allocation5] sm:$0xff] %vm331, 0.0
        %522 = vst.msk [vmem:[#allocation5 + $0x8] sm:$0xff] %vm331, 0.0
        %523 = vst.msk [vmem:[#allocation5 + $0x10] sm:$0x3] %vm347, 0.0
        %s524 = scalar_lea.vmem [#allocation5], 408
        %525 = vst.msk [vmem:[%s524] sm:$0xff] %vm331, 0.0
        %526 = vst.msk [vmem:[%s524 + $0x8] sm:$0xff] %vm331, 0.0
        %527 = vst.msk [vmem:[%s524 + $0x10] sm:$0x3] %vm347, 0.0
        %s528 = scalar_lea.vmem [#allocation5], 24
        %vm529 = vcmask 57344
        %530 = vst.msk [vmem:[%s528] sm:$0x1] %vm529, 0.0
        %531 = vst.msk [vmem:[%s528 + $0x18] sm:$0x1] %vm529, 0.0
        %532 = vst.msk [vmem:[%s528 + $0x30] sm:$0x1] %vm529, 0.0
        %533 = vst.msk [vmem:[%s528 + $0x48] sm:$0x1] %vm529, 0.0
        %534 = vst.msk [vmem:[%s528 + $0x60] sm:$0x1] %vm529, 0.0
        %535 = vst.msk [vmem:[%s528 + $0x78] sm:$0x1] %vm529, 0.0
        %536 = vst.msk [vmem:[%s528 + $0x90] sm:$0x1] %vm529, 0.0
        %537 = vst.msk [vmem:[%s528 + $0xa8] sm:$0x1] %vm529, 0.0
        %538 = vst.msk [vmem:[%s528 + $0xc0] sm:$0x1] %vm529, 0.0
        %539 = vst.msk [vmem:[%s528 + $0xd8] sm:$0x1] %vm529, 0.0
        %540 = vst.msk [vmem:[%s528 + $0xf0] sm:$0x1] %vm529, 0.0
        %541 = vst.msk [vmem:[%s528 + $0x108] sm:$0x1] %vm529, 0.0
        %542 = vst.msk [vmem:[%s528 + $0x120] sm:$0x1] %vm529, 0.0
        %543 = vst.msk [vmem:[%s528 + $0x138] sm:$0x1] %vm529, 0.0
        %544 = vst.msk [vmem:[%s528 + $0x150] sm:$0x1] %vm529, 0.0
        %545 = vst.msk [vmem:[%s528 + $0x168] sm:$0x1] %vm529, 0.0
        %546 = vst.msk [vmem:[%s528 + $0x11] sm:$0x1] %vm529, 0.0
        %547 = vst.msk [vmem:[%s528 + $0x29] sm:$0x1] %vm529, 0.0
        %548 = vst.msk [vmem:[%s528 + $0x41] sm:$0x1] %vm529, 0.0
        %549 = vst.msk [vmem:[%s528 + $0x59] sm:$0x1] %vm529, 0.0
        %550 = vst.msk [vmem:[%s528 + $0x71] sm:$0x1] %vm529, 0.0
        %551 = vst.msk [vmem:[%s528 + $0x89] sm:$0x1] %vm529, 0.0
        %552 = vst.msk [vmem:[%s528 + $0xa1] sm:$0x1] %vm529, 0.0
        %553 = vst.msk [vmem:[%s528 + $0xb9] sm:$0x1] %vm529, 0.0
        %554 = vst.msk [vmem:[%s528 + $0xd1] sm:$0x1] %vm529, 0.0
        %555 = vst.msk [vmem:[%s528 + $0xe9] sm:$0x1] %vm529, 0.0
        %556 = vst.msk [vmem:[%s528 + $0x101] sm:$0x1] %vm529, 0.0
        %557 = vst.msk [vmem:[%s528 + $0x119] sm:$0x1] %vm529, 0.0
        %558 = vst.msk [vmem:[%s528 + $0x131] sm:$0x1] %vm529, 0.0
        %559 = vst.msk [vmem:[%s528 + $0x149] sm:$0x1] %vm529, 0.0
        %560 = vst.msk [vmem:[%s528 + $0x161] sm:$0x1] %vm529, 0.0
        %561 = vst.msk [vmem:[%s528 + $0x179] sm:$0x1] %vm529, 0.0
        %v562 = vld [vmem:[%s1] sm:$0x1]
        %v563 = vld [vmem:[%s2] sm:$0x1]
        %v564 = vld [vmem:[%s330] sm:$0xff]
        %v565 = vld [vmem:[%s330 + $0x8] sm:$0xff]
        %v566 = vld [vmem:[%s330 + $0x10] sm:$0xff]
        %v567 = vld [vmem:[%s330 + $0x18] sm:$0xff]
        %v568 = vld [vmem:[%s330 + $0x20] sm:$0xff]
        %v569 = vld [vmem:[%s330 + $0x28] sm:$0xff]
        %v570 = vld [vmem:[%s330 + $0x30] sm:$0xff]
        %v571 = vld [vmem:[%s330 + $0x38] sm:$0xff]
        %v572 = vld [vmem:[%s330 + $0x40] sm:$0xff]
        %v573 = vld [vmem:[%s330 + $0x48] sm:$0xff]
        %v574 = vld [vmem:[%s330 + $0x50] sm:$0xff]
        %v575 = vld [vmem:[%s330 + $0x58] sm:$0xff]
        %v576 = vld [vmem:[%s330 + $0x60] sm:$0xff]
        %v577 = vld [vmem:[%s330 + $0x68] sm:$0xff]
        %v578 = vld [vmem:[%s330 + $0x70] sm:$0xff]
        %v579 = vld [vmem:[%s330 + $0x78] sm:$0xff]
        %v580 = vld [vmem:[%s330 + $0x80] sm:$0xff]
        %v581 = vld [vmem:[%s330 + $0x88] sm:$0xff]
        %v582 = vld [vmem:[%s330 + $0x90] sm:$0xff]
        %v583 = vld [vmem:[%s330 + $0x98] sm:$0xff]
        %v584 = vld [vmem:[%s330 + $0xa0] sm:$0xff]
        %v585 = vld [vmem:[%s330 + $0xa8] sm:$0xff]
        %v586 = vld [vmem:[%s330 + $0xb0] sm:$0xff]
        %v587 = vld [vmem:[%s330 + $0xb8] sm:$0xff]
        %v588 = vld [vmem:[%s330 + $0xc0] sm:$0xff]
        %v589 = vld [vmem:[%s330 + $0xc8] sm:$0xff]
        %v590 = vld [vmem:[%s330 + $0xd0] sm:$0xff]
        %v591 = vld [vmem:[%s330 + $0xd8] sm:$0xff]
        %v592 = vld [vmem:[%s330 + $0xe0] sm:$0xff]
        %v593 = vld [vmem:[%s330 + $0xe8] sm:$0xff]
        %v594 = vld [vmem:[%s330 + $0xf0] sm:$0xff]
        %v595 = vld [vmem:[%s330 + $0xf8] sm:$0xff]
        %v596 = vlaneseq
        %v597 = vshrl.u32 %v596, 7
        %v598 = vsub.s32 0, %v597
        %v599 = vrot.slane %v562, %v598
        %v600 = vmul.f32 %v564, %v599
        %v601 = vmul.f32 %v565, %v599
        %v602 = vmul.f32 %v566, %v599
        %v603 = vmul.f32 %v567, %v599
        %v604 = vmul.f32 %v568, %v599
        %v605 = vmul.f32 %v569, %v599
        %v606 = vmul.f32 %v570, %v599
        %v607 = vmul.f32 %v571, %v599
        %v608 = vmul.f32 %v572, %v599
        %v609 = vmul.f32 %v573, %v599
        %v610 = vmul.f32 %v574, %v599
        %v611 = vmul.f32 %v575, %v599
        %v612 = vmul.f32 %v576, %v599
        %v613 = vmul.f32 %v577, %v599
        %v614 = vmul.f32 %v578, %v599
        %v615 = vmul.f32 %v579, %v599
        %v616 = vmul.f32 %v580, %v599
        %v617 = vmul.f32 %v581, %v599
        %v618 = vmul.f32 %v582, %v599
        %v619 = vmul.f32 %v583, %v599
        %v620 = vmul.f32 %v584, %v599
        %v621 = vmul.f32 %v585, %v599
        %v622 = vmul.f32 %v586, %v599
        %v623 = vmul.f32 %v587, %v599
        %v624 = vmul.f32 %v588, %v599
        %v625 = vmul.f32 %v589, %v599
        %v626 = vmul.f32 %v590, %v599
        %v627 = vmul.f32 %v591, %v599
        %v628 = vmul.f32 %v592, %v599
        %v629 = vmul.f32 %v593, %v599
        %v630 = vmul.f32 %v594, %v599
        %v631 = vmul.f32 %v595, %v599
        %v632 = vlaneseq
        %v633 = vshrl.u32 %v632, 7
        %v634 = vsub.s32 0, %v633
        %v635 = vrot.slane %v563, %v634
        %v636 = vadd.f32 %v600, %v635
        %v637 = vadd.f32 %v601, %v635
        %v638 = vadd.f32 %v602, %v635
        %v639 = vadd.f32 %v603, %v635
        %v640 = vadd.f32 %v604, %v635
        %v641 = vadd.f32 %v605, %v635
        %v642 = vadd.f32 %v606, %v635
        %v643 = vadd.f32 %v607, %v635
        %v644 = vadd.f32 %v608, %v635
        %v645 = vadd.f32 %v609, %v635
        %v646 = vadd.f32 %v610, %v635
        %v647 = vadd.f32 %v611, %v635
        %v648 = vadd.f32 %v612, %v635
        %v649 = vadd.f32 %v613, %v635
        %v650 = vadd.f32 %v614, %v635
        %v651 = vadd.f32 %v615, %v635
        %v652 = vadd.f32 %v616, %v635
        %v653 = vadd.f32 %v617, %v635
        %v654 = vadd.f32 %v618, %v635
        %v655 = vadd.f32 %v619, %v635
        %v656 = vadd.f32 %v620, %v635
        %v657 = vadd.f32 %v621, %v635
        %v658 = vadd.f32 %v622, %v635
        %v659 = vadd.f32 %v623, %v635
        %v660 = vadd.f32 %v624, %v635
        %v661 = vadd.f32 %v625, %v635
        %v662 = vadd.f32 %v626, %v635
        %v663 = vadd.f32 %v627, %v635
        %v664 = vadd.f32 %v628, %v635
        %v665 = vadd.f32 %v629, %v635
        %v666 = vadd.f32 %v630, %v635
        %v667 = vadd.f32 %v631, %v635
        %v668 = vmax.f32 %v636, 0.0
        %v669 = vmax.f32 %v637, 0.0
        %v670 = vmax.f32 %v638, 0.0
        %v671 = vmax.f32 %v639, 0.0
        %v672 = vmax.f32 %v640, 0.0
        %v673 = vmax.f32 %v641, 0.0
        %v674 = vmax.f32 %v642, 0.0
        %v675 = vmax.f32 %v643, 0.0
        %v676 = vmax.f32 %v644, 0.0
        %v677 = vmax.f32 %v645, 0.0
        %v678 = vmax.f32 %v646, 0.0
        %v679 = vmax.f32 %v647, 0.0
        %v680 = vmax.f32 %v648, 0.0
        %v681 = vmax.f32 %v649, 0.0
        %v682 = vmax.f32 %v650, 0.0
        %v683 = vmax.f32 %v651, 0.0
        %v684 = vmax.f32 %v652, 0.0
        %v685 = vmax.f32 %v653, 0.0
        %v686 = vmax.f32 %v654, 0.0
        %v687 = vmax.f32 %v655, 0.0
        %v688 = vmax.f32 %v656, 0.0
        %v689 = vmax.f32 %v657, 0.0
        %v690 = vmax.f32 %v658, 0.0
        %v691 = vmax.f32 %v659, 0.0
        %v692 = vmax.f32 %v660, 0.0
        %v693 = vmax.f32 %v661, 0.0
        %v694 = vmax.f32 %v662, 0.0
        %v695 = vmax.f32 %v663, 0.0
        %v696 = vmax.f32 %v664, 0.0
        %v697 = vmax.f32 %v665, 0.0
        %v698 = vmax.f32 %v666, 0.0
        %v699 = vmax.f32 %v667, 0.0
        %700 = vst.msk [vmem:[%s346 + $0x2] sm:$0xff] %vm331, %v668
        %701 = vst.msk [vmem:[%s346 + $0xa] sm:$0xff] %vm331, %v669
        %702 = vst.msk [vmem:[%s346 + $0x1a] sm:$0xff] %vm331, %v670
        %703 = vst.msk [vmem:[%s346 + $0x22] sm:$0xff] %vm331, %v671
        %704 = vst.msk [vmem:[%s346 + $0x32] sm:$0xff] %vm331, %v672
        %705 = vst.msk [vmem:[%s346 + $0x3a] sm:$0xff] %vm331, %v673
        %706 = vst.msk [vmem:[%s346 + $0x4a] sm:$0xff] %vm331, %v674
        %707 = vst.msk [vmem:[%s346 + $0x52] sm:$0xff] %vm331, %v675
        %708 = vst.msk [vmem:[%s346 + $0x62] sm:$0xff] %vm331, %v676
        %709 = vst.msk [vmem:[%s346 + $0x6a] sm:$0xff] %vm331, %v677
        %710 = vst.msk [vmem:[%s346 + $0x7a] sm:$0xff] %vm331, %v678
        %711 = vst.msk [vmem:[%s346 + $0x82] sm:$0xff] %vm331, %v679
        %712 = vst.msk [vmem:[%s346 + $0x92] sm:$0xff] %vm331, %v680
        %713 = vst.msk [vmem:[%s346 + $0x9a] sm:$0xff] %vm331, %v681
        %714 = vst.msk [vmem:[%s346 + $0xaa] sm:$0xff] %vm331, %v682
        %715 = vst.msk [vmem:[%s346 + $0xb2] sm:$0xff] %vm331, %v683
        %716 = vst.msk [vmem:[%s346 + $0xc2] sm:$0xff] %vm331, %v684
        %717 = vst.msk [vmem:[%s346 + $0xca] sm:$0xff] %vm331, %v685
        %718 = vst.msk [vmem:[%s346 + $0xda] sm:$0xff] %vm331, %v686
        %719 = vst.msk [vmem:[%s346 + $0xe2] sm:$0xff] %vm331, %v687
        %720 = vst.msk [vmem:[%s346 + $0xf2] sm:$0xff] %vm331, %v688
        %721 = vst.msk [vmem:[%s346 + $0xfa] sm:$0xff] %vm331, %v689
        %722 = vst.msk [vmem:[%s346 + $0x10a] sm:$0xff] %vm331, %v690
        %723 = vst.msk [vmem:[%s346 + $0x112] sm:$0xff] %vm331, %v691
        %724 = vst.msk [vmem:[%s346 + $0x122] sm:$0xff] %vm331, %v692
        %725 = vst.msk [vmem:[%s346 + $0x12a] sm:$0xff] %vm331, %v693
        %726 = vst.msk [vmem:[%s346 + $0x13a] sm:$0xff] %vm331, %v694
        %727 = vst.msk [vmem:[%s346 + $0x142] sm:$0xff] %vm331, %v695
        %728 = vst.msk [vmem:[%s346 + $0x152] sm:$0xff] %vm331, %v696
        %729 = vst.msk [vmem:[%s346 + $0x15a] sm:$0xff] %vm331, %v697
        %730 = vst.msk [vmem:[%s346 + $0x16a] sm:$0xff] %vm331, %v698
        %731 = vst.msk [vmem:[%s346 + $0x172] sm:$0xff] %vm331, %v699
        %v732 = vld [vmem:[#allocation2] sm:$0xff]
        %v733 = vld [vmem:[#allocation2 + $0x8] sm:$0xff]
        %v734 = vld [vmem:[#allocation2 + $0x18] sm:$0xff]
        %v735 = vld [vmem:[#allocation2 + $0x20] sm:$0xff]
        %v736 = vld [vmem:[#allocation2 + $0x30] sm:$0xff]
        %v737 = vld [vmem:[#allocation2 + $0x38] sm:$0xff]
        %v738 = vld [vmem:[#allocation2 + $0x48] sm:$0xff]
        %v739 = vld [vmem:[#allocation2 + $0x50] sm:$0xff]
        %v740 = vld [vmem:[#allocation2 + $0x60] sm:$0xff]
        %v741 = vld [vmem:[#allocation2 + $0x68] sm:$0xff]
        %v742 = vld [vmem:[#allocation2 + $0x78] sm:$0xff]
        %v743 = vld [vmem:[#allocation2 + $0x80] sm:$0xff]
        %v744 = vld [vmem:[#allocation2 + $0x90] sm:$0xff]
        %v745 = vld [vmem:[#allocation2 + $0x98] sm:$0xff]
        %v746 = vld [vmem:[#allocation2 + $0xa8] sm:$0xff]
        %v747 = vld [vmem:[#allocation2 + $0xb0] sm:$0xff]
        %v748 = vld [vmem:[#allocation2 + $0xc0] sm:$0xff]
        %v749 = vld [vmem:[#allocation2 + $0xc8] sm:$0xff]
        %v750 = vld [vmem:[#allocation2 + $0xd8] sm:$0xff]
        %v751 = vld [vmem:[#allocation2 + $0xe0] sm:$0xff]
        %v752 = vld [vmem:[#allocation2 + $0xf0] sm:$0xff]
        %v753 = vld [vmem:[#allocation2 + $0xf8] sm:$0xff]
        %v754 = vld [vmem:[#allocation2 + $0x108] sm:$0xff]
        %v755 = vld [vmem:[#allocation2 + $0x110] sm:$0xff]
        %v756 = vld [vmem:[#allocation2 + $0x120] sm:$0xff]
        %v757 = vld [vmem:[#allocation2 + $0x128] sm:$0xff]
        %v758 = vld [vmem:[#allocation2 + $0x138] sm:$0xff]
        %v759 = vld [vmem:[#allocation2 + $0x140] sm:$0xff]
        %v760 = vld [vmem:[#allocation2 + $0x150] sm:$0xff]
        %v761 = vld [vmem:[#allocation2 + $0x158] sm:$0xff]
        %v762 = vld [vmem:[#allocation2 + $0x168] sm:$0xff]
        %v763 = vld [vmem:[#allocation2 + $0x170] sm:$0xff]
        %764 = vst.msk [vmem:[#allocation6] sm:$0xff] %vm331, %v732
        %765 = vst.msk [vmem:[#allocation6 + $0x8] sm:$0xff] %vm331, %v733
        %766 = vst.msk [vmem:[#allocation6 + $0x10] sm:$0xff] %vm331, %v734
        %767 = vst.msk [vmem:[#allocation6 + $0x18] sm:$0xff] %vm331, %v735
        %768 = vst.msk [vmem:[#allocation6 + $0x20] sm:$0xff] %vm331, %v736
        %769 = vst.msk [vmem:[#allocation6 + $0x28] sm:$0xff] %vm331, %v737
        %770 = vst.msk [vmem:[#allocation6 + $0x30] sm:$0xff] %vm331, %v738
        %771 = vst.msk [vmem:[#allocation6 + $0x38] sm:$0xff] %vm331, %v739
        %772 = vst.msk [vmem:[#allocation6 + $0x40] sm:$0xff] %vm331, %v740
        %773 = vst.msk [vmem:[#allocation6 + $0x48] sm:$0xff] %vm331, %v741
        %774 = vst.msk [vmem:[#allocation6 + $0x50] sm:$0xff] %vm331, %v742
        %775 = vst.msk [vmem:[#allocation6 + $0x58] sm:$0xff] %vm331, %v743
        %776 = vst.msk [vmem:[#allocation6 + $0x60] sm:$0xff] %vm331, %v744
        %777 = vst.msk [vmem:[#allocation6 + $0x68] sm:$0xff] %vm331, %v745
        %778 = vst.msk [vmem:[#allocation6 + $0x70] sm:$0xff] %vm331, %v746
        %779 = vst.msk [vmem:[#allocation6 + $0x78] sm:$0xff] %vm331, %v747
        %780 = vst.msk [vmem:[#allocation6 + $0x80] sm:$0xff] %vm331, %v748
        %781 = vst.msk [vmem:[#allocation6 + $0x88] sm:$0xff] %vm331, %v749
        %782 = vst.msk [vmem:[#allocation6 + $0x90] sm:$0xff] %vm331, %v750
        %783 = vst.msk [vmem:[#allocation6 + $0x98] sm:$0xff] %vm331, %v751
        %784 = vst.msk [vmem:[#allocation6 + $0xa0] sm:$0xff] %vm331, %v752
        %785 = vst.msk [vmem:[#allocation6 + $0xa8] sm:$0xff] %vm331, %v753
        %786 = vst.msk [vmem:[#allocation6 + $0xb0] sm:$0xff] %vm331, %v754
        %787 = vst.msk [vmem:[#allocation6 + $0xb8] sm:$0xff] %vm331, %v755
        %788 = vst.msk [vmem:[#allocation6 + $0xc0] sm:$0xff] %vm331, %v756
        %789 = vst.msk [vmem:[#allocation6 + $0xc8] sm:$0xff] %vm331, %v757
        %790 = vst.msk [vmem:[#allocation6 + $0xd0] sm:$0xff] %vm331, %v758
        %791 = vst.msk [vmem:[#allocation6 + $0xd8] sm:$0xff] %vm331, %v759
        %792 = vst.msk [vmem:[#allocation6 + $0xe0] sm:$0xff] %vm331, %v760
        %793 = vst.msk [vmem:[#allocation6 + $0xe8] sm:$0xff] %vm331, %v761
        %794 = vst.msk [vmem:[#allocation6 + $0xf0] sm:$0xff] %vm331, %v762
        %795 = vst.msk [vmem:[#allocation6 + $0xf8] sm:$0xff] %vm331, %v763
        %v796 = vld [vmem:[#allocation2 + $0x2] sm:$0xff]
        %v797 = vld [vmem:[#allocation2 + $0xa] sm:$0xff]
        %v798 = vld [vmem:[#allocation2 + $0x1a] sm:$0xff]
        %v799 = vld [vmem:[#allocation2 + $0x22] sm:$0xff]
        %v800 = vld [vmem:[#allocation2 + $0x32] sm:$0xff]
        %v801 = vld [vmem:[#allocation2 + $0x3a] sm:$0xff]
        %v802 = vld [vmem:[#allocation2 + $0x4a] sm:$0xff]
        %v803 = vld [vmem:[#allocation2 + $0x52] sm:$0xff]
        %v804 = vld [vmem:[#allocation2 + $0x62] sm:$0xff]
        %v805 = vld [vmem:[#allocation2 + $0x6a] sm:$0xff]
        %v806 = vld [vmem:[#allocation2 + $0x7a] sm:$0xff]
        %v807 = vld [vmem:[#allocation2 + $0x82] sm:$0xff]
        %v808 = vld [vmem:[#allocation2 + $0x92] sm:$0xff]
        %v809 = vld [vmem:[#allocation2 + $0x9a] sm:$0xff]
        %v810 = vld [vmem:[#allocation2 + $0xaa] sm:$0xff]
        %v811 = vld [vmem:[#allocation2 + $0xb2] sm:$0xff]
        %v812 = vld [vmem:[#allocation2 + $0xc2] sm:$0xff]
        %v813 = vld [vmem:[#allocation2 + $0xca] sm:$0xff]
        %v814 = vld [vmem:[#allocation2 + $0xda] sm:$0xff]
        %v815 = vld [vmem:[#allocation2 + $0xe2] sm:$0xff]
        %v816 = vld [vmem:[#allocation2 + $0xf2] sm:$0xff]
        %v817 = vld [vmem:[#allocation2 + $0xfa] sm:$0xff]
        %v818 = vld [vmem:[#allocation2 + $0x10a] sm:$0xff]
        %v819 = vld [vmem:[#allocation2 + $0x112] sm:$0xff]
        %v820 = vld [vmem:[#allocation2 + $0x122] sm:$0xff]
        %v821 = vld [vmem:[#allocation2 + $0x12a] sm:$0xff]
        %v822 = vld [vmem:[#allocation2 + $0x13a] sm:$0xff]
        %v823 = vld [vmem:[#allocation2 + $0x142] sm:$0xff]
        %v824 = vld [vmem:[#allocation2 + $0x152] sm:$0xff]
        %v825 = vld [vmem:[#allocation2 + $0x15a] sm:$0xff]
        %v826 = vld [vmem:[#allocation2 + $0x16a] sm:$0xff]
        %v827 = vld [vmem:[#allocation2 + $0x172] sm:$0xff]
        %860 = vrot.lane.b32.xlu0 %v796, 8
        %v861 = vpop.permute.xlu0 %860
        %862 = vrot.lane.b32.xlu0 %v797, 8
        %v863 = vpop.permute.xlu0 %862
        %864 = vrot.lane.b32.xlu0 %v798, 8
        %v865 = vpop.permute.xlu0 %864
        %866 = vrot.lane.b32.xlu0 %v799, 8
        %v867 = vpop.permute.xlu0 %866
        %868 = vrot.lane.b32.xlu0 %v800, 8
        %v869 = vpop.permute.xlu0 %868
        %870 = vrot.lane.b32.xlu0 %v801, 8
        %v871 = vpop.permute.xlu0 %870
        %872 = vrot.lane.b32.xlu0 %v802, 8
        %v873 = vpop.permute.xlu0 %872
        %874 = vrot.lane.b32.xlu0 %v803, 8
        %v875 = vpop.permute.xlu0 %874
        %876 = vrot.lane.b32.xlu0 %v804, 8
        %v877 = vpop.permute.xlu0 %876
        %878 = vrot.lane.b32.xlu0 %v805, 8
        %v879 = vpop.permute.xlu0 %878
        %880 = vrot.lane.b32.xlu0 %v806, 8
        %v881 = vpop.permute.xlu0 %880
        %882 = vrot.lane.b32.xlu0 %v807, 8
        %v883 = vpop.permute.xlu0 %882
        %884 = vrot.lane.b32.xlu0 %v808, 8
        %v885 = vpop.permute.xlu0 %884
        %886 = vrot.lane.b32.xlu0 %v809, 8
        %v887 = vpop.permute.xlu0 %886
        %888 = vrot.lane.b32.xlu0 %v810, 8
        %v889 = vpop.permute.xlu0 %888
        %890 = vrot.lane.b32.xlu0 %v811, 8
        %v891 = vpop.permute.xlu0 %890
        %892 = vrot.lane.b32.xlu0 %v812, 8
        %v893 = vpop.permute.xlu0 %892
        %894 = vrot.lane.b32.xlu0 %v813, 8
        %v895 = vpop.permute.xlu0 %894
        %896 = vrot.lane.b32.xlu0 %v814, 8
        %v897 = vpop.permute.xlu0 %896
        %898 = vrot.lane.b32.xlu0 %v815, 8
        %v899 = vpop.permute.xlu0 %898
        %900 = vrot.lane.b32.xlu0 %v816, 8
        %v901 = vpop.permute.xlu0 %900
        %902 = vrot.lane.b32.xlu0 %v817, 8
        %v903 = vpop.permute.xlu0 %902
        %904 = vrot.lane.b32.xlu0 %v818, 8
        %v905 = vpop.permute.xlu0 %904
        %906 = vrot.lane.b32.xlu0 %v819, 8
        %v907 = vpop.permute.xlu0 %906
        %908 = vrot.lane.b32.xlu0 %v820, 8
        %v909 = vpop.permute.xlu0 %908
        %910 = vrot.lane.b32.xlu0 %v821, 8
        %v911 = vpop.permute.xlu0 %910
        %912 = vrot.lane.b32.xlu0 %v822, 8
        %v913 = vpop.permute.xlu0 %912
        %914 = vrot.lane.b32.xlu0 %v823, 8
        %v915 = vpop.permute.xlu0 %914
        %916 = vrot.lane.b32.xlu0 %v824, 8
        %v917 = vpop.permute.xlu0 %916
        %918 = vrot.lane.b32.xlu0 %v825, 8
        %v919 = vpop.permute.xlu0 %918
        %920 = vrot.lane.b32.xlu0 %v826, 8
        %v921 = vpop.permute.xlu0 %920
        %922 = vrot.lane.b32.xlu0 %v827, 8
        %v923 = vpop.permute.xlu0 %922
        %vm956 = vcmask 130112
        %957 = vst.msk [vmem:[#allocation6] sm:$0xff] %vm956, %v861
        %958 = vst.msk [vmem:[#allocation6 + $0x8] sm:$0xff] %vm956, %v863
        %959 = vst.msk [vmem:[#allocation6 + $0x10] sm:$0xff] %vm956, %v865
        %960 = vst.msk [vmem:[#allocation6 + $0x18] sm:$0xff] %vm956, %v867
        %961 = vst.msk [vmem:[#allocation6 + $0x20] sm:$0xff] %vm956, %v869
        %962 = vst.msk [vmem:[#allocation6 + $0x28] sm:$0xff] %vm956, %v871
        %963 = vst.msk [vmem:[#allocation6 + $0x30] sm:$0xff] %vm956, %v873
        %964 = vst.msk [vmem:[#allocation6 + $0x38] sm:$0xff] %vm956, %v875
        %965 = vst.msk [vmem:[#allocation6 + $0x40] sm:$0xff] %vm956, %v877
        %966 = vst.msk [vmem:[#allocation6 + $0x48] sm:$0xff] %vm956, %v879
        %967 = vst.msk [vmem:[#allocation6 + $0x50] sm:$0xff] %vm956, %v881
        %968 = vst.msk [vmem:[#allocation6 + $0x58] sm:$0xff] %vm956, %v883
        %969 = vst.msk [vmem:[#allocation6 + $0x60] sm:$0xff] %vm956, %v885
        %970 = vst.msk [vmem:[#allocation6 + $0x68] sm:$0xff] %vm956, %v887
        %971 = vst.msk [vmem:[#allocation6 + $0x70] sm:$0xff] %vm956, %v889
        %972 = vst.msk [vmem:[#allocation6 + $0x78] sm:$0xff] %vm956, %v891
        %973 = vst.msk [vmem:[#allocation6 + $0x80] sm:$0xff] %vm956, %v893
        %974 = vst.msk [vmem:[#allocation6 + $0x88] sm:$0xff] %vm956, %v895
        %975 = vst.msk [vmem:[#allocation6 + $0x90] sm:$0xff] %vm956, %v897
        %976 = vst.msk [vmem:[#allocation6 + $0x98] sm:$0xff] %vm956, %v899
        %977 = vst.msk [vmem:[#allocation6 + $0xa0] sm:$0xff] %vm956, %v901
        %978 = vst.msk [vmem:[#allocation6 + $0xa8] sm:$0xff] %vm956, %v903
        %979 = vst.msk [vmem:[#allocation6 + $0xb0] sm:$0xff] %vm956, %v905
        %980 = vst.msk [vmem:[#allocation6 + $0xb8] sm:$0xff] %vm956, %v907
        %981 = vst.msk [vmem:[#allocation6 + $0xc0] sm:$0xff] %vm956, %v909
        %982 = vst.msk [vmem:[#allocation6 + $0xc8] sm:$0xff] %vm956, %v911
        %983 = vst.msk [vmem:[#allocation6 + $0xd0] sm:$0xff] %vm956, %v913
        %984 = vst.msk [vmem:[#allocation6 + $0xd8] sm:$0xff] %vm956, %v915
        %985 = vst.msk [vmem:[#allocation6 + $0xe0] sm:$0xff] %vm956, %v917
        %986 = vst.msk [vmem:[#allocation6 + $0xe8] sm:$0xff] %vm956, %v919
        %987 = vst.msk [vmem:[#allocation6 + $0xf0] sm:$0xff] %vm956, %v921
        %988 = vst.msk [vmem:[#allocation6 + $0xf8] sm:$0xff] %vm956, %v923
        %v989 = vld [vmem:[#allocation2 + $0x4] sm:$0xff]
        %v990 = vld [vmem:[#allocation2 + $0xc] sm:$0xff]
        %v991 = vld [vmem:[#allocation2 + $0x1c] sm:$0xff]
        %v992 = vld [vmem:[#allocation2 + $0x24] sm:$0xff]
        %v993 = vld [vmem:[#allocation2 + $0x34] sm:$0xff]
        %v994 = vld [vmem:[#allocation2 + $0x3c] sm:$0xff]
        %v995 = vld [vmem:[#allocation2 + $0x4c] sm:$0xff]
        %v996 = vld [vmem:[#allocation2 + $0x54] sm:$0xff]
        %v997 = vld [vmem:[#allocation2 + $0x64] sm:$0xff]
        %v998 = vld [vmem:[#allocation2 + $0x6c] sm:$0xff]
        %v999 = vld [vmem:[#allocation2 + $0x7c] sm:$0xff]
        %v1000 = vld [vmem:[#allocation2 + $0x84] sm:$0xff]
        %v1001 = vld [vmem:[#allocation2 + $0x94] sm:$0xff]
        %v1002 = vld [vmem:[#allocation2 + $0x9c] sm:$0xff]
        %v1003 = vld [vmem:[#allocation2 + $0xac] sm:$0xff]
        %v1004 = vld [vmem:[#allocation2 + $0xb4] sm:$0xff]
        %v1005 = vld [vmem:[#allocation2 + $0xc4] sm:$0xff]
        %v1006 = vld [vmem:[#allocation2 + $0xcc] sm:$0xff]
        %v1007 = vld [vmem:[#allocation2 + $0xdc] sm:$0xff]
        %v1008 = vld [vmem:[#allocation2 + $0xe4] sm:$0xff]
        %v1009 = vld [vmem:[#allocation2 + $0xf4] sm:$0xff]
        %v1010 = vld [vmem:[#allocation2 + $0xfc] sm:$0xff]
        %v1011 = vld [vmem:[#allocation2 + $0x10c] sm:$0xff]
        %v1012 = vld [vmem:[#allocation2 + $0x114] sm:$0xff]
        %v1013 = vld [vmem:[#allocation2 + $0x124] sm:$0xff]
        %v1014 = vld [vmem:[#allocation2 + $0x12c] sm:$0xff]
        %v1015 = vld [vmem:[#allocation2 + $0x13c] sm:$0xff]
        %v1016 = vld [vmem:[#allocation2 + $0x144] sm:$0xff]
        %v1017 = vld [vmem:[#allocation2 + $0x154] sm:$0xff]
        %v1018 = vld [vmem:[#allocation2 + $0x15c] sm:$0xff]
        %v1019 = vld [vmem:[#allocation2 + $0x16c] sm:$0xff]
        %v1020 = vld [vmem:[#allocation2 + $0x174] sm:$0xff]
        %1053 = vrot.lane.b32.xlu0 %v989, 16
        %v1054 = vpop.permute.xlu0 %1053
        %1055 = vrot.lane.b32.xlu0 %v990, 16
        %v1056 = vpop.permute.xlu0 %1055
        %1057 = vrot.lane.b32.xlu0 %v991, 16
        %v1058 = vpop.permute.xlu0 %1057
        %1059 = vrot.lane.b32.xlu0 %v992, 16
        %v1060 = vpop.permute.xlu0 %1059
        %1061 = vrot.lane.b32.xlu0 %v993, 16
        %v1062 = vpop.permute.xlu0 %1061
        %1063 = vrot.lane.b32.xlu0 %v994, 16
        %v1064 = vpop.permute.xlu0 %1063
        %1065 = vrot.lane.b32.xlu0 %v995, 16
        %v1066 = vpop.permute.xlu0 %1065
        %1067 = vrot.lane.b32.xlu0 %v996, 16
        %v1068 = vpop.permute.xlu0 %1067
        %1069 = vrot.lane.b32.xlu0 %v997, 16
        %v1070 = vpop.permute.xlu0 %1069
        %1071 = vrot.lane.b32.xlu0 %v998, 16
        %v1072 = vpop.permute.xlu0 %1071
        %1073 = vrot.lane.b32.xlu0 %v999, 16
        %v1074 = vpop.permute.xlu0 %1073
        %1075 = vrot.lane.b32.xlu0 %v1000, 16
        %v1076 = vpop.permute.xlu0 %1075
        %1077 = vrot.lane.b32.xlu0 %v1001, 16
        %v1078 = vpop.permute.xlu0 %1077
        %1079 = vrot.lane.b32.xlu0 %v1002, 16
        %v1080 = vpop.permute.xlu0 %1079
        %1081 = vrot.lane.b32.xlu0 %v1003, 16
        %v1082 = vpop.permute.xlu0 %1081
        %1083 = vrot.lane.b32.xlu0 %v1004, 16
        %v1084 = vpop.permute.xlu0 %1083
        %1085 = vrot.lane.b32.xlu0 %v1005, 16
        %v1086 = vpop.permute.xlu0 %1085
        %1087 = vrot.lane.b32.xlu0 %v1006, 16
        %v1088 = vpop.permute.xlu0 %1087
        %1089 = vrot.lane.b32.xlu0 %v1007, 16
        %v1090 = vpop.permute.xlu0 %1089
        %1091 = vrot.lane.b32.xlu0 %v1008, 16
        %v1092 = vpop.permute.xlu0 %1091
        %1093 = vrot.lane.b32.xlu0 %v1009, 16
        %v1094 = vpop.permute.xlu0 %1093
        %1095 = vrot.lane.b32.xlu0 %v1010, 16
        %v1096 = vpop.permute.xlu0 %1095
        %1097 = vrot.lane.b32.xlu0 %v1011, 16
        %v1098 = vpop.permute.xlu0 %1097
        %1099 = vrot.lane.b32.xlu0 %v1012, 16
        %v1100 = vpop.permute.xlu0 %1099
        %1101 = vrot.lane.b32.xlu0 %v1013, 16
        %v1102 = vpop.permute.xlu0 %1101
        %1103 = vrot.lane.b32.xlu0 %v1014, 16
        %v1104 = vpop.permute.xlu0 %1103
        %1105 = vrot.lane.b32.xlu0 %v1015, 16
        %v1106 = vpop.permute.xlu0 %1105
        %1107 = vrot.lane.b32.xlu0 %v1016, 16
        %v1108 = vpop.permute.xlu0 %1107
        %1109 = vrot.lane.b32.xlu0 %v1017, 16
        %v1110 = vpop.permute.xlu0 %1109
        %1111 = vrot.lane.b32.xlu0 %v1018, 16
        %v1112 = vpop.permute.xlu0 %1111
        %1113 = vrot.lane.b32.xlu0 %v1019, 16
        %v1114 = vpop.permute.xlu0 %1113
        %1115 = vrot.lane.b32.xlu0 %v1020, 16
        %v1116 = vpop.permute.xlu0 %1115
        %vm1149 = vcmask 195712
        %1150 = vst.msk [vmem:[#allocation6] sm:$0xff] %vm1149, %v1054
        %1151 = vst.msk [vmem:[#allocation6 + $0x8] sm:$0xff] %vm1149, %v1056
        %1152 = vst.msk [vmem:[#allocation6 + $0x10] sm:$0xff] %vm1149, %v1058
        %1153 = vst.msk [vmem:[#allocation6 + $0x18] sm:$0xff] %vm1149, %v1060
        %1154 = vst.msk [vmem:[#allocation6 + $0x20] sm:$0xff] %vm1149, %v1062
        %1155 = vst.msk [vmem:[#allocation6 + $0x28] sm:$0xff] %vm1149, %v1064
        %1156 = vst.msk [vmem:[#allocation6 + $0x30] sm:$0xff] %vm1149, %v1066
        %1157 = vst.msk [vmem:[#allocation6 + $0x38] sm:$0xff] %vm1149, %v1068
        %1158 = vst.msk [vmem:[#allocation6 + $0x40] sm:$0xff] %vm1149, %v1070
        %1159 = vst.msk [vmem:[#allocation6 + $0x48] sm:$0xff] %vm1149, %v1072
        %1160 = vst.msk [vmem:[#allocation6 + $0x50] sm:$0xff] %vm1149, %v1074
        %1161 = vst.msk [vmem:[#allocation6 + $0x58] sm:$0xff] %vm1149, %v1076
        %1162 = vst.msk [vmem:[#allocation6 + $0x60] sm:$0xff] %vm1149, %v1078
        %1163 = vst.msk [vmem:[#allocation6 + $0x68] sm:$0xff] %vm1149, %v1080
        %1164 = vst.msk [vmem:[#allocation6 + $0x70] sm:$0xff] %vm1149, %v1082
        %1165 = vst.msk [vmem:[#allocation6 + $0x78] sm:$0xff] %vm1149, %v1084
        %1166 = vst.msk [vmem:[#allocation6 + $0x80] sm:$0xff] %vm1149, %v1086
        %1167 = vst.msk [vmem:[#allocation6 + $0x88] sm:$0xff] %vm1149, %v1088
        %1168 = vst.msk [vmem:[#allocation6 + $0x90] sm:$0xff] %vm1149, %v1090
        %1169 = vst.msk [vmem:[#allocation6 + $0x98] sm:$0xff] %vm1149, %v1092
        %1170 = vst.msk [vmem:[#allocation6 + $0xa0] sm:$0xff] %vm1149, %v1094
        %1171 = vst.msk [vmem:[#allocation6 + $0xa8] sm:$0xff] %vm1149, %v1096
        %1172 = vst.msk [vmem:[#allocation6 + $0xb0] sm:$0xff] %vm1149, %v1098
        %1173 = vst.msk [vmem:[#allocation6 + $0xb8] sm:$0xff] %vm1149, %v1100
        %1174 = vst.msk [vmem:[#allocation6 + $0xc0] sm:$0xff] %vm1149, %v1102
        %1175 = vst.msk [vmem:[#allocation6 + $0xc8] sm:$0xff] %vm1149, %v1104
        %1176 = vst.msk [vmem:[#allocation6 + $0xd0] sm:$0xff] %vm1149, %v1106
        %1177 = vst.msk [vmem:[#allocation6 + $0xd8] sm:$0xff] %vm1149, %v1108
        %1178 = vst.msk [vmem:[#allocation6 + $0xe0] sm:$0xff] %vm1149, %v1110
        %1179 = vst.msk [vmem:[#allocation6 + $0xe8] sm:$0xff] %vm1149, %v1112
        %1180 = vst.msk [vmem:[#allocation6 + $0xf0] sm:$0xff] %vm1149, %v1114
        %1181 = vst.msk [vmem:[#allocation6 + $0xf8] sm:$0xff] %vm1149, %v1116
        %v1182 = vld [vmem:[%s346] sm:$0xff]
        %v1183 = vld [vmem:[%s346 + $0x8] sm:$0xff]
        %v1184 = vld [vmem:[%s346 + $0x18] sm:$0xff]
        %v1185 = vld [vmem:[%s346 + $0x20] sm:$0xff]
        %v1186 = vld [vmem:[%s346 + $0x30] sm:$0xff]
        %v1187 = vld [vmem:[%s346 + $0x38] sm:$0xff]
        %v1188 = vld [vmem:[%s346 + $0x48] sm:$0xff]
        %v1189 = vld [vmem:[%s346 + $0x50] sm:$0xff]
        %v1190 = vld [vmem:[%s346 + $0x60] sm:$0xff]
        %v1191 = vld [vmem:[%s346 + $0x68] sm:$0xff]
        %v1192 = vld [vmem:[%s346 + $0x78] sm:$0xff]
        %v1193 = vld [vmem:[%s346 + $0x80] sm:$0xff]
        %v1194 = vld [vmem:[%s346 + $0x90] sm:$0xff]
        %v1195 = vld [vmem:[%s346 + $0x98] sm:$0xff]
        %v1196 = vld [vmem:[%s346 + $0xa8] sm:$0xff]
        %v1197 = vld [vmem:[%s346 + $0xb0] sm:$0xff]
        %v1198 = vld [vmem:[%s346 + $0xc0] sm:$0xff]
        %v1199 = vld [vmem:[%s346 + $0xc8] sm:$0xff]
        %v1200 = vld [vmem:[%s346 + $0xd8] sm:$0xff]
        %v1201 = vld [vmem:[%s346 + $0xe0] sm:$0xff]
        %v1202 = vld [vmem:[%s346 + $0xf0] sm:$0xff]
        %v1203 = vld [vmem:[%s346 + $0xf8] sm:$0xff]
        %v1204 = vld [vmem:[%s346 + $0x108] sm:$0xff]
        %v1205 = vld [vmem:[%s346 + $0x110] sm:$0xff]
        %v1206 = vld [vmem:[%s346 + $0x120] sm:$0xff]
        %v1207 = vld [vmem:[%s346 + $0x128] sm:$0xff]
        %v1208 = vld [vmem:[%s346 + $0x138] sm:$0xff]
        %v1209 = vld [vmem:[%s346 + $0x140] sm:$0xff]
        %v1210 = vld [vmem:[%s346 + $0x150] sm:$0xff]
        %v1211 = vld [vmem:[%s346 + $0x158] sm:$0xff]
        %v1212 = vld [vmem:[%s346 + $0x168] sm:$0xff]
        %v1213 = vld [vmem:[%s346 + $0x170] sm:$0xff]
        %1246 = vrot.lane.b32.xlu0 %v1182, 24
        %v1247 = vpop.permute.xlu0 %1246
        %1248 = vrot.lane.b32.xlu0 %v1183, 24
        %v1249 = vpop.permute.xlu0 %1248
        %1250 = vrot.lane.b32.xlu0 %v1184, 24
        %v1251 = vpop.permute.xlu0 %1250
        %1252 = vrot.lane.b32.xlu0 %v1185, 24
        %v1253 = vpop.permute.xlu0 %1252
        %1254 = vrot.lane.b32.xlu0 %v1186, 24
        %v1255 = vpop.permute.xlu0 %1254
        %1256 = vrot.lane.b32.xlu0 %v1187, 24
        %v1257 = vpop.permute.xlu0 %1256
        %1258 = vrot.lane.b32.xlu0 %v1188, 24
        %v1259 = vpop.permute.xlu0 %1258
        %1260 = vrot.lane.b32.xlu0 %v1189, 24
        %v1261 = vpop.permute.xlu0 %1260
        %1262 = vrot.lane.b32.xlu0 %v1190, 24
        %v1263 = vpop.permute.xlu0 %1262
        %1264 = vrot.lane.b32.xlu0 %v1191, 24
        %v1265 = vpop.permute.xlu0 %1264
        %1266 = vrot.lane.b32.xlu0 %v1192, 24
        %v1267 = vpop.permute.xlu0 %1266
        %1268 = vrot.lane.b32.xlu0 %v1193, 24
        %v1269 = vpop.permute.xlu0 %1268
        %1270 = vrot.lane.b32.xlu0 %v1194, 24
        %v1271 = vpop.permute.xlu0 %1270
        %1272 = vrot.lane.b32.xlu0 %v1195, 24
        %v1273 = vpop.permute.xlu0 %1272
        %1274 = vrot.lane.b32.xlu0 %v1196, 24
        %v1275 = vpop.permute.xlu0 %1274
        %1276 = vrot.lane.b32.xlu0 %v1197, 24
        %v1277 = vpop.permute.xlu0 %1276
        %1278 = vrot.lane.b32.xlu0 %v1198, 24
        %v1279 = vpop.permute.xlu0 %1278
        %1280 = vrot.lane.b32.xlu0 %v1199, 24
        %v1281 = vpop.permute.xlu0 %1280
        %1282 = vrot.lane.b32.xlu0 %v1200, 24
        %v1283 = vpop.permute.xlu0 %1282
        %1284 = vrot.lane.b32.xlu0 %v1201, 24
        %v1285 = vpop.permute.xlu0 %1284
        %1286 = vrot.lane.b32.xlu0 %v1202, 24
        %v1287 = vpop.permute.xlu0 %1286
        %1288 = vrot.lane.b32.xlu0 %v1203, 24
        %v1289 = vpop.permute.xlu0 %1288
        %1290 = vrot.lane.b32.xlu0 %v1204, 24
        %v1291 = vpop.permute.xlu0 %1290
        %1292 = vrot.lane.b32.xlu0 %v1205, 24
        %v1293 = vpop.permute.xlu0 %1292
        %1294 = vrot.lane.b32.xlu0 %v1206, 24
        %v1295 = vpop.permute.xlu0 %1294
        %1296 = vrot.lane.b32.xlu0 %v1207, 24
        %v1297 = vpop.permute.xlu0 %1296
        %1298 = vrot.lane.b32.xlu0 %v1208, 24
        %v1299 = vpop.permute.xlu0 %1298
        %1300 = vrot.lane.b32.xlu0 %v1209, 24
        %v1301 = vpop.permute.xlu0 %1300
        %1302 = vrot.lane.b32.xlu0 %v1210, 24
        %v1303 = vpop.permute.xlu0 %1302
        %1304 = vrot.lane.b32.xlu0 %v1211, 24
        %v1305 = vpop.permute.xlu0 %1304
        %1306 = vrot.lane.b32.xlu0 %v1212, 24
        %v1307 = vpop.permute.xlu0 %1306
        %1308 = vrot.lane.b32.xlu0 %v1213, 24
        %v1309 = vpop.permute.xlu0 %1308
        %vm1342 = vcmask 261312
        %1343 = vst.msk [vmem:[#allocation6] sm:$0xff] %vm1342, %v1247
        %1344 = vst.msk [vmem:[#allocation6 + $0x8] sm:$0xff] %vm1342, %v1249
        %1345 = vst.msk [vmem:[#allocation6 + $0x10] sm:$0xff] %vm1342, %v1251
        %1346 = vst.msk [vmem:[#allocation6 + $0x18] sm:$0xff] %vm1342, %v1253
        %1347 = vst.msk [vmem:[#allocation6 + $0x20] sm:$0xff] %vm1342, %v1255
        %1348 = vst.msk [vmem:[#allocation6 + $0x28] sm:$0xff] %vm1342, %v1257
        %1349 = vst.msk [vmem:[#allocation6 + $0x30] sm:$0xff] %vm1342, %v1259
        %1350 = vst.msk [vmem:[#allocation6 + $0x38] sm:$0xff] %vm1342, %v1261
        %1351 = vst.msk [vmem:[#allocation6 + $0x40] sm:$0xff] %vm1342, %v1263
        %1352 = vst.msk [vmem:[#allocation6 + $0x48] sm:$0xff] %vm1342, %v1265
        %1353 = vst.msk [vmem:[#allocation6 + $0x50] sm:$0xff] %vm1342, %v1267
        %1354 = vst.msk [vmem:[#allocation6 + $0x58] sm:$0xff] %vm1342, %v1269
        %1355 = vst.msk [vmem:[#allocation6 + $0x60] sm:$0xff] %vm1342, %v1271
        %1356 = vst.msk [vmem:[#allocation6 + $0x68] sm:$0xff] %vm1342, %v1273
        %1357 = vst.msk [vmem:[#allocation6 + $0x70] sm:$0xff] %vm1342, %v1275
        %1358 = vst.msk [vmem:[#allocation6 + $0x78] sm:$0xff] %vm1342, %v1277
        %1359 = vst.msk [vmem:[#allocation6 + $0x80] sm:$0xff] %vm1342, %v1279
        %1360 = vst.msk [vmem:[#allocation6 + $0x88] sm:$0xff] %vm1342, %v1281
        %1361 = vst.msk [vmem:[#allocation6 + $0x90] sm:$0xff] %vm1342, %v1283
        %1362 = vst.msk [vmem:[#allocation6 + $0x98] sm:$0xff] %vm1342, %v1285
        %1363 = vst.msk [vmem:[#allocation6 + $0xa0] sm:$0xff] %vm1342, %v1287
        %1364 = vst.msk [vmem:[#allocation6 + $0xa8] sm:$0xff] %vm1342, %v1289
        %1365 = vst.msk [vmem:[#allocation6 + $0xb0] sm:$0xff] %vm1342, %v1291
        %1366 = vst.msk [vmem:[#allocation6 + $0xb8] sm:$0xff] %vm1342, %v1293
        %1367 = vst.msk [vmem:[#allocation6 + $0xc0] sm:$0xff] %vm1342, %v1295
        %1368 = vst.msk [vmem:[#allocation6 + $0xc8] sm:$0xff] %vm1342, %v1297
        %1369 = vst.msk [vmem:[#allocation6 + $0xd0] sm:$0xff] %vm1342, %v1299
        %1370 = vst.msk [vmem:[#allocation6 + $0xd8] sm:$0xff] %vm1342, %v1301
        %1371 = vst.msk [vmem:[#allocation6 + $0xe0] sm:$0xff] %vm1342, %v1303
        %1372 = vst.msk [vmem:[#allocation6 + $0xe8] sm:$0xff] %vm1342, %v1305
        %1373 = vst.msk [vmem:[#allocation6 + $0xf0] sm:$0xff] %vm1342, %v1307
        %1374 = vst.msk [vmem:[#allocation6 + $0xf8] sm:$0xff] %vm1342, %v1309
        %v1375 = vld [vmem:[%s346 + $0x2] sm:$0xff]
        %v1376 = vld [vmem:[%s346 + $0xa] sm:$0xff]
        %v1377 = vld [vmem:[%s346 + $0x1a] sm:$0xff]
        %v1378 = vld [vmem:[%s346 + $0x22] sm:$0xff]
        %v1379 = vld [vmem:[%s346 + $0x32] sm:$0xff]
        %v1380 = vld [vmem:[%s346 + $0x3a] sm:$0xff]
        %v1381 = vld [vmem:[%s346 + $0x4a] sm:$0xff]
        %v1382 = vld [vmem:[%s346 + $0x52] sm:$0xff]
        %v1383 = vld [vmem:[%s346 + $0x62] sm:$0xff]
        %v1384 = vld [vmem:[%s346 + $0x6a] sm:$0xff]
        %v1385 = vld [vmem:[%s346 + $0x7a] sm:$0xff]
        %v1386 = vld [vmem:[%s346 + $0x82] sm:$0xff]
        %v1387 = vld [vmem:[%s346 + $0x92] sm:$0xff]
        %v1388 = vld [vmem:[%s346 + $0x9a] sm:$0xff]
        %v1389 = vld [vmem:[%s346 + $0xaa] sm:$0xff]
        %v1390 = vld [vmem:[%s346 + $0xb2] sm:$0xff]
        %v1391 = vld [vmem:[%s346 + $0xc2] sm:$0xff]
        %v1392 = vld [vmem:[%s346 + $0xca] sm:$0xff]
        %v1393 = vld [vmem:[%s346 + $0xda] sm:$0xff]
        %v1394 = vld [vmem:[%s346 + $0xe2] sm:$0xff]
        %v1395 = vld [vmem:[%s346 + $0xf2] sm:$0xff]
        %v1396 = vld [vmem:[%s346 + $0xfa] sm:$0xff]
        %v1397 = vld [vmem:[%s346 + $0x10a] sm:$0xff]
        %v1398 = vld [vmem:[%s346 + $0x112] sm:$0xff]
        %v1399 = vld [vmem:[%s346 + $0x122] sm:$0xff]
        %v1400 = vld [vmem:[%s346 + $0x12a] sm:$0xff]
        %v1401 = vld [vmem:[%s346 + $0x13a] sm:$0xff]
        %v1402 = vld [vmem:[%s346 + $0x142] sm:$0xff]
        %v1403 = vld [vmem:[%s346 + $0x152] sm:$0xff]
        %v1404 = vld [vmem:[%s346 + $0x15a] sm:$0xff]
        %v1405 = vld [vmem:[%s346 + $0x16a] sm:$0xff]
        %v1406 = vld [vmem:[%s346 + $0x172] sm:$0xff]
        %1439 = vrot.lane.b32.xlu0 %v1375, 32
        %v1440 = vpop.permute.xlu0 %1439
        %1441 = vrot.lane.b32.xlu0 %v1376, 32
        %v1442 = vpop.permute.xlu0 %1441
        %1443 = vrot.lane.b32.xlu0 %v1377, 32
        %v1444 = vpop.permute.xlu0 %1443
        %1445 = vrot.lane.b32.xlu0 %v1378, 32
        %v1446 = vpop.permute.xlu0 %1445
        %1447 = vrot.lane.b32.xlu0 %v1379, 32
        %v1448 = vpop.permute.xlu0 %1447
        %1449 = vrot.lane.b32.xlu0 %v1380, 32
        %v1450 = vpop.permute.xlu0 %1449
        %1451 = vrot.lane.b32.xlu0 %v1381, 32
        %v1452 = vpop.permute.xlu0 %1451
        %1453 = vrot.lane.b32.xlu0 %v1382, 32
        %v1454 = vpop.permute.xlu0 %1453
        %1455 = vrot.lane.b32.xlu0 %v1383, 32
        %v1456 = vpop.permute.xlu0 %1455
        %1457 = vrot.lane.b32.xlu0 %v1384, 32
        %v1458 = vpop.permute.xlu0 %1457
        %1459 = vrot.lane.b32.xlu0 %v1385, 32
        %v1460 = vpop.permute.xlu0 %1459
        %1461 = vrot.lane.b32.xlu0 %v1386, 32
        %v1462 = vpop.permute.xlu0 %1461
        %1463 = vrot.lane.b32.xlu0 %v1387, 32
        %v1464 = vpop.permute.xlu0 %1463
        %1465 = vrot.lane.b32.xlu0 %v1388, 32
        %v1466 = vpop.permute.xlu0 %1465
        %1467 = vrot.lane.b32.xlu0 %v1389, 32
        %v1468 = vpop.permute.xlu0 %1467
        %1469 = vrot.lane.b32.xlu0 %v1390, 32
        %v1470 = vpop.permute.xlu0 %1469
        %1471 = vrot.lane.b32.xlu0 %v1391, 32
        %v1472 = vpop.permute.xlu0 %1471
        %1473 = vrot.lane.b32.xlu0 %v1392, 32
        %v1474 = vpop.permute.xlu0 %1473
        %1475 = vrot.lane.b32.xlu0 %v1393, 32
        %v1476 = vpop.permute.xlu0 %1475
        %1477 = vrot.lane.b32.xlu0 %v1394, 32
        %v1478 = vpop.permute.xlu0 %1477
        %1479 = vrot.lane.b32.xlu0 %v1395, 32
        %v1480 = vpop.permute.xlu0 %1479
        %1481 = vrot.lane.b32.xlu0 %v1396, 32
        %v1482 = vpop.permute.xlu0 %1481
        %1483 = vrot.lane.b32.xlu0 %v1397, 32
        %v1484 = vpop.permute.xlu0 %1483
        %1485 = vrot.lane.b32.xlu0 %v1398, 32
        %v1486 = vpop.permute.xlu0 %1485
        %1487 = vrot.lane.b32.xlu0 %v1399, 32
        %v1488 = vpop.permute.xlu0 %1487
        %1489 = vrot.lane.b32.xlu0 %v1400, 32
        %v1490 = vpop.permute.xlu0 %1489
        %1491 = vrot.lane.b32.xlu0 %v1401, 32
        %v1492 = vpop.permute.xlu0 %1491
        %1493 = vrot.lane.b32.xlu0 %v1402, 32
        %v1494 = vpop.permute.xlu0 %1493
        %1495 = vrot.lane.b32.xlu0 %v1403, 32
        %v1496 = vpop.permute.xlu0 %1495
        %1497 = vrot.lane.b32.xlu0 %v1404, 32
        %v1498 = vpop.permute.xlu0 %1497
        %1499 = vrot.lane.b32.xlu0 %v1405, 32
        %v1500 = vpop.permute.xlu0 %1499
        %1501 = vrot.lane.b32.xlu0 %v1406, 32
        %v1502 = vpop.permute.xlu0 %1501
        %vm1535 = vcmask 326912
        %1536 = vst.msk [vmem:[#allocation6] sm:$0xff] %vm1535, %v1440
        %1537 = vst.msk [vmem:[#allocation6 + $0x8] sm:$0xff] %vm1535, %v1442
        %1538 = vst.msk [vmem:[#allocation6 + $0x10] sm:$0xff] %vm1535, %v1444
        %1539 = vst.msk [vmem:[#allocation6 + $0x18] sm:$0xff] %vm1535, %v1446
        %1540 = vst.msk [vmem:[#allocation6 + $0x20] sm:$0xff] %vm1535, %v1448
        %1541 = vst.msk [vmem:[#allocation6 + $0x28] sm:$0xff] %vm1535, %v1450
        %1542 = vst.msk [vmem:[#allocation6 + $0x30] sm:$0xff] %vm1535, %v1452
        %1543 = vst.msk [vmem:[#allocation6 + $0x38] sm:$0xff] %vm1535, %v1454
        %1544 = vst.msk [vmem:[#allocation6 + $0x40] sm:$0xff] %vm1535, %v1456
        %1545 = vst.msk [vmem:[#allocation6 + $0x48] sm:$0xff] %vm1535, %v1458
        %1546 = vst.msk [vmem:[#allocation6 + $0x50] sm:$0xff] %vm1535, %v1460
        %1547 = vst.msk [vmem:[#allocation6 + $0x58] sm:$0xff] %vm1535, %v1462
        %1548 = vst.msk [vmem:[#allocation6 + $0x60] sm:$0xff] %vm1535, %v1464
        %1549 = vst.msk [vmem:[#allocation6 + $0x68] sm:$0xff] %vm1535, %v1466
        %1550 = vst.msk [vmem:[#allocation6 + $0x70] sm:$0xff] %vm1535, %v1468
        %1551 = vst.msk [vmem:[#allocation6 + $0x78] sm:$0xff] %vm1535, %v1470
        %1552 = vst.msk [vmem:[#allocation6 + $0x80] sm:$0xff] %vm1535, %v1472
        %1553 = vst.msk [vmem:[#allocation6 + $0x88] sm:$0xff] %vm1535, %v1474
        %1554 = vst.msk [vmem:[#allocation6 + $0x90] sm:$0xff] %vm1535, %v1476
        %1555 = vst.msk [vmem:[#allocation6 + $0x98] sm:$0xff] %vm1535, %v1478
        %1556 = vst.msk [vmem:[#allocation6 + $0xa0] sm:$0xff] %vm1535, %v1480
        %1557 = vst.msk [vmem:[#allocation6 + $0xa8] sm:$0xff] %vm1535, %v1482
        %1558 = vst.msk [vmem:[#allocation6 + $0xb0] sm:$0xff] %vm1535, %v1484
        %1559 = vst.msk [vmem:[#allocation6 + $0xb8] sm:$0xff] %vm1535, %v1486
        %1560 = vst.msk [vmem:[#allocation6 + $0xc0] sm:$0xff] %vm1535, %v1488
        %1561 = vst.msk [vmem:[#allocation6 + $0xc8] sm:$0xff] %vm1535, %v1490
        %1562 = vst.msk [vmem:[#allocation6 + $0xd0] sm:$0xff] %vm1535, %v1492
        %1563 = vst.msk [vmem:[#allocation6 + $0xd8] sm:$0xff] %vm1535, %v1494
        %1564 = vst.msk [vmem:[#allocation6 + $0xe0] sm:$0xff] %vm1535, %v1496
        %1565 = vst.msk [vmem:[#allocation6 + $0xe8] sm:$0xff] %vm1535, %v1498
        %1566 = vst.msk [vmem:[#allocation6 + $0xf0] sm:$0xff] %vm1535, %v1500
        %1567 = vst.msk [vmem:[#allocation6 + $0xf8] sm:$0xff] %vm1535, %v1502
        %v1568 = vld [vmem:[%s346 + $0x4] sm:$0xff]
        %v1569 = vld [vmem:[%s346 + $0xc] sm:$0xff]
        %v1570 = vld [vmem:[%s346 + $0x1c] sm:$0xff]
        %v1571 = vld [vmem:[%s346 + $0x24] sm:$0xff]
        %v1572 = vld [vmem:[%s346 + $0x34] sm:$0xff]
        %v1573 = vld [vmem:[%s346 + $0x3c] sm:$0xff]
        %v1574 = vld [vmem:[%s346 + $0x4c] sm:$0xff]
        %v1575 = vld [vmem:[%s346 + $0x54] sm:$0xff]
        %v1576 = vld [vmem:[%s346 + $0x64] sm:$0xff]
        %v1577 = vld [vmem:[%s346 + $0x6c] sm:$0xff]
        %v1578 = vld [vmem:[%s346 + $0x7c] sm:$0xff]
        %v1579 = vld [vmem:[%s346 + $0x84] sm:$0xff]
        %v1580 = vld [vmem:[%s346 + $0x94] sm:$0xff]
        %v1581 = vld [vmem:[%s346 + $0x9c] sm:$0xff]
        %v1582 = vld [vmem:[%s346 + $0xac] sm:$0xff]
        %v1583 = vld [vmem:[%s346 + $0xb4] sm:$0xff]
        %v1584 = vld [vmem:[%s346 + $0xc4] sm:$0xff]
        %v1585 = vld [vmem:[%s346 + $0xcc] sm:$0xff]
        %v1586 = vld [vmem:[%s346 + $0xdc] sm:$0xff]
        %v1587 = vld [vmem:[%s346 + $0xe4] sm:$0xff]
        %v1588 = vld [vmem:[%s346 + $0xf4] sm:$0xff]
        %v1589 = vld [vmem:[%s346 + $0xfc] sm:$0xff]
        %v1590 = vld [vmem:[%s346 + $0x10c] sm:$0xff]
        %v1591 = vld [vmem:[%s346 + $0x114] sm:$0xff]
        %v1592 = vld [vmem:[%s346 + $0x124] sm:$0xff]
        %v1593 = vld [vmem:[%s346 + $0x12c] sm:$0xff]
        %v1594 = vld [vmem:[%s346 + $0x13c] sm:$0xff]
        %v1595 = vld [vmem:[%s346 + $0x144] sm:$0xff]
        %v1596 = vld [vmem:[%s346 + $0x154] sm:$0xff]
        %v1597 = vld [vmem:[%s346 + $0x15c] sm:$0xff]
        %v1598 = vld [vmem:[%s346 + $0x16c] sm:$0xff]
        %v1599 = vld [vmem:[%s346 + $0x174] sm:$0xff]
        %1632 = vrot.lane.b32.xlu0 %v1568, 40
        %v1633 = vpop.permute.xlu0 %1632
        %1634 = vrot.lane.b32.xlu0 %v1569, 40
        %v1635 = vpop.permute.xlu0 %1634
        %1636 = vrot.lane.b32.xlu0 %v1570, 40
        %v1637 = vpop.permute.xlu0 %1636
        %1638 = vrot.lane.b32.xlu0 %v1571, 40
        %v1639 = vpop.permute.xlu0 %1638
        %1640 = vrot.lane.b32.xlu0 %v1572, 40
        %v1641 = vpop.permute.xlu0 %1640
        %1642 = vrot.lane.b32.xlu0 %v1573, 40
        %v1643 = vpop.permute.xlu0 %1642
        %1644 = vrot.lane.b32.xlu0 %v1574, 40
        %v1645 = vpop.permute.xlu0 %1644
        %1646 = vrot.lane.b32.xlu0 %v1575, 40
        %v1647 = vpop.permute.xlu0 %1646
        %1648 = vrot.lane.b32.xlu0 %v1576, 40
        %v1649 = vpop.permute.xlu0 %1648
        %1650 = vrot.lane.b32.xlu0 %v1577, 40
        %v1651 = vpop.permute.xlu0 %1650
        %1652 = vrot.lane.b32.xlu0 %v1578, 40
        %v1653 = vpop.permute.xlu0 %1652
        %1654 = vrot.lane.b32.xlu0 %v1579, 40
        %v1655 = vpop.permute.xlu0 %1654
        %1656 = vrot.lane.b32.xlu0 %v1580, 40
        %v1657 = vpop.permute.xlu0 %1656
        %1658 = vrot.lane.b32.xlu0 %v1581, 40
        %v1659 = vpop.permute.xlu0 %1658
        %1660 = vrot.lane.b32.xlu0 %v1582, 40
        %v1661 = vpop.permute.xlu0 %1660
        %1662 = vrot.lane.b32.xlu0 %v1583, 40
        %v1663 = vpop.permute.xlu0 %1662
        %1664 = vrot.lane.b32.xlu0 %v1584, 40
        %v1665 = vpop.permute.xlu0 %1664
        %1666 = vrot.lane.b32.xlu0 %v1585, 40
        %v1667 = vpop.permute.xlu0 %1666
        %1668 = vrot.lane.b32.xlu0 %v1586, 40
        %v1669 = vpop.permute.xlu0 %1668
        %1670 = vrot.lane.b32.xlu0 %v1587, 40
        %v1671 = vpop.permute.xlu0 %1670
        %1672 = vrot.lane.b32.xlu0 %v1588, 40
        %v1673 = vpop.permute.xlu0 %1672
        %1674 = vrot.lane.b32.xlu0 %v1589, 40
        %v1675 = vpop.permute.xlu0 %1674
        %1676 = vrot.lane.b32.xlu0 %v1590, 40
        %v1677 = vpop.permute.xlu0 %1676
        %1678 = vrot.lane.b32.xlu0 %v1591, 40
        %v1679 = vpop.permute.xlu0 %1678
        %1680 = vrot.lane.b32.xlu0 %v1592, 40
        %v1681 = vpop.permute.xlu0 %1680
        %1682 = vrot.lane.b32.xlu0 %v1593, 40
        %v1683 = vpop.permute.xlu0 %1682
        %1684 = vrot.lane.b32.xlu0 %v1594, 40
        %v1685 = vpop.permute.xlu0 %1684
        %1686 = vrot.lane.b32.xlu0 %v1595, 40
        %v1687 = vpop.permute.xlu0 %1686
        %1688 = vrot.lane.b32.xlu0 %v1596, 40
        %v1689 = vpop.permute.xlu0 %1688
        %1690 = vrot.lane.b32.xlu0 %v1597, 40
        %v1691 = vpop.permute.xlu0 %1690
        %1692 = vrot.lane.b32.xlu0 %v1598, 40
        %v1693 = vpop.permute.xlu0 %1692
        %1694 = vrot.lane.b32.xlu0 %v1599, 40
        %v1695 = vpop.permute.xlu0 %1694
        %vm1728 = vcmask 392512
        %1729 = vst.msk [vmem:[#allocation6] sm:$0xff] %vm1728, %v1633
        %1730 = vst.msk [vmem:[#allocation6 + $0x8] sm:$0xff] %vm1728, %v1635
        %1731 = vst.msk [vmem:[#allocation6 + $0x10] sm:$0xff] %vm1728, %v1637
        %1732 = vst.msk [vmem:[#allocation6 + $0x18] sm:$0xff] %vm1728, %v1639
        %1733 = vst.msk [vmem:[#allocation6 + $0x20] sm:$0xff] %vm1728, %v1641
        %1734 = vst.msk [vmem:[#allocation6 + $0x28] sm:$0xff] %vm1728, %v1643
        %1735 = vst.msk [vmem:[#allocation6 + $0x30] sm:$0xff] %vm1728, %v1645
        %1736 = vst.msk [vmem:[#allocation6 + $0x38] sm:$0xff] %vm1728, %v1647
        %1737 = vst.msk [vmem:[#allocation6 + $0x40] sm:$0xff] %vm1728, %v1649
        %1738 = vst.msk [vmem:[#allocation6 + $0x48] sm:$0xff] %vm1728, %v1651
        %1739 = vst.msk [vmem:[#allocation6 + $0x50] sm:$0xff] %vm1728, %v1653
        %1740 = vst.msk [vmem:[#allocation6 + $0x58] sm:$0xff] %vm1728, %v1655
        %1741 = vst.msk [vmem:[#allocation6 + $0x60] sm:$0xff] %vm1728, %v1657
        %1742 = vst.msk [vmem:[#allocation6 + $0x68] sm:$0xff] %vm1728, %v1659
        %1743 = vst.msk [vmem:[#allocation6 + $0x70] sm:$0xff] %vm1728, %v1661
        %1744 = vst.msk [vmem:[#allocation6 + $0x78] sm:$0xff] %vm1728, %v1663
        %1745 = vst.msk [vmem:[#allocation6 + $0x80] sm:$0xff] %vm1728, %v1665
        %1746 = vst.msk [vmem:[#allocation6 + $0x88] sm:$0xff] %vm1728, %v1667
        %1747 = vst.msk [vmem:[#allocation6 + $0x90] sm:$0xff] %vm1728, %v1669
        %1748 = vst.msk [vmem:[#allocation6 + $0x98] sm:$0xff] %vm1728, %v1671
        %1749 = vst.msk [vmem:[#allocation6 + $0xa0] sm:$0xff] %vm1728, %v1673
        %1750 = vst.msk [vmem:[#allocation6 + $0xa8] sm:$0xff] %vm1728, %v1675
        %1751 = vst.msk [vmem:[#allocation6 + $0xb0] sm:$0xff] %vm1728, %v1677
        %1752 = vst.msk [vmem:[#allocation6 + $0xb8] sm:$0xff] %vm1728, %v1679
        %1753 = vst.msk [vmem:[#allocation6 + $0xc0] sm:$0xff] %vm1728, %v1681
        %1754 = vst.msk [vmem:[#allocation6 + $0xc8] sm:$0xff] %vm1728, %v1683
        %1755 = vst.msk [vmem:[#allocation6 + $0xd0] sm:$0xff] %vm1728, %v1685
        %1756 = vst.msk [vmem:[#allocation6 + $0xd8] sm:$0xff] %vm1728, %v1687
        %1757 = vst.msk [vmem:[#allocation6 + $0xe0] sm:$0xff] %vm1728, %v1689
        %1758 = vst.msk [vmem:[#allocation6 + $0xe8] sm:$0xff] %vm1728, %v1691
        %1759 = vst.msk [vmem:[#allocation6 + $0xf0] sm:$0xff] %vm1728, %v1693
        %1760 = vst.msk [vmem:[#allocation6 + $0xf8] sm:$0xff] %vm1728, %v1695
        %s1761 = scalar_lea.vmem [#allocation2], 96
        %v1762 = vld [vmem:[%s1761] sm:$0xff]
        %v1763 = vld [vmem:[%s1761 + $0x8] sm:$0xff]
        %v1764 = vld [vmem:[%s1761 + $0x18] sm:$0xff]
        %v1765 = vld [vmem:[%s1761 + $0x20] sm:$0xff]
        %v1766 = vld [vmem:[%s1761 + $0x30] sm:$0xff]
        %v1767 = vld [vmem:[%s1761 + $0x38] sm:$0xff]
        %v1768 = vld [vmem:[%s1761 + $0x48] sm:$0xff]
        %v1769 = vld [vmem:[%s1761 + $0x50] sm:$0xff]
        %v1770 = vld [vmem:[%s1761 + $0x60] sm:$0xff]
        %v1771 = vld [vmem:[%s1761 + $0x68] sm:$0xff]
        %v1772 = vld [vmem:[%s1761 + $0x78] sm:$0xff]
        %v1773 = vld [vmem:[%s1761 + $0x80] sm:$0xff]
        %v1774 = vld [vmem:[%s1761 + $0x90] sm:$0xff]
        %v1775 = vld [vmem:[%s1761 + $0x98] sm:$0xff]
        %v1776 = vld [vmem:[%s1761 + $0xa8] sm:$0xff]
        %v1777 = vld [vmem:[%s1761 + $0xb0] sm:$0xff]
        %v1778 = vld [vmem:[%s1761 + $0xc0] sm:$0xff]
        %v1779 = vld [vmem:[%s1761 + $0xc8] sm:$0xff]
        %v1780 = vld [vmem:[%s1761 + $0xd8] sm:$0xff]
        %v1781 = vld [vmem:[%s1761 + $0xe0] sm:$0xff]
        %v1782 = vld [vmem:[%s1761 + $0xf0] sm:$0xff]
        %v1783 = vld [vmem:[%s1761 + $0xf8] sm:$0xff]
        %v1784 = vld [vmem:[%s1761 + $0x108] sm:$0xff]
        %v1785 = vld [vmem:[%s1761 + $0x110] sm:$0xff]
        %v1786 = vld [vmem:[%s1761 + $0x120] sm:$0xff]
        %v1787 = vld [vmem:[%s1761 + $0x128] sm:$0xff]
        %v1788 = vld [vmem:[%s1761 + $0x138] sm:$0xff]
        %v1789 = vld [vmem:[%s1761 + $0x140] sm:$0xff]
        %v1790 = vld [vmem:[%s1761 + $0x150] sm:$0xff]
        %v1791 = vld [vmem:[%s1761 + $0x158] sm:$0xff]
        %v1792 = vld [vmem:[%s1761 + $0x168] sm:$0xff]
        %v1793 = vld [vmem:[%s1761 + $0x170] sm:$0xff]
        %1826 = vrot.lane.b32.xlu0 %v1762, 48
        %v1827 = vpop.permute.xlu0 %1826
        %1828 = vrot.lane.b32.xlu0 %v1763, 48
        %v1829 = vpop.permute.xlu0 %1828
        %1830 = vrot.lane.b32.xlu0 %v1764, 48
        %v1831 = vpop.permute.xlu0 %1830
        %1832 = vrot.lane.b32.xlu0 %v1765, 48
        %v1833 = vpop.permute.xlu0 %1832
        %1834 = vrot.lane.b32.xlu0 %v1766, 48
        %v1835 = vpop.permute.xlu0 %1834
        %1836 = vrot.lane.b32.xlu0 %v1767, 48
        %v1837 = vpop.permute.xlu0 %1836
        %1838 = vrot.lane.b32.xlu0 %v1768, 48
        %v1839 = vpop.permute.xlu0 %1838
        %1840 = vrot.lane.b32.xlu0 %v1769, 48
        %v1841 = vpop.permute.xlu0 %1840
        %1842 = vrot.lane.b32.xlu0 %v1770, 48
        %v1843 = vpop.permute.xlu0 %1842
        %1844 = vrot.lane.b32.xlu0 %v1771, 48
        %v1845 = vpop.permute.xlu0 %1844
        %1846 = vrot.lane.b32.xlu0 %v1772, 48
        %v1847 = vpop.permute.xlu0 %1846
        %1848 = vrot.lane.b32.xlu0 %v1773, 48
        %v1849 = vpop.permute.xlu0 %1848
        %1850 = vrot.lane.b32.xlu0 %v1774, 48
        %v1851 = vpop.permute.xlu0 %1850
        %1852 = vrot.lane.b32.xlu0 %v1775, 48
        %v1853 = vpop.permute.xlu0 %1852
        %1854 = vrot.lane.b32.xlu0 %v1776, 48
        %v1855 = vpop.permute.xlu0 %1854
        %1856 = vrot.lane.b32.xlu0 %v1777, 48
        %v1857 = vpop.permute.xlu0 %1856
        %1858 = vrot.lane.b32.xlu0 %v1778, 48
        %v1859 = vpop.permute.xlu0 %1858
        %1860 = vrot.lane.b32.xlu0 %v1779, 48
        %v1861 = vpop.permute.xlu0 %1860
        %1862 = vrot.lane.b32.xlu0 %v1780, 48
        %v1863 = vpop.permute.xlu0 %1862
        %1864 = vrot.lane.b32.xlu0 %v1781, 48
        %v1865 = vpop.permute.xlu0 %1864
        %1866 = vrot.lane.b32.xlu0 %v1782, 48
        %v1867 = vpop.permute.xlu0 %1866
        %1868 = vrot.lane.b32.xlu0 %v1783, 48
        %v1869 = vpop.permute.xlu0 %1868
        %1870 = vrot.lane.b32.xlu0 %v1784, 48
        %v1871 = vpop.permute.xlu0 %1870
        %1872 = vrot.lane.b32.xlu0 %v1785, 48
        %v1873 = vpop.permute.xlu0 %1872
        %1874 = vrot.lane.b32.xlu0 %v1786, 48
        %v1875 = vpop.permute.xlu0 %1874
        %1876 = vrot.lane.b32.xlu0 %v1787, 48
        %v1877 = vpop.permute.xlu0 %1876
        %1878 = vrot.lane.b32.xlu0 %v1788, 48
        %v1879 = vpop.permute.xlu0 %1878
        %1880 = vrot.lane.b32.xlu0 %v1789, 48
        %v1881 = vpop.permute.xlu0 %1880
        %1882 = vrot.lane.b32.xlu0 %v1790, 48
        %v1883 = vpop.permute.xlu0 %1882
        %1884 = vrot.lane.b32.xlu0 %v1791, 48
        %v1885 = vpop.permute.xlu0 %1884
        %1886 = vrot.lane.b32.xlu0 %v1792, 48
        %v1887 = vpop.permute.xlu0 %1886
        %1888 = vrot.lane.b32.xlu0 %v1793, 48
        %v1889 = vpop.permute.xlu0 %1888
        %vm1922 = vcmask 458112
        %1923 = vst.msk [vmem:[#allocation6] sm:$0xff] %vm1922, %v1827
        %1924 = vst.msk [vmem:[#allocation6 + $0x8] sm:$0xff] %vm1922, %v1829
        %1925 = vst.msk [vmem:[#allocation6 + $0x10] sm:$0xff] %vm1922, %v1831
        %1926 = vst.msk [vmem:[#allocation6 + $0x18] sm:$0xff] %vm1922, %v1833
        %1927 = vst.msk [vmem:[#allocation6 + $0x20] sm:$0xff] %vm1922, %v1835
        %1928 = vst.msk [vmem:[#allocation6 + $0x28] sm:$0xff] %vm1922, %v1837
        %1929 = vst.msk [vmem:[#allocation6 + $0x30] sm:$0xff] %vm1922, %v1839
        %1930 = vst.msk [vmem:[#allocation6 + $0x38] sm:$0xff] %vm1922, %v1841
        %1931 = vst.msk [vmem:[#allocation6 + $0x40] sm:$0xff] %vm1922, %v1843
        %1932 = vst.msk [vmem:[#allocation6 + $0x48] sm:$0xff] %vm1922, %v1845
        %1933 = vst.msk [vmem:[#allocation6 + $0x50] sm:$0xff] %vm1922, %v1847
        %1934 = vst.msk [vmem:[#allocation6 + $0x58] sm:$0xff] %vm1922, %v1849
        %1935 = vst.msk [vmem:[#allocation6 + $0x60] sm:$0xff] %vm1922, %v1851
        %1936 = vst.msk [vmem:[#allocation6 + $0x68] sm:$0xff] %vm1922, %v1853
        %1937 = vst.msk [vmem:[#allocation6 + $0x70] sm:$0xff] %vm1922, %v1855
        %1938 = vst.msk [vmem:[#allocation6 + $0x78] sm:$0xff] %vm1922, %v1857
        %1939 = vst.msk [vmem:[#allocation6 + $0x80] sm:$0xff] %vm1922, %v1859
        %1940 = vst.msk [vmem:[#allocation6 + $0x88] sm:$0xff] %vm1922, %v1861
        %1941 = vst.msk [vmem:[#allocation6 + $0x90] sm:$0xff] %vm1922, %v1863
        %1942 = vst.msk [vmem:[#allocation6 + $0x98] sm:$0xff] %vm1922, %v1865
        %1943 = vst.msk [vmem:[#allocation6 + $0xa0] sm:$0xff] %vm1922, %v1867
        %1944 = vst.msk [vmem:[#allocation6 + $0xa8] sm:$0xff] %vm1922, %v1869
        %1945 = vst.msk [vmem:[#allocation6 + $0xb0] sm:$0xff] %vm1922, %v1871
        %1946 = vst.msk [vmem:[#allocation6 + $0xb8] sm:$0xff] %vm1922, %v1873
        %1947 = vst.msk [vmem:[#allocation6 + $0xc0] sm:$0xff] %vm1922, %v1875
        %1948 = vst.msk [vmem:[#allocation6 + $0xc8] sm:$0xff] %vm1922, %v1877
        %1949 = vst.msk [vmem:[#allocation6 + $0xd0] sm:$0xff] %vm1922, %v1879
        %1950 = vst.msk [vmem:[#allocation6 + $0xd8] sm:$0xff] %vm1922, %v1881
        %1951 = vst.msk [vmem:[#allocation6 + $0xe0] sm:$0xff] %vm1922, %v1883
        %1952 = vst.msk [vmem:[#allocation6 + $0xe8] sm:$0xff] %vm1922, %v1885
        %1953 = vst.msk [vmem:[#allocation6 + $0xf0] sm:$0xff] %vm1922, %v1887
        %1954 = vst.msk [vmem:[#allocation6 + $0xf8] sm:$0xff] %vm1922, %v1889
        %v1955 = vld [vmem:[%s1761 + $0x2] sm:$0xff]
        %v1956 = vld [vmem:[%s1761 + $0xa] sm:$0xff]
        %v1957 = vld [vmem:[%s1761 + $0x1a] sm:$0xff]
        %v1958 = vld [vmem:[%s1761 + $0x22] sm:$0xff]
        %v1959 = vld [vmem:[%s1761 + $0x32] sm:$0xff]
        %v1960 = vld [vmem:[%s1761 + $0x3a] sm:$0xff]
        %v1961 = vld [vmem:[%s1761 + $0x4a] sm:$0xff]
        %v1962 = vld [vmem:[%s1761 + $0x52] sm:$0xff]
        %v1963 = vld [vmem:[%s1761 + $0x62] sm:$0xff]
        %v1964 = vld [vmem:[%s1761 + $0x6a] sm:$0xff]
        %v1965 = vld [vmem:[%s1761 + $0x7a] sm:$0xff]
        %v1966 = vld [vmem:[%s1761 + $0x82] sm:$0xff]
        %v1967 = vld [vmem:[%s1761 + $0x92] sm:$0xff]
        %v1968 = vld [vmem:[%s1761 + $0x9a] sm:$0xff]
        %v1969 = vld [vmem:[%s1761 + $0xaa] sm:$0xff]
        %v1970 = vld [vmem:[%s1761 + $0xb2] sm:$0xff]
        %v1971 = vld [vmem:[%s1761 + $0xc2] sm:$0xff]
        %v1972 = vld [vmem:[%s1761 + $0xca] sm:$0xff]
        %v1973 = vld [vmem:[%s1761 + $0xda] sm:$0xff]
        %v1974 = vld [vmem:[%s1761 + $0xe2] sm:$0xff]
        %v1975 = vld [vmem:[%s1761 + $0xf2] sm:$0xff]
        %v1976 = vld [vmem:[%s1761 + $0xfa] sm:$0xff]
        %v1977 = vld [vmem:[%s1761 + $0x10a] sm:$0xff]
        %v1978 = vld [vmem:[%s1761 + $0x112] sm:$0xff]
        %v1979 = vld [vmem:[%s1761 + $0x122] sm:$0xff]
        %v1980 = vld [vmem:[%s1761 + $0x12a] sm:$0xff]
        %v1981 = vld [vmem:[%s1761 + $0x13a] sm:$0xff]
        %v1982 = vld [vmem:[%s1761 + $0x142] sm:$0xff]
        %v1983 = vld [vmem:[%s1761 + $0x152] sm:$0xff]
        %v1984 = vld [vmem:[%s1761 + $0x15a] sm:$0xff]
        %v1985 = vld [vmem:[%s1761 + $0x16a] sm:$0xff]
        %v1986 = vld [vmem:[%s1761 + $0x172] sm:$0xff]
        %2019 = vrot.lane.b32.xlu0 %v1955, 56
        %v2020 = vpop.permute.xlu0 %2019
        %2021 = vrot.lane.b32.xlu0 %v1956, 56
        %v2022 = vpop.permute.xlu0 %2021
        %2023 = vrot.lane.b32.xlu0 %v1957, 56
        %v2024 = vpop.permute.xlu0 %2023
        %2025 = vrot.lane.b32.xlu0 %v1958, 56
        %v2026 = vpop.permute.xlu0 %2025
        %2027 = vrot.lane.b32.xlu0 %v1959, 56
        %v2028 = vpop.permute.xlu0 %2027
        %2029 = vrot.lane.b32.xlu0 %v1960, 56
        %v2030 = vpop.permute.xlu0 %2029
        %2031 = vrot.lane.b32.xlu0 %v1961, 56
        %v2032 = vpop.permute.xlu0 %2031
        %2033 = vrot.lane.b32.xlu0 %v1962, 56
        %v2034 = vpop.permute.xlu0 %2033
        %2035 = vrot.lane.b32.xlu0 %v1963, 56
        %v2036 = vpop.permute.xlu0 %2035
        %2037 = vrot.lane.b32.xlu0 %v1964, 56
        %v2038 = vpop.permute.xlu0 %2037
        %2039 = vrot.lane.b32.xlu0 %v1965, 56
        %v2040 = vpop.permute.xlu0 %2039
        %2041 = vrot.lane.b32.xlu0 %v1966, 56
        %v2042 = vpop.permute.xlu0 %2041
        %2043 = vrot.lane.b32.xlu0 %v1967, 56
        %v2044 = vpop.permute.xlu0 %2043
        %2045 = vrot.lane.b32.xlu0 %v1968, 56
        %v2046 = vpop.permute.xlu0 %2045
        %2047 = vrot.lane.b32.xlu0 %v1969, 56
        %v2048 = vpop.permute.xlu0 %2047
        %2049 = vrot.lane.b32.xlu0 %v1970, 56
        %v2050 = vpop.permute.xlu0 %2049
        %2051 = vrot.lane.b32.xlu0 %v1971, 56
        %v2052 = vpop.permute.xlu0 %2051
        %2053 = vrot.lane.b32.xlu0 %v1972, 56
        %v2054 = vpop.permute.xlu0 %2053
        %2055 = vrot.lane.b32.xlu0 %v1973, 56
        %v2056 = vpop.permute.xlu0 %2055
        %2057 = vrot.lane.b32.xlu0 %v1974, 56
        %v2058 = vpop.permute.xlu0 %2057
        %2059 = vrot.lane.b32.xlu0 %v1975, 56
        %v2060 = vpop.permute.xlu0 %2059
        %2061 = vrot.lane.b32.xlu0 %v1976, 56
        %v2062 = vpop.permute.xlu0 %2061
        %2063 = vrot.lane.b32.xlu0 %v1977, 56
        %v2064 = vpop.permute.xlu0 %2063
        %2065 = vrot.lane.b32.xlu0 %v1978, 56
        %v2066 = vpop.permute.xlu0 %2065
        %2067 = vrot.lane.b32.xlu0 %v1979, 56
        %v2068 = vpop.permute.xlu0 %2067
        %2069 = vrot.lane.b32.xlu0 %v1980, 56
        %v2070 = vpop.permute.xlu0 %2069
        %2071 = vrot.lane.b32.xlu0 %v1981, 56
        %v2072 = vpop.permute.xlu0 %2071
        %2073 = vrot.lane.b32.xlu0 %v1982, 56
        %v2074 = vpop.permute.xlu0 %2073
        %2075 = vrot.lane.b32.xlu0 %v1983, 56
        %v2076 = vpop.permute.xlu0 %2075
        %2077 = vrot.lane.b32.xlu0 %v1984, 56
        %v2078 = vpop.permute.xlu0 %2077
        %2079 = vrot.lane.b32.xlu0 %v1985, 56
        %v2080 = vpop.permute.xlu0 %2079
        %2081 = vrot.lane.b32.xlu0 %v1986, 56
        %v2082 = vpop.permute.xlu0 %2081
        %vm2115 = vcmask 523712
        %2116 = vst.msk [vmem:[#allocation6] sm:$0xff] %vm2115, %v2020
        %2117 = vst.msk [vmem:[#allocation6 + $0x8] sm:$0xff] %vm2115, %v2022
        %2118 = vst.msk [vmem:[#allocation6 + $0x10] sm:$0xff] %vm2115, %v2024
        %2119 = vst.msk [vmem:[#allocation6 + $0x18] sm:$0xff] %vm2115, %v2026
        %2120 = vst.msk [vmem:[#allocation6 + $0x20] sm:$0xff] %vm2115, %v2028
        %2121 = vst.msk [vmem:[#allocation6 + $0x28] sm:$0xff] %vm2115, %v2030
        %2122 = vst.msk [vmem:[#allocation6 + $0x30] sm:$0xff] %vm2115, %v2032
        %2123 = vst.msk [vmem:[#allocation6 + $0x38] sm:$0xff] %vm2115, %v2034
        %2124 = vst.msk [vmem:[#allocation6 + $0x40] sm:$0xff] %vm2115, %v2036
        %2125 = vst.msk [vmem:[#allocation6 + $0x48] sm:$0xff] %vm2115, %v2038
        %2126 = vst.msk [vmem:[#allocation6 + $0x50] sm:$0xff] %vm2115, %v2040
        %2127 = vst.msk [vmem:[#allocation6 + $0x58] sm:$0xff] %vm2115, %v2042
        %2128 = vst.msk [vmem:[#allocation6 + $0x60] sm:$0xff] %vm2115, %v2044
        %2129 = vst.msk [vmem:[#allocation6 + $0x68] sm:$0xff] %vm2115, %v2046
        %2130 = vst.msk [vmem:[#allocation6 + $0x70] sm:$0xff] %vm2115, %v2048
        %2131 = vst.msk [vmem:[#allocation6 + $0x78] sm:$0xff] %vm2115, %v2050
        %2132 = vst.msk [vmem:[#allocation6 + $0x80] sm:$0xff] %vm2115, %v2052
        %2133 = vst.msk [vmem:[#allocation6 + $0x88] sm:$0xff] %vm2115, %v2054
        %2134 = vst.msk [vmem:[#allocation6 + $0x90] sm:$0xff] %vm2115, %v2056
        %2135 = vst.msk [vmem:[#allocation6 + $0x98] sm:$0xff] %vm2115, %v2058
        %2136 = vst.msk [vmem:[#allocation6 + $0xa0] sm:$0xff] %vm2115, %v2060
        %2137 = vst.msk [vmem:[#allocation6 + $0xa8] sm:$0xff] %vm2115, %v2062
        %2138 = vst.msk [vmem:[#allocation6 + $0xb0] sm:$0xff] %vm2115, %v2064
        %2139 = vst.msk [vmem:[#allocation6 + $0xb8] sm:$0xff] %vm2115, %v2066
        %2140 = vst.msk [vmem:[#allocation6 + $0xc0] sm:$0xff] %vm2115, %v2068
        %2141 = vst.msk [vmem:[#allocation6 + $0xc8] sm:$0xff] %vm2115, %v2070
        %2142 = vst.msk [vmem:[#allocation6 + $0xd0] sm:$0xff] %vm2115, %v2072
        %2143 = vst.msk [vmem:[#allocation6 + $0xd8] sm:$0xff] %vm2115, %v2074
        %2144 = vst.msk [vmem:[#allocation6 + $0xe0] sm:$0xff] %vm2115, %v2076
        %2145 = vst.msk [vmem:[#allocation6 + $0xe8] sm:$0xff] %vm2115, %v2078
        %2146 = vst.msk [vmem:[#allocation6 + $0xf0] sm:$0xff] %vm2115, %v2080
        %2147 = vst.msk [vmem:[#allocation6 + $0xf8] sm:$0xff] %vm2115, %v2082
        %v2148 = vld [vmem:[%s1761 + $0x4] sm:$0xff]
        %v2149 = vld [vmem:[%s1761 + $0xc] sm:$0xff]
        %v2150 = vld [vmem:[%s1761 + $0x1c] sm:$0xff]
        %v2151 = vld [vmem:[%s1761 + $0x24] sm:$0xff]
        %v2152 = vld [vmem:[%s1761 + $0x34] sm:$0xff]
        %v2153 = vld [vmem:[%s1761 + $0x3c] sm:$0xff]
        %v2154 = vld [vmem:[%s1761 + $0x4c] sm:$0xff]
        %v2155 = vld [vmem:[%s1761 + $0x54] sm:$0xff]
        %v2156 = vld [vmem:[%s1761 + $0x64] sm:$0xff]
        %v2157 = vld [vmem:[%s1761 + $0x6c] sm:$0xff]
        %v2158 = vld [vmem:[%s1761 + $0x7c] sm:$0xff]
        %v2159 = vld [vmem:[%s1761 + $0x84] sm:$0xff]
        %v2160 = vld [vmem:[%s1761 + $0x94] sm:$0xff]
        %v2161 = vld [vmem:[%s1761 + $0x9c] sm:$0xff]
        %v2162 = vld [vmem:[%s1761 + $0xac] sm:$0xff]
        %v2163 = vld [vmem:[%s1761 + $0xb4] sm:$0xff]
        %v2164 = vld [vmem:[%s1761 + $0xc4] sm:$0xff]
        %v2165 = vld [vmem:[%s1761 + $0xcc] sm:$0xff]
        %v2166 = vld [vmem:[%s1761 + $0xdc] sm:$0xff]
        %v2167 = vld [vmem:[%s1761 + $0xe4] sm:$0xff]
        %v2168 = vld [vmem:[%s1761 + $0xf4] sm:$0xff]
        %v2169 = vld [vmem:[%s1761 + $0xfc] sm:$0xff]
        %v2170 = vld [vmem:[%s1761 + $0x10c] sm:$0xff]
        %v2171 = vld [vmem:[%s1761 + $0x114] sm:$0xff]
        %v2172 = vld [vmem:[%s1761 + $0x124] sm:$0xff]
        %v2173 = vld [vmem:[%s1761 + $0x12c] sm:$0xff]
        %v2174 = vld [vmem:[%s1761 + $0x13c] sm:$0xff]
        %v2175 = vld [vmem:[%s1761 + $0x144] sm:$0xff]
        %v2176 = vld [vmem:[%s1761 + $0x154] sm:$0xff]
        %v2177 = vld [vmem:[%s1761 + $0x15c] sm:$0xff]
        %v2178 = vld [vmem:[%s1761 + $0x16c] sm:$0xff]
        %v2179 = vld [vmem:[%s1761 + $0x174] sm:$0xff]
        %2212 = vrot.lane.b32.xlu0 %v2148, 64
        %v2213 = vpop.permute.xlu0 %2212
        %2214 = vrot.lane.b32.xlu0 %v2149, 64
        %v2215 = vpop.permute.xlu0 %2214
        %2216 = vrot.lane.b32.xlu0 %v2150, 64
        %v2217 = vpop.permute.xlu0 %2216
        %2218 = vrot.lane.b32.xlu0 %v2151, 64
        %v2219 = vpop.permute.xlu0 %2218
        %2220 = vrot.lane.b32.xlu0 %v2152, 64
        %v2221 = vpop.permute.xlu0 %2220
        %2222 = vrot.lane.b32.xlu0 %v2153, 64
        %v2223 = vpop.permute.xlu0 %2222
        %2224 = vrot.lane.b32.xlu0 %v2154, 64
        %v2225 = vpop.permute.xlu0 %2224
        %2226 = vrot.lane.b32.xlu0 %v2155, 64
        %v2227 = vpop.permute.xlu0 %2226
        %2228 = vrot.lane.b32.xlu0 %v2156, 64
        %v2229 = vpop.permute.xlu0 %2228
        %2230 = vrot.lane.b32.xlu0 %v2157, 64
        %v2231 = vpop.permute.xlu0 %2230
        %2232 = vrot.lane.b32.xlu0 %v2158, 64
        %v2233 = vpop.permute.xlu0 %2232
        %2234 = vrot.lane.b32.xlu0 %v2159, 64
        %v2235 = vpop.permute.xlu0 %2234
        %2236 = vrot.lane.b32.xlu0 %v2160, 64
        %v2237 = vpop.permute.xlu0 %2236
        %2238 = vrot.lane.b32.xlu0 %v2161, 64
        %v2239 = vpop.permute.xlu0 %2238
        %2240 = vrot.lane.b32.xlu0 %v2162, 64
        %v2241 = vpop.permute.xlu0 %2240
        %2242 = vrot.lane.b32.xlu0 %v2163, 64
        %v2243 = vpop.permute.xlu0 %2242
        %2244 = vrot.lane.b32.xlu0 %v2164, 64
        %v2245 = vpop.permute.xlu0 %2244
        %2246 = vrot.lane.b32.xlu0 %v2165, 64
        %v2247 = vpop.permute.xlu0 %2246
        %2248 = vrot.lane.b32.xlu0 %v2166, 64
        %v2249 = vpop.permute.xlu0 %2248
        %2250 = vrot.lane.b32.xlu0 %v2167, 64
        %v2251 = vpop.permute.xlu0 %2250
        %2252 = vrot.lane.b32.xlu0 %v2168, 64
        %v2253 = vpop.permute.xlu0 %2252
        %2254 = vrot.lane.b32.xlu0 %v2169, 64
        %v2255 = vpop.permute.xlu0 %2254
        %2256 = vrot.lane.b32.xlu0 %v2170, 64
        %v2257 = vpop.permute.xlu0 %2256
        %2258 = vrot.lane.b32.xlu0 %v2171, 64
        %v2259 = vpop.permute.xlu0 %2258
        %2260 = vrot.lane.b32.xlu0 %v2172, 64
        %v2261 = vpop.permute.xlu0 %2260
        %2262 = vrot.lane.b32.xlu0 %v2173, 64
        %v2263 = vpop.permute.xlu0 %2262
        %2264 = vrot.lane.b32.xlu0 %v2174, 64
        %v2265 = vpop.permute.xlu0 %2264
        %2266 = vrot.lane.b32.xlu0 %v2175, 64
        %v2267 = vpop.permute.xlu0 %2266
        %2268 = vrot.lane.b32.xlu0 %v2176, 64
        %v2269 = vpop.permute.xlu0 %2268
        %2270 = vrot.lane.b32.xlu0 %v2177, 64
        %v2271 = vpop.permute.xlu0 %2270
        %2272 = vrot.lane.b32.xlu0 %v2178, 64
        %v2273 = vpop.permute.xlu0 %2272
        %2274 = vrot.lane.b32.xlu0 %v2179, 64
        %v2275 = vpop.permute.xlu0 %2274
        %vm2308 = vcmask 589312
        %2309 = vst.msk [vmem:[#allocation6] sm:$0xff] %vm2308, %v2213
        %2310 = vst.msk [vmem:[#allocation6 + $0x8] sm:$0xff] %vm2308, %v2215
        %2311 = vst.msk [vmem:[#allocation6 + $0x10] sm:$0xff] %vm2308, %v2217
        %2312 = vst.msk [vmem:[#allocation6 + $0x18] sm:$0xff] %vm2308, %v2219
        %2313 = vst.msk [vmem:[#allocation6 + $0x20] sm:$0xff] %vm2308, %v2221
        %2314 = vst.msk [vmem:[#allocation6 + $0x28] sm:$0xff] %vm2308, %v2223
        %2315 = vst.msk [vmem:[#allocation6 + $0x30] sm:$0xff] %vm2308, %v2225
        %2316 = vst.msk [vmem:[#allocation6 + $0x38] sm:$0xff] %vm2308, %v2227
        %2317 = vst.msk [vmem:[#allocation6 + $0x40] sm:$0xff] %vm2308, %v2229
        %2318 = vst.msk [vmem:[#allocation6 + $0x48] sm:$0xff] %vm2308, %v2231
        %2319 = vst.msk [vmem:[#allocation6 + $0x50] sm:$0xff] %vm2308, %v2233
        %2320 = vst.msk [vmem:[#allocation6 + $0x58] sm:$0xff] %vm2308, %v2235
        %2321 = vst.msk [vmem:[#allocation6 + $0x60] sm:$0xff] %vm2308, %v2237
        %2322 = vst.msk [vmem:[#allocation6 + $0x68] sm:$0xff] %vm2308, %v2239
        %2323 = vst.msk [vmem:[#allocation6 + $0x70] sm:$0xff] %vm2308, %v2241
        %2324 = vst.msk [vmem:[#allocation6 + $0x78] sm:$0xff] %vm2308, %v2243
        %2325 = vst.msk [vmem:[#allocation6 + $0x80] sm:$0xff] %vm2308, %v2245
        %2326 = vst.msk [vmem:[#allocation6 + $0x88] sm:$0xff] %vm2308, %v2247
        %2327 = vst.msk [vmem:[#allocation6 + $0x90] sm:$0xff] %vm2308, %v2249
        %2328 = vst.msk [vmem:[#allocation6 + $0x98] sm:$0xff] %vm2308, %v2251
        %2329 = vst.msk [vmem:[#allocation6 + $0xa0] sm:$0xff] %vm2308, %v2253
        %2330 = vst.msk [vmem:[#allocation6 + $0xa8] sm:$0xff] %vm2308, %v2255
        %2331 = vst.msk [vmem:[#allocation6 + $0xb0] sm:$0xff] %vm2308, %v2257
        %2332 = vst.msk [vmem:[#allocation6 + $0xb8] sm:$0xff] %vm2308, %v2259
        %2333 = vst.msk [vmem:[#allocation6 + $0xc0] sm:$0xff] %vm2308, %v2261
        %2334 = vst.msk [vmem:[#allocation6 + $0xc8] sm:$0xff] %vm2308, %v2263
        %2335 = vst.msk [vmem:[#allocation6 + $0xd0] sm:$0xff] %vm2308, %v2265
        %2336 = vst.msk [vmem:[#allocation6 + $0xd8] sm:$0xff] %vm2308, %v2267
        %2337 = vst.msk [vmem:[#allocation6 + $0xe0] sm:$0xff] %vm2308, %v2269
        %2338 = vst.msk [vmem:[#allocation6 + $0xe8] sm:$0xff] %vm2308, %v2271
        %2339 = vst.msk [vmem:[#allocation6 + $0xf0] sm:$0xff] %vm2308, %v2273
        %2340 = vst.msk [vmem:[#allocation6 + $0xf8] sm:$0xff] %vm2308, %v2275
        %v2341 = vld [vmem:[#allocation6] sm:$0xff]
        %v2342 = vld [vmem:[#allocation6 + $0x8] sm:$0xff]
        %v2343 = vld [vmem:[#allocation6 + $0x10] sm:$0xff]
        %v2344 = vld [vmem:[#allocation6 + $0x18] sm:$0xff]
        %v2345 = vld [vmem:[#allocation6 + $0x20] sm:$0xff]
        %v2346 = vld [vmem:[#allocation6 + $0x28] sm:$0xff]
        %v2347 = vld [vmem:[#allocation6 + $0x30] sm:$0xff]
        %v2348 = vld [vmem:[#allocation6 + $0x38] sm:$0xff]
        %v2349 = vld [vmem:[#allocation6 + $0x40] sm:$0xff]
        %v2350 = vld [vmem:[#allocation6 + $0x48] sm:$0xff]
        %v2351 = vld [vmem:[#allocation6 + $0x50] sm:$0xff]
        %v2352 = vld [vmem:[#allocation6 + $0x58] sm:$0xff]
        %v2353 = vld [vmem:[#allocation6 + $0x60] sm:$0xff]
        %v2354 = vld [vmem:[#allocation6 + $0x68] sm:$0xff]
        %v2355 = vld [vmem:[#allocation6 + $0x70] sm:$0xff]
        %v2356 = vld [vmem:[#allocation6 + $0x78] sm:$0xff]
        %v2357 = vld [vmem:[#allocation6 + $0x80] sm:$0xff]
        %v2358 = vld [vmem:[#allocation6 + $0x88] sm:$0xff]
        %v2359 = vld [vmem:[#allocation6 + $0x90] sm:$0xff]
        %v2360 = vld [vmem:[#allocation6 + $0x98] sm:$0xff]
        %v2361 = vld [vmem:[#allocation6 + $0xa0] sm:$0xff]
        %v2362 = vld [vmem:[#allocation6 + $0xa8] sm:$0xff]
        %v2363 = vld [vmem:[#allocation6 + $0xb0] sm:$0xff]
        %v2364 = vld [vmem:[#allocation6 + $0xb8] sm:$0xff]
        %v2365 = vld [vmem:[#allocation6 + $0xc0] sm:$0xff]
        %v2366 = vld [vmem:[#allocation6 + $0xc8] sm:$0xff]
        %v2367 = vld [vmem:[#allocation6 + $0xd0] sm:$0xff]
        %v2368 = vld [vmem:[#allocation6 + $0xd8] sm:$0xff]
        %v2369 = vld [vmem:[#allocation6 + $0xe0] sm:$0xff]
        %v2370 = vld [vmem:[#allocation6 + $0xe8] sm:$0xff]
        %v2371 = vld [vmem:[#allocation6 + $0xf0] sm:$0xff]
        %v2372 = vld [vmem:[#allocation6 + $0xf8] sm:$0xff]
        %v2373 = vld [vmem:[%s3] sm:$0xff]
        %v2374 = vld [vmem:[%s3 + $0x8] sm:$0xff]
        %v2375 = vld [vmem:[%s3 + $0x10] sm:$0xff]
        %v2376 = vld [vmem:[%s3 + $0x18] sm:$0xff]
        %v2377 = vld [vmem:[%s3 + $0x20] sm:$0xff]
        %v2378 = vld [vmem:[%s3 + $0x28] sm:$0xff]
        %v2379 = vld [vmem:[%s3 + $0x30] sm:$0xff]
        %v2380 = vld [vmem:[%s3 + $0x38] sm:$0xff]
        %v2381 = vld [vmem:[%s3 + $0x40] sm:$0xff]
        %v2382 = vld [vmem:[%s4] sm:$0x1]
        %v2383 = vlaneseq
        %v2384 = vshrl.u32 %v2383, 7
        %v2385 = vsub.s32 0, %v2384
        %v2386 = vrot.slane %v2382, %v2385
        %vm2387 = vcmask 588800
        %v2389 = vsel %vm2387, %v2341, 0
        %v2392 = vsel %vm2387, %v2342, 0
        %v2395 = vsel %vm2387, %v2343, 0
        %v2398 = vsel %vm2387, %v2344, 0
        %v2401 = vsel %vm2387, %v2345, 0
        %v2404 = vsel %vm2387, %v2346, 0
        %v2407 = vsel %vm2387, %v2347, 0
        %v2410 = vsel %vm2387, %v2348, 0
        %v2413 = vsel %vm2387, %v2349, 0
        %v2416 = vsel %vm2387, %v2350, 0
        %v2419 = vsel %vm2387, %v2351, 0
        %v2422 = vsel %vm2387, %v2352, 0
        %v2425 = vsel %vm2387, %v2353, 0
        %v2428 = vsel %vm2387, %v2354, 0
        %v2431 = vsel %vm2387, %v2355, 0
        %v2434 = vsel %vm2387, %v2356, 0
        %v2437 = vsel %vm2387, %v2357, 0
        %v2440 = vsel %vm2387, %v2358, 0
        %v2443 = vsel %vm2387, %v2359, 0
        %v2446 = vsel %vm2387, %v2360, 0
        %v2449 = vsel %vm2387, %v2361, 0
        %v2452 = vsel %vm2387, %v2362, 0
        %v2455 = vsel %vm2387, %v2363, 0
        %v2458 = vsel %vm2387, %v2364, 0
        %v2461 = vsel %vm2387, %v2365, 0
        %v2464 = vsel %vm2387, %v2366, 0
        %v2467 = vsel %vm2387, %v2367, 0
        %v2470 = vsel %vm2387, %v2368, 0
        %v2473 = vsel %vm2387, %v2369, 0
        %v2476 = vsel %vm2387, %v2370, 0
        %v2479 = vsel %vm2387, %v2371, 0
        %v2482 = vsel %vm2387, %v2372, 0
        %2484 = vmatprep.subr.mxu0 0.0
        %2485 = vmatpush1.msra.mxu0 %v2373
        %2486 = vmatprep.subr.mxu0 0.0
        %2487 = vmatpush1.msra.mxu0 %v2374
        %2488 = vmatprep.subr.mxu0 0.0
        %2489 = vmatpush1.msra.mxu0 %v2375
        %2490 = vmatprep.subr.mxu0 0.0
        %2491 = vmatpush1.msra.mxu0 %v2376
        %2492 = vmatprep.subr.mxu0 0.0
        %2493 = vmatpush1.msra.mxu0 %v2377
        %2494 = vmatprep.subr.mxu0 0.0
        %2495 = vmatpush1.msra.mxu0 %v2378
        %2496 = vmatprep.subr.mxu0 0.0
        %2497 = vmatpush1.msra.mxu0 %v2379
        %2498 = vmatprep.subr.mxu0 0.0
        %2499 = vmatpush1.msra.mxu0 %v2380
        %2500 = vmatprep.subr.mxu0 0.0
        %2501 = vmatpush1.msra.mxu0 %v2381
        %2502 = vmatprep.subr.mxu0 0.0
        %2503 = vmatpush1.msra.mxu0 0.0
        %2504 = vmatprep.subr.mxu0 0.0
        %2505 = vmatpush1.msra.mxu0 0.0
        %2506 = vmatprep.subr.mxu0 0.0
        %2507 = vmatpush1.msra.mxu0 0.0
        %2508 = vmatprep.subr.mxu0 0.0
        %2509 = vmatpush1.msra.mxu0 0.0
        %2510 = vmatprep.subr.mxu0 0.0
        %2511 = vmatpush1.msra.mxu0 0.0
        %2512 = vmatprep.subr.mxu0 0.0
        %2513 = vmatpush1.msra.mxu0 0.0
        %2514 = vmatprep.subr.mxu0 0.0
        %2515 = vmatpush1.msra.mxu0 0.0
        %2516 = vmatprep.subr.mxu0 0.0
        %2517 = vmatpush1.msra.mxu0 0.0
        %2518 = vmatprep.subr.mxu0 0.0
        %2519 = vmatpush1.msra.mxu0 0.0
        %2520 = vmatprep.subr.mxu0 0.0
        %2521 = vmatpush1.msra.mxu0 0.0
        %2522 = vmatprep.subr.mxu0 0.0
        %2523 = vmatpush1.msra.mxu0 0.0
        %2524 = vmatprep.subr.mxu0 0.0
        %2525 = vmatpush1.msra.mxu0 0.0
        %2526 = vmatprep.subr.mxu0 0.0
        %2527 = vmatpush1.msra.mxu0 0.0
        %2528 = vmatprep.subr.mxu0 0.0
        %2529 = vmatpush1.msra.mxu0 0.0
        %2530 = vmatprep.subr.mxu0 0.0
        %2531 = vmatpush1.msra.mxu0 0.0
        %2532 = vmatprep.subr.mxu0 0.0
        %2533 = vmatpush1.msra.mxu0 0.0
        %2534 = vmatprep.subr.mxu0 0.0
        %2535 = vmatpush1.msra.mxu0 0.0
        %2536 = vmatprep.subr.mxu0 0.0
        %2537 = vmatpush1.msra.mxu0 0.0
        %2538 = vmatprep.subr.mxu0 0.0
        %2539 = vmatpush1.msra.mxu0 0.0
        %2540 = vmatprep.subr.mxu0 0.0
        %2541 = vmatpush1.msra.mxu0 0.0
        %2542 = vmatprep.subr.mxu0 0.0
        %2543 = vmatpush1.msra.mxu0 0.0
        %2544 = vmatprep.subr.mxu0 0.0
        %2545 = vmatpush1.msra.mxu0 0.0
        %2546 = vmatprep.subr.mxu0 0.0
        %2547 = vmatpush1.msra.mxu0 0.0
        %2548 = vmatprep.mubr.f32.mxu0 0.0
        %2549 = vmatmul.mubr.f32.gmra.mrb[0].mxu0 %v2389
        %v2550 = vpop.f32.mrb[0].mxu0
        %v2551 = vadd.f32 %v2386, %v2550
        %v2552 = vpop.f32.mrb[0].mxu0
        %2553 = vmatprep.mubr.f32.mxu0 0.0
        %2554 = vmatmul.mubr.f32.gmra.mrb[0].mxu0 %v2392
        %v2555 = vpop.f32.mrb[0].mxu0
        %v2556 = vadd.f32 %v2386, %v2555
        %v2557 = vpop.f32.mrb[0].mxu0
        %2558 = vmatprep.mubr.f32.mxu0 0.0
        %2559 = vmatmul.mubr.f32.gmra.mrb[0].mxu0 %v2395
        %v2560 = vpop.f32.mrb[0].mxu0
        %v2561 = vadd.f32 %v2386, %v2560
        %v2562 = vpop.f32.mrb[0].mxu0
        %2563 = vmatprep.mubr.f32.mxu0 0.0
        %2564 = vmatmul.mubr.f32.gmra.mrb[0].mxu0 %v2398
        %v2565 = vpop.f32.mrb[0].mxu0
        %v2566 = vadd.f32 %v2386, %v2565
        %v2567 = vpop.f32.mrb[0].mxu0
        %2568 = vmatprep.mubr.f32.mxu0 0.0
        %2569 = vmatmul.mubr.f32.gmra.mrb[0].mxu0 %v2401
        %v2570 = vpop.f32.mrb[0].mxu0
        %v2571 = vadd.f32 %v2386, %v2570
        %v2572 = vpop.f32.mrb[0].mxu0
        %2573 = vmatprep.mubr.f32.mxu0 0.0
        %2574 = vmatmul.mubr.f32.gmra.mrb[0].mxu0 %v2404
        %v2575 = vpop.f32.mrb[0].mxu0
        %v2576 = vadd.f32 %v2386, %v2575
        %v2577 = vpop.f32.mrb[0].mxu0
        %2578 = vmatprep.mubr.f32.mxu0 0.0
        %2579 = vmatmul.mubr.f32.gmra.mrb[0].mxu0 %v2407
        %v2580 = vpop.f32.mrb[0].mxu0
        %v2581 = vadd.f32 %v2386, %v2580
        %v2582 = vpop.f32.mrb[0].mxu0
        %2583 = vmatprep.mubr.f32.mxu0 0.0
        %2584 = vmatmul.mubr.f32.gmra.mrb[0].mxu0 %v2410
        %v2585 = vpop.f32.mrb[0].mxu0
        %v2586 = vadd.f32 %v2386, %v2585
        %v2587 = vpop.f32.mrb[0].mxu0
        %2588 = vmatprep.mubr.f32.mxu0 0.0
        %2589 = vmatmul.mubr.f32.gmra.mrb[0].mxu0 %v2413
        %v2590 = vpop.f32.mrb[0].mxu0
        %v2591 = vadd.f32 %v2386, %v2590
        %v2592 = vpop.f32.mrb[0].mxu0
        %2593 = vmatprep.mubr.f32.mxu0 0.0
        %2594 = vmatmul.mubr.f32.gmra.mrb[0].mxu0 %v2416
        %v2595 = vpop.f32.mrb[0].mxu0
        %v2596 = vadd.f32 %v2386, %v2595
        %v2597 = vpop.f32.mrb[0].mxu0
        %2598 = vmatprep.mubr.f32.mxu0 0.0
        %2599 = vmatmul.mubr.f32.gmra.mrb[0].mxu0 %v2419
        %v2600 = vpop.f32.mrb[0].mxu0
        %v2601 = vadd.f32 %v2386, %v2600
        %v2602 = vpop.f32.mrb[0].mxu0
        %2603 = vmatprep.mubr.f32.mxu0 0.0
        %2604 = vmatmul.mubr.f32.gmra.mrb[0].mxu0 %v2422
        %v2605 = vpop.f32.mrb[0].mxu0
        %v2606 = vadd.f32 %v2386, %v2605
        %v2607 = vpop.f32.mrb[0].mxu0
        %2608 = vmatprep.mubr.f32.mxu0 0.0
        %2609 = vmatmul.mubr.f32.gmra.mrb[0].mxu0 %v2425
        %v2610 = vpop.f32.mrb[0].mxu0
        %v2611 = vadd.f32 %v2386, %v2610
        %v2612 = vpop.f32.mrb[0].mxu0
        %2613 = vmatprep.mubr.f32.mxu0 0.0
        %2614 = vmatmul.mubr.f32.gmra.mrb[0].mxu0 %v2428
        %v2615 = vpop.f32.mrb[0].mxu0
        %v2616 = vadd.f32 %v2386, %v2615
        %v2617 = vpop.f32.mrb[0].mxu0
        %2618 = vmatprep.mubr.f32.mxu0 0.0
        %2619 = vmatmul.mubr.f32.gmra.mrb[0].mxu0 %v2431
        %v2620 = vpop.f32.mrb[0].mxu0
        %v2621 = vadd.f32 %v2386, %v2620
        %v2622 = vpop.f32.mrb[0].mxu0
        %2623 = vmatprep.mubr.f32.mxu0 0.0
        %2624 = vmatmul.mubr.f32.gmra.mrb[0].mxu0 %v2434
        %v2625 = vpop.f32.mrb[0].mxu0
        %v2626 = vadd.f32 %v2386, %v2625
        %v2627 = vpop.f32.mrb[0].mxu0
        %2628 = vmatprep.mubr.f32.mxu0 0.0
        %2629 = vmatmul.mubr.f32.gmra.mrb[0].mxu0 %v2437
        %v2630 = vpop.f32.mrb[0].mxu0
        %v2631 = vadd.f32 %v2386, %v2630
        %v2632 = vpop.f32.mrb[0].mxu0
        %2633 = vmatprep.mubr.f32.mxu0 0.0
        %2634 = vmatmul.mubr.f32.gmra.mrb[0].mxu0 %v2440
        %v2635 = vpop.f32.mrb[0].mxu0
        %v2636 = vadd.f32 %v2386, %v2635
        %v2637 = vpop.f32.mrb[0].mxu0
        %2638 = vmatprep.mubr.f32.mxu0 0.0
        %2639 = vmatmul.mubr.f32.gmra.mrb[0].mxu0 %v2443
        %v2640 = vpop.f32.mrb[0].mxu0
        %v2641 = vadd.f32 %v2386, %v2640
        %v2642 = vpop.f32.mrb[0].mxu0
        %2643 = vmatprep.mubr.f32.mxu0 0.0
        %2644 = vmatmul.mubr.f32.gmra.mrb[0].mxu0 %v2446
        %v2645 = vpop.f32.mrb[0].mxu0
        %v2646 = vadd.f32 %v2386, %v2645
        %v2647 = vpop.f32.mrb[0].mxu0
        %2648 = vmatprep.mubr.f32.mxu0 0.0
        %2649 = vmatmul.mubr.f32.gmra.mrb[0].mxu0 %v2449
        %v2650 = vpop.f32.mrb[0].mxu0
        %v2651 = vadd.f32 %v2386, %v2650
        %v2652 = vpop.f32.mrb[0].mxu0
        %2653 = vmatprep.mubr.f32.mxu0 0.0
        %2654 = vmatmul.mubr.f32.gmra.mrb[0].mxu0 %v2452
        %v2655 = vpop.f32.mrb[0].mxu0
        %v2656 = vadd.f32 %v2386, %v2655
        %v2657 = vpop.f32.mrb[0].mxu0
        %2658 = vmatprep.mubr.f32.mxu0 0.0
        %2659 = vmatmul.mubr.f32.gmra.mrb[0].mxu0 %v2455
        %v2660 = vpop.f32.mrb[0].mxu0
        %v2661 = vadd.f32 %v2386, %v2660
        %v2662 = vpop.f32.mrb[0].mxu0
        %2663 = vmatprep.mubr.f32.mxu0 0.0
        %2664 = vmatmul.mubr.f32.gmra.mrb[0].mxu0 %v2458
        %v2665 = vpop.f32.mrb[0].mxu0
        %v2666 = vadd.f32 %v2386, %v2665
        %v2667 = vpop.f32.mrb[0].mxu0
        %2668 = vmatprep.mubr.f32.mxu0 0.0
        %2669 = vmatmul.mubr.f32.gmra.mrb[0].mxu0 %v2461
        %v2670 = vpop.f32.mrb[0].mxu0
        %v2671 = vadd.f32 %v2386, %v2670
        %v2672 = vpop.f32.mrb[0].mxu0
        %2673 = vmatprep.mubr.f32.mxu0 0.0
        %2674 = vmatmul.mubr.f32.gmra.mrb[0].mxu0 %v2464
        %v2675 = vpop.f32.mrb[0].mxu0
        %v2676 = vadd.f32 %v2386, %v2675
        %v2677 = vpop.f32.mrb[0].mxu0
        %2678 = vmatprep.mubr.f32.mxu0 0.0
        %2679 = vmatmul.mubr.f32.gmra.mrb[0].mxu0 %v2467
        %v2680 = vpop.f32.mrb[0].mxu0
        %v2681 = vadd.f32 %v2386, %v2680
        %v2682 = vpop.f32.mrb[0].mxu0
        %2683 = vmatprep.mubr.f32.mxu0 0.0
        %2684 = vmatmul.mubr.f32.gmra.mrb[0].mxu0 %v2470
        %v2685 = vpop.f32.mrb[0].mxu0
        %v2686 = vadd.f32 %v2386, %v2685
        %v2687 = vpop.f32.mrb[0].mxu0
        %2688 = vmatprep.mubr.f32.mxu0 0.0
        %2689 = vmatmul.mubr.f32.gmra.mrb[0].mxu0 %v2473
        %v2690 = vpop.f32.mrb[0].mxu0
        %v2691 = vadd.f32 %v2386, %v2690
        %v2692 = vpop.f32.mrb[0].mxu0
        %2693 = vmatprep.mubr.f32.mxu0 0.0
        %2694 = vmatmul.mubr.f32.gmra.mrb[0].mxu0 %v2476
        %v2695 = vpop.f32.mrb[0].mxu0
        %v2696 = vadd.f32 %v2386, %v2695
        %v2697 = vpop.f32.mrb[0].mxu0
        %2698 = vmatprep.mubr.f32.mxu0 0.0
        %2699 = vmatmul.mubr.f32.gmra.mrb[0].mxu0 %v2479
        %v2700 = vpop.f32.mrb[0].mxu0
        %v2701 = vadd.f32 %v2386, %v2700
        %v2702 = vpop.f32.mrb[0].mxu0
        %2703 = vmatprep.mubr.f32.mxu0 0.0
        %2704 = vmatmul.mubr.f32.gmra.mrb[0].mxu0 %v2482
        %v2705 = vpop.f32.mrb[0].mxu0
        %v2706 = vadd.f32 %v2386, %v2705
        %v2707 = vpop.f32.mrb[0].mxu0
        %2708 = vdwg.mxu0
        %v2709 = vld [vmem:[%s5] sm:$0x1]
        %v2710 = vlaneseq
        %v2711 = vshrl.u32 %v2710, 7
        %v2712 = vsub.s32 0, %v2711
        %v2713 = vrot.slane %v2709, %v2712
        %v2714 = vmul.f32 %v2551, %v2713
        %v2715 = vmul.f32 %v2556, %v2713
        %v2716 = vmul.f32 %v2561, %v2713
        %v2717 = vmul.f32 %v2566, %v2713
        %v2718 = vmul.f32 %v2571, %v2713
        %v2719 = vmul.f32 %v2576, %v2713
        %v2720 = vmul.f32 %v2581, %v2713
        %v2721 = vmul.f32 %v2586, %v2713
        %v2722 = vmul.f32 %v2591, %v2713
        %v2723 = vmul.f32 %v2596, %v2713
        %v2724 = vmul.f32 %v2601, %v2713
        %v2725 = vmul.f32 %v2606, %v2713
        %v2726 = vmul.f32 %v2611, %v2713
        %v2727 = vmul.f32 %v2616, %v2713
        %v2728 = vmul.f32 %v2621, %v2713
        %v2729 = vmul.f32 %v2626, %v2713
        %v2730 = vmul.f32 %v2631, %v2713
        %v2731 = vmul.f32 %v2636, %v2713
        %v2732 = vmul.f32 %v2641, %v2713
        %v2733 = vmul.f32 %v2646, %v2713
        %v2734 = vmul.f32 %v2651, %v2713
        %v2735 = vmul.f32 %v2656, %v2713
        %v2736 = vmul.f32 %v2661, %v2713
        %v2737 = vmul.f32 %v2666, %v2713
        %v2738 = vmul.f32 %v2671, %v2713
        %v2739 = vmul.f32 %v2676, %v2713
        %v2740 = vmul.f32 %v2681, %v2713
        %v2741 = vmul.f32 %v2686, %v2713
        %v2742 = vmul.f32 %v2691, %v2713
        %v2743 = vmul.f32 %v2696, %v2713
        %v2744 = vmul.f32 %v2701, %v2713
        %v2745 = vmul.f32 %v2706, %v2713
        %v2746 = vld [vmem:[%s6] sm:$0x1]
        %v2747 = vlaneseq
        %v2748 = vshrl.u32 %v2747, 7
        %v2749 = vsub.s32 0, %v2748
        %v2750 = vrot.slane %v2746, %v2749
        %v2751 = vadd.f32 %v2714, %v2750
        %v2752 = vadd.f32 %v2715, %v2750
        %v2753 = vadd.f32 %v2716, %v2750
        %v2754 = vadd.f32 %v2717, %v2750
        %v2755 = vadd.f32 %v2718, %v2750
        %v2756 = vadd.f32 %v2719, %v2750
        %v2757 = vadd.f32 %v2720, %v2750
        %v2758 = vadd.f32 %v2721, %v2750
        %v2759 = vadd.f32 %v2722, %v2750
        %v2760 = vadd.f32 %v2723, %v2750
        %v2761 = vadd.f32 %v2724, %v2750
        %v2762 = vadd.f32 %v2725, %v2750
        %v2763 = vadd.f32 %v2726, %v2750
        %v2764 = vadd.f32 %v2727, %v2750
        %v2765 = vadd.f32 %v2728, %v2750
        %v2766 = vadd.f32 %v2729, %v2750
        %v2767 = vadd.f32 %v2730, %v2750
        %v2768 = vadd.f32 %v2731, %v2750
        %v2769 = vadd.f32 %v2732, %v2750
        %v2770 = vadd.f32 %v2733, %v2750
        %v2771 = vadd.f32 %v2734, %v2750
        %v2772 = vadd.f32 %v2735, %v2750
        %v2773 = vadd.f32 %v2736, %v2750
        %v2774 = vadd.f32 %v2737, %v2750
        %v2775 = vadd.f32 %v2738, %v2750
        %v2776 = vadd.f32 %v2739, %v2750
        %v2777 = vadd.f32 %v2740, %v2750
        %v2778 = vadd.f32 %v2741, %v2750
        %v2779 = vadd.f32 %v2742, %v2750
        %v2780 = vadd.f32 %v2743, %v2750
        %v2781 = vadd.f32 %v2744, %v2750
        %v2782 = vadd.f32 %v2745, %v2750
        %v2783 = vmax.f32 %v2751, 0.0
        %v2784 = vmax.f32 %v2752, 0.0
        %v2785 = vmax.f32 %v2753, 0.0
        %v2786 = vmax.f32 %v2754, 0.0
        %v2787 = vmax.f32 %v2755, 0.0
        %v2788 = vmax.f32 %v2756, 0.0
        %v2789 = vmax.f32 %v2757, 0.0
        %v2790 = vmax.f32 %v2758, 0.0
        %v2791 = vmax.f32 %v2759, 0.0
        %v2792 = vmax.f32 %v2760, 0.0
        %v2793 = vmax.f32 %v2761, 0.0
        %v2794 = vmax.f32 %v2762, 0.0
        %v2795 = vmax.f32 %v2763, 0.0
        %v2796 = vmax.f32 %v2764, 0.0
        %v2797 = vmax.f32 %v2765, 0.0
        %v2798 = vmax.f32 %v2766, 0.0
        %v2799 = vmax.f32 %v2767, 0.0
        %v2800 = vmax.f32 %v2768, 0.0
        %v2801 = vmax.f32 %v2769, 0.0
        %v2802 = vmax.f32 %v2770, 0.0
        %v2803 = vmax.f32 %v2771, 0.0
        %v2804 = vmax.f32 %v2772, 0.0
        %v2805 = vmax.f32 %v2773, 0.0
        %v2806 = vmax.f32 %v2774, 0.0
        %v2807 = vmax.f32 %v2775, 0.0
        %v2808 = vmax.f32 %v2776, 0.0
        %v2809 = vmax.f32 %v2777, 0.0
        %v2810 = vmax.f32 %v2778, 0.0
        %v2811 = vmax.f32 %v2779, 0.0
        %v2812 = vmax.f32 %v2780, 0.0
        %v2813 = vmax.f32 %v2781, 0.0
        %v2814 = vmax.f32 %v2782, 0.0
        %2815 = vst.msk [vmem:[%s528 + $0x1] sm:$0xff] %vm331, %v2783
        %2816 = vst.msk [vmem:[%s528 + $0x9] sm:$0xff] %vm331, %v2784
        %2817 = vst.msk [vmem:[%s528 + $0x19] sm:$0xff] %vm331, %v2785
        %2818 = vst.msk [vmem:[%s528 + $0x21] sm:$0xff] %vm331, %v2786
        %2819 = vst.msk [vmem:[%s528 + $0x31] sm:$0xff] %vm331, %v2787
        %2820 = vst.msk [vmem:[%s528 + $0x39] sm:$0xff] %vm331, %v2788
        %2821 = vst.msk [vmem:[%s528 + $0x49] sm:$0xff] %vm331, %v2789
        %2822 = vst.msk [vmem:[%s528 + $0x51] sm:$0xff] %vm331, %v2790
        %2823 = vst.msk [vmem:[%s528 + $0x61] sm:$0xff] %vm331, %v2791
        %2824 = vst.msk [vmem:[%s528 + $0x69] sm:$0xff] %vm331, %v2792
        %2825 = vst.msk [vmem:[%s528 + $0x79] sm:$0xff] %vm331, %v2793
        %2826 = vst.msk [vmem:[%s528 + $0x81] sm:$0xff] %vm331, %v2794
        %2827 = vst.msk [vmem:[%s528 + $0x91] sm:$0xff] %vm331, %v2795
        %2828 = vst.msk [vmem:[%s528 + $0x99] sm:$0xff] %vm331, %v2796
        %2829 = vst.msk [vmem:[%s528 + $0xa9] sm:$0xff] %vm331, %v2797
        %2830 = vst.msk [vmem:[%s528 + $0xb1] sm:$0xff] %vm331, %v2798
        %2831 = vst.msk [vmem:[%s528 + $0xc1] sm:$0xff] %vm331, %v2799
        %2832 = vst.msk [vmem:[%s528 + $0xc9] sm:$0xff] %vm331, %v2800
        %2833 = vst.msk [vmem:[%s528 + $0xd9] sm:$0xff] %vm331, %v2801
        %2834 = vst.msk [vmem:[%s528 + $0xe1] sm:$0xff] %vm331, %v2802
        %2835 = vst.msk [vmem:[%s528 + $0xf1] sm:$0xff] %vm331, %v2803
        %2836 = vst.msk [vmem:[%s528 + $0xf9] sm:$0xff] %vm331, %v2804
        %2837 = vst.msk [vmem:[%s528 + $0x109] sm:$0xff] %vm331, %v2805
        %2838 = vst.msk [vmem:[%s528 + $0x111] sm:$0xff] %vm331, %v2806
        %2839 = vst.msk [vmem:[%s528 + $0x121] sm:$0xff] %vm331, %v2807
        %2840 = vst.msk [vmem:[%s528 + $0x129] sm:$0xff] %vm331, %v2808
        %2841 = vst.msk [vmem:[%s528 + $0x139] sm:$0xff] %vm331, %v2809
        %2842 = vst.msk [vmem:[%s528 + $0x141] sm:$0xff] %vm331, %v2810
        %2843 = vst.msk [vmem:[%s528 + $0x151] sm:$0xff] %vm331, %v2811
        %2844 = vst.msk [vmem:[%s528 + $0x159] sm:$0xff] %vm331, %v2812
        %2845 = vst.msk [vmem:[%s528 + $0x169] sm:$0xff] %vm331, %v2813
        %2846 = vst.msk [vmem:[%s528 + $0x171] sm:$0xff] %vm331, %v2814
        %v2847 = vld [vmem:[#allocation5] ss:$2 sm:$0xff]
        %s2848 = scalar_lea.vmem [#allocation5], 48
        %v2849 = vld [vmem:[%s2848] ss:$2 sm:$0xff]
        %s2850 = scalar_lea.vmem [#allocation5], 96
        %v2851 = vld [vmem:[%s2850] ss:$2 sm:$0xff]
        %s2852 = scalar_lea.vmem [#allocation5], 144
        %v2853 = vld [vmem:[%s2852] ss:$2 sm:$0xff]
        %s2854 = scalar_lea.vmem [#allocation5], 192
        %v2855 = vld [vmem:[%s2854] ss:$2 sm:$0xff]
        %s2856 = scalar_lea.vmem [#allocation5], 240
        %v2857 = vld [vmem:[%s2856] ss:$2 sm:$0xff]
        %s2858 = scalar_lea.vmem [#allocation5], 288
        %v2859 = vld [vmem:[%s2858] ss:$2 sm:$0xff]
        %s2860 = scalar_lea.vmem [#allocation5], 336
        %v2861 = vld [vmem:[%s2860] ss:$2 sm:$0xff]
        %2862 = vst.msk [vmem:[#allocation7] sm:$0xff] %vm331, %v2847
        %2863 = vst.msk [vmem:[#allocation7 + $0x8] sm:$0xff] %vm331, %v2849
        %2864 = vst.msk [vmem:[#allocation7 + $0x10] sm:$0xff] %vm331, %v2851
        %2865 = vst.msk [vmem:[#allocation7 + $0x18] sm:$0xff] %vm331, %v2853
        %2866 = vst.msk [vmem:[#allocation7 + $0x20] sm:$0xff] %vm331, %v2855
        %2867 = vst.msk [vmem:[#allocation7 + $0x28] sm:$0xff] %vm331, %v2857
        %2868 = vst.msk [vmem:[#allocation7 + $0x30] sm:$0xff] %vm331, %v2859
        %2869 = vst.msk [vmem:[#allocation7 + $0x38] sm:$0xff] %vm331, %v2861
        %s2870 = scalar_lea.vmem [#allocation5], 1
        %v2871 = vld [vmem:[%s2870] ss:$2 sm:$0xff]
        %s2872 = scalar_lea.vmem [#allocation5], 49
        %v2873 = vld [vmem:[%s2872] ss:$2 sm:$0xff]
        %s2874 = scalar_lea.vmem [#allocation5], 97
        %v2875 = vld [vmem:[%s2874] ss:$2 sm:$0xff]
        %s2876 = scalar_lea.vmem [#allocation5], 145
        %v2877 = vld [vmem:[%s2876] ss:$2 sm:$0xff]
        %s2878 = scalar_lea.vmem [#allocation5], 193
        %v2879 = vld [vmem:[%s2878] ss:$2 sm:$0xff]
        %s2880 = scalar_lea.vmem [#allocation5], 241
        %v2881 = vld [vmem:[%s2880] ss:$2 sm:$0xff]
        %s2882 = scalar_lea.vmem [#allocation5], 289
        %v2883 = vld [vmem:[%s2882] ss:$2 sm:$0xff]
        %s2884 = scalar_lea.vmem [#allocation5], 337
        %v2885 = vld [vmem:[%s2884] ss:$2 sm:$0xff]
        %2894 = vrot.lane.b32.xlu0 %v2871, 8
        %v2895 = vpop.permute.xlu0 %2894
        %2896 = vrot.lane.b32.xlu0 %v2873, 8
        %v2897 = vpop.permute.xlu0 %2896
        %2898 = vrot.lane.b32.xlu0 %v2875, 8
        %v2899 = vpop.permute.xlu0 %2898
        %2900 = vrot.lane.b32.xlu0 %v2877, 8
        %v2901 = vpop.permute.xlu0 %2900
        %2902 = vrot.lane.b32.xlu0 %v2879, 8
        %v2903 = vpop.permute.xlu0 %2902
        %2904 = vrot.lane.b32.xlu0 %v2881, 8
        %v2905 = vpop.permute.xlu0 %2904
        %2906 = vrot.lane.b32.xlu0 %v2883, 8
        %v2907 = vpop.permute.xlu0 %2906
        %2908 = vrot.lane.b32.xlu0 %v2885, 8
        %v2909 = vpop.permute.xlu0 %2908
        %2918 = vst.msk [vmem:[#allocation7] sm:$0xff] %vm956, %v2895
        %2919 = vst.msk [vmem:[#allocation7 + $0x8] sm:$0xff] %vm956, %v2897
        %2920 = vst.msk [vmem:[#allocation7 + $0x10] sm:$0xff] %vm956, %v2899
        %2921 = vst.msk [vmem:[#allocation7 + $0x18] sm:$0xff] %vm956, %v2901
        %2922 = vst.msk [vmem:[#allocation7 + $0x20] sm:$0xff] %vm956, %v2903
        %2923 = vst.msk [vmem:[#allocation7 + $0x28] sm:$0xff] %vm956, %v2905
        %2924 = vst.msk [vmem:[#allocation7 + $0x30] sm:$0xff] %vm956, %v2907
        %2925 = vst.msk [vmem:[#allocation7 + $0x38] sm:$0xff] %vm956, %v2909
        %s2926 = scalar_lea.vmem [#allocation5], 2
        %v2927 = vld [vmem:[%s2926] ss:$2 sm:$0xff]
        %s2928 = scalar_lea.vmem [#allocation5], 50
        %v2929 = vld [vmem:[%s2928] ss:$2 sm:$0xff]
        %s2930 = scalar_lea.vmem [#allocation5], 98
        %v2931 = vld [vmem:[%s2930] ss:$2 sm:$0xff]
        %s2932 = scalar_lea.vmem [#allocation5], 146
        %v2933 = vld [vmem:[%s2932] ss:$2 sm:$0xff]
        %s2934 = scalar_lea.vmem [#allocation5], 194
        %v2935 = vld [vmem:[%s2934] ss:$2 sm:$0xff]
        %s2936 = scalar_lea.vmem [#allocation5], 242
        %v2937 = vld [vmem:[%s2936] ss:$2 sm:$0xff]
        %s2938 = scalar_lea.vmem [#allocation5], 290
        %v2939 = vld [vmem:[%s2938] ss:$2 sm:$0xff]
        %s2940 = scalar_lea.vmem [#allocation5], 338
        %v2941 = vld [vmem:[%s2940] ss:$2 sm:$0xff]
        %2950 = vrot.lane.b32.xlu0 %v2927, 16
        %v2951 = vpop.permute.xlu0 %2950
        %2952 = vrot.lane.b32.xlu0 %v2929, 16
        %v2953 = vpop.permute.xlu0 %2952
        %2954 = vrot.lane.b32.xlu0 %v2931, 16
        %v2955 = vpop.permute.xlu0 %2954
        %2956 = vrot.lane.b32.xlu0 %v2933, 16
        %v2957 = vpop.permute.xlu0 %2956
        %2958 = vrot.lane.b32.xlu0 %v2935, 16
        %v2959 = vpop.permute.xlu0 %2958
        %2960 = vrot.lane.b32.xlu0 %v2937, 16
        %v2961 = vpop.permute.xlu0 %2960
        %2962 = vrot.lane.b32.xlu0 %v2939, 16
        %v2963 = vpop.permute.xlu0 %2962
        %2964 = vrot.lane.b32.xlu0 %v2941, 16
        %v2965 = vpop.permute.xlu0 %2964
        %2974 = vst.msk [vmem:[#allocation7] sm:$0xff] %vm1149, %v2951
        %2975 = vst.msk [vmem:[#allocation7 + $0x8] sm:$0xff] %vm1149, %v2953
        %2976 = vst.msk [vmem:[#allocation7 + $0x10] sm:$0xff] %vm1149, %v2955
        %2977 = vst.msk [vmem:[#allocation7 + $0x18] sm:$0xff] %vm1149, %v2957
        %2978 = vst.msk [vmem:[#allocation7 + $0x20] sm:$0xff] %vm1149, %v2959
        %2979 = vst.msk [vmem:[#allocation7 + $0x28] sm:$0xff] %vm1149, %v2961
        %2980 = vst.msk [vmem:[#allocation7 + $0x30] sm:$0xff] %vm1149, %v2963
        %2981 = vst.msk [vmem:[#allocation7 + $0x38] sm:$0xff] %vm1149, %v2965
        %v2982 = vld [vmem:[%s528] ss:$2 sm:$0xff]
        %s2983 = scalar_lea.vmem %s528, 48 [#allocation5]
        %v2984 = vld [vmem:[%s2983] ss:$2 sm:$0xff]
        %s2985 = scalar_lea.vmem %s528, 96 [#allocation5]
        %v2986 = vld [vmem:[%s2985] ss:$2 sm:$0xff]
        %s2987 = scalar_lea.vmem %s528, 144 [#allocation5]
        %v2988 = vld [vmem:[%s2987] ss:$2 sm:$0xff]
        %s2989 = scalar_lea.vmem %s528, 192 [#allocation5]
        %v2990 = vld [vmem:[%s2989] ss:$2 sm:$0xff]
        %s2991 = scalar_lea.vmem %s528, 240 [#allocation5]
        %v2992 = vld [vmem:[%s2991] ss:$2 sm:$0xff]
        %s2993 = scalar_lea.vmem %s528, 288 [#allocation5]
        %v2994 = vld [vmem:[%s2993] ss:$2 sm:$0xff]
        %s2995 = scalar_lea.vmem %s528, 336 [#allocation5]
        %v2996 = vld [vmem:[%s2995] ss:$2 sm:$0xff]
        %3005 = vrot.lane.b32.xlu0 %v2982, 24
        %v3006 = vpop.permute.xlu0 %3005
        %3007 = vrot.lane.b32.xlu0 %v2984, 24
        %v3008 = vpop.permute.xlu0 %3007
        %3009 = vrot.lane.b32.xlu0 %v2986, 24
        %v3010 = vpop.permute.xlu0 %3009
        %3011 = vrot.lane.b32.xlu0 %v2988, 24
        %v3012 = vpop.permute.xlu0 %3011
        %3013 = vrot.lane.b32.xlu0 %v2990, 24
        %v3014 = vpop.permute.xlu0 %3013
        %3015 = vrot.lane.b32.xlu0 %v2992, 24
        %v3016 = vpop.permute.xlu0 %3015
        %3017 = vrot.lane.b32.xlu0 %v2994, 24
        %v3018 = vpop.permute.xlu0 %3017
        %3019 = vrot.lane.b32.xlu0 %v2996, 24
        %v3020 = vpop.permute.xlu0 %3019
        %3029 = vst.msk [vmem:[#allocation7] sm:$0xff] %vm1342, %v3006
        %3030 = vst.msk [vmem:[#allocation7 + $0x8] sm:$0xff] %vm1342, %v3008
        %3031 = vst.msk [vmem:[#allocation7 + $0x10] sm:$0xff] %vm1342, %v3010
        %3032 = vst.msk [vmem:[#allocation7 + $0x18] sm:$0xff] %vm1342, %v3012
        %3033 = vst.msk [vmem:[#allocation7 + $0x20] sm:$0xff] %vm1342, %v3014
        %3034 = vst.msk [vmem:[#allocation7 + $0x28] sm:$0xff] %vm1342, %v3016
        %3035 = vst.msk [vmem:[#allocation7 + $0x30] sm:$0xff] %vm1342, %v3018
        %3036 = vst.msk [vmem:[#allocation7 + $0x38] sm:$0xff] %vm1342, %v3020
        %s3037 = scalar_lea.vmem %s528, 1 [#allocation5]
        %v3038 = vld [vmem:[%s3037] ss:$2 sm:$0xff]
        %s3039 = scalar_lea.vmem %s528, 49 [#allocation5]
        %v3040 = vld [vmem:[%s3039] ss:$2 sm:$0xff]
        %s3041 = scalar_lea.vmem %s528, 97 [#allocation5]
        %v3042 = vld [vmem:[%s3041] ss:$2 sm:$0xff]
        %s3043 = scalar_lea.vmem %s528, 145 [#allocation5]
        %v3044 = vld [vmem:[%s3043] ss:$2 sm:$0xff]
        %s3045 = scalar_lea.vmem %s528, 193 [#allocation5]
        %v3046 = vld [vmem:[%s3045] ss:$2 sm:$0xff]
        %s3047 = scalar_lea.vmem %s528, 241 [#allocation5]
        %v3048 = vld [vmem:[%s3047] ss:$2 sm:$0xff]
        %s3049 = scalar_lea.vmem %s528, 289 [#allocation5]
        %v3050 = vld [vmem:[%s3049] ss:$2 sm:$0xff]
        %s3051 = scalar_lea.vmem %s528, 337 [#allocation5]
        %v3052 = vld [vmem:[%s3051] ss:$2 sm:$0xff]
        %3061 = vrot.lane.b32.xlu0 %v3038, 32
        %v3062 = vpop.permute.xlu0 %3061
        %3063 = vrot.lane.b32.xlu0 %v3040, 32
        %v3064 = vpop.permute.xlu0 %3063
        %3065 = vrot.lane.b32.xlu0 %v3042, 32
        %v3066 = vpop.permute.xlu0 %3065
        %3067 = vrot.lane.b32.xlu0 %v3044, 32
        %v3068 = vpop.permute.xlu0 %3067
        %3069 = vrot.lane.b32.xlu0 %v3046, 32
        %v3070 = vpop.permute.xlu0 %3069
        %3071 = vrot.lane.b32.xlu0 %v3048, 32
        %v3072 = vpop.permute.xlu0 %3071
        %3073 = vrot.lane.b32.xlu0 %v3050, 32
        %v3074 = vpop.permute.xlu0 %3073
        %3075 = vrot.lane.b32.xlu0 %v3052, 32
        %v3076 = vpop.permute.xlu0 %3075
        %3085 = vst.msk [vmem:[#allocation7] sm:$0xff] %vm1535, %v3062
        %3086 = vst.msk [vmem:[#allocation7 + $0x8] sm:$0xff] %vm1535, %v3064
        %3087 = vst.msk [vmem:[#allocation7 + $0x10] sm:$0xff] %vm1535, %v3066
        %3088 = vst.msk [vmem:[#allocation7 + $0x18] sm:$0xff] %vm1535, %v3068
        %3089 = vst.msk [vmem:[#allocation7 + $0x20] sm:$0xff] %vm1535, %v3070
        %3090 = vst.msk [vmem:[#allocation7 + $0x28] sm:$0xff] %vm1535, %v3072
        %3091 = vst.msk [vmem:[#allocation7 + $0x30] sm:$0xff] %vm1535, %v3074
        %3092 = vst.msk [vmem:[#allocation7 + $0x38] sm:$0xff] %vm1535, %v3076
        %s3093 = scalar_lea.vmem %s528, 2 [#allocation5]
        %v3094 = vld [vmem:[%s3093] ss:$2 sm:$0xff]
        %s3095 = scalar_lea.vmem %s528, 50 [#allocation5]
        %v3096 = vld [vmem:[%s3095] ss:$2 sm:$0xff]
        %s3097 = scalar_lea.vmem %s528, 98 [#allocation5]
        %v3098 = vld [vmem:[%s3097] ss:$2 sm:$0xff]
        %s3099 = scalar_lea.vmem %s528, 146 [#allocation5]
        %v3100 = vld [vmem:[%s3099] ss:$2 sm:$0xff]
        %s3101 = scalar_lea.vmem %s528, 194 [#allocation5]
        %v3102 = vld [vmem:[%s3101] ss:$2 sm:$0xff]
        %s3103 = scalar_lea.vmem %s528, 242 [#allocation5]
        %v3104 = vld [vmem:[%s3103] ss:$2 sm:$0xff]
        %s3105 = scalar_lea.vmem %s528, 290 [#allocation5]
        %v3106 = vld [vmem:[%s3105] ss:$2 sm:$0xff]
        %s3107 = scalar_lea.vmem %s528, 338 [#allocation5]
        %v3108 = vld [vmem:[%s3107] ss:$2 sm:$0xff]
        %3117 = vrot.lane.b32.xlu0 %v3094, 40
        %v3118 = vpop.permute.xlu0 %3117
        %3119 = vrot.lane.b32.xlu0 %v3096, 40
        %v3120 = vpop.permute.xlu0 %3119
        %3121 = vrot.lane.b32.xlu0 %v3098, 40
        %v3122 = vpop.permute.xlu0 %3121
        %3123 = vrot.lane.b32.xlu0 %v3100, 40
        %v3124 = vpop.permute.xlu0 %3123
        %3125 = vrot.lane.b32.xlu0 %v3102, 40
        %v3126 = vpop.permute.xlu0 %3125
        %3127 = vrot.lane.b32.xlu0 %v3104, 40
        %v3128 = vpop.permute.xlu0 %3127
        %3129 = vrot.lane.b32.xlu0 %v3106, 40
        %v3130 = vpop.permute.xlu0 %3129
        %3131 = vrot.lane.b32.xlu0 %v3108, 40
        %v3132 = vpop.permute.xlu0 %3131
        %3141 = vst.msk [vmem:[#allocation7] sm:$0xff] %vm1728, %v3118
        %3142 = vst.msk [vmem:[#allocation7 + $0x8] sm:$0xff] %vm1728, %v3120
        %3143 = vst.msk [vmem:[#allocation7 + $0x10] sm:$0xff] %vm1728, %v3122
        %3144 = vst.msk [vmem:[#allocation7 + $0x18] sm:$0xff] %vm1728, %v3124
        %3145 = vst.msk [vmem:[#allocation7 + $0x20] sm:$0xff] %vm1728, %v3126
        %3146 = vst.msk [vmem:[#allocation7 + $0x28] sm:$0xff] %vm1728, %v3128
        %3147 = vst.msk [vmem:[#allocation7 + $0x30] sm:$0xff] %vm1728, %v3130
        %3148 = vst.msk [vmem:[#allocation7 + $0x38] sm:$0xff] %vm1728, %v3132
        %s3149 = scalar_lea.vmem [#allocation5], 48
        %v3150 = vld [vmem:[%s3149] ss:$2 sm:$0xff]
        %s3151 = scalar_lea.vmem %s3149, 48 [#allocation5]
        %v3152 = vld [vmem:[%s3151] ss:$2 sm:$0xff]
        %s3153 = scalar_lea.vmem %s3149, 96 [#allocation5]
        %v3154 = vld [vmem:[%s3153] ss:$2 sm:$0xff]
        %s3155 = scalar_lea.vmem %s3149, 144 [#allocation5]
        %v3156 = vld [vmem:[%s3155] ss:$2 sm:$0xff]
        %s3157 = scalar_lea.vmem %s3149, 192 [#allocation5]
        %v3158 = vld [vmem:[%s3157] ss:$2 sm:$0xff]
        %s3159 = scalar_lea.vmem %s3149, 240 [#allocation5]
        %v3160 = vld [vmem:[%s3159] ss:$2 sm:$0xff]
        %s3161 = scalar_lea.vmem %s3149, 288 [#allocation5]
        %v3162 = vld [vmem:[%s3161] ss:$2 sm:$0xff]
        %s3163 = scalar_lea.vmem %s3149, 336 [#allocation5]
        %v3164 = vld [vmem:[%s3163] ss:$2 sm:$0xff]
        %3173 = vrot.lane.b32.xlu0 %v3150, 48
        %v3174 = vpop.permute.xlu0 %3173
        %3175 = vrot.lane.b32.xlu0 %v3152, 48
        %v3176 = vpop.permute.xlu0 %3175
        %3177 = vrot.lane.b32.xlu0 %v3154, 48
        %v3178 = vpop.permute.xlu0 %3177
        %3179 = vrot.lane.b32.xlu0 %v3156, 48
        %v3180 = vpop.permute.xlu0 %3179
        %3181 = vrot.lane.b32.xlu0 %v3158, 48
        %v3182 = vpop.permute.xlu0 %3181
        %3183 = vrot.lane.b32.xlu0 %v3160, 48
        %v3184 = vpop.permute.xlu0 %3183
        %3185 = vrot.lane.b32.xlu0 %v3162, 48
        %v3186 = vpop.permute.xlu0 %3185
        %3187 = vrot.lane.b32.xlu0 %v3164, 48
        %v3188 = vpop.permute.xlu0 %3187
        %3197 = vst.msk [vmem:[#allocation7] sm:$0xff] %vm1922, %v3174
        %3198 = vst.msk [vmem:[#allocation7 + $0x8] sm:$0xff] %vm1922, %v3176
        %3199 = vst.msk [vmem:[#allocation7 + $0x10] sm:$0xff] %vm1922, %v3178
        %3200 = vst.msk [vmem:[#allocation7 + $0x18] sm:$0xff] %vm1922, %v3180
        %3201 = vst.msk [vmem:[#allocation7 + $0x20] sm:$0xff] %vm1922, %v3182
        %3202 = vst.msk [vmem:[#allocation7 + $0x28] sm:$0xff] %vm1922, %v3184
        %3203 = vst.msk [vmem:[#allocation7 + $0x30] sm:$0xff] %vm1922, %v3186
        %3204 = vst.msk [vmem:[#allocation7 + $0x38] sm:$0xff] %vm1922, %v3188
        %s3205 = scalar_lea.vmem %s3149, 1 [#allocation5]
        %v3206 = vld [vmem:[%s3205] ss:$2 sm:$0xff]
        %s3207 = scalar_lea.vmem %s3149, 49 [#allocation5]
        %v3208 = vld [vmem:[%s3207] ss:$2 sm:$0xff]
        %s3209 = scalar_lea.vmem %s3149, 97 [#allocation5]
        %v3210 = vld [vmem:[%s3209] ss:$2 sm:$0xff]
        %s3211 = scalar_lea.vmem %s3149, 145 [#allocation5]
        %v3212 = vld [vmem:[%s3211] ss:$2 sm:$0xff]
        %s3213 = scalar_lea.vmem %s3149, 193 [#allocation5]
        %v3214 = vld [vmem:[%s3213] ss:$2 sm:$0xff]
        %s3215 = scalar_lea.vmem %s3149, 241 [#allocation5]
        %v3216 = vld [vmem:[%s3215] ss:$2 sm:$0xff]
        %s3217 = scalar_lea.vmem %s3149, 289 [#allocation5]
        %v3218 = vld [vmem:[%s3217] ss:$2 sm:$0xff]
        %s3219 = scalar_lea.vmem %s3149, 337 [#allocation5]
        %v3220 = vld [vmem:[%s3219] ss:$2 sm:$0xff]
        %3229 = vrot.lane.b32.xlu0 %v3206, 56
        %v3230 = vpop.permute.xlu0 %3229
        %3231 = vrot.lane.b32.xlu0 %v3208, 56
        %v3232 = vpop.permute.xlu0 %3231
        %3233 = vrot.lane.b32.xlu0 %v3210, 56
        %v3234 = vpop.permute.xlu0 %3233
        %3235 = vrot.lane.b32.xlu0 %v3212, 56
        %v3236 = vpop.permute.xlu0 %3235
        %3237 = vrot.lane.b32.xlu0 %v3214, 56
        %v3238 = vpop.permute.xlu0 %3237
        %3239 = vrot.lane.b32.xlu0 %v3216, 56
        %v3240 = vpop.permute.xlu0 %3239
        %3241 = vrot.lane.b32.xlu0 %v3218, 56
        %v3242 = vpop.permute.xlu0 %3241
        %3243 = vrot.lane.b32.xlu0 %v3220, 56
        %v3244 = vpop.permute.xlu0 %3243
        %3253 = vst.msk [vmem:[#allocation7] sm:$0xff] %vm2115, %v3230
        %3254 = vst.msk [vmem:[#allocation7 + $0x8] sm:$0xff] %vm2115, %v3232
        %3255 = vst.msk [vmem:[#allocation7 + $0x10] sm:$0xff] %vm2115, %v3234
        %3256 = vst.msk [vmem:[#allocation7 + $0x18] sm:$0xff] %vm2115, %v3236
        %3257 = vst.msk [vmem:[#allocation7 + $0x20] sm:$0xff] %vm2115, %v3238
        %3258 = vst.msk [vmem:[#allocation7 + $0x28] sm:$0xff] %vm2115, %v3240
        %3259 = vst.msk [vmem:[#allocation7 + $0x30] sm:$0xff] %vm2115, %v3242
        %3260 = vst.msk [vmem:[#allocation7 + $0x38] sm:$0xff] %vm2115, %v3244
        %s3261 = scalar_lea.vmem %s3149, 2 [#allocation5]
        %v3262 = vld [vmem:[%s3261] ss:$2 sm:$0xff]
        %s3263 = scalar_lea.vmem %s3149, 50 [#allocation5]
        %v3264 = vld [vmem:[%s3263] ss:$2 sm:$0xff]
        %s3265 = scalar_lea.vmem %s3149, 98 [#allocation5]
        %v3266 = vld [vmem:[%s3265] ss:$2 sm:$0xff]
        %s3267 = scalar_lea.vmem %s3149, 146 [#allocation5]
        %v3268 = vld [vmem:[%s3267] ss:$2 sm:$0xff]
        %s3269 = scalar_lea.vmem %s3149, 194 [#allocation5]
        %v3270 = vld [vmem:[%s3269] ss:$2 sm:$0xff]
        %s3271 = scalar_lea.vmem %s3149, 242 [#allocation5]
        %v3272 = vld [vmem:[%s3271] ss:$2 sm:$0xff]
        %s3273 = scalar_lea.vmem %s3149, 290 [#allocation5]
        %v3274 = vld [vmem:[%s3273] ss:$2 sm:$0xff]
        %s3275 = scalar_lea.vmem %s3149, 338 [#allocation5]
        %v3276 = vld [vmem:[%s3275] ss:$2 sm:$0xff]
        %3285 = vrot.lane.b32.xlu0 %v3262, 64
        %v3286 = vpop.permute.xlu0 %3285
        %3287 = vrot.lane.b32.xlu0 %v3264, 64
        %v3288 = vpop.permute.xlu0 %3287
        %3289 = vrot.lane.b32.xlu0 %v3266, 64
        %v3290 = vpop.permute.xlu0 %3289
        %3291 = vrot.lane.b32.xlu0 %v3268, 64
        %v3292 = vpop.permute.xlu0 %3291
        %3293 = vrot.lane.b32.xlu0 %v3270, 64
        %v3294 = vpop.permute.xlu0 %3293
        %3295 = vrot.lane.b32.xlu0 %v3272, 64
        %v3296 = vpop.permute.xlu0 %3295
        %3297 = vrot.lane.b32.xlu0 %v3274, 64
        %v3298 = vpop.permute.xlu0 %3297
        %3299 = vrot.lane.b32.xlu0 %v3276, 64
        %v3300 = vpop.permute.xlu0 %3299
        %3309 = vst.msk [vmem:[#allocation7] sm:$0xff] %vm2308, %v3286
        %3310 = vst.msk [vmem:[#allocation7 + $0x8] sm:$0xff] %vm2308, %v3288
        %3311 = vst.msk [vmem:[#allocation7 + $0x10] sm:$0xff] %vm2308, %v3290
        %3312 = vst.msk [vmem:[#allocation7 + $0x18] sm:$0xff] %vm2308, %v3292
        %3313 = vst.msk [vmem:[#allocation7 + $0x20] sm:$0xff] %vm2308, %v3294
        %3314 = vst.msk [vmem:[#allocation7 + $0x28] sm:$0xff] %vm2308, %v3296
        %3315 = vst.msk [vmem:[#allocation7 + $0x30] sm:$0xff] %vm2308, %v3298
        %3316 = vst.msk [vmem:[#allocation7 + $0x38] sm:$0xff] %vm2308, %v3300
        %v3317 = vld [vmem:[#allocation7] sm:$0xff]
        %v3318 = vld [vmem:[#allocation7 + $0x8] sm:$0xff]
        %v3319 = vld [vmem:[#allocation7 + $0x10] sm:$0xff]
        %v3320 = vld [vmem:[#allocation7 + $0x18] sm:$0xff]
        %v3321 = vld [vmem:[#allocation7 + $0x20] sm:$0xff]
        %v3322 = vld [vmem:[#allocation7 + $0x28] sm:$0xff]
        %v3323 = vld [vmem:[#allocation7 + $0x30] sm:$0xff]
        %v3324 = vld [vmem:[#allocation7 + $0x38] sm:$0xff]
        %v3325 = vld [vmem:[%s7] sm:$0xff]
        %v3326 = vld [vmem:[%s7 + $0x8] sm:$0xff]
        %v3327 = vld [vmem:[%s7 + $0x10] sm:$0xff]
        %v3328 = vld [vmem:[%s7 + $0x18] sm:$0xff]
        %v3329 = vld [vmem:[%s7 + $0x20] sm:$0xff]
        %v3330 = vld [vmem:[%s7 + $0x28] sm:$0xff]
        %v3331 = vld [vmem:[%s7 + $0x30] sm:$0xff]
        %v3332 = vld [vmem:[%s7 + $0x38] sm:$0xff]
        %v3333 = vld [vmem:[%s7 + $0x40] sm:$0xff]
        %v3334 = vld [vmem:[%s1 + $0x1] sm:$0x1]
        %v3335 = vld [vmem:[%s2 + $0x1] sm:$0x1]
        %v3336 = vld [vmem:[%s330] sm:$0xff]
        %v3337 = vld [vmem:[%s330 + $0x8] sm:$0xff]
        %v3338 = vld [vmem:[%s330 + $0x10] sm:$0xff]
        %v3339 = vld [vmem:[%s330 + $0x18] sm:$0xff]
        %v3340 = vld [vmem:[%s330 + $0x20] sm:$0xff]
        %v3341 = vld [vmem:[%s330 + $0x28] sm:$0xff]
        %v3342 = vld [vmem:[%s330 + $0x30] sm:$0xff]
        %v3343 = vld [vmem:[%s330 + $0x38] sm:$0xff]
        %v3344 = vld [vmem:[%s330 + $0x40] sm:$0xff]
        %v3345 = vld [vmem:[%s330 + $0x48] sm:$0xff]
        %v3346 = vld [vmem:[%s330 + $0x50] sm:$0xff]
        %v3347 = vld [vmem:[%s330 + $0x58] sm:$0xff]
        %v3348 = vld [vmem:[%s330 + $0x60] sm:$0xff]
        %v3349 = vld [vmem:[%s330 + $0x68] sm:$0xff]
        %v3350 = vld [vmem:[%s330 + $0x70] sm:$0xff]
        %v3351 = vld [vmem:[%s330 + $0x78] sm:$0xff]
        %v3352 = vld [vmem:[%s330 + $0x80] sm:$0xff]
        %v3353 = vld [vmem:[%s330 + $0x88] sm:$0xff]
        %v3354 = vld [vmem:[%s330 + $0x90] sm:$0xff]
        %v3355 = vld [vmem:[%s330 + $0x98] sm:$0xff]
        %v3356 = vld [vmem:[%s330 + $0xa0] sm:$0xff]
        %v3357 = vld [vmem:[%s330 + $0xa8] sm:$0xff]
        %v3358 = vld [vmem:[%s330 + $0xb0] sm:$0xff]
        %v3359 = vld [vmem:[%s330 + $0xb8] sm:$0xff]
        %v3360 = vld [vmem:[%s330 + $0xc0] sm:$0xff]
        %v3361 = vld [vmem:[%s330 + $0xc8] sm:$0xff]
        %v3362 = vld [vmem:[%s330 + $0xd0] sm:$0xff]
        %v3363 = vld [vmem:[%s330 + $0xd8] sm:$0xff]
        %v3364 = vld [vmem:[%s330 + $0xe0] sm:$0xff]
        %v3365 = vld [vmem:[%s330 + $0xe8] sm:$0xff]
        %v3366 = vld [vmem:[%s330 + $0xf0] sm:$0xff]
        %v3367 = vld [vmem:[%s330 + $0xf8] sm:$0xff]
        %v3368 = vlaneseq
        %v3369 = vshrl.u32 %v3368, 7
        %v3370 = vsub.s32 0, %v3369
        %v3371 = vrot.slane %v3334, %v3370
        %v3372 = vmul.f32 %v3336, %v3371
        %v3373 = vmul.f32 %v3337, %v3371
        %v3374 = vmul.f32 %v3338, %v3371
        %v3375 = vmul.f32 %v3339, %v3371
        %v3376 = vmul.f32 %v3340, %v3371
        %v3377 = vmul.f32 %v3341, %v3371
        %v3378 = vmul.f32 %v3342, %v3371
        %v3379 = vmul.f32 %v3343, %v3371
        %v3380 = vmul.f32 %v3344, %v3371
        %v3381 = vmul.f32 %v3345, %v3371
        %v3382 = vmul.f32 %v3346, %v3371
        %v3383 = vmul.f32 %v3347, %v3371
        %v3384 = vmul.f32 %v3348, %v3371
        %v3385 = vmul.f32 %v3349, %v3371
        %v3386 = vmul.f32 %v3350, %v3371
        %v3387 = vmul.f32 %v3351, %v3371
        %v3388 = vmul.f32 %v3352, %v3371
        %v3389 = vmul.f32 %v3353, %v3371
        %v3390 = vmul.f32 %v3354, %v3371
        %v3391 = vmul.f32 %v3355, %v3371
        %v3392 = vmul.f32 %v3356, %v3371
        %v3393 = vmul.f32 %v3357, %v3371
        %v3394 = vmul.f32 %v3358, %v3371
        %v3395 = vmul.f32 %v3359, %v3371
        %v3396 = vmul.f32 %v3360, %v3371
        %v3397 = vmul.f32 %v3361, %v3371
        %v3398 = vmul.f32 %v3362, %v3371
        %v3399 = vmul.f32 %v3363, %v3371
        %v3400 = vmul.f32 %v3364, %v3371
        %v3401 = vmul.f32 %v3365, %v3371
        %v3402 = vmul.f32 %v3366, %v3371
        %v3403 = vmul.f32 %v3367, %v3371
        %v3404 = vlaneseq
        %v3405 = vshrl.u32 %v3404, 7
        %v3406 = vsub.s32 0, %v3405
        %v3407 = vrot.slane %v3335, %v3406
        %v3408 = vadd.f32 %v3372, %v3407
        %v3409 = vadd.f32 %v3373, %v3407
        %v3410 = vadd.f32 %v3374, %v3407
        %v3411 = vadd.f32 %v3375, %v3407
        %v3412 = vadd.f32 %v3376, %v3407
        %v3413 = vadd.f32 %v3377, %v3407
        %v3414 = vadd.f32 %v3378, %v3407
        %v3415 = vadd.f32 %v3379, %v3407
        %v3416 = vadd.f32 %v3380, %v3407
        %v3417 = vadd.f32 %v3381, %v3407
        %v3418 = vadd.f32 %v3382, %v3407
        %v3419 = vadd.f32 %v3383, %v3407
        %v3420 = vadd.f32 %v3384, %v3407
        %v3421 = vadd.f32 %v3385, %v3407
        %v3422 = vadd.f32 %v3386, %v3407
        %v3423 = vadd.f32 %v3387, %v3407
        %v3424 = vadd.f32 %v3388, %v3407
        %v3425 = vadd.f32 %v3389, %v3407
        %v3426 = vadd.f32 %v3390, %v3407
        %v3427 = vadd.f32 %v3391, %v3407
        %v3428 = vadd.f32 %v3392, %v3407
        %v3429 = vadd.f32 %v3393, %v3407
        %v3430 = vadd.f32 %v3394, %v3407
        %v3431 = vadd.f32 %v3395, %v3407
        %v3432 = vadd.f32 %v3396, %v3407
        %v3433 = vadd.f32 %v3397, %v3407
        %v3434 = vadd.f32 %v3398, %v3407
        %v3435 = vadd.f32 %v3399, %v3407
        %v3436 = vadd.f32 %v3400, %v3407
        %v3437 = vadd.f32 %v3401, %v3407
        %v3438 = vadd.f32 %v3402, %v3407
        %v3439 = vadd.f32 %v3403, %v3407
        %v3440 = vmax.f32 %v3408, 0.0
        %v3441 = vmax.f32 %v3409, 0.0
        %v3442 = vmax.f32 %v3410, 0.0
        %v3443 = vmax.f32 %v3411, 0.0
        %v3444 = vmax.f32 %v3412, 0.0
        %v3445 = vmax.f32 %v3413, 0.0
        %v3446 = vmax.f32 %v3414, 0.0
        %v3447 = vmax.f32 %v3415, 0.0
        %v3448 = vmax.f32 %v3416, 0.0
        %v3449 = vmax.f32 %v3417, 0.0
        %v3450 = vmax.f32 %v3418, 0.0
        %v3451 = vmax.f32 %v3419, 0.0
        %v3452 = vmax.f32 %v3420, 0.0
        %v3453 = vmax.f32 %v3421, 0.0
        %v3454 = vmax.f32 %v3422, 0.0
        %v3455 = vmax.f32 %v3423, 0.0
        %v3456 = vmax.f32 %v3424, 0.0
        %v3457 = vmax.f32 %v3425, 0.0
        %v3458 = vmax.f32 %v3426, 0.0
        %v3459 = vmax.f32 %v3427, 0.0
        %v3460 = vmax.f32 %v3428, 0.0
        %v3461 = vmax.f32 %v3429, 0.0
        %v3462 = vmax.f32 %v3430, 0.0
        %v3463 = vmax.f32 %v3431, 0.0
        %v3464 = vmax.f32 %v3432, 0.0
        %v3465 = vmax.f32 %v3433, 0.0
        %v3466 = vmax.f32 %v3434, 0.0
        %v3467 = vmax.f32 %v3435, 0.0
        %v3468 = vmax.f32 %v3436, 0.0
        %v3469 = vmax.f32 %v3437, 0.0
        %v3470 = vmax.f32 %v3438, 0.0
        %v3471 = vmax.f32 %v3439, 0.0
        %3472 = vst.msk [vmem:[%s405 + $0x4] sm:$0xff] %vm331, %v3440
        %3473 = vst.msk [vmem:[%s405 + $0xc] sm:$0xff] %vm331, %v3441
        %3474 = vst.msk [vmem:[%s405 + $0x1c] sm:$0xff] %vm331, %v3442
        %3475 = vst.msk [vmem:[%s405 + $0x24] sm:$0xff] %vm331, %v3443
        %3476 = vst.msk [vmem:[%s405 + $0x34] sm:$0xff] %vm331, %v3444
        %3477 = vst.msk [vmem:[%s405 + $0x3c] sm:$0xff] %vm331, %v3445
        %3478 = vst.msk [vmem:[%s405 + $0x4c] sm:$0xff] %vm331, %v3446
        %3479 = vst.msk [vmem:[%s405 + $0x54] sm:$0xff] %vm331, %v3447
        %3480 = vst.msk [vmem:[%s405 + $0x64] sm:$0xff] %vm331, %v3448
        %3481 = vst.msk [vmem:[%s405 + $0x6c] sm:$0xff] %vm331, %v3449
        %3482 = vst.msk [vmem:[%s405 + $0x7c] sm:$0xff] %vm331, %v3450
        %3483 = vst.msk [vmem:[%s405 + $0x84] sm:$0xff] %vm331, %v3451
        %3484 = vst.msk [vmem:[%s405 + $0x94] sm:$0xff] %vm331, %v3452
        %3485 = vst.msk [vmem:[%s405 + $0x9c] sm:$0xff] %vm331, %v3453
        %3486 = vst.msk [vmem:[%s405 + $0xac] sm:$0xff] %vm331, %v3454
        %3487 = vst.msk [vmem:[%s405 + $0xb4] sm:$0xff] %vm331, %v3455
        %3488 = vst.msk [vmem:[%s405 + $0xc4] sm:$0xff] %vm331, %v3456
        %3489 = vst.msk [vmem:[%s405 + $0xcc] sm:$0xff] %vm331, %v3457
        %3490 = vst.msk [vmem:[%s405 + $0xdc] sm:$0xff] %vm331, %v3458
        %3491 = vst.msk [vmem:[%s405 + $0xe4] sm:$0xff] %vm331, %v3459
        %3492 = vst.msk [vmem:[%s405 + $0xf4] sm:$0xff] %vm331, %v3460
        %3493 = vst.msk [vmem:[%s405 + $0xfc] sm:$0xff] %vm331, %v3461
        %3494 = vst.msk [vmem:[%s405 + $0x10c] sm:$0xff] %vm331, %v3462
        %3495 = vst.msk [vmem:[%s405 + $0x114] sm:$0xff] %vm331, %v3463
        %3496 = vst.msk [vmem:[%s405 + $0x124] sm:$0xff] %vm331, %v3464
        %3497 = vst.msk [vmem:[%s405 + $0x12c] sm:$0xff] %vm331, %v3465
        %3498 = vst.msk [vmem:[%s405 + $0x13c] sm:$0xff] %vm331, %v3466
        %3499 = vst.msk [vmem:[%s405 + $0x144] sm:$0xff] %vm331, %v3467
        %3500 = vst.msk [vmem:[%s405 + $0x154] sm:$0xff] %vm331, %v3468
        %3501 = vst.msk [vmem:[%s405 + $0x15c] sm:$0xff] %vm331, %v3469
        %3502 = vst.msk [vmem:[%s405 + $0x16c] sm:$0xff] %vm331, %v3470
        %3503 = vst.msk [vmem:[%s405 + $0x174] sm:$0xff] %vm331, %v3471
        %v3504 = vld [vmem:[#allocation3] sm:$0xff]
        %v3505 = vld [vmem:[#allocation3 + $0x8] sm:$0xff]
        %v3506 = vld [vmem:[#allocation3 + $0x18] sm:$0xff]
        %v3507 = vld [vmem:[#allocation3 + $0x20] sm:$0xff]
        %v3508 = vld [vmem:[#allocation3 + $0x30] sm:$0xff]
        %v3509 = vld [vmem:[#allocation3 + $0x38] sm:$0xff]
        %v3510 = vld [vmem:[#allocation3 + $0x48] sm:$0xff]
        %v3511 = vld [vmem:[#allocation3 + $0x50] sm:$0xff]
        %v3512 = vld [vmem:[#allocation3 + $0x60] sm:$0xff]
        %v3513 = vld [vmem:[#allocation3 + $0x68] sm:$0xff]
        %v3514 = vld [vmem:[#allocation3 + $0x78] sm:$0xff]
        %v3515 = vld [vmem:[#allocation3 + $0x80] sm:$0xff]
        %v3516 = vld [vmem:[#allocation3 + $0x90] sm:$0xff]
        %v3517 = vld [vmem:[#allocation3 + $0x98] sm:$0xff]
        %v3518 = vld [vmem:[#allocation3 + $0xa8] sm:$0xff]
        %v3519 = vld [vmem:[#allocation3 + $0xb0] sm:$0xff]
        %v3520 = vld [vmem:[#allocation3 + $0xc0] sm:$0xff]
        %v3521 = vld [vmem:[#allocation3 + $0xc8] sm:$0xff]
        %v3522 = vld [vmem:[#allocation3 + $0xd8] sm:$0xff]
        %v3523 = vld [vmem:[#allocation3 + $0xe0] sm:$0xff]
        %v3524 = vld [vmem:[#allocation3 + $0xf0] sm:$0xff]
        %v3525 = vld [vmem:[#allocation3 + $0xf8] sm:$0xff]
        %v3526 = vld [vmem:[#allocation3 + $0x108] sm:$0xff]
        %v3527 = vld [vmem:[#allocation3 + $0x110] sm:$0xff]
        %v3528 = vld [vmem:[#allocation3 + $0x120] sm:$0xff]
        %v3529 = vld [vmem:[#allocation3 + $0x128] sm:$0xff]
        %v3530 = vld [vmem:[#allocation3 + $0x138] sm:$0xff]
        %v3531 = vld [vmem:[#allocation3 + $0x140] sm:$0xff]
        %v3532 = vld [vmem:[#allocation3 + $0x150] sm:$0xff]
        %v3533 = vld [vmem:[#allocation3 + $0x158] sm:$0xff]
        %v3534 = vld [vmem:[#allocation3 + $0x168] sm:$0xff]
        %v3535 = vld [vmem:[#allocation3 + $0x170] sm:$0xff]
        %3536 = vst.msk [vmem:[#allocation6] sm:$0xff] %vm331, %v3504
        %3537 = vst.msk [vmem:[#allocation6 + $0x8] sm:$0xff] %vm331, %v3505
        %3538 = vst.msk [vmem:[#allocation6 + $0x10] sm:$0xff] %vm331, %v3506
        %3539 = vst.msk [vmem:[#allocation6 + $0x18] sm:$0xff] %vm331, %v3507
        %3540 = vst.msk [vmem:[#allocation6 + $0x20] sm:$0xff] %vm331, %v3508
        %3541 = vst.msk [vmem:[#allocation6 + $0x28] sm:$0xff] %vm331, %v3509
        %3542 = vst.msk [vmem:[#allocation6 + $0x30] sm:$0xff] %vm331, %v3510
        %3543 = vst.msk [vmem:[#allocation6 + $0x38] sm:$0xff] %vm331, %v3511
        %3544 = vst.msk [vmem:[#allocation6 + $0x40] sm:$0xff] %vm331, %v3512
        %3545 = vst.msk [vmem:[#allocation6 + $0x48] sm:$0xff] %vm331, %v3513
        %3546 = vst.msk [vmem:[#allocation6 + $0x50] sm:$0xff] %vm331, %v3514
        %3547 = vst.msk [vmem:[#allocation6 + $0x58] sm:$0xff] %vm331, %v3515
        %3548 = vst.msk [vmem:[#allocation6 + $0x60] sm:$0xff] %vm331, %v3516
        %3549 = vst.msk [vmem:[#allocation6 + $0x68] sm:$0xff] %vm331, %v3517
        %3550 = vst.msk [vmem:[#allocation6 + $0x70] sm:$0xff] %vm331, %v3518
        %3551 = vst.msk [vmem:[#allocation6 + $0x78] sm:$0xff] %vm331, %v3519
        %3552 = vst.msk [vmem:[#allocation6 + $0x80] sm:$0xff] %vm331, %v3520
        %3553 = vst.msk [vmem:[#allocation6 + $0x88] sm:$0xff] %vm331, %v3521
        %3554 = vst.msk [vmem:[#allocation6 + $0x90] sm:$0xff] %vm331, %v3522
        %3555 = vst.msk [vmem:[#allocation6 + $0x98] sm:$0xff] %vm331, %v3523
        %3556 = vst.msk [vmem:[#allocation6 + $0xa0] sm:$0xff] %vm331, %v3524
        %3557 = vst.msk [vmem:[#allocation6 + $0xa8] sm:$0xff] %vm331, %v3525
        %3558 = vst.msk [vmem:[#allocation6 + $0xb0] sm:$0xff] %vm331, %v3526
        %3559 = vst.msk [vmem:[#allocation6 + $0xb8] sm:$0xff] %vm331, %v3527
        %3560 = vst.msk [vmem:[#allocation6 + $0xc0] sm:$0xff] %vm331, %v3528
        %3561 = vst.msk [vmem:[#allocation6 + $0xc8] sm:$0xff] %vm331, %v3529
        %3562 = vst.msk [vmem:[#allocation6 + $0xd0] sm:$0xff] %vm331, %v3530
        %3563 = vst.msk [vmem:[#allocation6 + $0xd8] sm:$0xff] %vm331, %v3531
        %3564 = vst.msk [vmem:[#allocation6 + $0xe0] sm:$0xff] %vm331, %v3532
        %3565 = vst.msk [vmem:[#allocation6 + $0xe8] sm:$0xff] %vm331, %v3533
        %3566 = vst.msk [vmem:[#allocation6 + $0xf0] sm:$0xff] %vm331, %v3534
        %3567 = vst.msk [vmem:[#allocation6 + $0xf8] sm:$0xff] %vm331, %v3535
        %v3568 = vld [vmem:[#allocation3 + $0x4] sm:$0xff]
        %v3569 = vld [vmem:[#allocation3 + $0xc] sm:$0xff]
        %v3570 = vld [vmem:[#allocation3 + $0x1c] sm:$0xff]
        %v3571 = vld [vmem:[#allocation3 + $0x24] sm:$0xff]
        %v3572 = vld [vmem:[#allocation3 + $0x34] sm:$0xff]
        %v3573 = vld [vmem:[#allocation3 + $0x3c] sm:$0xff]
        %v3574 = vld [vmem:[#allocation3 + $0x4c] sm:$0xff]
        %v3575 = vld [vmem:[#allocation3 + $0x54] sm:$0xff]
        %v3576 = vld [vmem:[#allocation3 + $0x64] sm:$0xff]
        %v3577 = vld [vmem:[#allocation3 + $0x6c] sm:$0xff]
        %v3578 = vld [vmem:[#allocation3 + $0x7c] sm:$0xff]
        %v3579 = vld [vmem:[#allocation3 + $0x84] sm:$0xff]
        %v3580 = vld [vmem:[#allocation3 + $0x94] sm:$0xff]
        %v3581 = vld [vmem:[#allocation3 + $0x9c] sm:$0xff]
        %v3582 = vld [vmem:[#allocation3 + $0xac] sm:$0xff]
        %v3583 = vld [vmem:[#allocation3 + $0xb4] sm:$0xff]
        %v3584 = vld [vmem:[#allocation3 + $0xc4] sm:$0xff]
        %v3585 = vld [vmem:[#allocation3 + $0xcc] sm:$0xff]
        %v3586 = vld [vmem:[#allocation3 + $0xdc] sm:$0xff]
        %v3587 = vld [vmem:[#allocation3 + $0xe4] sm:$0xff]
        %v3588 = vld [vmem:[#allocation3 + $0xf4] sm:$0xff]
        %v3589 = vld [vmem:[#allocation3 + $0xfc] sm:$0xff]
        %v3590 = vld [vmem:[#allocation3 + $0x10c] sm:$0xff]
        %v3591 = vld [vmem:[#allocation3 + $0x114] sm:$0xff]
        %v3592 = vld [vmem:[#allocation3 + $0x124] sm:$0xff]
        %v3593 = vld [vmem:[#allocation3 + $0x12c] sm:$0xff]
        %v3594 = vld [vmem:[#allocation3 + $0x13c] sm:$0xff]
        %v3595 = vld [vmem:[#allocation3 + $0x144] sm:$0xff]
        %v3596 = vld [vmem:[#allocation3 + $0x154] sm:$0xff]
        %v3597 = vld [vmem:[#allocation3 + $0x15c] sm:$0xff]
        %v3598 = vld [vmem:[#allocation3 + $0x16c] sm:$0xff]
        %v3599 = vld [vmem:[#allocation3 + $0x174] sm:$0xff]
        %3632 = vrot.lane.b32.xlu0 %v3568, 8
        %v3633 = vpop.permute.xlu0 %3632
        %3634 = vrot.lane.b32.xlu0 %v3569, 8
        %v3635 = vpop.permute.xlu0 %3634
        %3636 = vrot.lane.b32.xlu0 %v3570, 8
        %v3637 = vpop.permute.xlu0 %3636
        %3638 = vrot.lane.b32.xlu0 %v3571, 8
        %v3639 = vpop.permute.xlu0 %3638
        %3640 = vrot.lane.b32.xlu0 %v3572, 8
        %v3641 = vpop.permute.xlu0 %3640
        %3642 = vrot.lane.b32.xlu0 %v3573, 8
        %v3643 = vpop.permute.xlu0 %3642
        %3644 = vrot.lane.b32.xlu0 %v3574, 8
        %v3645 = vpop.permute.xlu0 %3644
        %3646 = vrot.lane.b32.xlu0 %v3575, 8
        %v3647 = vpop.permute.xlu0 %3646
        %3648 = vrot.lane.b32.xlu0 %v3576, 8
        %v3649 = vpop.permute.xlu0 %3648
        %3650 = vrot.lane.b32.xlu0 %v3577, 8
        %v3651 = vpop.permute.xlu0 %3650
        %3652 = vrot.lane.b32.xlu0 %v3578, 8
        %v3653 = vpop.permute.xlu0 %3652
        %3654 = vrot.lane.b32.xlu0 %v3579, 8
        %v3655 = vpop.permute.xlu0 %3654
        %3656 = vrot.lane.b32.xlu0 %v3580, 8
        %v3657 = vpop.permute.xlu0 %3656
        %3658 = vrot.lane.b32.xlu0 %v3581, 8
        %v3659 = vpop.permute.xlu0 %3658
        %3660 = vrot.lane.b32.xlu0 %v3582, 8
        %v3661 = vpop.permute.xlu0 %3660
        %3662 = vrot.lane.b32.xlu0 %v3583, 8
        %v3663 = vpop.permute.xlu0 %3662
        %3664 = vrot.lane.b32.xlu0 %v3584, 8
        %v3665 = vpop.permute.xlu0 %3664
        %3666 = vrot.lane.b32.xlu0 %v3585, 8
        %v3667 = vpop.permute.xlu0 %3666
        %3668 = vrot.lane.b32.xlu0 %v3586, 8
        %v3669 = vpop.permute.xlu0 %3668
        %3670 = vrot.lane.b32.xlu0 %v3587, 8
        %v3671 = vpop.permute.xlu0 %3670
        %3672 = vrot.lane.b32.xlu0 %v3588, 8
        %v3673 = vpop.permute.xlu0 %3672
        %3674 = vrot.lane.b32.xlu0 %v3589, 8
        %v3675 = vpop.permute.xlu0 %3674
        %3676 = vrot.lane.b32.xlu0 %v3590, 8
        %v3677 = vpop.permute.xlu0 %3676
        %3678 = vrot.lane.b32.xlu0 %v3591, 8
        %v3679 = vpop.permute.xlu0 %3678
        %3680 = vrot.lane.b32.xlu0 %v3592, 8
        %v3681 = vpop.permute.xlu0 %3680
        %3682 = vrot.lane.b32.xlu0 %v3593, 8
        %v3683 = vpop.permute.xlu0 %3682
        %3684 = vrot.lane.b32.xlu0 %v3594, 8
        %v3685 = vpop.permute.xlu0 %3684
        %3686 = vrot.lane.b32.xlu0 %v3595, 8
        %v3687 = vpop.permute.xlu0 %3686
        %3688 = vrot.lane.b32.xlu0 %v3596, 8
        %v3689 = vpop.permute.xlu0 %3688
        %3690 = vrot.lane.b32.xlu0 %v3597, 8
        %v3691 = vpop.permute.xlu0 %3690
        %3692 = vrot.lane.b32.xlu0 %v3598, 8
        %v3693 = vpop.permute.xlu0 %3692
        %3694 = vrot.lane.b32.xlu0 %v3599, 8
        %v3695 = vpop.permute.xlu0 %3694
        %3728 = vst.msk [vmem:[#allocation6] sm:$0xff] %vm956, %v3633
        %3729 = vst.msk [vmem:[#allocation6 + $0x8] sm:$0xff] %vm956, %v3635
        %3730 = vst.msk [vmem:[#allocation6 + $0x10] sm:$0xff] %vm956, %v3637
        %3731 = vst.msk [vmem:[#allocation6 + $0x18] sm:$0xff] %vm956, %v3639
        %3732 = vst.msk [vmem:[#allocation6 + $0x20] sm:$0xff] %vm956, %v3641
        %3733 = vst.msk [vmem:[#allocation6 + $0x28] sm:$0xff] %vm956, %v3643
        %3734 = vst.msk [vmem:[#allocation6 + $0x30] sm:$0xff] %vm956, %v3645
        %3735 = vst.msk [vmem:[#allocation6 + $0x38] sm:$0xff] %vm956, %v3647
        %3736 = vst.msk [vmem:[#allocation6 + $0x40] sm:$0xff] %vm956, %v3649
        %3737 = vst.msk [vmem:[#allocation6 + $0x48] sm:$0xff] %vm956, %v3651
        %3738 = vst.msk [vmem:[#allocation6 + $0x50] sm:$0xff] %vm956, %v3653
        %3739 = vst.msk [vmem:[#allocation6 + $0x58] sm:$0xff] %vm956, %v3655
        %3740 = vst.msk [vmem:[#allocation6 + $0x60] sm:$0xff] %vm956, %v3657
        %3741 = vst.msk [vmem:[#allocation6 + $0x68] sm:$0xff] %vm956, %v3659
        %3742 = vst.msk [vmem:[#allocation6 + $0x70] sm:$0xff] %vm956, %v3661
        %3743 = vst.msk [vmem:[#allocation6 + $0x78] sm:$0xff] %vm956, %v3663
        %3744 = vst.msk [vmem:[#allocation6 + $0x80] sm:$0xff] %vm956, %v3665
        %3745 = vst.msk [vmem:[#allocation6 + $0x88] sm:$0xff] %vm956, %v3667
        %3746 = vst.msk [vmem:[#allocation6 + $0x90] sm:$0xff] %vm956, %v3669
        %3747 = vst.msk [vmem:[#allocation6 + $0x98] sm:$0xff] %vm956, %v3671
        %3748 = vst.msk [vmem:[#allocation6 + $0xa0] sm:$0xff] %vm956, %v3673
        %3749 = vst.msk [vmem:[#allocation6 + $0xa8] sm:$0xff] %vm956, %v3675
        %3750 = vst.msk [vmem:[#allocation6 + $0xb0] sm:$0xff] %vm956, %v3677
        %3751 = vst.msk [vmem:[#allocation6 + $0xb8] sm:$0xff] %vm956, %v3679
        %3752 = vst.msk [vmem:[#allocation6 + $0xc0] sm:$0xff] %vm956, %v3681
        %3753 = vst.msk [vmem:[#allocation6 + $0xc8] sm:$0xff] %vm956, %v3683
        %3754 = vst.msk [vmem:[#allocation6 + $0xd0] sm:$0xff] %vm956, %v3685
        %3755 = vst.msk [vmem:[#allocation6 + $0xd8] sm:$0xff] %vm956, %v3687
        %3756 = vst.msk [vmem:[#allocation6 + $0xe0] sm:$0xff] %vm956, %v3689
        %3757 = vst.msk [vmem:[#allocation6 + $0xe8] sm:$0xff] %vm956, %v3691
        %3758 = vst.msk [vmem:[#allocation6 + $0xf0] sm:$0xff] %vm956, %v3693
        %3759 = vst.msk [vmem:[#allocation6 + $0xf8] sm:$0xff] %vm956, %v3695
        %v3760 = vld [vmem:[#allocation3 + $0x8] sm:$0xff]
        %v3761 = vld [vmem:[#allocation3 + $0x10] sm:$0xff]
        %v3762 = vld [vmem:[#allocation3 + $0x20] sm:$0xff]
        %v3763 = vld [vmem:[#allocation3 + $0x28] sm:$0xff]
        %v3764 = vld [vmem:[#allocation3 + $0x38] sm:$0xff]
        %v3765 = vld [vmem:[#allocation3 + $0x40] sm:$0xff]
        %v3766 = vld [vmem:[#allocation3 + $0x50] sm:$0xff]
        %v3767 = vld [vmem:[#allocation3 + $0x58] sm:$0xff]
        %v3768 = vld [vmem:[#allocation3 + $0x68] sm:$0xff]
        %v3769 = vld [vmem:[#allocation3 + $0x70] sm:$0xff]
        %v3770 = vld [vmem:[#allocation3 + $0x80] sm:$0xff]
        %v3771 = vld [vmem:[#allocation3 + $0x88] sm:$0xff]
        %v3772 = vld [vmem:[#allocation3 + $0x98] sm:$0xff]
        %v3773 = vld [vmem:[#allocation3 + $0xa0] sm:$0xff]
        %v3774 = vld [vmem:[#allocation3 + $0xb0] sm:$0xff]
        %v3775 = vld [vmem:[#allocation3 + $0xb8] sm:$0xff]
        %v3776 = vld [vmem:[#allocation3 + $0xc8] sm:$0xff]
        %v3777 = vld [vmem:[#allocation3 + $0xd0] sm:$0xff]
        %v3778 = vld [vmem:[#allocation3 + $0xe0] sm:$0xff]
        %v3779 = vld [vmem:[#allocation3 + $0xe8] sm:$0xff]
        %v3780 = vld [vmem:[#allocation3 + $0xf8] sm:$0xff]
        %v3781 = vld [vmem:[#allocation3 + $0x100] sm:$0xff]
        %v3782 = vld [vmem:[#allocation3 + $0x110] sm:$0xff]
        %v3783 = vld [vmem:[#allocation3 + $0x118] sm:$0xff]
        %v3784 = vld [vmem:[#allocation3 + $0x128] sm:$0xff]
        %v3785 = vld [vmem:[#allocation3 + $0x130] sm:$0xff]
        %v3786 = vld [vmem:[#allocation3 + $0x140] sm:$0xff]
        %v3787 = vld [vmem:[#allocation3 + $0x148] sm:$0xff]
        %v3788 = vld [vmem:[#allocation3 + $0x158] sm:$0xff]
        %v3789 = vld [vmem:[#allocation3 + $0x160] sm:$0xff]
        %v3790 = vld [vmem:[#allocation3 + $0x170] sm:$0xff]
        %v3791 = vld [vmem:[#allocation3 + $0x178] sm:$0xff]
        %3824 = vrot.lane.b32.xlu0 %v3760, 16
        %v3825 = vpop.permute.xlu0 %3824
        %3826 = vrot.lane.b32.xlu0 %v3761, 16
        %v3827 = vpop.permute.xlu0 %3826
        %3828 = vrot.lane.b32.xlu0 %v3762, 16
        %v3829 = vpop.permute.xlu0 %3828
        %3830 = vrot.lane.b32.xlu0 %v3763, 16
        %v3831 = vpop.permute.xlu0 %3830
        %3832 = vrot.lane.b32.xlu0 %v3764, 16
        %v3833 = vpop.permute.xlu0 %3832
        %3834 = vrot.lane.b32.xlu0 %v3765, 16
        %v3835 = vpop.permute.xlu0 %3834
        %3836 = vrot.lane.b32.xlu0 %v3766, 16
        %v3837 = vpop.permute.xlu0 %3836
        %3838 = vrot.lane.b32.xlu0 %v3767, 16
        %v3839 = vpop.permute.xlu0 %3838
        %3840 = vrot.lane.b32.xlu0 %v3768, 16
        %v3841 = vpop.permute.xlu0 %3840
        %3842 = vrot.lane.b32.xlu0 %v3769, 16
        %v3843 = vpop.permute.xlu0 %3842
        %3844 = vrot.lane.b32.xlu0 %v3770, 16
        %v3845 = vpop.permute.xlu0 %3844
        %3846 = vrot.lane.b32.xlu0 %v3771, 16
        %v3847 = vpop.permute.xlu0 %3846
        %3848 = vrot.lane.b32.xlu0 %v3772, 16
        %v3849 = vpop.permute.xlu0 %3848
        %3850 = vrot.lane.b32.xlu0 %v3773, 16
        %v3851 = vpop.permute.xlu0 %3850
        %3852 = vrot.lane.b32.xlu0 %v3774, 16
        %v3853 = vpop.permute.xlu0 %3852
        %3854 = vrot.lane.b32.xlu0 %v3775, 16
        %v3855 = vpop.permute.xlu0 %3854
        %3856 = vrot.lane.b32.xlu0 %v3776, 16
        %v3857 = vpop.permute.xlu0 %3856
        %3858 = vrot.lane.b32.xlu0 %v3777, 16
        %v3859 = vpop.permute.xlu0 %3858
        %3860 = vrot.lane.b32.xlu0 %v3778, 16
        %v3861 = vpop.permute.xlu0 %3860
        %3862 = vrot.lane.b32.xlu0 %v3779, 16
        %v3863 = vpop.permute.xlu0 %3862
        %3864 = vrot.lane.b32.xlu0 %v3780, 16
        %v3865 = vpop.permute.xlu0 %3864
        %3866 = vrot.lane.b32.xlu0 %v3781, 16
        %v3867 = vpop.permute.xlu0 %3866
        %3868 = vrot.lane.b32.xlu0 %v3782, 16
        %v3869 = vpop.permute.xlu0 %3868
        %3870 = vrot.lane.b32.xlu0 %v3783, 16
        %v3871 = vpop.permute.xlu0 %3870
        %3872 = vrot.lane.b32.xlu0 %v3784, 16
        %v3873 = vpop.permute.xlu0 %3872
        %3874 = vrot.lane.b32.xlu0 %v3785, 16
        %v3875 = vpop.permute.xlu0 %3874
        %3876 = vrot.lane.b32.xlu0 %v3786, 16
        %v3877 = vpop.permute.xlu0 %3876
        %3878 = vrot.lane.b32.xlu0 %v3787, 16
        %v3879 = vpop.permute.xlu0 %3878
        %3880 = vrot.lane.b32.xlu0 %v3788, 16
        %v3881 = vpop.permute.xlu0 %3880
        %3882 = vrot.lane.b32.xlu0 %v3789, 16
        %v3883 = vpop.permute.xlu0 %3882
        %3884 = vrot.lane.b32.xlu0 %v3790, 16
        %v3885 = vpop.permute.xlu0 %3884
        %3886 = vrot.lane.b32.xlu0 %v3791, 16
        %v3887 = vpop.permute.xlu0 %3886
        %3920 = vst.msk [vmem:[#allocation6] sm:$0xff] %vm1149, %v3825
        %3921 = vst.msk [vmem:[#allocation6 + $0x8] sm:$0xff] %vm1149, %v3827
        %3922 = vst.msk [vmem:[#allocation6 + $0x10] sm:$0xff] %vm1149, %v3829
        %3923 = vst.msk [vmem:[#allocation6 + $0x18] sm:$0xff] %vm1149, %v3831
        %3924 = vst.msk [vmem:[#allocation6 + $0x20] sm:$0xff] %vm1149, %v3833
        %3925 = vst.msk [vmem:[#allocation6 + $0x28] sm:$0xff] %vm1149, %v3835
        %3926 = vst.msk [vmem:[#allocation6 + $0x30] sm:$0xff] %vm1149, %v3837
        %3927 = vst.msk [vmem:[#allocation6 + $0x38] sm:$0xff] %vm1149, %v3839
        %3928 = vst.msk [vmem:[#allocation6 + $0x40] sm:$0xff] %vm1149, %v3841
        %3929 = vst.msk [vmem:[#allocation6 + $0x48] sm:$0xff] %vm1149, %v3843
        %3930 = vst.msk [vmem:[#allocation6 + $0x50] sm:$0xff] %vm1149, %v3845
        %3931 = vst.msk [vmem:[#allocation6 + $0x58] sm:$0xff] %vm1149, %v3847
        %3932 = vst.msk [vmem:[#allocation6 + $0x60] sm:$0xff] %vm1149, %v3849
        %3933 = vst.msk [vmem:[#allocation6 + $0x68] sm:$0xff] %vm1149, %v3851
        %3934 = vst.msk [vmem:[#allocation6 + $0x70] sm:$0xff] %vm1149, %v3853
        %3935 = vst.msk [vmem:[#allocation6 + $0x78] sm:$0xff] %vm1149, %v3855
        %3936 = vst.msk [vmem:[#allocation6 + $0x80] sm:$0xff] %vm1149, %v3857
        %3937 = vst.msk [vmem:[#allocation6 + $0x88] sm:$0xff] %vm1149, %v3859
        %3938 = vst.msk [vmem:[#allocation6 + $0x90] sm:$0xff] %vm1149, %v3861
        %3939 = vst.msk [vmem:[#allocation6 + $0x98] sm:$0xff] %vm1149, %v3863
        %3940 = vst.msk [vmem:[#allocation6 + $0xa0] sm:$0xff] %vm1149, %v3865
        %3941 = vst.msk [vmem:[#allocation6 + $0xa8] sm:$0xff] %vm1149, %v3867
        %3942 = vst.msk [vmem:[#allocation6 + $0xb0] sm:$0xff] %vm1149, %v3869
        %3943 = vst.msk [vmem:[#allocation6 + $0xb8] sm:$0xff] %vm1149, %v3871
        %3944 = vst.msk [vmem:[#allocation6 + $0xc0] sm:$0xff] %vm1149, %v3873
        %3945 = vst.msk [vmem:[#allocation6 + $0xc8] sm:$0xff] %vm1149, %v3875
        %3946 = vst.msk [vmem:[#allocation6 + $0xd0] sm:$0xff] %vm1149, %v3877
        %3947 = vst.msk [vmem:[#allocation6 + $0xd8] sm:$0xff] %vm1149, %v3879
        %3948 = vst.msk [vmem:[#allocation6 + $0xe0] sm:$0xff] %vm1149, %v3881
        %3949 = vst.msk [vmem:[#allocation6 + $0xe8] sm:$0xff] %vm1149, %v3883
        %3950 = vst.msk [vmem:[#allocation6 + $0xf0] sm:$0xff] %vm1149, %v3885
        %3951 = vst.msk [vmem:[#allocation6 + $0xf8] sm:$0xff] %vm1149, %v3887
        %v3952 = vld [vmem:[%s405] sm:$0xff]
        %v3953 = vld [vmem:[%s405 + $0x8] sm:$0xff]
        %v3954 = vld [vmem:[%s405 + $0x18] sm:$0xff]
        %v3955 = vld [vmem:[%s405 + $0x20] sm:$0xff]
        %v3956 = vld [vmem:[%s405 + $0x30] sm:$0xff]
        %v3957 = vld [vmem:[%s405 + $0x38] sm:$0xff]
        %v3958 = vld [vmem:[%s405 + $0x48] sm:$0xff]
        %v3959 = vld [vmem:[%s405 + $0x50] sm:$0xff]
        %v3960 = vld [vmem:[%s405 + $0x60] sm:$0xff]
        %v3961 = vld [vmem:[%s405 + $0x68] sm:$0xff]
        %v3962 = vld [vmem:[%s405 + $0x78] sm:$0xff]
        %v3963 = vld [vmem:[%s405 + $0x80] sm:$0xff]
        %v3964 = vld [vmem:[%s405 + $0x90] sm:$0xff]
        %v3965 = vld [vmem:[%s405 + $0x98] sm:$0xff]
        %v3966 = vld [vmem:[%s405 + $0xa8] sm:$0xff]
        %v3967 = vld [vmem:[%s405 + $0xb0] sm:$0xff]
        %v3968 = vld [vmem:[%s405 + $0xc0] sm:$0xff]
        %v3969 = vld [vmem:[%s405 + $0xc8] sm:$0xff]
        %v3970 = vld [vmem:[%s405 + $0xd8] sm:$0xff]
        %v3971 = vld [vmem:[%s405 + $0xe0] sm:$0xff]
        %v3972 = vld [vmem:[%s405 + $0xf0] sm:$0xff]
        %v3973 = vld [vmem:[%s405 + $0xf8] sm:$0xff]
        %v3974 = vld [vmem:[%s405 + $0x108] sm:$0xff]
        %v3975 = vld [vmem:[%s405 + $0x110] sm:$0xff]
        %v3976 = vld [vmem:[%s405 + $0x120] sm:$0xff]
        %v3977 = vld [vmem:[%s405 + $0x128] sm:$0xff]
        %v3978 = vld [vmem:[%s405 + $0x138] sm:$0xff]
        %v3979 = vld [vmem:[%s405 + $0x140] sm:$0xff]
        %v3980 = vld [vmem:[%s405 + $0x150] sm:$0xff]
        %v3981 = vld [vmem:[%s405 + $0x158] sm:$0xff]
        %v3982 = vld [vmem:[%s405 + $0x168] sm:$0xff]
        %v3983 = vld [vmem:[%s405 + $0x170] sm:$0xff]
        %4016 = vrot.lane.b32.xlu0 %v3952, 24
        %v4017 = vpop.permute.xlu0 %4016
        %4018 = vrot.lane.b32.xlu0 %v3953, 24
        %v4019 = vpop.permute.xlu0 %4018
        %4020 = vrot.lane.b32.xlu0 %v3954, 24
        %v4021 = vpop.permute.xlu0 %4020
        %4022 = vrot.lane.b32.xlu0 %v3955, 24
        %v4023 = vpop.permute.xlu0 %4022
        %4024 = vrot.lane.b32.xlu0 %v3956, 24
        %v4025 = vpop.permute.xlu0 %4024
        %4026 = vrot.lane.b32.xlu0 %v3957, 24
        %v4027 = vpop.permute.xlu0 %4026
        %4028 = vrot.lane.b32.xlu0 %v3958, 24
        %v4029 = vpop.permute.xlu0 %4028
        %4030 = vrot.lane.b32.xlu0 %v3959, 24
        %v4031 = vpop.permute.xlu0 %4030
        %4032 = vrot.lane.b32.xlu0 %v3960, 24
        %v4033 = vpop.permute.xlu0 %4032
        %4034 = vrot.lane.b32.xlu0 %v3961, 24
        %v4035 = vpop.permute.xlu0 %4034
        %4036 = vrot.lane.b32.xlu0 %v3962, 24
        %v4037 = vpop.permute.xlu0 %4036
        %4038 = vrot.lane.b32.xlu0 %v3963, 24
        %v4039 = vpop.permute.xlu0 %4038
        %4040 = vrot.lane.b32.xlu0 %v3964, 24
        %v4041 = vpop.permute.xlu0 %4040
        %4042 = vrot.lane.b32.xlu0 %v3965, 24
        %v4043 = vpop.permute.xlu0 %4042
        %4044 = vrot.lane.b32.xlu0 %v3966, 24
        %v4045 = vpop.permute.xlu0 %4044
        %4046 = vrot.lane.b32.xlu0 %v3967, 24
        %v4047 = vpop.permute.xlu0 %4046
        %4048 = vrot.lane.b32.xlu0 %v3968, 24
        %v4049 = vpop.permute.xlu0 %4048
        %4050 = vrot.lane.b32.xlu0 %v3969, 24
        %v4051 = vpop.permute.xlu0 %4050
        %4052 = vrot.lane.b32.xlu0 %v3970, 24
        %v4053 = vpop.permute.xlu0 %4052
        %4054 = vrot.lane.b32.xlu0 %v3971, 24
        %v4055 = vpop.permute.xlu0 %4054
        %4056 = vrot.lane.b32.xlu0 %v3972, 24
        %v4057 = vpop.permute.xlu0 %4056
        %4058 = vrot.lane.b32.xlu0 %v3973, 24
        %v4059 = vpop.permute.xlu0 %4058
        %4060 = vrot.lane.b32.xlu0 %v3974, 24
        %v4061 = vpop.permute.xlu0 %4060
        %4062 = vrot.lane.b32.xlu0 %v3975, 24
        %v4063 = vpop.permute.xlu0 %4062
        %4064 = vrot.lane.b32.xlu0 %v3976, 24
        %v4065 = vpop.permute.xlu0 %4064
        %4066 = vrot.lane.b32.xlu0 %v3977, 24
        %v4067 = vpop.permute.xlu0 %4066
        %4068 = vrot.lane.b32.xlu0 %v3978, 24
        %v4069 = vpop.permute.xlu0 %4068
        %4070 = vrot.lane.b32.xlu0 %v3979, 24
        %v4071 = vpop.permute.xlu0 %4070
        %4072 = vrot.lane.b32.xlu0 %v3980, 24
        %v4073 = vpop.permute.xlu0 %4072
        %4074 = vrot.lane.b32.xlu0 %v3981, 24
        %v4075 = vpop.permute.xlu0 %4074
        %4076 = vrot.lane.b32.xlu0 %v3982, 24
        %v4077 = vpop.permute.xlu0 %4076
        %4078 = vrot.lane.b32.xlu0 %v3983, 24
        %v4079 = vpop.permute.xlu0 %4078
        %4112 = vst.msk [vmem:[#allocation6] sm:$0xff] %vm1342, %v4017
        %4113 = vst.msk [vmem:[#allocation6 + $0x8] sm:$0xff] %vm1342, %v4019
        %4114 = vst.msk [vmem:[#allocation6 + $0x10] sm:$0xff] %vm1342, %v4021
        %4115 = vst.msk [vmem:[#allocation6 + $0x18] sm:$0xff] %vm1342, %v4023
        %4116 = vst.msk [vmem:[#allocation6 + $0x20] sm:$0xff] %vm1342, %v4025
        %4117 = vst.msk [vmem:[#allocation6 + $0x28] sm:$0xff] %vm1342, %v4027
        %4118 = vst.msk [vmem:[#allocation6 + $0x30] sm:$0xff] %vm1342, %v4029
        %4119 = vst.msk [vmem:[#allocation6 + $0x38] sm:$0xff] %vm1342, %v4031
        %4120 = vst.msk [vmem:[#allocation6 + $0x40] sm:$0xff] %vm1342, %v4033
        %4121 = vst.msk [vmem:[#allocation6 + $0x48] sm:$0xff] %vm1342, %v4035
        %4122 = vst.msk [vmem:[#allocation6 + $0x50] sm:$0xff] %vm1342, %v4037
        %4123 = vst.msk [vmem:[#allocation6 + $0x58] sm:$0xff] %vm1342, %v4039
        %4124 = vst.msk [vmem:[#allocation6 + $0x60] sm:$0xff] %vm1342, %v4041
        %4125 = vst.msk [vmem:[#allocation6 + $0x68] sm:$0xff] %vm1342, %v4043
        %4126 = vst.msk [vmem:[#allocation6 + $0x70] sm:$0xff] %vm1342, %v4045
        %4127 = vst.msk [vmem:[#allocation6 + $0x78] sm:$0xff] %vm1342, %v4047
        %4128 = vst.msk [vmem:[#allocation6 + $0x80] sm:$0xff] %vm1342, %v4049
        %4129 = vst.msk [vmem:[#allocation6 + $0x88] sm:$0xff] %vm1342, %v4051
        %4130 = vst.msk [vmem:[#allocation6 + $0x90] sm:$0xff] %vm1342, %v4053
        %4131 = vst.msk [vmem:[#allocation6 + $0x98] sm:$0xff] %vm1342, %v4055
        %4132 = vst.msk [vmem:[#allocation6 + $0xa0] sm:$0xff] %vm1342, %v4057
        %4133 = vst.msk [vmem:[#allocation6 + $0xa8] sm:$0xff] %vm1342, %v4059
        %4134 = vst.msk [vmem:[#allocation6 + $0xb0] sm:$0xff] %vm1342, %v4061
        %4135 = vst.msk [vmem:[#allocation6 + $0xb8] sm:$0xff] %vm1342, %v4063
        %4136 = vst.msk [vmem:[#allocation6 + $0xc0] sm:$0xff] %vm1342, %v4065
        %4137 = vst.msk [vmem:[#allocation6 + $0xc8] sm:$0xff] %vm1342, %v4067
        %4138 = vst.msk [vmem:[#allocation6 + $0xd0] sm:$0xff] %vm1342, %v4069
        %4139 = vst.msk [vmem:[#allocation6 + $0xd8] sm:$0xff] %vm1342, %v4071
        %4140 = vst.msk [vmem:[#allocation6 + $0xe0] sm:$0xff] %vm1342, %v4073
        %4141 = vst.msk [vmem:[#allocation6 + $0xe8] sm:$0xff] %vm1342, %v4075
        %4142 = vst.msk [vmem:[#allocation6 + $0xf0] sm:$0xff] %vm1342, %v4077
        %4143 = vst.msk [vmem:[#allocation6 + $0xf8] sm:$0xff] %vm1342, %v4079
        %v4144 = vld [vmem:[%s405 + $0x4] sm:$0xff]
        %v4145 = vld [vmem:[%s405 + $0xc] sm:$0xff]
        %v4146 = vld [vmem:[%s405 + $0x1c] sm:$0xff]
        %v4147 = vld [vmem:[%s405 + $0x24] sm:$0xff]
        %v4148 = vld [vmem:[%s405 + $0x34] sm:$0xff]
        %v4149 = vld [vmem:[%s405 + $0x3c] sm:$0xff]
        %v4150 = vld [vmem:[%s405 + $0x4c] sm:$0xff]
        %v4151 = vld [vmem:[%s405 + $0x54] sm:$0xff]
        %v4152 = vld [vmem:[%s405 + $0x64] sm:$0xff]
        %v4153 = vld [vmem:[%s405 + $0x6c] sm:$0xff]
        %v4154 = vld [vmem:[%s405 + $0x7c] sm:$0xff]
        %v4155 = vld [vmem:[%s405 + $0x84] sm:$0xff]
        %v4156 = vld [vmem:[%s405 + $0x94] sm:$0xff]
        %v4157 = vld [vmem:[%s405 + $0x9c] sm:$0xff]
        %v4158 = vld [vmem:[%s405 + $0xac] sm:$0xff]
        %v4159 = vld [vmem:[%s405 + $0xb4] sm:$0xff]
        %v4160 = vld [vmem:[%s405 + $0xc4] sm:$0xff]
        %v4161 = vld [vmem:[%s405 + $0xcc] sm:$0xff]
        %v4162 = vld [vmem:[%s405 + $0xdc] sm:$0xff]
        %v4163 = vld [vmem:[%s405 + $0xe4] sm:$0xff]
        %v4164 = vld [vmem:[%s405 + $0xf4] sm:$0xff]
        %v4165 = vld [vmem:[%s405 + $0xfc] sm:$0xff]
        %v4166 = vld [vmem:[%s405 + $0x10c] sm:$0xff]
        %v4167 = vld [vmem:[%s405 + $0x114] sm:$0xff]
        %v4168 = vld [vmem:[%s405 + $0x124] sm:$0xff]
        %v4169 = vld [vmem:[%s405 + $0x12c] sm:$0xff]
        %v4170 = vld [vmem:[%s405 + $0x13c] sm:$0xff]
        %v4171 = vld [vmem:[%s405 + $0x144] sm:$0xff]
        %v4172 = vld [vmem:[%s405 + $0x154] sm:$0xff]
        %v4173 = vld [vmem:[%s405 + $0x15c] sm:$0xff]
        %v4174 = vld [vmem:[%s405 + $0x16c] sm:$0xff]
        %v4175 = vld [vmem:[%s405 + $0x174] sm:$0xff]
        %4208 = vrot.lane.b32.xlu0 %v4144, 32
        %v4209 = vpop.permute.xlu0 %4208
        %4210 = vrot.lane.b32.xlu0 %v4145, 32
        %v4211 = vpop.permute.xlu0 %4210
        %4212 = vrot.lane.b32.xlu0 %v4146, 32
        %v4213 = vpop.permute.xlu0 %4212
        %4214 = vrot.lane.b32.xlu0 %v4147, 32
        %v4215 = vpop.permute.xlu0 %4214
        %4216 = vrot.lane.b32.xlu0 %v4148, 32
        %v4217 = vpop.permute.xlu0 %4216
        %4218 = vrot.lane.b32.xlu0 %v4149, 32
        %v4219 = vpop.permute.xlu0 %4218
        %4220 = vrot.lane.b32.xlu0 %v4150, 32
        %v4221 = vpop.permute.xlu0 %4220
        %4222 = vrot.lane.b32.xlu0 %v4151, 32
        %v4223 = vpop.permute.xlu0 %4222
        %4224 = vrot.lane.b32.xlu0 %v4152, 32
        %v4225 = vpop.permute.xlu0 %4224
        %4226 = vrot.lane.b32.xlu0 %v4153, 32
        %v4227 = vpop.permute.xlu0 %4226
        %4228 = vrot.lane.b32.xlu0 %v4154, 32
        %v4229 = vpop.permute.xlu0 %4228
        %4230 = vrot.lane.b32.xlu0 %v4155, 32
        %v4231 = vpop.permute.xlu0 %4230
        %4232 = vrot.lane.b32.xlu0 %v4156, 32
        %v4233 = vpop.permute.xlu0 %4232
        %4234 = vrot.lane.b32.xlu0 %v4157, 32
        %v4235 = vpop.permute.xlu0 %4234
        %4236 = vrot.lane.b32.xlu0 %v4158, 32
        %v4237 = vpop.permute.xlu0 %4236
        %4238 = vrot.lane.b32.xlu0 %v4159, 32
        %v4239 = vpop.permute.xlu0 %4238
        %4240 = vrot.lane.b32.xlu0 %v4160, 32
        %v4241 = vpop.permute.xlu0 %4240
        %4242 = vrot.lane.b32.xlu0 %v4161, 32
        %v4243 = vpop.permute.xlu0 %4242
        %4244 = vrot.lane.b32.xlu0 %v4162, 32
        %v4245 = vpop.permute.xlu0 %4244
        %4246 = vrot.lane.b32.xlu0 %v4163, 32
        %v4247 = vpop.permute.xlu0 %4246
        %4248 = vrot.lane.b32.xlu0 %v4164, 32
        %v4249 = vpop.permute.xlu0 %4248
        %4250 = vrot.lane.b32.xlu0 %v4165, 32
        %v4251 = vpop.permute.xlu0 %4250
        %4252 = vrot.lane.b32.xlu0 %v4166, 32
        %v4253 = vpop.permute.xlu0 %4252
        %4254 = vrot.lane.b32.xlu0 %v4167, 32
        %v4255 = vpop.permute.xlu0 %4254
        %4256 = vrot.lane.b32.xlu0 %v4168, 32
        %v4257 = vpop.permute.xlu0 %4256
        %4258 = vrot.lane.b32.xlu0 %v4169, 32
        %v4259 = vpop.permute.xlu0 %4258
        %4260 = vrot.lane.b32.xlu0 %v4170, 32
        %v4261 = vpop.permute.xlu0 %4260
        %4262 = vrot.lane.b32.xlu0 %v4171, 32
        %v4263 = vpop.permute.xlu0 %4262
        %4264 = vrot.lane.b32.xlu0 %v4172, 32
        %v4265 = vpop.permute.xlu0 %4264
        %4266 = vrot.lane.b32.xlu0 %v4173, 32
        %v4267 = vpop.permute.xlu0 %4266
        %4268 = vrot.lane.b32.xlu0 %v4174, 32
        %v4269 = vpop.permute.xlu0 %4268
        %4270 = vrot.lane.b32.xlu0 %v4175, 32
        %v4271 = vpop.permute.xlu0 %4270
        %4304 = vst.msk [vmem:[#allocation6] sm:$0xff] %vm1535, %v4209
        %4305 = vst.msk [vmem:[#allocation6 + $0x8] sm:$0xff] %vm1535, %v4211
        %4306 = vst.msk [vmem:[#allocation6 + $0x10] sm:$0xff] %vm1535, %v4213
        %4307 = vst.msk [vmem:[#allocation6 + $0x18] sm:$0xff] %vm1535, %v4215
        %4308 = vst.msk [vmem:[#allocation6 + $0x20] sm:$0xff] %vm1535, %v4217
        %4309 = vst.msk [vmem:[#allocation6 + $0x28] sm:$0xff] %vm1535, %v4219
        %4310 = vst.msk [vmem:[#allocation6 + $0x30] sm:$0xff] %vm1535, %v4221
        %4311 = vst.msk [vmem:[#allocation6 + $0x38] sm:$0xff] %vm1535, %v4223
        %4312 = vst.msk [vmem:[#allocation6 + $0x40] sm:$0xff] %vm1535, %v4225
        %4313 = vst.msk [vmem:[#allocation6 + $0x48] sm:$0xff] %vm1535, %v4227
        %4314 = vst.msk [vmem:[#allocation6 + $0x50] sm:$0xff] %vm1535, %v4229
        %4315 = vst.msk [vmem:[#allocation6 + $0x58] sm:$0xff] %vm1535, %v4231
        %4316 = vst.msk [vmem:[#allocation6 + $0x60] sm:$0xff] %vm1535, %v4233
        %4317 = vst.msk [vmem:[#allocation6 + $0x68] sm:$0xff] %vm1535, %v4235
        %4318 = vst.msk [vmem:[#allocation6 + $0x70] sm:$0xff] %vm1535, %v4237
        %4319 = vst.msk [vmem:[#allocation6 + $0x78] sm:$0xff] %vm1535, %v4239
        %4320 = vst.msk [vmem:[#allocation6 + $0x80] sm:$0xff] %vm1535, %v4241
        %4321 = vst.msk [vmem:[#allocation6 + $0x88] sm:$0xff] %vm1535, %v4243
        %4322 = vst.msk [vmem:[#allocation6 + $0x90] sm:$0xff] %vm1535, %v4245
        %4323 = vst.msk [vmem:[#allocation6 + $0x98] sm:$0xff] %vm1535, %v4247
        %4324 = vst.msk [vmem:[#allocation6 + $0xa0] sm:$0xff] %vm1535, %v4249
        %4325 = vst.msk [vmem:[#allocation6 + $0xa8] sm:$0xff] %vm1535, %v4251
        %4326 = vst.msk [vmem:[#allocation6 + $0xb0] sm:$0xff] %vm1535, %v4253
        %4327 = vst.msk [vmem:[#allocation6 + $0xb8] sm:$0xff] %vm1535, %v4255
        %4328 = vst.msk [vmem:[#allocation6 + $0xc0] sm:$0xff] %vm1535, %v4257
        %4329 = vst.msk [vmem:[#allocation6 + $0xc8] sm:$0xff] %vm1535, %v4259
        %4330 = vst.msk [vmem:[#allocation6 + $0xd0] sm:$0xff] %vm1535, %v4261
        %4331 = vst.msk [vmem:[#allocation6 + $0xd8] sm:$0xff] %vm1535, %v4263
        %4332 = vst.msk [vmem:[#allocation6 + $0xe0] sm:$0xff] %vm1535, %v4265
        %4333 = vst.msk [vmem:[#allocation6 + $0xe8] sm:$0xff] %vm1535, %v4267
        %4334 = vst.msk [vmem:[#allocation6 + $0xf0] sm:$0xff] %vm1535, %v4269
        %4335 = vst.msk [vmem:[#allocation6 + $0xf8] sm:$0xff] %vm1535, %v4271
        %v4336 = vld [vmem:[%s405 + $0x8] sm:$0xff]
        %v4337 = vld [vmem:[%s405 + $0x10] sm:$0xff]
        %v4338 = vld [vmem:[%s405 + $0x20] sm:$0xff]
        %v4339 = vld [vmem:[%s405 + $0x28] sm:$0xff]
        %v4340 = vld [vmem:[%s405 + $0x38] sm:$0xff]
        %v4341 = vld [vmem:[%s405 + $0x40] sm:$0xff]
        %v4342 = vld [vmem:[%s405 + $0x50] sm:$0xff]
        %v4343 = vld [vmem:[%s405 + $0x58] sm:$0xff]
        %v4344 = vld [vmem:[%s405 + $0x68] sm:$0xff]
        %v4345 = vld [vmem:[%s405 + $0x70] sm:$0xff]
        %v4346 = vld [vmem:[%s405 + $0x80] sm:$0xff]
        %v4347 = vld [vmem:[%s405 + $0x88] sm:$0xff]
        %v4348 = vld [vmem:[%s405 + $0x98] sm:$0xff]
        %v4349 = vld [vmem:[%s405 + $0xa0] sm:$0xff]
        %v4350 = vld [vmem:[%s405 + $0xb0] sm:$0xff]
        %v4351 = vld [vmem:[%s405 + $0xb8] sm:$0xff]
        %v4352 = vld [vmem:[%s405 + $0xc8] sm:$0xff]
        %v4353 = vld [vmem:[%s405 + $0xd0] sm:$0xff]
        %v4354 = vld [vmem:[%s405 + $0xe0] sm:$0xff]
        %v4355 = vld [vmem:[%s405 + $0xe8] sm:$0xff]
        %v4356 = vld [vmem:[%s405 + $0xf8] sm:$0xff]
        %v4357 = vld [vmem:[%s405 + $0x100] sm:$0xff]
        %v4358 = vld [vmem:[%s405 + $0x110] sm:$0xff]
        %v4359 = vld [vmem:[%s405 + $0x118] sm:$0xff]
        %v4360 = vld [vmem:[%s405 + $0x128] sm:$0xff]
        %v4361 = vld [vmem:[%s405 + $0x130] sm:$0xff]
        %v4362 = vld [vmem:[%s405 + $0x140] sm:$0xff]
        %v4363 = vld [vmem:[%s405 + $0x148] sm:$0xff]
        %v4364 = vld [vmem:[%s405 + $0x158] sm:$0xff]
        %v4365 = vld [vmem:[%s405 + $0x160] sm:$0xff]
        %v4366 = vld [vmem:[%s405 + $0x170] sm:$0xff]
        %v4367 = vld [vmem:[%s405 + $0x178] sm:$0xff]
        %4400 = vrot.lane.b32.xlu0 %v4336, 40
        %v4401 = vpop.permute.xlu0 %4400
        %4402 = vrot.lane.b32.xlu0 %v4337, 40
        %v4403 = vpop.permute.xlu0 %4402
        %4404 = vrot.lane.b32.xlu0 %v4338, 40
        %v4405 = vpop.permute.xlu0 %4404
        %4406 = vrot.lane.b32.xlu0 %v4339, 40
        %v4407 = vpop.permute.xlu0 %4406
        %4408 = vrot.lane.b32.xlu0 %v4340, 40
        %v4409 = vpop.permute.xlu0 %4408
        %4410 = vrot.lane.b32.xlu0 %v4341, 40
        %v4411 = vpop.permute.xlu0 %4410
        %4412 = vrot.lane.b32.xlu0 %v4342, 40
        %v4413 = vpop.permute.xlu0 %4412
        %4414 = vrot.lane.b32.xlu0 %v4343, 40
        %v4415 = vpop.permute.xlu0 %4414
        %4416 = vrot.lane.b32.xlu0 %v4344, 40
        %v4417 = vpop.permute.xlu0 %4416
        %4418 = vrot.lane.b32.xlu0 %v4345, 40
        %v4419 = vpop.permute.xlu0 %4418
        %4420 = vrot.lane.b32.xlu0 %v4346, 40
        %v4421 = vpop.permute.xlu0 %4420
        %4422 = vrot.lane.b32.xlu0 %v4347, 40
        %v4423 = vpop.permute.xlu0 %4422
        %4424 = vrot.lane.b32.xlu0 %v4348, 40
        %v4425 = vpop.permute.xlu0 %4424
        %4426 = vrot.lane.b32.xlu0 %v4349, 40
        %v4427 = vpop.permute.xlu0 %4426
        %4428 = vrot.lane.b32.xlu0 %v4350, 40
        %v4429 = vpop.permute.xlu0 %4428
        %4430 = vrot.lane.b32.xlu0 %v4351, 40
        %v4431 = vpop.permute.xlu0 %4430
        %4432 = vrot.lane.b32.xlu0 %v4352, 40
        %v4433 = vpop.permute.xlu0 %4432
        %4434 = vrot.lane.b32.xlu0 %v4353, 40
        %v4435 = vpop.permute.xlu0 %4434
        %4436 = vrot.lane.b32.xlu0 %v4354, 40
        %v4437 = vpop.permute.xlu0 %4436
        %4438 = vrot.lane.b32.xlu0 %v4355, 40
        %v4439 = vpop.permute.xlu0 %4438
        %4440 = vrot.lane.b32.xlu0 %v4356, 40
        %v4441 = vpop.permute.xlu0 %4440
        %4442 = vrot.lane.b32.xlu0 %v4357, 40
        %v4443 = vpop.permute.xlu0 %4442
        %4444 = vrot.lane.b32.xlu0 %v4358, 40
        %v4445 = vpop.permute.xlu0 %4444
        %4446 = vrot.lane.b32.xlu0 %v4359, 40
        %v4447 = vpop.permute.xlu0 %4446
        %4448 = vrot.lane.b32.xlu0 %v4360, 40
        %v4449 = vpop.permute.xlu0 %4448
        %4450 = vrot.lane.b32.xlu0 %v4361, 40
        %v4451 = vpop.permute.xlu0 %4450
        %4452 = vrot.lane.b32.xlu0 %v4362, 40
        %v4453 = vpop.permute.xlu0 %4452
        %4454 = vrot.lane.b32.xlu0 %v4363, 40
        %v4455 = vpop.permute.xlu0 %4454
        %4456 = vrot.lane.b32.xlu0 %v4364, 40
        %v4457 = vpop.permute.xlu0 %4456
        %4458 = vrot.lane.b32.xlu0 %v4365, 40
        %v4459 = vpop.permute.xlu0 %4458
        %4460 = vrot.lane.b32.xlu0 %v4366, 40
        %v4461 = vpop.permute.xlu0 %4460
        %4462 = vrot.lane.b32.xlu0 %v4367, 40
        %v4463 = vpop.permute.xlu0 %4462
        %4496 = vst.msk [vmem:[#allocation6] sm:$0xff] %vm1728, %v4401
        %4497 = vst.msk [vmem:[#allocation6 + $0x8] sm:$0xff] %vm1728, %v4403
        %4498 = vst.msk [vmem:[#allocation6 + $0x10] sm:$0xff] %vm1728, %v4405
        %4499 = vst.msk [vmem:[#allocation6 + $0x18] sm:$0xff] %vm1728, %v4407
        %4500 = vst.msk [vmem:[#allocation6 + $0x20] sm:$0xff] %vm1728, %v4409
        %4501 = vst.msk [vmem:[#allocation6 + $0x28] sm:$0xff] %vm1728, %v4411
        %4502 = vst.msk [vmem:[#allocation6 + $0x30] sm:$0xff] %vm1728, %v4413
        %4503 = vst.msk [vmem:[#allocation6 + $0x38] sm:$0xff] %vm1728, %v4415
        %4504 = vst.msk [vmem:[#allocation6 + $0x40] sm:$0xff] %vm1728, %v4417
        %4505 = vst.msk [vmem:[#allocation6 + $0x48] sm:$0xff] %vm1728, %v4419
        %4506 = vst.msk [vmem:[#allocation6 + $0x50] sm:$0xff] %vm1728, %v4421
        %4507 = vst.msk [vmem:[#allocation6 + $0x58] sm:$0xff] %vm1728, %v4423
        %4508 = vst.msk [vmem:[#allocation6 + $0x60] sm:$0xff] %vm1728, %v4425
        %4509 = vst.msk [vmem:[#allocation6 + $0x68] sm:$0xff] %vm1728, %v4427
        %4510 = vst.msk [vmem:[#allocation6 + $0x70] sm:$0xff] %vm1728, %v4429
        %4511 = vst.msk [vmem:[#allocation6 + $0x78] sm:$0xff] %vm1728, %v4431
        %4512 = vst.msk [vmem:[#allocation6 + $0x80] sm:$0xff] %vm1728, %v4433
        %4513 = vst.msk [vmem:[#allocation6 + $0x88] sm:$0xff] %vm1728, %v4435
        %4514 = vst.msk [vmem:[#allocation6 + $0x90] sm:$0xff] %vm1728, %v4437
        %4515 = vst.msk [vmem:[#allocation6 + $0x98] sm:$0xff] %vm1728, %v4439
        %4516 = vst.msk [vmem:[#allocation6 + $0xa0] sm:$0xff] %vm1728, %v4441
        %4517 = vst.msk [vmem:[#allocation6 + $0xa8] sm:$0xff] %vm1728, %v4443
        %4518 = vst.msk [vmem:[#allocation6 + $0xb0] sm:$0xff] %vm1728, %v4445
        %4519 = vst.msk [vmem:[#allocation6 + $0xb8] sm:$0xff] %vm1728, %v4447
        %4520 = vst.msk [vmem:[#allocation6 + $0xc0] sm:$0xff] %vm1728, %v4449
        %4521 = vst.msk [vmem:[#allocation6 + $0xc8] sm:$0xff] %vm1728, %v4451
        %4522 = vst.msk [vmem:[#allocation6 + $0xd0] sm:$0xff] %vm1728, %v4453
        %4523 = vst.msk [vmem:[#allocation6 + $0xd8] sm:$0xff] %vm1728, %v4455
        %4524 = vst.msk [vmem:[#allocation6 + $0xe0] sm:$0xff] %vm1728, %v4457
        %4525 = vst.msk [vmem:[#allocation6 + $0xe8] sm:$0xff] %vm1728, %v4459
        %4526 = vst.msk [vmem:[#allocation6 + $0xf0] sm:$0xff] %vm1728, %v4461
        %4527 = vst.msk [vmem:[#allocation6 + $0xf8] sm:$0xff] %vm1728, %v4463
        %s4528 = scalar_lea.vmem [#allocation3], 192
        %v4529 = vld [vmem:[%s4528] sm:$0xff]
        %v4530 = vld [vmem:[%s4528 + $0x8] sm:$0xff]
        %v4531 = vld [vmem:[%s4528 + $0x18] sm:$0xff]
        %v4532 = vld [vmem:[%s4528 + $0x20] sm:$0xff]
        %v4533 = vld [vmem:[%s4528 + $0x30] sm:$0xff]
        %v4534 = vld [vmem:[%s4528 + $0x38] sm:$0xff]
        %v4535 = vld [vmem:[%s4528 + $0x48] sm:$0xff]
        %v4536 = vld [vmem:[%s4528 + $0x50] sm:$0xff]
        %v4537 = vld [vmem:[%s4528 + $0x60] sm:$0xff]
        %v4538 = vld [vmem:[%s4528 + $0x68] sm:$0xff]
        %v4539 = vld [vmem:[%s4528 + $0x78] sm:$0xff]
        %v4540 = vld [vmem:[%s4528 + $0x80] sm:$0xff]
        %v4541 = vld [vmem:[%s4528 + $0x90] sm:$0xff]
        %v4542 = vld [vmem:[%s4528 + $0x98] sm:$0xff]
        %v4543 = vld [vmem:[%s4528 + $0xa8] sm:$0xff]
        %v4544 = vld [vmem:[%s4528 + $0xb0] sm:$0xff]
        %v4545 = vld [vmem:[%s4528 + $0xc0] sm:$0xff]
        %v4546 = vld [vmem:[%s4528 + $0xc8] sm:$0xff]
        %v4547 = vld [vmem:[%s4528 + $0xd8] sm:$0xff]
        %v4548 = vld [vmem:[%s4528 + $0xe0] sm:$0xff]
        %v4549 = vld [vmem:[%s4528 + $0xf0] sm:$0xff]
        %v4550 = vld [vmem:[%s4528 + $0xf8] sm:$0xff]
        %v4551 = vld [vmem:[%s4528 + $0x108] sm:$0xff]
        %v4552 = vld [vmem:[%s4528 + $0x110] sm:$0xff]
        %v4553 = vld [vmem:[%s4528 + $0x120] sm:$0xff]
        %v4554 = vld [vmem:[%s4528 + $0x128] sm:$0xff]
        %v4555 = vld [vmem:[%s4528 + $0x138] sm:$0xff]
        %v4556 = vld [vmem:[%s4528 + $0x140] sm:$0xff]
        %v4557 = vld [vmem:[%s4528 + $0x150] sm:$0xff]
        %v4558 = vld [vmem:[%s4528 + $0x158] sm:$0xff]
        %v4559 = vld [vmem:[%s4528 + $0x168] sm:$0xff]
        %v4560 = vld [vmem:[%s4528 + $0x170] sm:$0xff]
        %4593 = vrot.lane.b32.xlu0 %v4529, 48
        %v4594 = vpop.permute.xlu0 %4593
        %4595 = vrot.lane.b32.xlu0 %v4530, 48
        %v4596 = vpop.permute.xlu0 %4595
        %4597 = vrot.lane.b32.xlu0 %v4531, 48
        %v4598 = vpop.permute.xlu0 %4597
        %4599 = vrot.lane.b32.xlu0 %v4532, 48
        %v4600 = vpop.permute.xlu0 %4599
        %4601 = vrot.lane.b32.xlu0 %v4533, 48
        %v4602 = vpop.permute.xlu0 %4601
        %4603 = vrot.lane.b32.xlu0 %v4534, 48
        %v4604 = vpop.permute.xlu0 %4603
        %4605 = vrot.lane.b32.xlu0 %v4535, 48
        %v4606 = vpop.permute.xlu0 %4605
        %4607 = vrot.lane.b32.xlu0 %v4536, 48
        %v4608 = vpop.permute.xlu0 %4607
        %4609 = vrot.lane.b32.xlu0 %v4537, 48
        %v4610 = vpop.permute.xlu0 %4609
        %4611 = vrot.lane.b32.xlu0 %v4538, 48
        %v4612 = vpop.permute.xlu0 %4611
        %4613 = vrot.lane.b32.xlu0 %v4539, 48
        %v4614 = vpop.permute.xlu0 %4613
        %4615 = vrot.lane.b32.xlu0 %v4540, 48
        %v4616 = vpop.permute.xlu0 %4615
        %4617 = vrot.lane.b32.xlu0 %v4541, 48
        %v4618 = vpop.permute.xlu0 %4617
        %4619 = vrot.lane.b32.xlu0 %v4542, 48
        %v4620 = vpop.permute.xlu0 %4619
        %4621 = vrot.lane.b32.xlu0 %v4543, 48
        %v4622 = vpop.permute.xlu0 %4621
        %4623 = vrot.lane.b32.xlu0 %v4544, 48
        %v4624 = vpop.permute.xlu0 %4623
        %4625 = vrot.lane.b32.xlu0 %v4545, 48
        %v4626 = vpop.permute.xlu0 %4625
        %4627 = vrot.lane.b32.xlu0 %v4546, 48
        %v4628 = vpop.permute.xlu0 %4627
        %4629 = vrot.lane.b32.xlu0 %v4547, 48
        %v4630 = vpop.permute.xlu0 %4629
        %4631 = vrot.lane.b32.xlu0 %v4548, 48
        %v4632 = vpop.permute.xlu0 %4631
        %4633 = vrot.lane.b32.xlu0 %v4549, 48
        %v4634 = vpop.permute.xlu0 %4633
        %4635 = vrot.lane.b32.xlu0 %v4550, 48
        %v4636 = vpop.permute.xlu0 %4635
        %4637 = vrot.lane.b32.xlu0 %v4551, 48
        %v4638 = vpop.permute.xlu0 %4637
        %4639 = vrot.lane.b32.xlu0 %v4552, 48
        %v4640 = vpop.permute.xlu0 %4639
        %4641 = vrot.lane.b32.xlu0 %v4553, 48
        %v4642 = vpop.permute.xlu0 %4641
        %4643 = vrot.lane.b32.xlu0 %v4554, 48
        %v4644 = vpop.permute.xlu0 %4643
        %4645 = vrot.lane.b32.xlu0 %v4555, 48
        %v4646 = vpop.permute.xlu0 %4645
        %4647 = vrot.lane.b32.xlu0 %v4556, 48
        %v4648 = vpop.permute.xlu0 %4647
        %4649 = vrot.lane.b32.xlu0 %v4557, 48
        %v4650 = vpop.permute.xlu0 %4649
        %4651 = vrot.lane.b32.xlu0 %v4558, 48
        %v4652 = vpop.permute.xlu0 %4651
        %4653 = vrot.lane.b32.xlu0 %v4559, 48
        %v4654 = vpop.permute.xlu0 %4653
        %4655 = vrot.lane.b32.xlu0 %v4560, 48
        %v4656 = vpop.permute.xlu0 %4655
        %4689 = vst.msk [vmem:[#allocation6] sm:$0xff] %vm1922, %v4594
        %4690 = vst.msk [vmem:[#allocation6 + $0x8] sm:$0xff] %vm1922, %v4596
        %4691 = vst.msk [vmem:[#allocation6 + $0x10] sm:$0xff] %vm1922, %v4598
        %4692 = vst.msk [vmem:[#allocation6 + $0x18] sm:$0xff] %vm1922, %v4600
        %4693 = vst.msk [vmem:[#allocation6 + $0x20] sm:$0xff] %vm1922, %v4602
        %4694 = vst.msk [vmem:[#allocation6 + $0x28] sm:$0xff] %vm1922, %v4604
        %4695 = vst.msk [vmem:[#allocation6 + $0x30] sm:$0xff] %vm1922, %v4606
        %4696 = vst.msk [vmem:[#allocation6 + $0x38] sm:$0xff] %vm1922, %v4608
        %4697 = vst.msk [vmem:[#allocation6 + $0x40] sm:$0xff] %vm1922, %v4610
        %4698 = vst.msk [vmem:[#allocation6 + $0x48] sm:$0xff] %vm1922, %v4612
        %4699 = vst.msk [vmem:[#allocation6 + $0x50] sm:$0xff] %vm1922, %v4614
        %4700 = vst.msk [vmem:[#allocation6 + $0x58] sm:$0xff] %vm1922, %v4616
        %4701 = vst.msk [vmem:[#allocation6 + $0x60] sm:$0xff] %vm1922, %v4618
        %4702 = vst.msk [vmem:[#allocation6 + $0x68] sm:$0xff] %vm1922, %v4620
        %4703 = vst.msk [vmem:[#allocation6 + $0x70] sm:$0xff] %vm1922, %v4622
        %4704 = vst.msk [vmem:[#allocation6 + $0x78] sm:$0xff] %vm1922, %v4624
        %4705 = vst.msk [vmem:[#allocation6 + $0x80] sm:$0xff] %vm1922, %v4626
        %4706 = vst.msk [vmem:[#allocation6 + $0x88] sm:$0xff] %vm1922, %v4628
        %4707 = vst.msk [vmem:[#allocation6 + $0x90] sm:$0xff] %vm1922, %v4630
        %4708 = vst.msk [vmem:[#allocation6 + $0x98] sm:$0xff] %vm1922, %v4632
        %4709 = vst.msk [vmem:[#allocation6 + $0xa0] sm:$0xff] %vm1922, %v4634
        %4710 = vst.msk [vmem:[#allocation6 + $0xa8] sm:$0xff] %vm1922, %v4636
        %4711 = vst.msk [vmem:[#allocation6 + $0xb0] sm:$0xff] %vm1922, %v4638
        %4712 = vst.msk [vmem:[#allocation6 + $0xb8] sm:$0xff] %vm1922, %v4640
        %4713 = vst.msk [vmem:[#allocation6 + $0xc0] sm:$0xff] %vm1922, %v4642
        %4714 = vst.msk [vmem:[#allocation6 + $0xc8] sm:$0xff] %vm1922, %v4644
        %4715 = vst.msk [vmem:[#allocation6 + $0xd0] sm:$0xff] %vm1922, %v4646
        %4716 = vst.msk [vmem:[#allocation6 + $0xd8] sm:$0xff] %vm1922, %v4648
        %4717 = vst.msk [vmem:[#allocation6 + $0xe0] sm:$0xff] %vm1922, %v4650
        %4718 = vst.msk [vmem:[#allocation6 + $0xe8] sm:$0xff] %vm1922, %v4652
        %4719 = vst.msk [vmem:[#allocation6 + $0xf0] sm:$0xff] %vm1922, %v4654
        %4720 = vst.msk [vmem:[#allocation6 + $0xf8] sm:$0xff] %vm1922, %v4656
        %v4721 = vld [vmem:[%s4528 + $0x4] sm:$0xff]
        %v4722 = vld [vmem:[%s4528 + $0xc] sm:$0xff]
        %v4723 = vld [vmem:[%s4528 + $0x1c] sm:$0xff]
        %v4724 = vld [vmem:[%s4528 + $0x24] sm:$0xff]
        %v4725 = vld [vmem:[%s4528 + $0x34] sm:$0xff]
        %v4726 = vld [vmem:[%s4528 + $0x3c] sm:$0xff]
        %v4727 = vld [vmem:[%s4528 + $0x4c] sm:$0xff]
        %v4728 = vld [vmem:[%s4528 + $0x54] sm:$0xff]
        %v4729 = vld [vmem:[%s4528 + $0x64] sm:$0xff]
        %v4730 = vld [vmem:[%s4528 + $0x6c] sm:$0xff]
        %v4731 = vld [vmem:[%s4528 + $0x7c] sm:$0xff]
        %v4732 = vld [vmem:[%s4528 + $0x84] sm:$0xff]
        %v4733 = vld [vmem:[%s4528 + $0x94] sm:$0xff]
        %v4734 = vld [vmem:[%s4528 + $0x9c] sm:$0xff]
        %v4735 = vld [vmem:[%s4528 + $0xac] sm:$0xff]
        %v4736 = vld [vmem:[%s4528 + $0xb4] sm:$0xff]
        %v4737 = vld [vmem:[%s4528 + $0xc4] sm:$0xff]
        %v4738 = vld [vmem:[%s4528 + $0xcc] sm:$0xff]
        %v4739 = vld [vmem:[%s4528 + $0xdc] sm:$0xff]
        %v4740 = vld [vmem:[%s4528 + $0xe4] sm:$0xff]
        %v4741 = vld [vmem:[%s4528 + $0xf4] sm:$0xff]
        %v4742 = vld [vmem:[%s4528 + $0xfc] sm:$0xff]
        %v4743 = vld [vmem:[%s4528 + $0x10c] sm:$0xff]
        %v4744 = vld [vmem:[%s4528 + $0x114] sm:$0xff]
        %v4745 = vld [vmem:[%s4528 + $0x124] sm:$0xff]
        %v4746 = vld [vmem:[%s4528 + $0x12c] sm:$0xff]
        %v4747 = vld [vmem:[%s4528 + $0x13c] sm:$0xff]
        %v4748 = vld [vmem:[%s4528 + $0x144] sm:$0xff]
        %v4749 = vld [vmem:[%s4528 + $0x154] sm:$0xff]
        %v4750 = vld [vmem:[%s4528 + $0x15c] sm:$0xff]
        %v4751 = vld [vmem:[%s4528 + $0x16c] sm:$0xff]
        %v4752 = vld [vmem:[%s4528 + $0x174] sm:$0xff]
        %4785 = vrot.lane.b32.xlu0 %v4721, 56
        %v4786 = vpop.permute.xlu0 %4785
        %4787 = vrot.lane.b32.xlu0 %v4722, 56
        %v4788 = vpop.permute.xlu0 %4787
        %4789 = vrot.lane.b32.xlu0 %v4723, 56
        %v4790 = vpop.permute.xlu0 %4789
        %4791 = vrot.lane.b32.xlu0 %v4724, 56
        %v4792 = vpop.permute.xlu0 %4791
        %4793 = vrot.lane.b32.xlu0 %v4725, 56
        %v4794 = vpop.permute.xlu0 %4793
        %4795 = vrot.lane.b32.xlu0 %v4726, 56
        %v4796 = vpop.permute.xlu0 %4795
        %4797 = vrot.lane.b32.xlu0 %v4727, 56
        %v4798 = vpop.permute.xlu0 %4797
        %4799 = vrot.lane.b32.xlu0 %v4728, 56
        %v4800 = vpop.permute.xlu0 %4799
        %4801 = vrot.lane.b32.xlu0 %v4729, 56
        %v4802 = vpop.permute.xlu0 %4801
        %4803 = vrot.lane.b32.xlu0 %v4730, 56
        %v4804 = vpop.permute.xlu0 %4803
        %4805 = vrot.lane.b32.xlu0 %v4731, 56
        %v4806 = vpop.permute.xlu0 %4805
        %4807 = vrot.lane.b32.xlu0 %v4732, 56
        %v4808 = vpop.permute.xlu0 %4807
        %4809 = vrot.lane.b32.xlu0 %v4733, 56
        %v4810 = vpop.permute.xlu0 %4809
        %4811 = vrot.lane.b32.xlu0 %v4734, 56
        %v4812 = vpop.permute.xlu0 %4811
        %4813 = vrot.lane.b32.xlu0 %v4735, 56
        %v4814 = vpop.permute.xlu0 %4813
        %4815 = vrot.lane.b32.xlu0 %v4736, 56
        %v4816 = vpop.permute.xlu0 %4815
        %4817 = vrot.lane.b32.xlu0 %v4737, 56
        %v4818 = vpop.permute.xlu0 %4817
        %4819 = vrot.lane.b32.xlu0 %v4738, 56
        %v4820 = vpop.permute.xlu0 %4819
        %4821 = vrot.lane.b32.xlu0 %v4739, 56
        %v4822 = vpop.permute.xlu0 %4821
        %4823 = vrot.lane.b32.xlu0 %v4740, 56
        %v4824 = vpop.permute.xlu0 %4823
        %4825 = vrot.lane.b32.xlu0 %v4741, 56
        %v4826 = vpop.permute.xlu0 %4825
        %4827 = vrot.lane.b32.xlu0 %v4742, 56
        %v4828 = vpop.permute.xlu0 %4827
        %4829 = vrot.lane.b32.xlu0 %v4743, 56
        %v4830 = vpop.permute.xlu0 %4829
        %4831 = vrot.lane.b32.xlu0 %v4744, 56
        %v4832 = vpop.permute.xlu0 %4831
        %4833 = vrot.lane.b32.xlu0 %v4745, 56
        %v4834 = vpop.permute.xlu0 %4833
        %4835 = vrot.lane.b32.xlu0 %v4746, 56
        %v4836 = vpop.permute.xlu0 %4835
        %4837 = vrot.lane.b32.xlu0 %v4747, 56
        %v4838 = vpop.permute.xlu0 %4837
        %4839 = vrot.lane.b32.xlu0 %v4748, 56
        %v4840 = vpop.permute.xlu0 %4839
        %4841 = vrot.lane.b32.xlu0 %v4749, 56
        %v4842 = vpop.permute.xlu0 %4841
        %4843 = vrot.lane.b32.xlu0 %v4750, 56
        %v4844 = vpop.permute.xlu0 %4843
        %4845 = vrot.lane.b32.xlu0 %v4751, 56
        %v4846 = vpop.permute.xlu0 %4845
        %4847 = vrot.lane.b32.xlu0 %v4752, 56
        %v4848 = vpop.permute.xlu0 %4847
        %4881 = vst.msk [vmem:[#allocation6] sm:$0xff] %vm2115, %v4786
        %4882 = vst.msk [vmem:[#allocation6 + $0x8] sm:$0xff] %vm2115, %v4788
        %4883 = vst.msk [vmem:[#allocation6 + $0x10] sm:$0xff] %vm2115, %v4790
        %4884 = vst.msk [vmem:[#allocation6 + $0x18] sm:$0xff] %vm2115, %v4792
        %4885 = vst.msk [vmem:[#allocation6 + $0x20] sm:$0xff] %vm2115, %v4794
        %4886 = vst.msk [vmem:[#allocation6 + $0x28] sm:$0xff] %vm2115, %v4796
        %4887 = vst.msk [vmem:[#allocation6 + $0x30] sm:$0xff] %vm2115, %v4798
        %4888 = vst.msk [vmem:[#allocation6 + $0x38] sm:$0xff] %vm2115, %v4800
        %4889 = vst.msk [vmem:[#allocation6 + $0x40] sm:$0xff] %vm2115, %v4802
        %4890 = vst.msk [vmem:[#allocation6 + $0x48] sm:$0xff] %vm2115, %v4804
        %4891 = vst.msk [vmem:[#allocation6 + $0x50] sm:$0xff] %vm2115, %v4806
        %4892 = vst.msk [vmem:[#allocation6 + $0x58] sm:$0xff] %vm2115, %v4808
        %4893 = vst.msk [vmem:[#allocation6 + $0x60] sm:$0xff] %vm2115, %v4810
        %4894 = vst.msk [vmem:[#allocation6 + $0x68] sm:$0xff] %vm2115, %v4812
        %4895 = vst.msk [vmem:[#allocation6 + $0x70] sm:$0xff] %vm2115, %v4814
        %4896 = vst.msk [vmem:[#allocation6 + $0x78] sm:$0xff] %vm2115, %v4816
        %4897 = vst.msk [vmem:[#allocation6 + $0x80] sm:$0xff] %vm2115, %v4818
        %4898 = vst.msk [vmem:[#allocation6 + $0x88] sm:$0xff] %vm2115, %v4820
        %4899 = vst.msk [vmem:[#allocation6 + $0x90] sm:$0xff] %vm2115, %v4822
        %4900 = vst.msk [vmem:[#allocation6 + $0x98] sm:$0xff] %vm2115, %v4824
        %4901 = vst.msk [vmem:[#allocation6 + $0xa0] sm:$0xff] %vm2115, %v4826
        %4902 = vst.msk [vmem:[#allocation6 + $0xa8] sm:$0xff] %vm2115, %v4828
        %4903 = vst.msk [vmem:[#allocation6 + $0xb0] sm:$0xff] %vm2115, %v4830
        %4904 = vst.msk [vmem:[#allocation6 + $0xb8] sm:$0xff] %vm2115, %v4832
        %4905 = vst.msk [vmem:[#allocation6 + $0xc0] sm:$0xff] %vm2115, %v4834
        %4906 = vst.msk [vmem:[#allocation6 + $0xc8] sm:$0xff] %vm2115, %v4836
        %4907 = vst.msk [vmem:[#allocation6 + $0xd0] sm:$0xff] %vm2115, %v4838
        %4908 = vst.msk [vmem:[#allocation6 + $0xd8] sm:$0xff] %vm2115, %v4840
        %4909 = vst.msk [vmem:[#allocation6 + $0xe0] sm:$0xff] %vm2115, %v4842
        %4910 = vst.msk [vmem:[#allocation6 + $0xe8] sm:$0xff] %vm2115, %v4844
        %4911 = vst.msk [vmem:[#allocation6 + $0xf0] sm:$0xff] %vm2115, %v4846
        %4912 = vst.msk [vmem:[#allocation6 + $0xf8] sm:$0xff] %vm2115, %v4848
        %v4913 = vld [vmem:[%s4528 + $0x8] sm:$0xff]
        %v4914 = vld [vmem:[%s4528 + $0x10] sm:$0xff]
        %v4915 = vld [vmem:[%s4528 + $0x20] sm:$0xff]
        %v4916 = vld [vmem:[%s4528 + $0x28] sm:$0xff]
        %v4917 = vld [vmem:[%s4528 + $0x38] sm:$0xff]
        %v4918 = vld [vmem:[%s4528 + $0x40] sm:$0xff]
        %v4919 = vld [vmem:[%s4528 + $0x50] sm:$0xff]
        %v4920 = vld [vmem:[%s4528 + $0x58] sm:$0xff]
        %v4921 = vld [vmem:[%s4528 + $0x68] sm:$0xff]
        %v4922 = vld [vmem:[%s4528 + $0x70] sm:$0xff]
        %v4923 = vld [vmem:[%s4528 + $0x80] sm:$0xff]
        %v4924 = vld [vmem:[%s4528 + $0x88] sm:$0xff]
        %v4925 = vld [vmem:[%s4528 + $0x98] sm:$0xff]
        %v4926 = vld [vmem:[%s4528 + $0xa0] sm:$0xff]
        %v4927 = vld [vmem:[%s4528 + $0xb0] sm:$0xff]
        %v4928 = vld [vmem:[%s4528 + $0xb8] sm:$0xff]
        %v4929 = vld [vmem:[%s4528 + $0xc8] sm:$0xff]
        %v4930 = vld [vmem:[%s4528 + $0xd0] sm:$0xff]
        %v4931 = vld [vmem:[%s4528 + $0xe0] sm:$0xff]
        %v4932 = vld [vmem:[%s4528 + $0xe8] sm:$0xff]
        %v4933 = vld [vmem:[%s4528 + $0xf8] sm:$0xff]
        %v4934 = vld [vmem:[%s4528 + $0x100] sm:$0xff]
        %v4935 = vld [vmem:[%s4528 + $0x110] sm:$0xff]
        %v4936 = vld [vmem:[%s4528 + $0x118] sm:$0xff]
        %v4937 = vld [vmem:[%s4528 + $0x128] sm:$0xff]
        %v4938 = vld [vmem:[%s4528 + $0x130] sm:$0xff]
        %v4939 = vld [vmem:[%s4528 + $0x140] sm:$0xff]
        %v4940 = vld [vmem:[%s4528 + $0x148] sm:$0xff]
        %v4941 = vld [vmem:[%s4528 + $0x158] sm:$0xff]
        %v4942 = vld [vmem:[%s4528 + $0x160] sm:$0xff]
        %v4943 = vld [vmem:[%s4528 + $0x170] sm:$0xff]
        %v4944 = vld [vmem:[%s4528 + $0x178] sm:$0xff]
        %4977 = vrot.lane.b32.xlu0 %v4913, 64
        %v4978 = vpop.permute.xlu0 %4977
        %4979 = vrot.lane.b32.xlu0 %v4914, 64
        %v4980 = vpop.permute.xlu0 %4979
        %4981 = vrot.lane.b32.xlu0 %v4915, 64
        %v4982 = vpop.permute.xlu0 %4981
        %4983 = vrot.lane.b32.xlu0 %v4916, 64
        %v4984 = vpop.permute.xlu0 %4983
        %4985 = vrot.lane.b32.xlu0 %v4917, 64
        %v4986 = vpop.permute.xlu0 %4985
        %4987 = vrot.lane.b32.xlu0 %v4918, 64
        %v4988 = vpop.permute.xlu0 %4987
        %4989 = vrot.lane.b32.xlu0 %v4919, 64
        %v4990 = vpop.permute.xlu0 %4989
        %4991 = vrot.lane.b32.xlu0 %v4920, 64
        %v4992 = vpop.permute.xlu0 %4991
        %4993 = vrot.lane.b32.xlu0 %v4921, 64
        %v4994 = vpop.permute.xlu0 %4993
        %4995 = vrot.lane.b32.xlu0 %v4922, 64
        %v4996 = vpop.permute.xlu0 %4995
        %4997 = vrot.lane.b32.xlu0 %v4923, 64
        %v4998 = vpop.permute.xlu0 %4997
        %4999 = vrot.lane.b32.xlu0 %v4924, 64
        %v5000 = vpop.permute.xlu0 %4999
        %5001 = vrot.lane.b32.xlu0 %v4925, 64
        %v5002 = vpop.permute.xlu0 %5001
        %5003 = vrot.lane.b32.xlu0 %v4926, 64
        %v5004 = vpop.permute.xlu0 %5003
        %5005 = vrot.lane.b32.xlu0 %v4927, 64
        %v5006 = vpop.permute.xlu0 %5005
        %5007 = vrot.lane.b32.xlu0 %v4928, 64
        %v5008 = vpop.permute.xlu0 %5007
        %5009 = vrot.lane.b32.xlu0 %v4929, 64
        %v5010 = vpop.permute.xlu0 %5009
        %5011 = vrot.lane.b32.xlu0 %v4930, 64
        %v5012 = vpop.permute.xlu0 %5011
        %5013 = vrot.lane.b32.xlu0 %v4931, 64
        %v5014 = vpop.permute.xlu0 %5013
        %5015 = vrot.lane.b32.xlu0 %v4932, 64
        %v5016 = vpop.permute.xlu0 %5015
        %5017 = vrot.lane.b32.xlu0 %v4933, 64
        %v5018 = vpop.permute.xlu0 %5017
        %5019 = vrot.lane.b32.xlu0 %v4934, 64
        %v5020 = vpop.permute.xlu0 %5019
        %5021 = vrot.lane.b32.xlu0 %v4935, 64
        %v5022 = vpop.permute.xlu0 %5021
        %5023 = vrot.lane.b32.xlu0 %v4936, 64
        %v5024 = vpop.permute.xlu0 %5023
        %5025 = vrot.lane.b32.xlu0 %v4937, 64
        %v5026 = vpop.permute.xlu0 %5025
        %5027 = vrot.lane.b32.xlu0 %v4938, 64
        %v5028 = vpop.permute.xlu0 %5027
        %5029 = vrot.lane.b32.xlu0 %v4939, 64
        %v5030 = vpop.permute.xlu0 %5029
        %5031 = vrot.lane.b32.xlu0 %v4940, 64
        %v5032 = vpop.permute.xlu0 %5031
        %5033 = vrot.lane.b32.xlu0 %v4941, 64
        %v5034 = vpop.permute.xlu0 %5033
        %5035 = vrot.lane.b32.xlu0 %v4942, 64
        %v5036 = vpop.permute.xlu0 %5035
        %5037 = vrot.lane.b32.xlu0 %v4943, 64
        %v5038 = vpop.permute.xlu0 %5037
        %5039 = vrot.lane.b32.xlu0 %v4944, 64
        %v5040 = vpop.permute.xlu0 %5039
        %5073 = vst.msk [vmem:[#allocation6] sm:$0xff] %vm2308, %v4978
        %5074 = vst.msk [vmem:[#allocation6 + $0x8] sm:$0xff] %vm2308, %v4980
        %5075 = vst.msk [vmem:[#allocation6 + $0x10] sm:$0xff] %vm2308, %v4982
        %5076 = vst.msk [vmem:[#allocation6 + $0x18] sm:$0xff] %vm2308, %v4984
        %5077 = vst.msk [vmem:[#allocation6 + $0x20] sm:$0xff] %vm2308, %v4986
        %5078 = vst.msk [vmem:[#allocation6 + $0x28] sm:$0xff] %vm2308, %v4988
        %5079 = vst.msk [vmem:[#allocation6 + $0x30] sm:$0xff] %vm2308, %v4990
        %5080 = vst.msk [vmem:[#allocation6 + $0x38] sm:$0xff] %vm2308, %v4992
        %5081 = vst.msk [vmem:[#allocation6 + $0x40] sm:$0xff] %vm2308, %v4994
        %5082 = vst.msk [vmem:[#allocation6 + $0x48] sm:$0xff] %vm2308, %v4996
        %5083 = vst.msk [vmem:[#allocation6 + $0x50] sm:$0xff] %vm2308, %v4998
        %5084 = vst.msk [vmem:[#allocation6 + $0x58] sm:$0xff] %vm2308, %v5000
        %5085 = vst.msk [vmem:[#allocation6 + $0x60] sm:$0xff] %vm2308, %v5002
        %5086 = vst.msk [vmem:[#allocation6 + $0x68] sm:$0xff] %vm2308, %v5004
        %5087 = vst.msk [vmem:[#allocation6 + $0x70] sm:$0xff] %vm2308, %v5006
        %5088 = vst.msk [vmem:[#allocation6 + $0x78] sm:$0xff] %vm2308, %v5008
        %5089 = vst.msk [vmem:[#allocation6 + $0x80] sm:$0xff] %vm2308, %v5010
        %5090 = vst.msk [vmem:[#allocation6 + $0x88] sm:$0xff] %vm2308, %v5012
        %5091 = vst.msk [vmem:[#allocation6 + $0x90] sm:$0xff] %vm2308, %v5014
        %5092 = vst.msk [vmem:[#allocation6 + $0x98] sm:$0xff] %vm2308, %v5016
        %5093 = vst.msk [vmem:[#allocation6 + $0xa0] sm:$0xff] %vm2308, %v5018
        %5094 = vst.msk [vmem:[#allocation6 + $0xa8] sm:$0xff] %vm2308, %v5020
        %5095 = vst.msk [vmem:[#allocation6 + $0xb0] sm:$0xff] %vm2308, %v5022
        %5096 = vst.msk [vmem:[#allocation6 + $0xb8] sm:$0xff] %vm2308, %v5024
        %5097 = vst.msk [vmem:[#allocation6 + $0xc0] sm:$0xff] %vm2308, %v5026
        %5098 = vst.msk [vmem:[#allocation6 + $0xc8] sm:$0xff] %vm2308, %v5028
        %5099 = vst.msk [vmem:[#allocation6 + $0xd0] sm:$0xff] %vm2308, %v5030
        %5100 = vst.msk [vmem:[#allocation6 + $0xd8] sm:$0xff] %vm2308, %v5032
        %5101 = vst.msk [vmem:[#allocation6 + $0xe0] sm:$0xff] %vm2308, %v5034
        %5102 = vst.msk [vmem:[#allocation6 + $0xe8] sm:$0xff] %vm2308, %v5036
        %5103 = vst.msk [vmem:[#allocation6 + $0xf0] sm:$0xff] %vm2308, %v5038
        %5104 = vst.msk [vmem:[#allocation6 + $0xf8] sm:$0xff] %vm2308, %v5040
        %v5105 = vld [vmem:[#allocation6] sm:$0xff]
        %v5106 = vld [vmem:[#allocation6 + $0x8] sm:$0xff]
        %v5107 = vld [vmem:[#allocation6 + $0x10] sm:$0xff]
        %v5108 = vld [vmem:[#allocation6 + $0x18] sm:$0xff]
        %v5109 = vld [vmem:[#allocation6 + $0x20] sm:$0xff]
        %v5110 = vld [vmem:[#allocation6 + $0x28] sm:$0xff]
        %v5111 = vld [vmem:[#allocation6 + $0x30] sm:$0xff]
        %v5112 = vld [vmem:[#allocation6 + $0x38] sm:$0xff]
        %v5113 = vld [vmem:[#allocation6 + $0x40] sm:$0xff]
        %v5114 = vld [vmem:[#allocation6 + $0x48] sm:$0xff]
        %v5115 = vld [vmem:[#allocation6 + $0x50] sm:$0xff]
        %v5116 = vld [vmem:[#allocation6 + $0x58] sm:$0xff]
        %v5117 = vld [vmem:[#allocation6 + $0x60] sm:$0xff]
        %v5118 = vld [vmem:[#allocation6 + $0x68] sm:$0xff]
        %v5119 = vld [vmem:[#allocation6 + $0x70] sm:$0xff]
        %v5120 = vld [vmem:[#allocation6 + $0x78] sm:$0xff]
        %v5121 = vld [vmem:[#allocation6 + $0x80] sm:$0xff]
        %v5122 = vld [vmem:[#allocation6 + $0x88] sm:$0xff]
        %v5123 = vld [vmem:[#allocation6 + $0x90] sm:$0xff]
        %v5124 = vld [vmem:[#allocation6 + $0x98] sm:$0xff]
        %v5125 = vld [vmem:[#allocation6 + $0xa0] sm:$0xff]
        %v5126 = vld [vmem:[#allocation6 + $0xa8] sm:$0xff]
        %v5127 = vld [vmem:[#allocation6 + $0xb0] sm:$0xff]
        %v5128 = vld [vmem:[#allocation6 + $0xb8] sm:$0xff]
        %v5129 = vld [vmem:[#allocation6 + $0xc0] sm:$0xff]
        %v5130 = vld [vmem:[#allocation6 + $0xc8] sm:$0xff]
        %v5131 = vld [vmem:[#allocation6 + $0xd0] sm:$0xff]
        %v5132 = vld [vmem:[#allocation6 + $0xd8] sm:$0xff]
        %v5133 = vld [vmem:[#allocation6 + $0xe0] sm:$0xff]
        %v5134 = vld [vmem:[#allocation6 + $0xe8] sm:$0xff]
        %v5135 = vld [vmem:[#allocation6 + $0xf0] sm:$0xff]
        %v5136 = vld [vmem:[#allocation6 + $0xf8] sm:$0xff]
        %s5137 = scalar_lea.vmem %s3, 72
        %v5138 = vld [vmem:[%s5137] sm:$0xff]
        %v5139 = vld [vmem:[%s5137 + $0x8] sm:$0xff]
        %v5140 = vld [vmem:[%s5137 + $0x10] sm:$0xff]
        %v5141 = vld [vmem:[%s5137 + $0x18] sm:$0xff]
        %v5142 = vld [vmem:[%s5137 + $0x20] sm:$0xff]
        %v5143 = vld [vmem:[%s5137 + $0x28] sm:$0xff]
        %v5144 = vld [vmem:[%s5137 + $0x30] sm:$0xff]
        %v5145 = vld [vmem:[%s5137 + $0x38] sm:$0xff]
        %v5146 = vld [vmem:[%s5137 + $0x40] sm:$0xff]
        %v5147 = vld [vmem:[%s4 + $0x1] sm:$0x1]
        %v5148 = vlaneseq
        %v5149 = vshrl.u32 %v5148, 7
        %v5150 = vsub.s32 0, %v5149
        %v5151 = vrot.slane %v5147, %v5150
        %v5153 = vsel %vm2387, %v5105, 0
        %v5156 = vsel %vm2387, %v5106, 0
        %v5159 = vsel %vm2387, %v5107, 0
        %v5162 = vsel %vm2387, %v5108, 0
        %v5165 = vsel %vm2387, %v5109, 0
        %v5168 = vsel %vm2387, %v5110, 0
        %v5171 = vsel %vm2387, %v5111, 0
        %v5174 = vsel %vm2387, %v5112, 0
        %v5177 = vsel %vm2387, %v5113, 0
        %v5180 = vsel %vm2387, %v5114, 0
        %v5183 = vsel %vm2387, %v5115, 0
        %v5186 = vsel %vm2387, %v5116, 0
        %v5189 = vsel %vm2387, %v5117, 0
        %v5192 = vsel %vm2387, %v5118, 0
        %v5195 = vsel %vm2387, %v5119, 0
        %v5198 = vsel %vm2387, %v5120, 0
        %v5201 = vsel %vm2387, %v5121, 0
        %v5204 = vsel %vm2387, %v5122, 0
        %v5207 = vsel %vm2387, %v5123, 0
        %v5210 = vsel %vm2387, %v5124, 0
        %v5213 = vsel %vm2387, %v5125, 0
        %v5216 = vsel %vm2387, %v5126, 0
        %v5219 = vsel %vm2387, %v5127, 0
        %v5222 = vsel %vm2387, %v5128, 0
        %v5225 = vsel %vm2387, %v5129, 0
        %v5228 = vsel %vm2387, %v5130, 0
        %v5231 = vsel %vm2387, %v5131, 0
        %v5234 = vsel %vm2387, %v5132, 0
        %v5237 = vsel %vm2387, %v5133, 0
        %v5240 = vsel %vm2387, %v5134, 0
        %v5243 = vsel %vm2387, %v5135, 0
        %v5246 = vsel %vm2387, %v5136, 0
        %5248 = vmatprep.subr.mxu0 0.0
        %5249 = vmatpush1.msra.mxu0 %v5138
        %5250 = vmatprep.subr.mxu0 0.0
        %5251 = vmatpush1.msra.mxu0 %v5139
        %5252 = vmatprep.subr.mxu0 0.0
        %5253 = vmatpush1.msra.mxu0 %v5140
        %5254 = vmatprep.subr.mxu0 0.0
        %5255 = vmatpush1.msra.mxu0 %v5141
        %5256 = vmatprep.subr.mxu0 0.0
        %5257 = vmatpush1.msra.mxu0 %v5142
        %5258 = vmatprep.subr.mxu0 0.0
        %5259 = vmatpush1.msra.mxu0 %v5143
        %5260 = vmatprep.subr.mxu0 0.0
        %5261 = vmatpush1.msra.mxu0 %v5144
        %5262 = vmatprep.subr.mxu0 0.0
        %5263 = vmatpush1.msra.mxu0 %v5145
        %5264 = vmatprep.subr.mxu0 0.0
        %5265 = vmatpush1.msra.mxu0 %v5146
        %5266 = vmatprep.subr.mxu0 0.0
        %5267 = vmatpush1.msra.mxu0 0.0
        %5268 = vmatprep.subr.mxu0 0.0
        %5269 = vmatpush1.msra.mxu0 0.0
        %5270 = vmatprep.subr.mxu0 0.0
        %5271 = vmatpush1.msra.mxu0 0.0
        %5272 = vmatprep.subr.mxu0 0.0
        %5273 = vmatpush1.msra.mxu0 0.0
        %5274 = vmatprep.subr.mxu0 0.0
        %5275 = vmatpush1.msra.mxu0 0.0
        %5276 = vmatprep.subr.mxu0 0.0
        %5277 = vmatpush1.msra.mxu0 0.0
        %5278 = vmatprep.subr.mxu0 0.0
        %5279 = vmatpush1.msra.mxu0 0.0
        %5280 = vmatprep.subr.mxu0 0.0
        %5281 = vmatpush1.msra.mxu0 0.0
        %5282 = vmatprep.subr.mxu0 0.0
        %5283 = vmatpush1.msra.mxu0 0.0
        %5284 = vmatprep.subr.mxu0 0.0
        %5285 = vmatpush1.msra.mxu0 0.0
        %5286 = vmatprep.subr.mxu0 0.0
        %5287 = vmatpush1.msra.mxu0 0.0
        %5288 = vmatprep.subr.mxu0 0.0
        %5289 = vmatpush1.msra.mxu0 0.0
        %5290 = vmatprep.subr.mxu0 0.0
        %5291 = vmatpush1.msra.mxu0 0.0
        %5292 = vmatprep.subr.mxu0 0.0
        %5293 = vmatpush1.msra.mxu0 0.0
        %5294 = vmatprep.subr.mxu0 0.0
        %5295 = vmatpush1.msra.mxu0 0.0
        %5296 = vmatprep.subr.mxu0 0.0
        %5297 = vmatpush1.msra.mxu0 0.0
        %5298 = vmatprep.subr.mxu0 0.0
        %5299 = vmatpush1.msra.mxu0 0.0
        %5300 = vmatprep.subr.mxu0 0.0
        %5301 = vmatpush1.msra.mxu0 0.0
        %5302 = vmatprep.subr.mxu0 0.0
        %5303 = vmatpush1.msra.mxu0 0.0
        %5304 = vmatprep.subr.mxu0 0.0
        %5305 = vmatpush1.msra.mxu0 0.0
        %5306 = vmatprep.subr.mxu0 0.0
        %5307 = vmatpush1.msra.mxu0 0.0
        %5308 = vmatprep.subr.mxu0 0.0
        %5309 = vmatpush1.msra.mxu0 0.0
        %5310 = vmatprep.subr.mxu0 0.0
        %5311 = vmatpush1.msra.mxu0 0.0
        %5312 = vmatprep.mubr.f32.mxu0 0.0
        %5313 = vmatmul.mubr.f32.gmra.mrb[0].mxu0 %v5153
        %v5314 = vpop.f32.mrb[0].mxu0
        %v5315 = vadd.f32 %v5151, %v5314
        %v5316 = vpop.f32.mrb[0].mxu0
        %5317 = vmatprep.mubr.f32.mxu0 0.0
        %5318 = vmatmul.mubr.f32.gmra.mrb[0].mxu0 %v5156
        %v5319 = vpop.f32.mrb[0].mxu0
        %v5320 = vadd.f32 %v5151, %v5319
        %v5321 = vpop.f32.mrb[0].mxu0
        %5322 = vmatprep.mubr.f32.mxu0 0.0
        %5323 = vmatmul.mubr.f32.gmra.mrb[0].mxu0 %v5159
        %v5324 = vpop.f32.mrb[0].mxu0
        %v5325 = vadd.f32 %v5151, %v5324
        %v5326 = vpop.f32.mrb[0].mxu0
        %5327 = vmatprep.mubr.f32.mxu0 0.0
        %5328 = vmatmul.mubr.f32.gmra.mrb[0].mxu0 %v5162
        %v5329 = vpop.f32.mrb[0].mxu0
        %v5330 = vadd.f32 %v5151, %v5329
        %v5331 = vpop.f32.mrb[0].mxu0
        %5332 = vmatprep.mubr.f32.mxu0 0.0
        %5333 = vmatmul.mubr.f32.gmra.mrb[0].mxu0 %v5165
        %v5334 = vpop.f32.mrb[0].mxu0
        %v5335 = vadd.f32 %v5151, %v5334
        %v5336 = vpop.f32.mrb[0].mxu0
        %5337 = vmatprep.mubr.f32.mxu0 0.0
        %5338 = vmatmul.mubr.f32.gmra.mrb[0].mxu0 %v5168
        %v5339 = vpop.f32.mrb[0].mxu0
        %v5340 = vadd.f32 %v5151, %v5339
        %v5341 = vpop.f32.mrb[0].mxu0
        %5342 = vmatprep.mubr.f32.mxu0 0.0
        %5343 = vmatmul.mubr.f32.gmra.mrb[0].mxu0 %v5171
        %v5344 = vpop.f32.mrb[0].mxu0
        %v5345 = vadd.f32 %v5151, %v5344
        %v5346 = vpop.f32.mrb[0].mxu0
        %5347 = vmatprep.mubr.f32.mxu0 0.0
        %5348 = vmatmul.mubr.f32.gmra.mrb[0].mxu0 %v5174
        %v5349 = vpop.f32.mrb[0].mxu0
        %v5350 = vadd.f32 %v5151, %v5349
        %v5351 = vpop.f32.mrb[0].mxu0
        %5352 = vmatprep.mubr.f32.mxu0 0.0
        %5353 = vmatmul.mubr.f32.gmra.mrb[0].mxu0 %v5177
        %v5354 = vpop.f32.mrb[0].mxu0
        %v5355 = vadd.f32 %v5151, %v5354
        %v5356 = vpop.f32.mrb[0].mxu0
        %5357 = vmatprep.mubr.f32.mxu0 0.0
        %5358 = vmatmul.mubr.f32.gmra.mrb[0].mxu0 %v5180
        %v5359 = vpop.f32.mrb[0].mxu0
        %v5360 = vadd.f32 %v5151, %v5359
        %v5361 = vpop.f32.mrb[0].mxu0
        %5362 = vmatprep.mubr.f32.mxu0 0.0
        %5363 = vmatmul.mubr.f32.gmra.mrb[0].mxu0 %v5183
        %v5364 = vpop.f32.mrb[0].mxu0
        %v5365 = vadd.f32 %v5151, %v5364
        %v5366 = vpop.f32.mrb[0].mxu0
        %5367 = vmatprep.mubr.f32.mxu0 0.0
        %5368 = vmatmul.mubr.f32.gmra.mrb[0].mxu0 %v5186
        %v5369 = vpop.f32.mrb[0].mxu0
        %v5370 = vadd.f32 %v5151, %v5369
        %v5371 = vpop.f32.mrb[0].mxu0
        %5372 = vmatprep.mubr.f32.mxu0 0.0
        %5373 = vmatmul.mubr.f32.gmra.mrb[0].mxu0 %v5189
        %v5374 = vpop.f32.mrb[0].mxu0
        %v5375 = vadd.f32 %v5151, %v5374
        %v5376 = vpop.f32.mrb[0].mxu0
        %5377 = vmatprep.mubr.f32.mxu0 0.0
        %5378 = vmatmul.mubr.f32.gmra.mrb[0].mxu0 %v5192
        %v5379 = vpop.f32.mrb[0].mxu0
        %v5380 = vadd.f32 %v5151, %v5379
        %v5381 = vpop.f32.mrb[0].mxu0
        %5382 = vmatprep.mubr.f32.mxu0 0.0
        %5383 = vmatmul.mubr.f32.gmra.mrb[0].mxu0 %v5195
        %v5384 = vpop.f32.mrb[0].mxu0
        %v5385 = vadd.f32 %v5151, %v5384
        %v5386 = vpop.f32.mrb[0].mxu0
        %5387 = vmatprep.mubr.f32.mxu0 0.0
        %5388 = vmatmul.mubr.f32.gmra.mrb[0].mxu0 %v5198
        %v5389 = vpop.f32.mrb[0].mxu0
        %v5390 = vadd.f32 %v5151, %v5389
        %v5391 = vpop.f32.mrb[0].mxu0
        %5392 = vmatprep.mubr.f32.mxu0 0.0
        %5393 = vmatmul.mubr.f32.gmra.mrb[0].mxu0 %v5201
        %v5394 = vpop.f32.mrb[0].mxu0
        %v5395 = vadd.f32 %v5151, %v5394
        %v5396 = vpop.f32.mrb[0].mxu0
        %5397 = vmatprep.mubr.f32.mxu0 0.0
        %5398 = vmatmul.mubr.f32.gmra.mrb[0].mxu0 %v5204
        %v5399 = vpop.f32.mrb[0].mxu0
        %v5400 = vadd.f32 %v5151, %v5399
        %v5401 = vpop.f32.mrb[0].mxu0
        %5402 = vmatprep.mubr.f32.mxu0 0.0
        %5403 = vmatmul.mubr.f32.gmra.mrb[0].mxu0 %v5207
        %v5404 = vpop.f32.mrb[0].mxu0
        %v5405 = vadd.f32 %v5151, %v5404
        %v5406 = vpop.f32.mrb[0].mxu0
        %5407 = vmatprep.mubr.f32.mxu0 0.0
        %5408 = vmatmul.mubr.f32.gmra.mrb[0].mxu0 %v5210
        %v5409 = vpop.f32.mrb[0].mxu0
        %v5410 = vadd.f32 %v5151, %v5409
        %v5411 = vpop.f32.mrb[0].mxu0
        %5412 = vmatprep.mubr.f32.mxu0 0.0
        %5413 = vmatmul.mubr.f32.gmra.mrb[0].mxu0 %v5213
        %v5414 = vpop.f32.mrb[0].mxu0
        %v5415 = vadd.f32 %v5151, %v5414
        %v5416 = vpop.f32.mrb[0].mxu0
        %5417 = vmatprep.mubr.f32.mxu0 0.0
        %5418 = vmatmul.mubr.f32.gmra.mrb[0].mxu0 %v5216
        %v5419 = vpop.f32.mrb[0].mxu0
        %v5420 = vadd.f32 %v5151, %v5419
        %v5421 = vpop.f32.mrb[0].mxu0
        %5422 = vmatprep.mubr.f32.mxu0 0.0
        %5423 = vmatmul.mubr.f32.gmra.mrb[0].mxu0 %v5219
        %v5424 = vpop.f32.mrb[0].mxu0
        %v5425 = vadd.f32 %v5151, %v5424
        %v5426 = vpop.f32.mrb[0].mxu0
        %5427 = vmatprep.mubr.f32.mxu0 0.0
        %5428 = vmatmul.mubr.f32.gmra.mrb[0].mxu0 %v5222
        %v5429 = vpop.f32.mrb[0].mxu0
        %v5430 = vadd.f32 %v5151, %v5429
        %v5431 = vpop.f32.mrb[0].mxu0
        %5432 = vmatprep.mubr.f32.mxu0 0.0
        %5433 = vmatmul.mubr.f32.gmra.mrb[0].mxu0 %v5225
        %v5434 = vpop.f32.mrb[0].mxu0
        %v5435 = vadd.f32 %v5151, %v5434
        %v5436 = vpop.f32.mrb[0].mxu0
        %5437 = vmatprep.mubr.f32.mxu0 0.0
        %5438 = vmatmul.mubr.f32.gmra.mrb[0].mxu0 %v5228
        %v5439 = vpop.f32.mrb[0].mxu0
        %v5440 = vadd.f32 %v5151, %v5439
        %v5441 = vpop.f32.mrb[0].mxu0
        %5442 = vmatprep.mubr.f32.mxu0 0.0
        %5443 = vmatmul.mubr.f32.gmra.mrb[0].mxu0 %v5231
        %v5444 = vpop.f32.mrb[0].mxu0
        %v5445 = vadd.f32 %v5151, %v5444
        %v5446 = vpop.f32.mrb[0].mxu0
        %5447 = vmatprep.mubr.f32.mxu0 0.0
        %5448 = vmatmul.mubr.f32.gmra.mrb[0].mxu0 %v5234
        %v5449 = vpop.f32.mrb[0].mxu0
        %v5450 = vadd.f32 %v5151, %v5449
        %v5451 = vpop.f32.mrb[0].mxu0
        %5452 = vmatprep.mubr.f32.mxu0 0.0
        %5453 = vmatmul.mubr.f32.gmra.mrb[0].mxu0 %v5237
        %v5454 = vpop.f32.mrb[0].mxu0
        %v5455 = vadd.f32 %v5151, %v5454
        %v5456 = vpop.f32.mrb[0].mxu0
        %5457 = vmatprep.mubr.f32.mxu0 0.0
        %5458 = vmatmul.mubr.f32.gmra.mrb[0].mxu0 %v5240
        %v5459 = vpop.f32.mrb[0].mxu0
        %v5460 = vadd.f32 %v5151, %v5459
        %v5461 = vpop.f32.mrb[0].mxu0
        %5462 = vmatprep.mubr.f32.mxu0 0.0
        %5463 = vmatmul.mubr.f32.gmra.mrb[0].mxu0 %v5243
        %v5464 = vpop.f32.mrb[0].mxu0
        %v5465 = vadd.f32 %v5151, %v5464
        %v5466 = vpop.f32.mrb[0].mxu0
        %5467 = vmatprep.mubr.f32.mxu0 0.0
        %5468 = vmatmul.mubr.f32.gmra.mrb[0].mxu0 %v5246
        %v5469 = vpop.f32.mrb[0].mxu0
        %v5470 = vadd.f32 %v5151, %v5469
        %v5471 = vpop.f32.mrb[0].mxu0
        %5472 = vdwg.mxu0
        %v5473 = vld [vmem:[%s5 + $0x1] sm:$0x1]
        %v5474 = vlaneseq
        %v5475 = vshrl.u32 %v5474, 7
        %v5476 = vsub.s32 0, %v5475
        %v5477 = vrot.slane %v5473, %v5476
        %v5478 = vmul.f32 %v5315, %v5477
        %v5479 = vmul.f32 %v5320, %v5477
        %v5480 = vmul.f32 %v5325, %v5477
        %v5481 = vmul.f32 %v5330, %v5477
        %v5482 = vmul.f32 %v5335, %v5477
        %v5483 = vmul.f32 %v5340, %v5477
        %v5484 = vmul.f32 %v5345, %v5477
        %v5485 = vmul.f32 %v5350, %v5477
        %v5486 = vmul.f32 %v5355, %v5477
        %v5487 = vmul.f32 %v5360, %v5477
        %v5488 = vmul.f32 %v5365, %v5477
        %v5489 = vmul.f32 %v5370, %v5477
        %v5490 = vmul.f32 %v5375, %v5477
        %v5491 = vmul.f32 %v5380, %v5477
        %v5492 = vmul.f32 %v5385, %v5477
        %v5493 = vmul.f32 %v5390, %v5477
        %v5494 = vmul.f32 %v5395, %v5477
        %v5495 = vmul.f32 %v5400, %v5477
        %v5496 = vmul.f32 %v5405, %v5477
        %v5497 = vmul.f32 %v5410, %v5477
        %v5498 = vmul.f32 %v5415, %v5477
        %v5499 = vmul.f32 %v5420, %v5477
        %v5500 = vmul.f32 %v5425, %v5477
        %v5501 = vmul.f32 %v5430, %v5477
        %v5502 = vmul.f32 %v5435, %v5477
        %v5503 = vmul.f32 %v5440, %v5477
        %v5504 = vmul.f32 %v5445, %v5477
        %v5505 = vmul.f32 %v5450, %v5477
        %v5506 = vmul.f32 %v5455, %v5477
        %v5507 = vmul.f32 %v5460, %v5477
        %v5508 = vmul.f32 %v5465, %v5477
        %v5509 = vmul.f32 %v5470, %v5477
        %v5510 = vld [vmem:[%s6 + $0x1] sm:$0x1]
        %v5511 = vlaneseq
        %v5512 = vshrl.u32 %v5511, 7
        %v5513 = vsub.s32 0, %v5512
        %v5514 = vrot.slane %v5510, %v5513
        %v5515 = vadd.f32 %v5478, %v5514
        %v5516 = vadd.f32 %v5479, %v5514
        %v5517 = vadd.f32 %v5480, %v5514
        %v5518 = vadd.f32 %v5481, %v5514
        %v5519 = vadd.f32 %v5482, %v5514
        %v5520 = vadd.f32 %v5483, %v5514
        %v5521 = vadd.f32 %v5484, %v5514
        %v5522 = vadd.f32 %v5485, %v5514
        %v5523 = vadd.f32 %v5486, %v5514
        %v5524 = vadd.f32 %v5487, %v5514
        %v5525 = vadd.f32 %v5488, %v5514
        %v5526 = vadd.f32 %v5489, %v5514
        %v5527 = vadd.f32 %v5490, %v5514
        %v5528 = vadd.f32 %v5491, %v5514
        %v5529 = vadd.f32 %v5492, %v5514
        %v5530 = vadd.f32 %v5493, %v5514
        %v5531 = vadd.f32 %v5494, %v5514
        %v5532 = vadd.f32 %v5495, %v5514
        %v5533 = vadd.f32 %v5496, %v5514
        %v5534 = vadd.f32 %v5497, %v5514
        %v5535 = vadd.f32 %v5498, %v5514
        %v5536 = vadd.f32 %v5499, %v5514
        %v5537 = vadd.f32 %v5500, %v5514
        %v5538 = vadd.f32 %v5501, %v5514
        %v5539 = vadd.f32 %v5502, %v5514
        %v5540 = vadd.f32 %v5503, %v5514
        %v5541 = vadd.f32 %v5504, %v5514
        %v5542 = vadd.f32 %v5505, %v5514
        %v5543 = vadd.f32 %v5506, %v5514
        %v5544 = vadd.f32 %v5507, %v5514
        %v5545 = vadd.f32 %v5508, %v5514
        %v5546 = vadd.f32 %v5509, %v5514
        %v5547 = vmax.f32 %v5515, 0.0
        %v5548 = vmax.f32 %v5516, 0.0
        %v5549 = vmax.f32 %v5517, 0.0
        %v5550 = vmax.f32 %v5518, 0.0
        %v5551 = vmax.f32 %v5519, 0.0
        %v5552 = vmax.f32 %v5520, 0.0
        %v5553 = vmax.f32 %v5521, 0.0
        %v5554 = vmax.f32 %v5522, 0.0
        %v5555 = vmax.f32 %v5523, 0.0
        %v5556 = vmax.f32 %v5524, 0.0
        %v5557 = vmax.f32 %v5525, 0.0
        %v5558 = vmax.f32 %v5526, 0.0
        %v5559 = vmax.f32 %v5527, 0.0
        %v5560 = vmax.f32 %v5528, 0.0
        %v5561 = vmax.f32 %v5529, 0.0
        %v5562 = vmax.f32 %v5530, 0.0
        %v5563 = vmax.f32 %v5531, 0.0
        %v5564 = vmax.f32 %v5532, 0.0
        %v5565 = vmax.f32 %v5533, 0.0
        %v5566 = vmax.f32 %v5534, 0.0
        %v5567 = vmax.f32 %v5535, 0.0
        %v5568 = vmax.f32 %v5536, 0.0
        %v5569 = vmax.f32 %v5537, 0.0
        %v5570 = vmax.f32 %v5538, 0.0
        %v5571 = vmax.f32 %v5539, 0.0
        %v5572 = vmax.f32 %v5540, 0.0
        %v5573 = vmax.f32 %v5541, 0.0
        %v5574 = vmax.f32 %v5542, 0.0
        %v5575 = vmax.f32 %v5543, 0.0
        %v5576 = vmax.f32 %v5544, 0.0
        %v5577 = vmax.f32 %v5545, 0.0
        %v5578 = vmax.f32 %v5546, 0.0
        %5579 = vst.msk [vmem:[%s528 + $0x1] sm:$0xff] %vm331, %v5547
        %5580 = vst.msk [vmem:[%s528 + $0x9] sm:$0xff] %vm331, %v5548
        %5581 = vst.msk [vmem:[%s528 + $0x19] sm:$0xff] %vm331, %v5549
        %5582 = vst.msk [vmem:[%s528 + $0x21] sm:$0xff] %vm331, %v5550
        %5583 = vst.msk [vmem:[%s528 + $0x31] sm:$0xff] %vm331, %v5551
        %5584 = vst.msk [vmem:[%s528 + $0x39] sm:$0xff] %vm331, %v5552
        %5585 = vst.msk [vmem:[%s528 + $0x49] sm:$0xff] %vm331, %v5553
        %5586 = vst.msk [vmem:[%s528 + $0x51] sm:$0xff] %vm331, %v5554
        %5587 = vst.msk [vmem:[%s528 + $0x61] sm:$0xff] %vm331, %v5555
        %5588 = vst.msk [vmem:[%s528 + $0x69] sm:$0xff] %vm331, %v5556
        %5589 = vst.msk [vmem:[%s528 + $0x79] sm:$0xff] %vm331, %v5557
        %5590 = vst.msk [vmem:[%s528 + $0x81] sm:$0xff] %vm331, %v5558
        %5591 = vst.msk [vmem:[%s528 + $0x91] sm:$0xff] %vm331, %v5559
        %5592 = vst.msk [vmem:[%s528 + $0x99] sm:$0xff] %vm331, %v5560
        %5593 = vst.msk [vmem:[%s528 + $0xa9] sm:$0xff] %vm331, %v5561
        %5594 = vst.msk [vmem:[%s528 + $0xb1] sm:$0xff] %vm331, %v5562
        %5595 = vst.msk [vmem:[%s528 + $0xc1] sm:$0xff] %vm331, %v5563
        %5596 = vst.msk [vmem:[%s528 + $0xc9] sm:$0xff] %vm331, %v5564
        %5597 = vst.msk [vmem:[%s528 + $0xd9] sm:$0xff] %vm331, %v5565
        %5598 = vst.msk [vmem:[%s528 + $0xe1] sm:$0xff] %vm331, %v5566
        %5599 = vst.msk [vmem:[%s528 + $0xf1] sm:$0xff] %vm331, %v5567
        %5600 = vst.msk [vmem:[%s528 + $0xf9] sm:$0xff] %vm331, %v5568
        %5601 = vst.msk [vmem:[%s528 + $0x109] sm:$0xff] %vm331, %v5569
        %5602 = vst.msk [vmem:[%s528 + $0x111] sm:$0xff] %vm331, %v5570
        %5603 = vst.msk [vmem:[%s528 + $0x121] sm:$0xff] %vm331, %v5571
        %5604 = vst.msk [vmem:[%s528 + $0x129] sm:$0xff] %vm331, %v5572
        %5605 = vst.msk [vmem:[%s528 + $0x139] sm:$0xff] %vm331, %v5573
        %5606 = vst.msk [vmem:[%s528 + $0x141] sm:$0xff] %vm331, %v5574
        %5607 = vst.msk [vmem:[%s528 + $0x151] sm:$0xff] %vm331, %v5575
        %5608 = vst.msk [vmem:[%s528 + $0x159] sm:$0xff] %vm331, %v5576
        %5609 = vst.msk [vmem:[%s528 + $0x169] sm:$0xff] %vm331, %v5577
        %5610 = vst.msk [vmem:[%s528 + $0x171] sm:$0xff] %vm331, %v5578
        %v5611 = vld [vmem:[#allocation5] ss:$2 sm:$0xff]
        %v5612 = vld [vmem:[%s2848] ss:$2 sm:$0xff]
        %v5613 = vld [vmem:[%s2850] ss:$2 sm:$0xff]
        %v5614 = vld [vmem:[%s2852] ss:$2 sm:$0xff]
        %v5615 = vld [vmem:[%s2854] ss:$2 sm:$0xff]
        %v5616 = vld [vmem:[%s2856] ss:$2 sm:$0xff]
        %v5617 = vld [vmem:[%s2858] ss:$2 sm:$0xff]
        %v5618 = vld [vmem:[%s2860] ss:$2 sm:$0xff]
        %5619 = vst.msk [vmem:[#allocation7] sm:$0xff] %vm331, %v5611
        %5620 = vst.msk [vmem:[#allocation7 + $0x8] sm:$0xff] %vm331, %v5612
        %5621 = vst.msk [vmem:[#allocation7 + $0x10] sm:$0xff] %vm331, %v5613
        %5622 = vst.msk [vmem:[#allocation7 + $0x18] sm:$0xff] %vm331, %v5614
        %5623 = vst.msk [vmem:[#allocation7 + $0x20] sm:$0xff] %vm331, %v5615
        %5624 = vst.msk [vmem:[#allocation7 + $0x28] sm:$0xff] %vm331, %v5616
        %5625 = vst.msk [vmem:[#allocation7 + $0x30] sm:$0xff] %vm331, %v5617
        %5626 = vst.msk [vmem:[#allocation7 + $0x38] sm:$0xff] %vm331, %v5618
        %v5627 = vld [vmem:[%s2870] ss:$2 sm:$0xff]
        %v5628 = vld [vmem:[%s2872] ss:$2 sm:$0xff]
        %v5629 = vld [vmem:[%s2874] ss:$2 sm:$0xff]
        %v5630 = vld [vmem:[%s2876] ss:$2 sm:$0xff]
        %v5631 = vld [vmem:[%s2878] ss:$2 sm:$0xff]
        %v5632 = vld [vmem:[%s2880] ss:$2 sm:$0xff]
        %v5633 = vld [vmem:[%s2882] ss:$2 sm:$0xff]
        %v5634 = vld [vmem:[%s2884] ss:$2 sm:$0xff]
        %5643 = vrot.lane.b32.xlu0 %v5627, 8
        %v5644 = vpop.permute.xlu0 %5643
        %5645 = vrot.lane.b32.xlu0 %v5628, 8
        %v5646 = vpop.permute.xlu0 %5645
        %5647 = vrot.lane.b32.xlu0 %v5629, 8
        %v5648 = vpop.permute.xlu0 %5647
        %5649 = vrot.lane.b32.xlu0 %v5630, 8
        %v5650 = vpop.permute.xlu0 %5649
        %5651 = vrot.lane.b32.xlu0 %v5631, 8
        %v5652 = vpop.permute.xlu0 %5651
        %5653 = vrot.lane.b32.xlu0 %v5632, 8
        %v5654 = vpop.permute.xlu0 %5653
        %5655 = vrot.lane.b32.xlu0 %v5633, 8
        %v5656 = vpop.permute.xlu0 %5655
        %5657 = vrot.lane.b32.xlu0 %v5634, 8
        %v5658 = vpop.permute.xlu0 %5657
        %5667 = vst.msk [vmem:[#allocation7] sm:$0xff] %vm956, %v5644
        %5668 = vst.msk [vmem:[#allocation7 + $0x8] sm:$0xff] %vm956, %v5646
        %5669 = vst.msk [vmem:[#allocation7 + $0x10] sm:$0xff] %vm956, %v5648
        %5670 = vst.msk [vmem:[#allocation7 + $0x18] sm:$0xff] %vm956, %v5650
        %5671 = vst.msk [vmem:[#allocation7 + $0x20] sm:$0xff] %vm956, %v5652
        %5672 = vst.msk [vmem:[#allocation7 + $0x28] sm:$0xff] %vm956, %v5654
        %5673 = vst.msk [vmem:[#allocation7 + $0x30] sm:$0xff] %vm956, %v5656
        %5674 = vst.msk [vmem:[#allocation7 + $0x38] sm:$0xff] %vm956, %v5658
        %v5675 = vld [vmem:[%s2926] ss:$2 sm:$0xff]
        %v5676 = vld [vmem:[%s2928] ss:$2 sm:$0xff]
        %v5677 = vld [vmem:[%s2930] ss:$2 sm:$0xff]
        %v5678 = vld [vmem:[%s2932] ss:$2 sm:$0xff]
        %v5679 = vld [vmem:[%s2934] ss:$2 sm:$0xff]
        %v5680 = vld [vmem:[%s2936] ss:$2 sm:$0xff]
        %v5681 = vld [vmem:[%s2938] ss:$2 sm:$0xff]
        %v5682 = vld [vmem:[%s2940] ss:$2 sm:$0xff]
        %5691 = vrot.lane.b32.xlu0 %v5675, 16
        %v5692 = vpop.permute.xlu0 %5691
        %5693 = vrot.lane.b32.xlu0 %v5676, 16
        %v5694 = vpop.permute.xlu0 %5693
        %5695 = vrot.lane.b32.xlu0 %v5677, 16
        %v5696 = vpop.permute.xlu0 %5695
        %5697 = vrot.lane.b32.xlu0 %v5678, 16
        %v5698 = vpop.permute.xlu0 %5697
        %5699 = vrot.lane.b32.xlu0 %v5679, 16
        %v5700 = vpop.permute.xlu0 %5699
        %5701 = vrot.lane.b32.xlu0 %v5680, 16
        %v5702 = vpop.permute.xlu0 %5701
        %5703 = vrot.lane.b32.xlu0 %v5681, 16
        %v5704 = vpop.permute.xlu0 %5703
        %5705 = vrot.lane.b32.xlu0 %v5682, 16
        %v5706 = vpop.permute.xlu0 %5705
        %5715 = vst.msk [vmem:[#allocation7] sm:$0xff] %vm1149, %v5692
        %5716 = vst.msk [vmem:[#allocation7 + $0x8] sm:$0xff] %vm1149, %v5694
        %5717 = vst.msk [vmem:[#allocation7 + $0x10] sm:$0xff] %vm1149, %v5696
        %5718 = vst.msk [vmem:[#allocation7 + $0x18] sm:$0xff] %vm1149, %v5698
        %5719 = vst.msk [vmem:[#allocation7 + $0x20] sm:$0xff] %vm1149, %v5700
        %5720 = vst.msk [vmem:[#allocation7 + $0x28] sm:$0xff] %vm1149, %v5702
        %5721 = vst.msk [vmem:[#allocation7 + $0x30] sm:$0xff] %vm1149, %v5704
        %5722 = vst.msk [vmem:[#allocation7 + $0x38] sm:$0xff] %vm1149, %v5706
        %v5723 = vld [vmem:[%s528] ss:$2 sm:$0xff]
        %v5724 = vld [vmem:[%s2983] ss:$2 sm:$0xff]
        %v5725 = vld [vmem:[%s2985] ss:$2 sm:$0xff]
        %v5726 = vld [vmem:[%s2987] ss:$2 sm:$0xff]
        %v5727 = vld [vmem:[%s2989] ss:$2 sm:$0xff]
        %v5728 = vld [vmem:[%s2991] ss:$2 sm:$0xff]
        %v5729 = vld [vmem:[%s2993] ss:$2 sm:$0xff]
        %v5730 = vld [vmem:[%s2995] ss:$2 sm:$0xff]
        %5739 = vrot.lane.b32.xlu0 %v5723, 24
        %v5740 = vpop.permute.xlu0 %5739
        %5741 = vrot.lane.b32.xlu0 %v5724, 24
        %v5742 = vpop.permute.xlu0 %5741
        %5743 = vrot.lane.b32.xlu0 %v5725, 24
        %v5744 = vpop.permute.xlu0 %5743
        %5745 = vrot.lane.b32.xlu0 %v5726, 24
        %v5746 = vpop.permute.xlu0 %5745
        %5747 = vrot.lane.b32.xlu0 %v5727, 24
        %v5748 = vpop.permute.xlu0 %5747
        %5749 = vrot.lane.b32.xlu0 %v5728, 24
        %v5750 = vpop.permute.xlu0 %5749
        %5751 = vrot.lane.b32.xlu0 %v5729, 24
        %v5752 = vpop.permute.xlu0 %5751
        %5753 = vrot.lane.b32.xlu0 %v5730, 24
        %v5754 = vpop.permute.xlu0 %5753
        %5763 = vst.msk [vmem:[#allocation7] sm:$0xff] %vm1342, %v5740
        %5764 = vst.msk [vmem:[#allocation7 + $0x8] sm:$0xff] %vm1342, %v5742
        %5765 = vst.msk [vmem:[#allocation7 + $0x10] sm:$0xff] %vm1342, %v5744
        %5766 = vst.msk [vmem:[#allocation7 + $0x18] sm:$0xff] %vm1342, %v5746
        %5767 = vst.msk [vmem:[#allocation7 + $0x20] sm:$0xff] %vm1342, %v5748
        %5768 = vst.msk [vmem:[#allocation7 + $0x28] sm:$0xff] %vm1342, %v5750
        %5769 = vst.msk [vmem:[#allocation7 + $0x30] sm:$0xff] %vm1342, %v5752
        %5770 = vst.msk [vmem:[#allocation7 + $0x38] sm:$0xff] %vm1342, %v5754
        %v5771 = vld [vmem:[%s3037] ss:$2 sm:$0xff]
        %v5772 = vld [vmem:[%s3039] ss:$2 sm:$0xff]
        %v5773 = vld [vmem:[%s3041] ss:$2 sm:$0xff]
        %v5774 = vld [vmem:[%s3043] ss:$2 sm:$0xff]
        %v5775 = vld [vmem:[%s3045] ss:$2 sm:$0xff]
        %v5776 = vld [vmem:[%s3047] ss:$2 sm:$0xff]
        %v5777 = vld [vmem:[%s3049] ss:$2 sm:$0xff]
        %v5778 = vld [vmem:[%s3051] ss:$2 sm:$0xff]
        %5787 = vrot.lane.b32.xlu0 %v5771, 32
        %v5788 = vpop.permute.xlu0 %5787
        %5789 = vrot.lane.b32.xlu0 %v5772, 32
        %v5790 = vpop.permute.xlu0 %5789
        %5791 = vrot.lane.b32.xlu0 %v5773, 32
        %v5792 = vpop.permute.xlu0 %5791
        %5793 = vrot.lane.b32.xlu0 %v5774, 32
        %v5794 = vpop.permute.xlu0 %5793
        %5795 = vrot.lane.b32.xlu0 %v5775, 32
        %v5796 = vpop.permute.xlu0 %5795
        %5797 = vrot.lane.b32.xlu0 %v5776, 32
        %v5798 = vpop.permute.xlu0 %5797
        %5799 = vrot.lane.b32.xlu0 %v5777, 32
        %v5800 = vpop.permute.xlu0 %5799
        %5801 = vrot.lane.b32.xlu0 %v5778, 32
        %v5802 = vpop.permute.xlu0 %5801
        %5811 = vst.msk [vmem:[#allocation7] sm:$0xff] %vm1535, %v5788
        %5812 = vst.msk [vmem:[#allocation7 + $0x8] sm:$0xff] %vm1535, %v5790
        %5813 = vst.msk [vmem:[#allocation7 + $0x10] sm:$0xff] %vm1535, %v5792
        %5814 = vst.msk [vmem:[#allocation7 + $0x18] sm:$0xff] %vm1535, %v5794
        %5815 = vst.msk [vmem:[#allocation7 + $0x20] sm:$0xff] %vm1535, %v5796
        %5816 = vst.msk [vmem:[#allocation7 + $0x28] sm:$0xff] %vm1535, %v5798
        %5817 = vst.msk [vmem:[#allocation7 + $0x30] sm:$0xff] %vm1535, %v5800
        %5818 = vst.msk [vmem:[#allocation7 + $0x38] sm:$0xff] %vm1535, %v5802
        %v5819 = vld [vmem:[%s3093] ss:$2 sm:$0xff]
        %v5820 = vld [vmem:[%s3095] ss:$2 sm:$0xff]
        %v5821 = vld [vmem:[%s3097] ss:$2 sm:$0xff]
        %v5822 = vld [vmem:[%s3099] ss:$2 sm:$0xff]
        %v5823 = vld [vmem:[%s3101] ss:$2 sm:$0xff]
        %v5824 = vld [vmem:[%s3103] ss:$2 sm:$0xff]
        %v5825 = vld [vmem:[%s3105] ss:$2 sm:$0xff]
        %v5826 = vld [vmem:[%s3107] ss:$2 sm:$0xff]
        %5835 = vrot.lane.b32.xlu0 %v5819, 40
        %v5836 = vpop.permute.xlu0 %5835
        %5837 = vrot.lane.b32.xlu0 %v5820, 40
        %v5838 = vpop.permute.xlu0 %5837
        %5839 = vrot.lane.b32.xlu0 %v5821, 40
        %v5840 = vpop.permute.xlu0 %5839
        %5841 = vrot.lane.b32.xlu0 %v5822, 40
        %v5842 = vpop.permute.xlu0 %5841
        %5843 = vrot.lane.b32.xlu0 %v5823, 40
        %v5844 = vpop.permute.xlu0 %5843
        %5845 = vrot.lane.b32.xlu0 %v5824, 40
        %v5846 = vpop.permute.xlu0 %5845
        %5847 = vrot.lane.b32.xlu0 %v5825, 40
        %v5848 = vpop.permute.xlu0 %5847
        %5849 = vrot.lane.b32.xlu0 %v5826, 40
        %v5850 = vpop.permute.xlu0 %5849
        %5859 = vst.msk [vmem:[#allocation7] sm:$0xff] %vm1728, %v5836
        %5860 = vst.msk [vmem:[#allocation7 + $0x8] sm:$0xff] %vm1728, %v5838
        %5861 = vst.msk [vmem:[#allocation7 + $0x10] sm:$0xff] %vm1728, %v5840
        %5862 = vst.msk [vmem:[#allocation7 + $0x18] sm:$0xff] %vm1728, %v5842
        %5863 = vst.msk [vmem:[#allocation7 + $0x20] sm:$0xff] %vm1728, %v5844
        %5864 = vst.msk [vmem:[#allocation7 + $0x28] sm:$0xff] %vm1728, %v5846
        %5865 = vst.msk [vmem:[#allocation7 + $0x30] sm:$0xff] %vm1728, %v5848
        %5866 = vst.msk [vmem:[#allocation7 + $0x38] sm:$0xff] %vm1728, %v5850
        %v5867 = vld [vmem:[%s3149] ss:$2 sm:$0xff]
        %v5868 = vld [vmem:[%s3151] ss:$2 sm:$0xff]
        %v5869 = vld [vmem:[%s3153] ss:$2 sm:$0xff]
        %v5870 = vld [vmem:[%s3155] ss:$2 sm:$0xff]
        %v5871 = vld [vmem:[%s3157] ss:$2 sm:$0xff]
        %v5872 = vld [vmem:[%s3159] ss:$2 sm:$0xff]
        %v5873 = vld [vmem:[%s3161] ss:$2 sm:$0xff]
        %v5874 = vld [vmem:[%s3163] ss:$2 sm:$0xff]
        %5883 = vrot.lane.b32.xlu0 %v5867, 48
        %v5884 = vpop.permute.xlu0 %5883
        %5885 = vrot.lane.b32.xlu0 %v5868, 48
        %v5886 = vpop.permute.xlu0 %5885
        %5887 = vrot.lane.b32.xlu0 %v5869, 48
        %v5888 = vpop.permute.xlu0 %5887
        %5889 = vrot.lane.b32.xlu0 %v5870, 48
        %v5890 = vpop.permute.xlu0 %5889
        %5891 = vrot.lane.b32.xlu0 %v5871, 48
        %v5892 = vpop.permute.xlu0 %5891
        %5893 = vrot.lane.b32.xlu0 %v5872, 48
        %v5894 = vpop.permute.xlu0 %5893
        %5895 = vrot.lane.b32.xlu0 %v5873, 48
        %v5896 = vpop.permute.xlu0 %5895
        %5897 = vrot.lane.b32.xlu0 %v5874, 48
        %v5898 = vpop.permute.xlu0 %5897
        %5907 = vst.msk [vmem:[#allocation7] sm:$0xff] %vm1922, %v5884
        %5908 = vst.msk [vmem:[#allocation7 + $0x8] sm:$0xff] %vm1922, %v5886
        %5909 = vst.msk [vmem:[#allocation7 + $0x10] sm:$0xff] %vm1922, %v5888
        %5910 = vst.msk [vmem:[#allocation7 + $0x18] sm:$0xff] %vm1922, %v5890
        %5911 = vst.msk [vmem:[#allocation7 + $0x20] sm:$0xff] %vm1922, %v5892
        %5912 = vst.msk [vmem:[#allocation7 + $0x28] sm:$0xff] %vm1922, %v5894
        %5913 = vst.msk [vmem:[#allocation7 + $0x30] sm:$0xff] %vm1922, %v5896
        %5914 = vst.msk [vmem:[#allocation7 + $0x38] sm:$0xff] %vm1922, %v5898
        %v5915 = vld [vmem:[%s3205] ss:$2 sm:$0xff]
        %v5916 = vld [vmem:[%s3207] ss:$2 sm:$0xff]
        %v5917 = vld [vmem:[%s3209] ss:$2 sm:$0xff]
        %v5918 = vld [vmem:[%s3211] ss:$2 sm:$0xff]
        %v5919 = vld [vmem:[%s3213] ss:$2 sm:$0xff]
        %v5920 = vld [vmem:[%s3215] ss:$2 sm:$0xff]
        %v5921 = vld [vmem:[%s3217] ss:$2 sm:$0xff]
        %v5922 = vld [vmem:[%s3219] ss:$2 sm:$0xff]
        %5931 = vrot.lane.b32.xlu0 %v5915, 56
        %v5932 = vpop.permute.xlu0 %5931
        %5933 = vrot.lane.b32.xlu0 %v5916, 56
        %v5934 = vpop.permute.xlu0 %5933
        %5935 = vrot.lane.b32.xlu0 %v5917, 56
        %v5936 = vpop.permute.xlu0 %5935
        %5937 = vrot.lane.b32.xlu0 %v5918, 56
        %v5938 = vpop.permute.xlu0 %5937
        %5939 = vrot.lane.b32.xlu0 %v5919, 56
        %v5940 = vpop.permute.xlu0 %5939
        %5941 = vrot.lane.b32.xlu0 %v5920, 56
        %v5942 = vpop.permute.xlu0 %5941
        %5943 = vrot.lane.b32.xlu0 %v5921, 56
        %v5944 = vpop.permute.xlu0 %5943
        %5945 = vrot.lane.b32.xlu0 %v5922, 56
        %v5946 = vpop.permute.xlu0 %5945
        %5955 = vst.msk [vmem:[#allocation7] sm:$0xff] %vm2115, %v5932
        %5956 = vst.msk [vmem:[#allocation7 + $0x8] sm:$0xff] %vm2115, %v5934
        %5957 = vst.msk [vmem:[#allocation7 + $0x10] sm:$0xff] %vm2115, %v5936
        %5958 = vst.msk [vmem:[#allocation7 + $0x18] sm:$0xff] %vm2115, %v5938
        %5959 = vst.msk [vmem:[#allocation7 + $0x20] sm:$0xff] %vm2115, %v5940
        %5960 = vst.msk [vmem:[#allocation7 + $0x28] sm:$0xff] %vm2115, %v5942
        %5961 = vst.msk [vmem:[#allocation7 + $0x30] sm:$0xff] %vm2115, %v5944
        %5962 = vst.msk [vmem:[#allocation7 + $0x38] sm:$0xff] %vm2115, %v5946
        %v5963 = vld [vmem:[%s3261] ss:$2 sm:$0xff]
        %v5964 = vld [vmem:[%s3263] ss:$2 sm:$0xff]
        %v5965 = vld [vmem:[%s3265] ss:$2 sm:$0xff]
        %v5966 = vld [vmem:[%s3267] ss:$2 sm:$0xff]
        %v5967 = vld [vmem:[%s3269] ss:$2 sm:$0xff]
        %v5968 = vld [vmem:[%s3271] ss:$2 sm:$0xff]
        %v5969 = vld [vmem:[%s3273] ss:$2 sm:$0xff]
        %v5970 = vld [vmem:[%s3275] ss:$2 sm:$0xff]
        %5979 = vrot.lane.b32.xlu0 %v5963, 64
        %v5980 = vpop.permute.xlu0 %5979
        %5981 = vrot.lane.b32.xlu0 %v5964, 64
        %v5982 = vpop.permute.xlu0 %5981
        %5983 = vrot.lane.b32.xlu0 %v5965, 64
        %v5984 = vpop.permute.xlu0 %5983
        %5985 = vrot.lane.b32.xlu0 %v5966, 64
        %v5986 = vpop.permute.xlu0 %5985
        %5987 = vrot.lane.b32.xlu0 %v5967, 64
        %v5988 = vpop.permute.xlu0 %5987
        %5989 = vrot.lane.b32.xlu0 %v5968, 64
        %v5990 = vpop.permute.xlu0 %5989
        %5991 = vrot.lane.b32.xlu0 %v5969, 64
        %v5992 = vpop.permute.xlu0 %5991
        %5993 = vrot.lane.b32.xlu0 %v5970, 64
        %v5994 = vpop.permute.xlu0 %5993
        %6003 = vst.msk [vmem:[#allocation7] sm:$0xff] %vm2308, %v5980
        %6004 = vst.msk [vmem:[#allocation7 + $0x8] sm:$0xff] %vm2308, %v5982
        %6005 = vst.msk [vmem:[#allocation7 + $0x10] sm:$0xff] %vm2308, %v5984
        %6006 = vst.msk [vmem:[#allocation7 + $0x18] sm:$0xff] %vm2308, %v5986
        %6007 = vst.msk [vmem:[#allocation7 + $0x20] sm:$0xff] %vm2308, %v5988
        %6008 = vst.msk [vmem:[#allocation7 + $0x28] sm:$0xff] %vm2308, %v5990
        %6009 = vst.msk [vmem:[#allocation7 + $0x30] sm:$0xff] %vm2308, %v5992
        %6010 = vst.msk [vmem:[#allocation7 + $0x38] sm:$0xff] %vm2308, %v5994
        %v6011 = vld [vmem:[#allocation7] sm:$0xff]
        %v6012 = vld [vmem:[#allocation7 + $0x8] sm:$0xff]
        %v6013 = vld [vmem:[#allocation7 + $0x10] sm:$0xff]
        %v6014 = vld [vmem:[#allocation7 + $0x18] sm:$0xff]
        %v6015 = vld [vmem:[#allocation7 + $0x20] sm:$0xff]
        %v6016 = vld [vmem:[#allocation7 + $0x28] sm:$0xff]
        %v6017 = vld [vmem:[#allocation7 + $0x30] sm:$0xff]
        %v6018 = vld [vmem:[#allocation7 + $0x38] sm:$0xff]
        %s6019 = scalar_lea.vmem %s7, 72
        %v6020 = vld [vmem:[%s6019] sm:$0xff]
        %v6021 = vld [vmem:[%s6019 + $0x8] sm:$0xff]
        %v6022 = vld [vmem:[%s6019 + $0x10] sm:$0xff]
        %v6023 = vld [vmem:[%s6019 + $0x18] sm:$0xff]
        %v6024 = vld [vmem:[%s6019 + $0x20] sm:$0xff]
        %v6025 = vld [vmem:[%s6019 + $0x28] sm:$0xff]
        %v6026 = vld [vmem:[%s6019 + $0x30] sm:$0xff]
        %v6027 = vld [vmem:[%s6019 + $0x38] sm:$0xff]
        %v6028 = vld [vmem:[%s6019 + $0x40] sm:$0xff]
        %v6030 = vsel %vm2387, %v6011, 0
        %v6033 = vsel %vm2387, %v6012, 0
        %v6036 = vsel %vm2387, %v6013, 0
        %v6039 = vsel %vm2387, %v6014, 0
        %v6042 = vsel %vm2387, %v6015, 0
        %v6045 = vsel %vm2387, %v6016, 0
        %v6048 = vsel %vm2387, %v6017, 0
        %v6051 = vsel %vm2387, %v6018, 0
        %6053 = vmatprep.subr.mxu0 0.0
        %6054 = vmatpush1.msra.mxu0 %v6020
        %6055 = vmatprep.subr.mxu0 0.0
        %6056 = vmatpush1.msra.mxu0 %v6021
        %6057 = vmatprep.subr.mxu0 0.0
        %6058 = vmatpush1.msra.mxu0 %v6022
        %6059 = vmatprep.subr.mxu0 0.0
        %6060 = vmatpush1.msra.mxu0 %v6023
        %6061 = vmatprep.subr.mxu0 0.0
        %6062 = vmatpush1.msra.mxu0 %v6024
        %6063 = vmatprep.subr.mxu0 0.0
        %6064 = vmatpush1.msra.mxu0 %v6025
        %6065 = vmatprep.subr.mxu0 0.0
        %6066 = vmatpush1.msra.mxu0 %v6026
        %6067 = vmatprep.subr.mxu0 0.0
        %6068 = vmatpush1.msra.mxu0 %v6027
        %6069 = vmatprep.subr.mxu0 0.0
        %6070 = vmatpush1.msra.mxu0 %v6028
        %6071 = vmatprep.subr.mxu0 0.0
        %6072 = vmatpush1.msra.mxu0 0.0
        %6073 = vmatprep.subr.mxu0 0.0
        %6074 = vmatpush1.msra.mxu0 0.0
        %6075 = vmatprep.subr.mxu0 0.0
        %6076 = vmatpush1.msra.mxu0 0.0
        %6077 = vmatprep.subr.mxu0 0.0
        %6078 = vmatpush1.msra.mxu0 0.0
        %6079 = vmatprep.subr.mxu0 0.0
        %6080 = vmatpush1.msra.mxu0 0.0
        %6081 = vmatprep.subr.mxu0 0.0
        %6082 = vmatpush1.msra.mxu0 0.0
        %6083 = vmatprep.subr.mxu0 0.0
        %6084 = vmatpush1.msra.mxu0 0.0
        %6085 = vmatprep.subr.mxu0 0.0
        %6086 = vmatpush1.msra.mxu0 0.0
        %6087 = vmatprep.subr.mxu0 0.0
        %6088 = vmatpush1.msra.mxu0 0.0
        %6089 = vmatprep.subr.mxu0 0.0
        %6090 = vmatpush1.msra.mxu0 0.0
        %6091 = vmatprep.subr.mxu0 0.0
        %6092 = vmatpush1.msra.mxu0 0.0
        %6093 = vmatprep.subr.mxu0 0.0
        %6094 = vmatpush1.msra.mxu0 0.0
        %6095 = vmatprep.subr.mxu0 0.0
        %6096 = vmatpush1.msra.mxu0 0.0
        %6097 = vmatprep.subr.mxu0 0.0
        %6098 = vmatpush1.msra.mxu0 0.0
        %6099 = vmatprep.subr.mxu0 0.0
        %6100 = vmatpush1.msra.mxu0 0.0
        %6101 = vmatprep.subr.mxu0 0.0
        %6102 = vmatpush1.msra.mxu0 0.0
        %6103 = vmatprep.subr.mxu0 0.0
        %6104 = vmatpush1.msra.mxu0 0.0
        %6105 = vmatprep.subr.mxu0 0.0
        %6106 = vmatpush1.msra.mxu0 0.0
        %6107 = vmatprep.subr.mxu0 0.0
        %6108 = vmatpush1.msra.mxu0 0.0
        %6109 = vmatprep.subr.mxu0 0.0
        %6110 = vmatpush1.msra.mxu0 0.0
        %6111 = vmatprep.subr.mxu0 0.0
        %6112 = vmatpush1.msra.mxu0 0.0
        %6113 = vmatprep.subr.mxu0 0.0
        %6114 = vmatpush1.msra.mxu0 0.0
        %6115 = vmatprep.subr.mxu0 0.0
        %6116 = vmatpush1.msra.mxu0 0.0
        %6117 = vmatprep.mubr.f32.mxu0 0.0
        %6118 = vmatmul.mubr.f32.gmra.mrb[0].mxu0 %v6030
        %v6119 = vpop.f32.mrb[0].mxu0
        %v6120 = vadd.f32 0.0, %v6119
        %v6121 = vpop.f32.mrb[0].mxu0
        %6122 = vmatprep.mubr.f32.mxu0 0.0
        %6123 = vmatmul.mubr.f32.gmra.mrb[0].mxu0 %v6033
        %v6124 = vpop.f32.mrb[0].mxu0
        %v6125 = vadd.f32 0.0, %v6124
        %v6126 = vpop.f32.mrb[0].mxu0
        %6127 = vmatprep.mubr.f32.mxu0 0.0
        %6128 = vmatmul.mubr.f32.gmra.mrb[0].mxu0 %v6036
        %v6129 = vpop.f32.mrb[0].mxu0
        %v6130 = vadd.f32 0.0, %v6129
        %v6131 = vpop.f32.mrb[0].mxu0
        %6132 = vmatprep.mubr.f32.mxu0 0.0
        %6133 = vmatmul.mubr.f32.gmra.mrb[0].mxu0 %v6039
        %v6134 = vpop.f32.mrb[0].mxu0
        %v6135 = vadd.f32 0.0, %v6134
        %v6136 = vpop.f32.mrb[0].mxu0
        %6137 = vmatprep.mubr.f32.mxu0 0.0
        %6138 = vmatmul.mubr.f32.gmra.mrb[0].mxu0 %v6042
        %v6139 = vpop.f32.mrb[0].mxu0
        %v6140 = vadd.f32 0.0, %v6139
        %v6141 = vpop.f32.mrb[0].mxu0
        %6142 = vmatprep.mubr.f32.mxu0 0.0
        %6143 = vmatmul.mubr.f32.gmra.mrb[0].mxu0 %v6045
        %v6144 = vpop.f32.mrb[0].mxu0
        %v6145 = vadd.f32 0.0, %v6144
        %v6146 = vpop.f32.mrb[0].mxu0
        %6147 = vmatprep.mubr.f32.mxu0 0.0
        %6148 = vmatmul.mubr.f32.gmra.mrb[0].mxu0 %v6048
        %v6149 = vpop.f32.mrb[0].mxu0
        %v6150 = vadd.f32 0.0, %v6149
        %v6151 = vpop.f32.mrb[0].mxu0
        %6152 = vmatprep.mubr.f32.mxu0 0.0
        %6153 = vmatmul.mubr.f32.gmra.mrb[0].mxu0 %v6051
        %v6154 = vpop.f32.mrb[0].mxu0
        %v6155 = vadd.f32 0.0, %v6154
        %v6156 = vpop.f32.mrb[0].mxu0
        %6157 = vdwg.mxu0
        %v6159 = vsel %vm2387, %v3317, 0
        %v6162 = vsel %vm2387, %v3318, 0
        %v6165 = vsel %vm2387, %v3319, 0
        %v6168 = vsel %vm2387, %v3320, 0
        %v6171 = vsel %vm2387, %v3321, 0
        %v6174 = vsel %vm2387, %v3322, 0
        %v6177 = vsel %vm2387, %v3323, 0
        %v6180 = vsel %vm2387, %v3324, 0
        %6182 = vmatprep.subr.mxu0 0.0
        %6183 = vmatpush1.msra.mxu0 %v3325
        %6184 = vmatprep.subr.mxu0 0.0
        %6185 = vmatpush1.msra.mxu0 %v3326
        %6186 = vmatprep.subr.mxu0 0.0
        %6187 = vmatpush1.msra.mxu0 %v3327
        %6188 = vmatprep.subr.mxu0 0.0
        %6189 = vmatpush1.msra.mxu0 %v3328
        %6190 = vmatprep.subr.mxu0 0.0
        %6191 = vmatpush1.msra.mxu0 %v3329
        %6192 = vmatprep.subr.mxu0 0.0
        %6193 = vmatpush1.msra.mxu0 %v3330
        %6194 = vmatprep.subr.mxu0 0.0
        %6195 = vmatpush1.msra.mxu0 %v3331
        %6196 = vmatprep.subr.mxu0 0.0
        %6197 = vmatpush1.msra.mxu0 %v3332
        %6198 = vmatprep.subr.mxu0 0.0
        %6199 = vmatpush1.msra.mxu0 %v3333
        %6200 = vmatprep.subr.mxu0 0.0
        %6201 = vmatpush1.msra.mxu0 0.0
        %6202 = vmatprep.subr.mxu0 0.0
        %6203 = vmatpush1.msra.mxu0 0.0
        %6204 = vmatprep.subr.mxu0 0.0
        %6205 = vmatpush1.msra.mxu0 0.0
        %6206 = vmatprep.subr.mxu0 0.0
        %6207 = vmatpush1.msra.mxu0 0.0
        %6208 = vmatprep.subr.mxu0 0.0
        %6209 = vmatpush1.msra.mxu0 0.0
        %6210 = vmatprep.subr.mxu0 0.0
        %6211 = vmatpush1.msra.mxu0 0.0
        %6212 = vmatprep.subr.mxu0 0.0
        %6213 = vmatpush1.msra.mxu0 0.0
        %6214 = vmatprep.subr.mxu0 0.0
        %6215 = vmatpush1.msra.mxu0 0.0
        %6216 = vmatprep.subr.mxu0 0.0
        %6217 = vmatpush1.msra.mxu0 0.0
        %6218 = vmatprep.subr.mxu0 0.0
        %6219 = vmatpush1.msra.mxu0 0.0
        %6220 = vmatprep.subr.mxu0 0.0
        %6221 = vmatpush1.msra.mxu0 0.0
        %6222 = vmatprep.subr.mxu0 0.0
        %6223 = vmatpush1.msra.mxu0 0.0
        %6224 = vmatprep.subr.mxu0 0.0
        %6225 = vmatpush1.msra.mxu0 0.0
        %6226 = vmatprep.subr.mxu0 0.0
        %6227 = vmatpush1.msra.mxu0 0.0
        %6228 = vmatprep.subr.mxu0 0.0
        %6229 = vmatpush1.msra.mxu0 0.0
        %6230 = vmatprep.subr.mxu0 0.0
        %6231 = vmatpush1.msra.mxu0 0.0
        %6232 = vmatprep.subr.mxu0 0.0
        %6233 = vmatpush1.msra.mxu0 0.0
        %6234 = vmatprep.subr.mxu0 0.0
        %6235 = vmatpush1.msra.mxu0 0.0
        %6236 = vmatprep.subr.mxu0 0.0
        %6237 = vmatpush1.msra.mxu0 0.0
        %6238 = vmatprep.subr.mxu0 0.0
        %6239 = vmatpush1.msra.mxu0 0.0
        %6240 = vmatprep.subr.mxu0 0.0
        %6241 = vmatpush1.msra.mxu0 0.0
        %6242 = vmatprep.subr.mxu0 0.0
        %6243 = vmatpush1.msra.mxu0 0.0
        %6244 = vmatprep.subr.mxu0 0.0
        %6245 = vmatpush1.msra.mxu0 0.0
        %6246 = vmatprep.mubr.f32.mxu0 0.0
        %6247 = vmatmul.mubr.f32.gmra.mrb[0].mxu0 %v6159
        %v6248 = vpop.f32.mrb[0].mxu0
        %v6249 = vadd.f32 %v6120, %v6248
        %v6250 = vpop.f32.mrb[0].mxu0
        %6251 = vmatprep.mubr.f32.mxu0 0.0
        %6252 = vmatmul.mubr.f32.gmra.mrb[0].mxu0 %v6162
        %v6253 = vpop.f32.mrb[0].mxu0
        %v6254 = vadd.f32 %v6125, %v6253
        %v6255 = vpop.f32.mrb[0].mxu0
        %6256 = vmatprep.mubr.f32.mxu0 0.0
        %6257 = vmatmul.mubr.f32.gmra.mrb[0].mxu0 %v6165
        %v6258 = vpop.f32.mrb[0].mxu0
        %v6259 = vadd.f32 %v6130, %v6258
        %v6260 = vpop.f32.mrb[0].mxu0
        %6261 = vmatprep.mubr.f32.mxu0 0.0
        %6262 = vmatmul.mubr.f32.gmra.mrb[0].mxu0 %v6168
        %v6263 = vpop.f32.mrb[0].mxu0
        %v6264 = vadd.f32 %v6135, %v6263
        %v6265 = vpop.f32.mrb[0].mxu0
        %6266 = vmatprep.mubr.f32.mxu0 0.0
        %6267 = vmatmul.mubr.f32.gmra.mrb[0].mxu0 %v6171
        %v6268 = vpop.f32.mrb[0].mxu0
        %v6269 = vadd.f32 %v6140, %v6268
        %v6270 = vpop.f32.mrb[0].mxu0
        %6271 = vmatprep.mubr.f32.mxu0 0.0
        %6272 = vmatmul.mubr.f32.gmra.mrb[0].mxu0 %v6174
        %v6273 = vpop.f32.mrb[0].mxu0
        %v6274 = vadd.f32 %v6145, %v6273
        %v6275 = vpop.f32.mrb[0].mxu0
        %6276 = vmatprep.mubr.f32.mxu0 0.0
        %6277 = vmatmul.mubr.f32.gmra.mrb[0].mxu0 %v6177
        %v6278 = vpop.f32.mrb[0].mxu0
        %v6279 = vadd.f32 %v6150, %v6278
        %v6280 = vpop.f32.mrb[0].mxu0
        %6281 = vmatprep.mubr.f32.mxu0 0.0
        %6282 = vmatmul.mubr.f32.gmra.mrb[0].mxu0 %v6180
        %v6283 = vpop.f32.mrb[0].mxu0
        %v6284 = vadd.f32 %v6155, %v6283
        %v6285 = vpop.f32.mrb[0].mxu0
        %6286 = vdwg.mxu0
        %v6287 = vld [vmem:[%s1 + $0x2] sm:$0x1]
        %v6288 = vld [vmem:[%s2 + $0x2] sm:$0x1]
        %v6289 = vld [vmem:[%s330] sm:$0xff]
        %v6290 = vld [vmem:[%s330 + $0x8] sm:$0xff]
        %v6291 = vld [vmem:[%s330 + $0x10] sm:$0xff]
        %v6292 = vld [vmem:[%s330 + $0x18] sm:$0xff]
        %v6293 = vld [vmem:[%s330 + $0x20] sm:$0xff]
        %v6294 = vld [vmem:[%s330 + $0x28] sm:$0xff]
        %v6295 = vld [vmem:[%s330 + $0x30] sm:$0xff]
        %v6296 = vld [vmem:[%s330 + $0x38] sm:$0xff]
        %v6297 = vld [vmem:[%s330 + $0x40] sm:$0xff]
        %v6298 = vld [vmem:[%s330 + $0x48] sm:$0xff]
        %v6299 = vld [vmem:[%s330 + $0x50] sm:$0xff]
        %v6300 = vld [vmem:[%s330 + $0x58] sm:$0xff]
        %v6301 = vld [vmem:[%s330 + $0x60] sm:$0xff]
        %v6302 = vld [vmem:[%s330 + $0x68] sm:$0xff]
        %v6303 = vld [vmem:[%s330 + $0x70] sm:$0xff]
        %v6304 = vld [vmem:[%s330 + $0x78] sm:$0xff]
        %v6305 = vld [vmem:[%s330 + $0x80] sm:$0xff]
        %v6306 = vld [vmem:[%s330 + $0x88] sm:$0xff]
        %v6307 = vld [vmem:[%s330 + $0x90] sm:$0xff]
        %v6308 = vld [vmem:[%s330 + $0x98] sm:$0xff]
        %v6309 = vld [vmem:[%s330 + $0xa0] sm:$0xff]
        %v6310 = vld [vmem:[%s330 + $0xa8] sm:$0xff]
        %v6311 = vld [vmem:[%s330 + $0xb0] sm:$0xff]
        %v6312 = vld [vmem:[%s330 + $0xb8] sm:$0xff]
        %v6313 = vld [vmem:[%s330 + $0xc0] sm:$0xff]
        %v6314 = vld [vmem:[%s330 + $0xc8] sm:$0xff]
        %v6315 = vld [vmem:[%s330 + $0xd0] sm:$0xff]
        %v6316 = vld [vmem:[%s330 + $0xd8] sm:$0xff]
        %v6317 = vld [vmem:[%s330 + $0xe0] sm:$0xff]
        %v6318 = vld [vmem:[%s330 + $0xe8] sm:$0xff]
        %v6319 = vld [vmem:[%s330 + $0xf0] sm:$0xff]
        %v6320 = vld [vmem:[%s330 + $0xf8] sm:$0xff]
        %v6321 = vlaneseq
        %v6322 = vshrl.u32 %v6321, 7
        %v6323 = vsub.s32 0, %v6322
        %v6324 = vrot.slane %v6287, %v6323
        %v6325 = vmul.f32 %v6289, %v6324
        %v6326 = vmul.f32 %v6290, %v6324
        %v6327 = vmul.f32 %v6291, %v6324
        %v6328 = vmul.f32 %v6292, %v6324
        %v6329 = vmul.f32 %v6293, %v6324
        %v6330 = vmul.f32 %v6294, %v6324
        %v6331 = vmul.f32 %v6295, %v6324
        %v6332 = vmul.f32 %v6296, %v6324
        %v6333 = vmul.f32 %v6297, %v6324
        %v6334 = vmul.f32 %v6298, %v6324
        %v6335 = vmul.f32 %v6299, %v6324
        %v6336 = vmul.f32 %v6300, %v6324
        %v6337 = vmul.f32 %v6301, %v6324
        %v6338 = vmul.f32 %v6302, %v6324
        %v6339 = vmul.f32 %v6303, %v6324
        %v6340 = vmul.f32 %v6304, %v6324
        %v6341 = vmul.f32 %v6305, %v6324
        %v6342 = vmul.f32 %v6306, %v6324
        %v6343 = vmul.f32 %v6307, %v6324
        %v6344 = vmul.f32 %v6308, %v6324
        %v6345 = vmul.f32 %v6309, %v6324
        %v6346 = vmul.f32 %v6310, %v6324
        %v6347 = vmul.f32 %v6311, %v6324
        %v6348 = vmul.f32 %v6312, %v6324
        %v6349 = vmul.f32 %v6313, %v6324
        %v6350 = vmul.f32 %v6314, %v6324
        %v6351 = vmul.f32 %v6315, %v6324
        %v6352 = vmul.f32 %v6316, %v6324
        %v6353 = vmul.f32 %v6317, %v6324
        %v6354 = vmul.f32 %v6318, %v6324
        %v6355 = vmul.f32 %v6319, %v6324
        %v6356 = vmul.f32 %v6320, %v6324
        %v6357 = vlaneseq
        %v6358 = vshrl.u32 %v6357, 7
        %v6359 = vsub.s32 0, %v6358
        %v6360 = vrot.slane %v6288, %v6359
        %v6361 = vadd.f32 %v6325, %v6360
        %v6362 = vadd.f32 %v6326, %v6360
        %v6363 = vadd.f32 %v6327, %v6360
        %v6364 = vadd.f32 %v6328, %v6360
        %v6365 = vadd.f32 %v6329, %v6360
        %v6366 = vadd.f32 %v6330, %v6360
        %v6367 = vadd.f32 %v6331, %v6360
        %v6368 = vadd.f32 %v6332, %v6360
        %v6369 = vadd.f32 %v6333, %v6360
        %v6370 = vadd.f32 %v6334, %v6360
        %v6371 = vadd.f32 %v6335, %v6360
        %v6372 = vadd.f32 %v6336, %v6360
        %v6373 = vadd.f32 %v6337, %v6360
        %v6374 = vadd.f32 %v6338, %v6360
        %v6375 = vadd.f32 %v6339, %v6360
        %v6376 = vadd.f32 %v6340, %v6360
        %v6377 = vadd.f32 %v6341, %v6360
        %v6378 = vadd.f32 %v6342, %v6360
        %v6379 = vadd.f32 %v6343, %v6360
        %v6380 = vadd.f32 %v6344, %v6360
        %v6381 = vadd.f32 %v6345, %v6360
        %v6382 = vadd.f32 %v6346, %v6360
        %v6383 = vadd.f32 %v6347, %v6360
        %v6384 = vadd.f32 %v6348, %v6360
        %v6385 = vadd.f32 %v6349, %v6360
        %v6386 = vadd.f32 %v6350, %v6360
        %v6387 = vadd.f32 %v6351, %v6360
        %v6388 = vadd.f32 %v6352, %v6360
        %v6389 = vadd.f32 %v6353, %v6360
        %v6390 = vadd.f32 %v6354, %v6360
        %v6391 = vadd.f32 %v6355, %v6360
        %v6392 = vadd.f32 %v6356, %v6360
        %v6393 = vmax.f32 %v6361, 0.0
        %v6394 = vmax.f32 %v6362, 0.0
        %v6395 = vmax.f32 %v6363, 0.0
        %v6396 = vmax.f32 %v6364, 0.0
        %v6397 = vmax.f32 %v6365, 0.0
        %v6398 = vmax.f32 %v6366, 0.0
        %v6399 = vmax.f32 %v6367, 0.0
        %v6400 = vmax.f32 %v6368, 0.0
        %v6401 = vmax.f32 %v6369, 0.0
        %v6402 = vmax.f32 %v6370, 0.0
        %v6403 = vmax.f32 %v6371, 0.0
        %v6404 = vmax.f32 %v6372, 0.0
        %v6405 = vmax.f32 %v6373, 0.0
        %v6406 = vmax.f32 %v6374, 0.0
        %v6407 = vmax.f32 %v6375, 0.0
        %v6408 = vmax.f32 %v6376, 0.0
        %v6409 = vmax.f32 %v6377, 0.0
        %v6410 = vmax.f32 %v6378, 0.0
        %v6411 = vmax.f32 %v6379, 0.0
        %v6412 = vmax.f32 %v6380, 0.0
        %v6413 = vmax.f32 %v6381, 0.0
        %v6414 = vmax.f32 %v6382, 0.0
        %v6415 = vmax.f32 %v6383, 0.0
        %v6416 = vmax.f32 %v6384, 0.0
        %v6417 = vmax.f32 %v6385, 0.0
        %v6418 = vmax.f32 %v6386, 0.0
        %v6419 = vmax.f32 %v6387, 0.0
        %v6420 = vmax.f32 %v6388, 0.0
        %v6421 = vmax.f32 %v6389, 0.0
        %v6422 = vmax.f32 %v6390, 0.0
        %v6423 = vmax.f32 %v6391, 0.0
        %v6424 = vmax.f32 %v6392, 0.0
        %6425 = vst.msk [vmem:[%s487 + $0x6] sm:$0xff] %vm331, %v6393
        %6426 = vst.msk [vmem:[%s487 + $0xe] sm:$0xff] %vm331, %v6394
        %6427 = vst.msk [vmem:[%s487 + $0x26] sm:$0xff] %vm331, %v6395
        %6428 = vst.msk [vmem:[%s487 + $0x2e] sm:$0xff] %vm331, %v6396
        %6429 = vst.msk [vmem:[%s487 + $0x46] sm:$0xff] %vm331, %v6397
        %6430 = vst.msk [vmem:[%s487 + $0x4e] sm:$0xff] %vm331, %v6398
        %6431 = vst.msk [vmem:[%s487 + $0x66] sm:$0xff] %vm331, %v6399
        %6432 = vst.msk [vmem:[%s487 + $0x6e] sm:$0xff] %vm331, %v6400
        %6433 = vst.msk [vmem:[%s487 + $0x86] sm:$0xff] %vm331, %v6401
        %6434 = vst.msk [vmem:[%s487 + $0x8e] sm:$0xff] %vm331, %v6402
        %6435 = vst.msk [vmem:[%s487 + $0xa6] sm:$0xff] %vm331, %v6403
        %6436 = vst.msk [vmem:[%s487 + $0xae] sm:$0xff] %vm331, %v6404
        %6437 = vst.msk [vmem:[%s487 + $0xc6] sm:$0xff] %vm331, %v6405
        %6438 = vst.msk [vmem:[%s487 + $0xce] sm:$0xff] %vm331, %v6406
        %6439 = vst.msk [vmem:[%s487 + $0xe6] sm:$0xff] %vm331, %v6407
        %6440 = vst.msk [vmem:[%s487 + $0xee] sm:$0xff] %vm331, %v6408
        %6441 = vst.msk [vmem:[%s487 + $0x106] sm:$0xff] %vm331, %v6409
        %6442 = vst.msk [vmem:[%s487 + $0x10e] sm:$0xff] %vm331, %v6410
        %6443 = vst.msk [vmem:[%s487 + $0x126] sm:$0xff] %vm331, %v6411
        %6444 = vst.msk [vmem:[%s487 + $0x12e] sm:$0xff] %vm331, %v6412
        %6445 = vst.msk [vmem:[%s487 + $0x146] sm:$0xff] %vm331, %v6413
        %6446 = vst.msk [vmem:[%s487 + $0x14e] sm:$0xff] %vm331, %v6414
        %6447 = vst.msk [vmem:[%s487 + $0x166] sm:$0xff] %vm331, %v6415
        %6448 = vst.msk [vmem:[%s487 + $0x16e] sm:$0xff] %vm331, %v6416
        %6449 = vst.msk [vmem:[%s487 + $0x186] sm:$0xff] %vm331, %v6417
        %6450 = vst.msk [vmem:[%s487 + $0x18e] sm:$0xff] %vm331, %v6418
        %6451 = vst.msk [vmem:[%s487 + $0x1a6] sm:$0xff] %vm331, %v6419
        %6452 = vst.msk [vmem:[%s487 + $0x1ae] sm:$0xff] %vm331, %v6420
        %6453 = vst.msk [vmem:[%s487 + $0x1c6] sm:$0xff] %vm331, %v6421
        %6454 = vst.msk [vmem:[%s487 + $0x1ce] sm:$0xff] %vm331, %v6422
        %6455 = vst.msk [vmem:[%s487 + $0x1e6] sm:$0xff] %vm331, %v6423
        %6456 = vst.msk [vmem:[%s487 + $0x1ee] sm:$0xff] %vm331, %v6424
        %v6457 = vld [vmem:[#allocation4] sm:$0xff]
        %v6458 = vld [vmem:[#allocation4 + $0x8] sm:$0xff]
        %v6459 = vld [vmem:[#allocation4 + $0x20] sm:$0xff]
        %v6460 = vld [vmem:[#allocation4 + $0x28] sm:$0xff]
        %v6461 = vld [vmem:[#allocation4 + $0x40] sm:$0xff]
        %v6462 = vld [vmem:[#allocation4 + $0x48] sm:$0xff]
        %v6463 = vld [vmem:[#allocation4 + $0x60] sm:$0xff]
        %v6464 = vld [vmem:[#allocation4 + $0x68] sm:$0xff]
        %v6465 = vld [vmem:[#allocation4 + $0x80] sm:$0xff]
        %v6466 = vld [vmem:[#allocation4 + $0x88] sm:$0xff]
        %v6467 = vld [vmem:[#allocation4 + $0xa0] sm:$0xff]
        %v6468 = vld [vmem:[#allocation4 + $0xa8] sm:$0xff]
        %v6469 = vld [vmem:[#allocation4 + $0xc0] sm:$0xff]
        %v6470 = vld [vmem:[#allocation4 + $0xc8] sm:$0xff]
        %v6471 = vld [vmem:[#allocation4 + $0xe0] sm:$0xff]
        %v6472 = vld [vmem:[#allocation4 + $0xe8] sm:$0xff]
        %v6473 = vld [vmem:[#allocation4 + $0x100] sm:$0xff]
        %v6474 = vld [vmem:[#allocation4 + $0x108] sm:$0xff]
        %v6475 = vld [vmem:[#allocation4 + $0x120] sm:$0xff]
        %v6476 = vld [vmem:[#allocation4 + $0x128] sm:$0xff]
        %v6477 = vld [vmem:[#allocation4 + $0x140] sm:$0xff]
        %v6478 = vld [vmem:[#allocation4 + $0x148] sm:$0xff]
        %v6479 = vld [vmem:[#allocation4 + $0x160] sm:$0xff]
        %v6480 = vld [vmem:[#allocation4 + $0x168] sm:$0xff]
        %v6481 = vld [vmem:[#allocation4 + $0x180] sm:$0xff]
        %v6482 = vld [vmem:[#allocation4 + $0x188] sm:$0xff]
        %v6483 = vld [vmem:[#allocation4 + $0x1a0] sm:$0xff]
        %v6484 = vld [vmem:[#allocation4 + $0x1a8] sm:$0xff]
        %v6485 = vld [vmem:[#allocation4 + $0x1c0] sm:$0xff]
        %v6486 = vld [vmem:[#allocation4 + $0x1c8] sm:$0xff]
        %v6487 = vld [vmem:[#allocation4 + $0x1e0] sm:$0xff]
        %v6488 = vld [vmem:[#allocation4 + $0x1e8] sm:$0xff]
        %6489 = vst.msk [vmem:[#allocation6] sm:$0xff] %vm331, %v6457
        %6490 = vst.msk [vmem:[#allocation6 + $0x8] sm:$0xff] %vm331, %v6458
        %6491 = vst.msk [vmem:[#allocation6 + $0x10] sm:$0xff] %vm331, %v6459
        %6492 = vst.msk [vmem:[#allocation6 + $0x18] sm:$0xff] %vm331, %v6460
        %6493 = vst.msk [vmem:[#allocation6 + $0x20] sm:$0xff] %vm331, %v6461
        %6494 = vst.msk [vmem:[#allocation6 + $0x28] sm:$0xff] %vm331, %v6462
        %6495 = vst.msk [vmem:[#allocation6 + $0x30] sm:$0xff] %vm331, %v6463
        %6496 = vst.msk [vmem:[#allocation6 + $0x38] sm:$0xff] %vm331, %v6464
        %6497 = vst.msk [vmem:[#allocation6 + $0x40] sm:$0xff] %vm331, %v6465
        %6498 = vst.msk [vmem:[#allocation6 + $0x48] sm:$0xff] %vm331, %v6466
        %6499 = vst.msk [vmem:[#allocation6 + $0x50] sm:$0xff] %vm331, %v6467
        %6500 = vst.msk [vmem:[#allocation6 + $0x58] sm:$0xff] %vm331, %v6468
        %6501 = vst.msk [vmem:[#allocation6 + $0x60] sm:$0xff] %vm331, %v6469
        %6502 = vst.msk [vmem:[#allocation6 + $0x68] sm:$0xff] %vm331, %v6470
        %6503 = vst.msk [vmem:[#allocation6 + $0x70] sm:$0xff] %vm331, %v6471
        %6504 = vst.msk [vmem:[#allocation6 + $0x78] sm:$0xff] %vm331, %v6472
        %6505 = vst.msk [vmem:[#allocation6 + $0x80] sm:$0xff] %vm331, %v6473
        %6506 = vst.msk [vmem:[#allocation6 + $0x88] sm:$0xff] %vm331, %v6474
        %6507 = vst.msk [vmem:[#allocation6 + $0x90] sm:$0xff] %vm331, %v6475
        %6508 = vst.msk [vmem:[#allocation6 + $0x98] sm:$0xff] %vm331, %v6476
        %6509 = vst.msk [vmem:[#allocation6 + $0xa0] sm:$0xff] %vm331, %v6477
        %6510 = vst.msk [vmem:[#allocation6 + $0xa8] sm:$0xff] %vm331, %v6478
        %6511 = vst.msk [vmem:[#allocation6 + $0xb0] sm:$0xff] %vm331, %v6479
        %6512 = vst.msk [vmem:[#allocation6 + $0xb8] sm:$0xff] %vm331, %v6480
        %6513 = vst.msk [vmem:[#allocation6 + $0xc0] sm:$0xff] %vm331, %v6481
        %6514 = vst.msk [vmem:[#allocation6 + $0xc8] sm:$0xff] %vm331, %v6482
        %6515 = vst.msk [vmem:[#allocation6 + $0xd0] sm:$0xff] %vm331, %v6483
        %6516 = vst.msk [vmem:[#allocation6 + $0xd8] sm:$0xff] %vm331, %v6484
        %6517 = vst.msk [vmem:[#allocation6 + $0xe0] sm:$0xff] %vm331, %v6485
        %6518 = vst.msk [vmem:[#allocation6 + $0xe8] sm:$0xff] %vm331, %v6486
        %6519 = vst.msk [vmem:[#allocation6 + $0xf0] sm:$0xff] %vm331, %v6487
        %6520 = vst.msk [vmem:[#allocation6 + $0xf8] sm:$0xff] %vm331, %v6488
        %v6521 = vld [vmem:[#allocation4 + $0x6] sm:$0xff]
        %v6522 = vld [vmem:[#allocation4 + $0xe] sm:$0xff]
        %v6523 = vld [vmem:[#allocation4 + $0x26] sm:$0xff]
        %v6524 = vld [vmem:[#allocation4 + $0x2e] sm:$0xff]
        %v6525 = vld [vmem:[#allocation4 + $0x46] sm:$0xff]
        %v6526 = vld [vmem:[#allocation4 + $0x4e] sm:$0xff]
        %v6527 = vld [vmem:[#allocation4 + $0x66] sm:$0xff]
        %v6528 = vld [vmem:[#allocation4 + $0x6e] sm:$0xff]
        %v6529 = vld [vmem:[#allocation4 + $0x86] sm:$0xff]
        %v6530 = vld [vmem:[#allocation4 + $0x8e] sm:$0xff]
        %v6531 = vld [vmem:[#allocation4 + $0xa6] sm:$0xff]
        %v6532 = vld [vmem:[#allocation4 + $0xae] sm:$0xff]
        %v6533 = vld [vmem:[#allocation4 + $0xc6] sm:$0xff]
        %v6534 = vld [vmem:[#allocation4 + $0xce] sm:$0xff]
        %v6535 = vld [vmem:[#allocation4 + $0xe6] sm:$0xff]
        %v6536 = vld [vmem:[#allocation4 + $0xee] sm:$0xff]
        %v6537 = vld [vmem:[#allocation4 + $0x106] sm:$0xff]
        %v6538 = vld [vmem:[#allocation4 + $0x10e] sm:$0xff]
        %v6539 = vld [vmem:[#allocation4 + $0x126] sm:$0xff]
        %v6540 = vld [vmem:[#allocation4 + $0x12e] sm:$0xff]
        %v6541 = vld [vmem:[#allocation4 + $0x146] sm:$0xff]
        %v6542 = vld [vmem:[#allocation4 + $0x14e] sm:$0xff]
        %v6543 = vld [vmem:[#allocation4 + $0x166] sm:$0xff]
        %v6544 = vld [vmem:[#allocation4 + $0x16e] sm:$0xff]
        %v6545 = vld [vmem:[#allocation4 + $0x186] sm:$0xff]
        %v6546 = vld [vmem:[#allocation4 + $0x18e] sm:$0xff]
        %v6547 = vld [vmem:[#allocation4 + $0x1a6] sm:$0xff]
        %v6548 = vld [vmem:[#allocation4 + $0x1ae] sm:$0xff]
        %v6549 = vld [vmem:[#allocation4 + $0x1c6] sm:$0xff]
        %v6550 = vld [vmem:[#allocation4 + $0x1ce] sm:$0xff]
        %v6551 = vld [vmem:[#allocation4 + $0x1e6] sm:$0xff]
        %v6552 = vld [vmem:[#allocation4 + $0x1ee] sm:$0xff]
        %6585 = vrot.lane.b32.xlu0 %v6521, 8
        %v6586 = vpop.permute.xlu0 %6585
        %6587 = vrot.lane.b32.xlu0 %v6522, 8
        %v6588 = vpop.permute.xlu0 %6587
        %6589 = vrot.lane.b32.xlu0 %v6523, 8
        %v6590 = vpop.permute.xlu0 %6589
        %6591 = vrot.lane.b32.xlu0 %v6524, 8
        %v6592 = vpop.permute.xlu0 %6591
        %6593 = vrot.lane.b32.xlu0 %v6525, 8
        %v6594 = vpop.permute.xlu0 %6593
        %6595 = vrot.lane.b32.xlu0 %v6526, 8
        %v6596 = vpop.permute.xlu0 %6595
        %6597 = vrot.lane.b32.xlu0 %v6527, 8
        %v6598 = vpop.permute.xlu0 %6597
        %6599 = vrot.lane.b32.xlu0 %v6528, 8
        %v6600 = vpop.permute.xlu0 %6599
        %6601 = vrot.lane.b32.xlu0 %v6529, 8
        %v6602 = vpop.permute.xlu0 %6601
        %6603 = vrot.lane.b32.xlu0 %v6530, 8
        %v6604 = vpop.permute.xlu0 %6603
        %6605 = vrot.lane.b32.xlu0 %v6531, 8
        %v6606 = vpop.permute.xlu0 %6605
        %6607 = vrot.lane.b32.xlu0 %v6532, 8
        %v6608 = vpop.permute.xlu0 %6607
        %6609 = vrot.lane.b32.xlu0 %v6533, 8
        %v6610 = vpop.permute.xlu0 %6609
        %6611 = vrot.lane.b32.xlu0 %v6534, 8
        %v6612 = vpop.permute.xlu0 %6611
        %6613 = vrot.lane.b32.xlu0 %v6535, 8
        %v6614 = vpop.permute.xlu0 %6613
        %6615 = vrot.lane.b32.xlu0 %v6536, 8
        %v6616 = vpop.permute.xlu0 %6615
        %6617 = vrot.lane.b32.xlu0 %v6537, 8
        %v6618 = vpop.permute.xlu0 %6617
        %6619 = vrot.lane.b32.xlu0 %v6538, 8
        %v6620 = vpop.permute.xlu0 %6619
        %6621 = vrot.lane.b32.xlu0 %v6539, 8
        %v6622 = vpop.permute.xlu0 %6621
        %6623 = vrot.lane.b32.xlu0 %v6540, 8
        %v6624 = vpop.permute.xlu0 %6623
        %6625 = vrot.lane.b32.xlu0 %v6541, 8
        %v6626 = vpop.permute.xlu0 %6625
        %6627 = vrot.lane.b32.xlu0 %v6542, 8
        %v6628 = vpop.permute.xlu0 %6627
        %6629 = vrot.lane.b32.xlu0 %v6543, 8
        %v6630 = vpop.permute.xlu0 %6629
        %6631 = vrot.lane.b32.xlu0 %v6544, 8
        %v6632 = vpop.permute.xlu0 %6631
        %6633 = vrot.lane.b32.xlu0 %v6545, 8
        %v6634 = vpop.permute.xlu0 %6633
        %6635 = vrot.lane.b32.xlu0 %v6546, 8
        %v6636 = vpop.permute.xlu0 %6635
        %6637 = vrot.lane.b32.xlu0 %v6547, 8
        %v6638 = vpop.permute.xlu0 %6637
        %6639 = vrot.lane.b32.xlu0 %v6548, 8
        %v6640 = vpop.permute.xlu0 %6639
        %6641 = vrot.lane.b32.xlu0 %v6549, 8
        %v6642 = vpop.permute.xlu0 %6641
        %6643 = vrot.lane.b32.xlu0 %v6550, 8
        %v6644 = vpop.permute.xlu0 %6643
        %6645 = vrot.lane.b32.xlu0 %v6551, 8
        %v6646 = vpop.permute.xlu0 %6645
        %6647 = vrot.lane.b32.xlu0 %v6552, 8
        %v6648 = vpop.permute.xlu0 %6647
        %6681 = vst.msk [vmem:[#allocation6] sm:$0xff] %vm956, %v6586
        %6682 = vst.msk [vmem:[#allocation6 + $0x8] sm:$0xff] %vm956, %v6588
        %6683 = vst.msk [vmem:[#allocation6 + $0x10] sm:$0xff] %vm956, %v6590
        %6684 = vst.msk [vmem:[#allocation6 + $0x18] sm:$0xff] %vm956, %v6592
        %6685 = vst.msk [vmem:[#allocation6 + $0x20] sm:$0xff] %vm956, %v6594
        %6686 = vst.msk [vmem:[#allocation6 + $0x28] sm:$0xff] %vm956, %v6596
        %6687 = vst.msk [vmem:[#allocation6 + $0x30] sm:$0xff] %vm956, %v6598
        %6688 = vst.msk [vmem:[#allocation6 + $0x38] sm:$0xff] %vm956, %v6600
        %6689 = vst.msk [vmem:[#allocation6 + $0x40] sm:$0xff] %vm956, %v6602
        %6690 = vst.msk [vmem:[#allocation6 + $0x48] sm:$0xff] %vm956, %v6604
        %6691 = vst.msk [vmem:[#allocation6 + $0x50] sm:$0xff] %vm956, %v6606
        %6692 = vst.msk [vmem:[#allocation6 + $0x58] sm:$0xff] %vm956, %v6608
        %6693 = vst.msk [vmem:[#allocation6 + $0x60] sm:$0xff] %vm956, %v6610
        %6694 = vst.msk [vmem:[#allocation6 + $0x68] sm:$0xff] %vm956, %v6612
        %6695 = vst.msk [vmem:[#allocation6 + $0x70] sm:$0xff] %vm956, %v6614
        %6696 = vst.msk [vmem:[#allocation6 + $0x78] sm:$0xff] %vm956, %v6616
        %6697 = vst.msk [vmem:[#allocation6 + $0x80] sm:$0xff] %vm956, %v6618
        %6698 = vst.msk [vmem:[#allocation6 + $0x88] sm:$0xff] %vm956, %v6620
        %6699 = vst.msk [vmem:[#allocation6 + $0x90] sm:$0xff] %vm956, %v6622
        %6700 = vst.msk [vmem:[#allocation6 + $0x98] sm:$0xff] %vm956, %v6624
        %6701 = vst.msk [vmem:[#allocation6 + $0xa0] sm:$0xff] %vm956, %v6626
        %6702 = vst.msk [vmem:[#allocation6 + $0xa8] sm:$0xff] %vm956, %v6628
        %6703 = vst.msk [vmem:[#allocation6 + $0xb0] sm:$0xff] %vm956, %v6630
        %6704 = vst.msk [vmem:[#allocation6 + $0xb8] sm:$0xff] %vm956, %v6632
        %6705 = vst.msk [vmem:[#allocation6 + $0xc0] sm:$0xff] %vm956, %v6634
        %6706 = vst.msk [vmem:[#allocation6 + $0xc8] sm:$0xff] %vm956, %v6636
        %6707 = vst.msk [vmem:[#allocation6 + $0xd0] sm:$0xff] %vm956, %v6638
        %6708 = vst.msk [vmem:[#allocation6 + $0xd8] sm:$0xff] %vm956, %v6640
        %6709 = vst.msk [vmem:[#allocation6 + $0xe0] sm:$0xff] %vm956, %v6642
        %6710 = vst.msk [vmem:[#allocation6 + $0xe8] sm:$0xff] %vm956, %v6644
        %6711 = vst.msk [vmem:[#allocation6 + $0xf0] sm:$0xff] %vm956, %v6646
        %6712 = vst.msk [vmem:[#allocation6 + $0xf8] sm:$0xff] %vm956, %v6648
        %v6713 = vld [vmem:[#allocation4 + $0xc] sm:$0xff]
        %v6714 = vld [vmem:[#allocation4 + $0x14] sm:$0xff]
        %v6715 = vld [vmem:[#allocation4 + $0x2c] sm:$0xff]
        %v6716 = vld [vmem:[#allocation4 + $0x34] sm:$0xff]
        %v6717 = vld [vmem:[#allocation4 + $0x4c] sm:$0xff]
        %v6718 = vld [vmem:[#allocation4 + $0x54] sm:$0xff]
        %v6719 = vld [vmem:[#allocation4 + $0x6c] sm:$0xff]
        %v6720 = vld [vmem:[#allocation4 + $0x74] sm:$0xff]
        %v6721 = vld [vmem:[#allocation4 + $0x8c] sm:$0xff]
        %v6722 = vld [vmem:[#allocation4 + $0x94] sm:$0xff]
        %v6723 = vld [vmem:[#allocation4 + $0xac] sm:$0xff]
        %v6724 = vld [vmem:[#allocation4 + $0xb4] sm:$0xff]
        %v6725 = vld [vmem:[#allocation4 + $0xcc] sm:$0xff]
        %v6726 = vld [vmem:[#allocation4 + $0xd4] sm:$0xff]
        %v6727 = vld [vmem:[#allocation4 + $0xec] sm:$0xff]
        %v6728 = vld [vmem:[#allocation4 + $0xf4] sm:$0xff]
        %v6729 = vld [vmem:[#allocation4 + $0x10c] sm:$0xff]
        %v6730 = vld [vmem:[#allocation4 + $0x114] sm:$0xff]
        %v6731 = vld [vmem:[#allocation4 + $0x12c] sm:$0xff]
        %v6732 = vld [vmem:[#allocation4 + $0x134] sm:$0xff]
        %v6733 = vld [vmem:[#allocation4 + $0x14c] sm:$0xff]
        %v6734 = vld [vmem:[#allocation4 + $0x154] sm:$0xff]
        %v6735 = vld [vmem:[#allocation4 + $0x16c] sm:$0xff]
        %v6736 = vld [vmem:[#allocation4 + $0x174] sm:$0xff]
        %v6737 = vld [vmem:[#allocation4 + $0x18c] sm:$0xff]
        %v6738 = vld [vmem:[#allocation4 + $0x194] sm:$0xff]
        %v6739 = vld [vmem:[#allocation4 + $0x1ac] sm:$0xff]
        %v6740 = vld [vmem:[#allocation4 + $0x1b4] sm:$0xff]
        %v6741 = vld [vmem:[#allocation4 + $0x1cc] sm:$0xff]
        %v6742 = vld [vmem:[#allocation4 + $0x1d4] sm:$0xff]
        %v6743 = vld [vmem:[#allocation4 + $0x1ec] sm:$0xff]
        %v6744 = vld [vmem:[#allocation4 + $0x1f4] sm:$0xff]
        %6777 = vrot.lane.b32.xlu0 %v6713, 16
        %v6778 = vpop.permute.xlu0 %6777
        %6779 = vrot.lane.b32.xlu0 %v6714, 16
        %v6780 = vpop.permute.xlu0 %6779
        %6781 = vrot.lane.b32.xlu0 %v6715, 16
        %v6782 = vpop.permute.xlu0 %6781
        %6783 = vrot.lane.b32.xlu0 %v6716, 16
        %v6784 = vpop.permute.xlu0 %6783
        %6785 = vrot.lane.b32.xlu0 %v6717, 16
        %v6786 = vpop.permute.xlu0 %6785
        %6787 = vrot.lane.b32.xlu0 %v6718, 16
        %v6788 = vpop.permute.xlu0 %6787
        %6789 = vrot.lane.b32.xlu0 %v6719, 16
        %v6790 = vpop.permute.xlu0 %6789
        %6791 = vrot.lane.b32.xlu0 %v6720, 16
        %v6792 = vpop.permute.xlu0 %6791
        %6793 = vrot.lane.b32.xlu0 %v6721, 16
        %v6794 = vpop.permute.xlu0 %6793
        %6795 = vrot.lane.b32.xlu0 %v6722, 16
        %v6796 = vpop.permute.xlu0 %6795
        %6797 = vrot.lane.b32.xlu0 %v6723, 16
        %v6798 = vpop.permute.xlu0 %6797
        %6799 = vrot.lane.b32.xlu0 %v6724, 16
        %v6800 = vpop.permute.xlu0 %6799
        %6801 = vrot.lane.b32.xlu0 %v6725, 16
        %v6802 = vpop.permute.xlu0 %6801
        %6803 = vrot.lane.b32.xlu0 %v6726, 16
        %v6804 = vpop.permute.xlu0 %6803
        %6805 = vrot.lane.b32.xlu0 %v6727, 16
        %v6806 = vpop.permute.xlu0 %6805
        %6807 = vrot.lane.b32.xlu0 %v6728, 16
        %v6808 = vpop.permute.xlu0 %6807
        %6809 = vrot.lane.b32.xlu0 %v6729, 16
        %v6810 = vpop.permute.xlu0 %6809
        %6811 = vrot.lane.b32.xlu0 %v6730, 16
        %v6812 = vpop.permute.xlu0 %6811
        %6813 = vrot.lane.b32.xlu0 %v6731, 16
        %v6814 = vpop.permute.xlu0 %6813
        %6815 = vrot.lane.b32.xlu0 %v6732, 16
        %v6816 = vpop.permute.xlu0 %6815
        %6817 = vrot.lane.b32.xlu0 %v6733, 16
        %v6818 = vpop.permute.xlu0 %6817
        %6819 = vrot.lane.b32.xlu0 %v6734, 16
        %v6820 = vpop.permute.xlu0 %6819
        %6821 = vrot.lane.b32.xlu0 %v6735, 16
        %v6822 = vpop.permute.xlu0 %6821
        %6823 = vrot.lane.b32.xlu0 %v6736, 16
        %v6824 = vpop.permute.xlu0 %6823
        %6825 = vrot.lane.b32.xlu0 %v6737, 16
        %v6826 = vpop.permute.xlu0 %6825
        %6827 = vrot.lane.b32.xlu0 %v6738, 16
        %v6828 = vpop.permute.xlu0 %6827
        %6829 = vrot.lane.b32.xlu0 %v6739, 16
        %v6830 = vpop.permute.xlu0 %6829
        %6831 = vrot.lane.b32.xlu0 %v6740, 16
        %v6832 = vpop.permute.xlu0 %6831
        %6833 = vrot.lane.b32.xlu0 %v6741, 16
        %v6834 = vpop.permute.xlu0 %6833
        %6835 = vrot.lane.b32.xlu0 %v6742, 16
        %v6836 = vpop.permute.xlu0 %6835
        %6837 = vrot.lane.b32.xlu0 %v6743, 16
        %v6838 = vpop.permute.xlu0 %6837
        %6839 = vrot.lane.b32.xlu0 %v6744, 16
        %v6840 = vpop.permute.xlu0 %6839
        %6873 = vst.msk [vmem:[#allocation6] sm:$0xff] %vm1149, %v6778
        %6874 = vst.msk [vmem:[#allocation6 + $0x8] sm:$0xff] %vm1149, %v6780
        %6875 = vst.msk [vmem:[#allocation6 + $0x10] sm:$0xff] %vm1149, %v6782
        %6876 = vst.msk [vmem:[#allocation6 + $0x18] sm:$0xff] %vm1149, %v6784
        %6877 = vst.msk [vmem:[#allocation6 + $0x20] sm:$0xff] %vm1149, %v6786
        %6878 = vst.msk [vmem:[#allocation6 + $0x28] sm:$0xff] %vm1149, %v6788
        %6879 = vst.msk [vmem:[#allocation6 + $0x30] sm:$0xff] %vm1149, %v6790
        %6880 = vst.msk [vmem:[#allocation6 + $0x38] sm:$0xff] %vm1149, %v6792
        %6881 = vst.msk [vmem:[#allocation6 + $0x40] sm:$0xff] %vm1149, %v6794
        %6882 = vst.msk [vmem:[#allocation6 + $0x48] sm:$0xff] %vm1149, %v6796
        %6883 = vst.msk [vmem:[#allocation6 + $0x50] sm:$0xff] %vm1149, %v6798
        %6884 = vst.msk [vmem:[#allocation6 + $0x58] sm:$0xff] %vm1149, %v6800
        %6885 = vst.msk [vmem:[#allocation6 + $0x60] sm:$0xff] %vm1149, %v6802
        %6886 = vst.msk [vmem:[#allocation6 + $0x68] sm:$0xff] %vm1149, %v6804
        %6887 = vst.msk [vmem:[#allocation6 + $0x70] sm:$0xff] %vm1149, %v6806
        %6888 = vst.msk [vmem:[#allocation6 + $0x78] sm:$0xff] %vm1149, %v6808
        %6889 = vst.msk [vmem:[#allocation6 + $0x80] sm:$0xff] %vm1149, %v6810
        %6890 = vst.msk [vmem:[#allocation6 + $0x88] sm:$0xff] %vm1149, %v6812
        %6891 = vst.msk [vmem:[#allocation6 + $0x90] sm:$0xff] %vm1149, %v6814
        %6892 = vst.msk [vmem:[#allocation6 + $0x98] sm:$0xff] %vm1149, %v6816
        %6893 = vst.msk [vmem:[#allocation6 + $0xa0] sm:$0xff] %vm1149, %v6818
        %6894 = vst.msk [vmem:[#allocation6 + $0xa8] sm:$0xff] %vm1149, %v6820
        %6895 = vst.msk [vmem:[#allocation6 + $0xb0] sm:$0xff] %vm1149, %v6822
        %6896 = vst.msk [vmem:[#allocation6 + $0xb8] sm:$0xff] %vm1149, %v6824
        %6897 = vst.msk [vmem:[#allocation6 + $0xc0] sm:$0xff] %vm1149, %v6826
        %6898 = vst.msk [vmem:[#allocation6 + $0xc8] sm:$0xff] %vm1149, %v6828
        %6899 = vst.msk [vmem:[#allocation6 + $0xd0] sm:$0xff] %vm1149, %v6830
        %6900 = vst.msk [vmem:[#allocation6 + $0xd8] sm:$0xff] %vm1149, %v6832
        %6901 = vst.msk [vmem:[#allocation6 + $0xe0] sm:$0xff] %vm1149, %v6834
        %6902 = vst.msk [vmem:[#allocation6 + $0xe8] sm:$0xff] %vm1149, %v6836
        %6903 = vst.msk [vmem:[#allocation6 + $0xf0] sm:$0xff] %vm1149, %v6838
        %6904 = vst.msk [vmem:[#allocation6 + $0xf8] sm:$0xff] %vm1149, %v6840
        %v6905 = vld [vmem:[%s487] sm:$0xff]
        %v6906 = vld [vmem:[%s487 + $0x8] sm:$0xff]
        %v6907 = vld [vmem:[%s487 + $0x20] sm:$0xff]
        %v6908 = vld [vmem:[%s487 + $0x28] sm:$0xff]
        %v6909 = vld [vmem:[%s487 + $0x40] sm:$0xff]
        %v6910 = vld [vmem:[%s487 + $0x48] sm:$0xff]
        %v6911 = vld [vmem:[%s487 + $0x60] sm:$0xff]
        %v6912 = vld [vmem:[%s487 + $0x68] sm:$0xff]
        %v6913 = vld [vmem:[%s487 + $0x80] sm:$0xff]
        %v6914 = vld [vmem:[%s487 + $0x88] sm:$0xff]
        %v6915 = vld [vmem:[%s487 + $0xa0] sm:$0xff]
        %v6916 = vld [vmem:[%s487 + $0xa8] sm:$0xff]
        %v6917 = vld [vmem:[%s487 + $0xc0] sm:$0xff]
        %v6918 = vld [vmem:[%s487 + $0xc8] sm:$0xff]
        %v6919 = vld [vmem:[%s487 + $0xe0] sm:$0xff]
        %v6920 = vld [vmem:[%s487 + $0xe8] sm:$0xff]
        %v6921 = vld [vmem:[%s487 + $0x100] sm:$0xff]
        %v6922 = vld [vmem:[%s487 + $0x108] sm:$0xff]
        %v6923 = vld [vmem:[%s487 + $0x120] sm:$0xff]
        %v6924 = vld [vmem:[%s487 + $0x128] sm:$0xff]
        %v6925 = vld [vmem:[%s487 + $0x140] sm:$0xff]
        %v6926 = vld [vmem:[%s487 + $0x148] sm:$0xff]
        %v6927 = vld [vmem:[%s487 + $0x160] sm:$0xff]
        %v6928 = vld [vmem:[%s487 + $0x168] sm:$0xff]
        %v6929 = vld [vmem:[%s487 + $0x180] sm:$0xff]
        %v6930 = vld [vmem:[%s487 + $0x188] sm:$0xff]
        %v6931 = vld [vmem:[%s487 + $0x1a0] sm:$0xff]
        %v6932 = vld [vmem:[%s487 + $0x1a8] sm:$0xff]
        %v6933 = vld [vmem:[%s487 + $0x1c0] sm:$0xff]
        %v6934 = vld [vmem:[%s487 + $0x1c8] sm:$0xff]
        %v6935 = vld [vmem:[%s487 + $0x1e0] sm:$0xff]
        %v6936 = vld [vmem:[%s487 + $0x1e8] sm:$0xff]
        %6969 = vrot.lane.b32.xlu0 %v6905, 24
        %v6970 = vpop.permute.xlu0 %6969
        %6971 = vrot.lane.b32.xlu0 %v6906, 24
        %v6972 = vpop.permute.xlu0 %6971
        %6973 = vrot.lane.b32.xlu0 %v6907, 24
        %v6974 = vpop.permute.xlu0 %6973
        %6975 = vrot.lane.b32.xlu0 %v6908, 24
        %v6976 = vpop.permute.xlu0 %6975
        %6977 = vrot.lane.b32.xlu0 %v6909, 24
        %v6978 = vpop.permute.xlu0 %6977
        %6979 = vrot.lane.b32.xlu0 %v6910, 24
        %v6980 = vpop.permute.xlu0 %6979
        %6981 = vrot.lane.b32.xlu0 %v6911, 24
        %v6982 = vpop.permute.xlu0 %6981
        %6983 = vrot.lane.b32.xlu0 %v6912, 24
        %v6984 = vpop.permute.xlu0 %6983
        %6985 = vrot.lane.b32.xlu0 %v6913, 24
        %v6986 = vpop.permute.xlu0 %6985
        %6987 = vrot.lane.b32.xlu0 %v6914, 24
        %v6988 = vpop.permute.xlu0 %6987
        %6989 = vrot.lane.b32.xlu0 %v6915, 24
        %v6990 = vpop.permute.xlu0 %6989
        %6991 = vrot.lane.b32.xlu0 %v6916, 24
        %v6992 = vpop.permute.xlu0 %6991
        %6993 = vrot.lane.b32.xlu0 %v6917, 24
        %v6994 = vpop.permute.xlu0 %6993
        %6995 = vrot.lane.b32.xlu0 %v6918, 24
        %v6996 = vpop.permute.xlu0 %6995
        %6997 = vrot.lane.b32.xlu0 %v6919, 24
        %v6998 = vpop.permute.xlu0 %6997
        %6999 = vrot.lane.b32.xlu0 %v6920, 24
        %v7000 = vpop.permute.xlu0 %6999
        %7001 = vrot.lane.b32.xlu0 %v6921, 24
        %v7002 = vpop.permute.xlu0 %7001
        %7003 = vrot.lane.b32.xlu0 %v6922, 24
        %v7004 = vpop.permute.xlu0 %7003
        %7005 = vrot.lane.b32.xlu0 %v6923, 24
        %v7006 = vpop.permute.xlu0 %7005
        %7007 = vrot.lane.b32.xlu0 %v6924, 24
        %v7008 = vpop.permute.xlu0 %7007
        %7009 = vrot.lane.b32.xlu0 %v6925, 24
        %v7010 = vpop.permute.xlu0 %7009
        %7011 = vrot.lane.b32.xlu0 %v6926, 24
        %v7012 = vpop.permute.xlu0 %7011
        %7013 = vrot.lane.b32.xlu0 %v6927, 24
        %v7014 = vpop.permute.xlu0 %7013
        %7015 = vrot.lane.b32.xlu0 %v6928, 24
        %v7016 = vpop.permute.xlu0 %7015
        %7017 = vrot.lane.b32.xlu0 %v6929, 24
        %v7018 = vpop.permute.xlu0 %7017
        %7019 = vrot.lane.b32.xlu0 %v6930, 24
        %v7020 = vpop.permute.xlu0 %7019
        %7021 = vrot.lane.b32.xlu0 %v6931, 24
        %v7022 = vpop.permute.xlu0 %7021
        %7023 = vrot.lane.b32.xlu0 %v6932, 24
        %v7024 = vpop.permute.xlu0 %7023
        %7025 = vrot.lane.b32.xlu0 %v6933, 24
        %v7026 = vpop.permute.xlu0 %7025
        %7027 = vrot.lane.b32.xlu0 %v6934, 24
        %v7028 = vpop.permute.xlu0 %7027
        %7029 = vrot.lane.b32.xlu0 %v6935, 24
        %v7030 = vpop.permute.xlu0 %7029
        %7031 = vrot.lane.b32.xlu0 %v6936, 24
        %v7032 = vpop.permute.xlu0 %7031
        %7065 = vst.msk [vmem:[#allocation6] sm:$0xff] %vm1342, %v6970
        %7066 = vst.msk [vmem:[#allocation6 + $0x8] sm:$0xff] %vm1342, %v6972
        %7067 = vst.msk [vmem:[#allocation6 + $0x10] sm:$0xff] %vm1342, %v6974
        %7068 = vst.msk [vmem:[#allocation6 + $0x18] sm:$0xff] %vm1342, %v6976
        %7069 = vst.msk [vmem:[#allocation6 + $0x20] sm:$0xff] %vm1342, %v6978
        %7070 = vst.msk [vmem:[#allocation6 + $0x28] sm:$0xff] %vm1342, %v6980
        %7071 = vst.msk [vmem:[#allocation6 + $0x30] sm:$0xff] %vm1342, %v6982
        %7072 = vst.msk [vmem:[#allocation6 + $0x38] sm:$0xff] %vm1342, %v6984
        %7073 = vst.msk [vmem:[#allocation6 + $0x40] sm:$0xff] %vm1342, %v6986
        %7074 = vst.msk [vmem:[#allocation6 + $0x48] sm:$0xff] %vm1342, %v6988
        %7075 = vst.msk [vmem:[#allocation6 + $0x50] sm:$0xff] %vm1342, %v6990
        %7076 = vst.msk [vmem:[#allocation6 + $0x58] sm:$0xff] %vm1342, %v6992
        %7077 = vst.msk [vmem:[#allocation6 + $0x60] sm:$0xff] %vm1342, %v6994
        %7078 = vst.msk [vmem:[#allocation6 + $0x68] sm:$0xff] %vm1342, %v6996
        %7079 = vst.msk [vmem:[#allocation6 + $0x70] sm:$0xff] %vm1342, %v6998
        %7080 = vst.msk [vmem:[#allocation6 + $0x78] sm:$0xff] %vm1342, %v7000
        %7081 = vst.msk [vmem:[#allocation6 + $0x80] sm:$0xff] %vm1342, %v7002
        %7082 = vst.msk [vmem:[#allocation6 + $0x88] sm:$0xff] %vm1342, %v7004
        %7083 = vst.msk [vmem:[#allocation6 + $0x90] sm:$0xff] %vm1342, %v7006
        %7084 = vst.msk [vmem:[#allocation6 + $0x98] sm:$0xff] %vm1342, %v7008
        %7085 = vst.msk [vmem:[#allocation6 + $0xa0] sm:$0xff] %vm1342, %v7010
        %7086 = vst.msk [vmem:[#allocation6 + $0xa8] sm:$0xff] %vm1342, %v7012
        %7087 = vst.msk [vmem:[#allocation6 + $0xb0] sm:$0xff] %vm1342, %v7014
        %7088 = vst.msk [vmem:[#allocation6 + $0xb8] sm:$0xff] %vm1342, %v7016
        %7089 = vst.msk [vmem:[#allocation6 + $0xc0] sm:$0xff] %vm1342, %v7018
        %7090 = vst.msk [vmem:[#allocation6 + $0xc8] sm:$0xff] %vm1342, %v7020
        %7091 = vst.msk [vmem:[#allocation6 + $0xd0] sm:$0xff] %vm1342, %v7022
        %7092 = vst.msk [vmem:[#allocation6 + $0xd8] sm:$0xff] %vm1342, %v7024
        %7093 = vst.msk [vmem:[#allocation6 + $0xe0] sm:$0xff] %vm1342, %v7026
        %7094 = vst.msk [vmem:[#allocation6 + $0xe8] sm:$0xff] %vm1342, %v7028
        %7095 = vst.msk [vmem:[#allocation6 + $0xf0] sm:$0xff] %vm1342, %v7030
        %7096 = vst.msk [vmem:[#allocation6 + $0xf8] sm:$0xff] %vm1342, %v7032
        %v7097 = vld [vmem:[%s487 + $0x6] sm:$0xff]
        %v7098 = vld [vmem:[%s487 + $0xe] sm:$0xff]
        %v7099 = vld [vmem:[%s487 + $0x26] sm:$0xff]
        %v7100 = vld [vmem:[%s487 + $0x2e] sm:$0xff]
        %v7101 = vld [vmem:[%s487 + $0x46] sm:$0xff]
        %v7102 = vld [vmem:[%s487 + $0x4e] sm:$0xff]
        %v7103 = vld [vmem:[%s487 + $0x66] sm:$0xff]
        %v7104 = vld [vmem:[%s487 + $0x6e] sm:$0xff]
        %v7105 = vld [vmem:[%s487 + $0x86] sm:$0xff]
        %v7106 = vld [vmem:[%s487 + $0x8e] sm:$0xff]
        %v7107 = vld [vmem:[%s487 + $0xa6] sm:$0xff]
        %v7108 = vld [vmem:[%s487 + $0xae] sm:$0xff]
        %v7109 = vld [vmem:[%s487 + $0xc6] sm:$0xff]
        %v7110 = vld [vmem:[%s487 + $0xce] sm:$0xff]
        %v7111 = vld [vmem:[%s487 + $0xe6] sm:$0xff]
        %v7112 = vld [vmem:[%s487 + $0xee] sm:$0xff]
        %v7113 = vld [vmem:[%s487 + $0x106] sm:$0xff]
        %v7114 = vld [vmem:[%s487 + $0x10e] sm:$0xff]
        %v7115 = vld [vmem:[%s487 + $0x126] sm:$0xff]
        %v7116 = vld [vmem:[%s487 + $0x12e] sm:$0xff]
        %v7117 = vld [vmem:[%s487 + $0x146] sm:$0xff]
        %v7118 = vld [vmem:[%s487 + $0x14e] sm:$0xff]
        %v7119 = vld [vmem:[%s487 + $0x166] sm:$0xff]
        %v7120 = vld [vmem:[%s487 + $0x16e] sm:$0xff]
        %v7121 = vld [vmem:[%s487 + $0x186] sm:$0xff]
        %v7122 = vld [vmem:[%s487 + $0x18e] sm:$0xff]
        %v7123 = vld [vmem:[%s487 + $0x1a6] sm:$0xff]
        %v7124 = vld [vmem:[%s487 + $0x1ae] sm:$0xff]
        %v7125 = vld [vmem:[%s487 + $0x1c6] sm:$0xff]
        %v7126 = vld [vmem:[%s487 + $0x1ce] sm:$0xff]
        %v7127 = vld [vmem:[%s487 + $0x1e6] sm:$0xff]
        %v7128 = vld [vmem:[%s487 + $0x1ee] sm:$0xff]
        %7161 = vrot.lane.b32.xlu0 %v7097, 32
        %v7162 = vpop.permute.xlu0 %7161
        %7163 = vrot.lane.b32.xlu0 %v7098, 32
        %v7164 = vpop.permute.xlu0 %7163
        %7165 = vrot.lane.b32.xlu0 %v7099, 32
        %v7166 = vpop.permute.xlu0 %7165
        %7167 = vrot.lane.b32.xlu0 %v7100, 32
        %v7168 = vpop.permute.xlu0 %7167
        %7169 = vrot.lane.b32.xlu0 %v7101, 32
        %v7170 = vpop.permute.xlu0 %7169
        %7171 = vrot.lane.b32.xlu0 %v7102, 32
        %v7172 = vpop.permute.xlu0 %7171
        %7173 = vrot.lane.b32.xlu0 %v7103, 32
        %v7174 = vpop.permute.xlu0 %7173
        %7175 = vrot.lane.b32.xlu0 %v7104, 32
        %v7176 = vpop.permute.xlu0 %7175
        %7177 = vrot.lane.b32.xlu0 %v7105, 32
        %v7178 = vpop.permute.xlu0 %7177
        %7179 = vrot.lane.b32.xlu0 %v7106, 32
        %v7180 = vpop.permute.xlu0 %7179
        %7181 = vrot.lane.b32.xlu0 %v7107, 32
        %v7182 = vpop.permute.xlu0 %7181
        %7183 = vrot.lane.b32.xlu0 %v7108, 32
        %v7184 = vpop.permute.xlu0 %7183
        %7185 = vrot.lane.b32.xlu0 %v7109, 32
        %v7186 = vpop.permute.xlu0 %7185
        %7187 = vrot.lane.b32.xlu0 %v7110, 32
        %v7188 = vpop.permute.xlu0 %7187
        %7189 = vrot.lane.b32.xlu0 %v7111, 32
        %v7190 = vpop.permute.xlu0 %7189
        %7191 = vrot.lane.b32.xlu0 %v7112, 32
        %v7192 = vpop.permute.xlu0 %7191
        %7193 = vrot.lane.b32.xlu0 %v7113, 32
        %v7194 = vpop.permute.xlu0 %7193
        %7195 = vrot.lane.b32.xlu0 %v7114, 32
        %v7196 = vpop.permute.xlu0 %7195
        %7197 = vrot.lane.b32.xlu0 %v7115, 32
        %v7198 = vpop.permute.xlu0 %7197
        %7199 = vrot.lane.b32.xlu0 %v7116, 32
        %v7200 = vpop.permute.xlu0 %7199
        %7201 = vrot.lane.b32.xlu0 %v7117, 32
        %v7202 = vpop.permute.xlu0 %7201
        %7203 = vrot.lane.b32.xlu0 %v7118, 32
        %v7204 = vpop.permute.xlu0 %7203
        %7205 = vrot.lane.b32.xlu0 %v7119, 32
        %v7206 = vpop.permute.xlu0 %7205
        %7207 = vrot.lane.b32.xlu0 %v7120, 32
        %v7208 = vpop.permute.xlu0 %7207
        %7209 = vrot.lane.b32.xlu0 %v7121, 32
        %v7210 = vpop.permute.xlu0 %7209
        %7211 = vrot.lane.b32.xlu0 %v7122, 32
        %v7212 = vpop.permute.xlu0 %7211
        %7213 = vrot.lane.b32.xlu0 %v7123, 32
        %v7214 = vpop.permute.xlu0 %7213
        %7215 = vrot.lane.b32.xlu0 %v7124, 32
        %v7216 = vpop.permute.xlu0 %7215
        %7217 = vrot.lane.b32.xlu0 %v7125, 32
        %v7218 = vpop.permute.xlu0 %7217
        %7219 = vrot.lane.b32.xlu0 %v7126, 32
        %v7220 = vpop.permute.xlu0 %7219
        %7221 = vrot.lane.b32.xlu0 %v7127, 32
        %v7222 = vpop.permute.xlu0 %7221
        %7223 = vrot.lane.b32.xlu0 %v7128, 32
        %v7224 = vpop.permute.xlu0 %7223
        %7257 = vst.msk [vmem:[#allocation6] sm:$0xff] %vm1535, %v7162
        %7258 = vst.msk [vmem:[#allocation6 + $0x8] sm:$0xff] %vm1535, %v7164
        %7259 = vst.msk [vmem:[#allocation6 + $0x10] sm:$0xff] %vm1535, %v7166
        %7260 = vst.msk [vmem:[#allocation6 + $0x18] sm:$0xff] %vm1535, %v7168
        %7261 = vst.msk [vmem:[#allocation6 + $0x20] sm:$0xff] %vm1535, %v7170
        %7262 = vst.msk [vmem:[#allocation6 + $0x28] sm:$0xff] %vm1535, %v7172
        %7263 = vst.msk [vmem:[#allocation6 + $0x30] sm:$0xff] %vm1535, %v7174
        %7264 = vst.msk [vmem:[#allocation6 + $0x38] sm:$0xff] %vm1535, %v7176
        %7265 = vst.msk [vmem:[#allocation6 + $0x40] sm:$0xff] %vm1535, %v7178
        %7266 = vst.msk [vmem:[#allocation6 + $0x48] sm:$0xff] %vm1535, %v7180
        %7267 = vst.msk [vmem:[#allocation6 + $0x50] sm:$0xff] %vm1535, %v7182
        %7268 = vst.msk [vmem:[#allocation6 + $0x58] sm:$0xff] %vm1535, %v7184
        %7269 = vst.msk [vmem:[#allocation6 + $0x60] sm:$0xff] %vm1535, %v7186
        %7270 = vst.msk [vmem:[#allocation6 + $0x68] sm:$0xff] %vm1535, %v7188
        %7271 = vst.msk [vmem:[#allocation6 + $0x70] sm:$0xff] %vm1535, %v7190
        %7272 = vst.msk [vmem:[#allocation6 + $0x78] sm:$0xff] %vm1535, %v7192
        %7273 = vst.msk [vmem:[#allocation6 + $0x80] sm:$0xff] %vm1535, %v7194
        %7274 = vst.msk [vmem:[#allocation6 + $0x88] sm:$0xff] %vm1535, %v7196
        %7275 = vst.msk [vmem:[#allocation6 + $0x90] sm:$0xff] %vm1535, %v7198
        %7276 = vst.msk [vmem:[#allocation6 + $0x98] sm:$0xff] %vm1535, %v7200
        %7277 = vst.msk [vmem:[#allocation6 + $0xa0] sm:$0xff] %vm1535, %v7202
        %7278 = vst.msk [vmem:[#allocation6 + $0xa8] sm:$0xff] %vm1535, %v7204
        %7279 = vst.msk [vmem:[#allocation6 + $0xb0] sm:$0xff] %vm1535, %v7206
        %7280 = vst.msk [vmem:[#allocation6 + $0xb8] sm:$0xff] %vm1535, %v7208
        %7281 = vst.msk [vmem:[#allocation6 + $0xc0] sm:$0xff] %vm1535, %v7210
        %7282 = vst.msk [vmem:[#allocation6 + $0xc8] sm:$0xff] %vm1535, %v7212
        %7283 = vst.msk [vmem:[#allocation6 + $0xd0] sm:$0xff] %vm1535, %v7214
        %7284 = vst.msk [vmem:[#allocation6 + $0xd8] sm:$0xff] %vm1535, %v7216
        %7285 = vst.msk [vmem:[#allocation6 + $0xe0] sm:$0xff] %vm1535, %v7218
        %7286 = vst.msk [vmem:[#allocation6 + $0xe8] sm:$0xff] %vm1535, %v7220
        %7287 = vst.msk [vmem:[#allocation6 + $0xf0] sm:$0xff] %vm1535, %v7222
        %7288 = vst.msk [vmem:[#allocation6 + $0xf8] sm:$0xff] %vm1535, %v7224
        %v7289 = vld [vmem:[%s487 + $0xc] sm:$0xff]
        %v7290 = vld [vmem:[%s487 + $0x14] sm:$0xff]
        %v7291 = vld [vmem:[%s487 + $0x2c] sm:$0xff]
        %v7292 = vld [vmem:[%s487 + $0x34] sm:$0xff]
        %v7293 = vld [vmem:[%s487 + $0x4c] sm:$0xff]
        %v7294 = vld [vmem:[%s487 + $0x54] sm:$0xff]
        %v7295 = vld [vmem:[%s487 + $0x6c] sm:$0xff]
        %v7296 = vld [vmem:[%s487 + $0x74] sm:$0xff]
        %v7297 = vld [vmem:[%s487 + $0x8c] sm:$0xff]
        %v7298 = vld [vmem:[%s487 + $0x94] sm:$0xff]
        %v7299 = vld [vmem:[%s487 + $0xac] sm:$0xff]
        %v7300 = vld [vmem:[%s487 + $0xb4] sm:$0xff]
        %v7301 = vld [vmem:[%s487 + $0xcc] sm:$0xff]
        %v7302 = vld [vmem:[%s487 + $0xd4] sm:$0xff]
        %v7303 = vld [vmem:[%s487 + $0xec] sm:$0xff]
        %v7304 = vld [vmem:[%s487 + $0xf4] sm:$0xff]
        %v7305 = vld [vmem:[%s487 + $0x10c] sm:$0xff]
        %v7306 = vld [vmem:[%s487 + $0x114] sm:$0xff]
        %v7307 = vld [vmem:[%s487 + $0x12c] sm:$0xff]
        %v7308 = vld [vmem:[%s487 + $0x134] sm:$0xff]
        %v7309 = vld [vmem:[%s487 + $0x14c] sm:$0xff]
        %v7310 = vld [vmem:[%s487 + $0x154] sm:$0xff]
        %v7311 = vld [vmem:[%s487 + $0x16c] sm:$0xff]
        %v7312 = vld [vmem:[%s487 + $0x174] sm:$0xff]
        %v7313 = vld [vmem:[%s487 + $0x18c] sm:$0xff]
        %v7314 = vld [vmem:[%s487 + $0x194] sm:$0xff]
        %v7315 = vld [vmem:[%s487 + $0x1ac] sm:$0xff]
        %v7316 = vld [vmem:[%s487 + $0x1b4] sm:$0xff]
        %v7317 = vld [vmem:[%s487 + $0x1cc] sm:$0xff]
        %v7318 = vld [vmem:[%s487 + $0x1d4] sm:$0xff]
        %v7319 = vld [vmem:[%s487 + $0x1ec] sm:$0xff]
        %v7320 = vld [vmem:[%s487 + $0x1f4] sm:$0xff]
        %7353 = vrot.lane.b32.xlu0 %v7289, 40
        %v7354 = vpop.permute.xlu0 %7353
        %7355 = vrot.lane.b32.xlu0 %v7290, 40
        %v7356 = vpop.permute.xlu0 %7355
        %7357 = vrot.lane.b32.xlu0 %v7291, 40
        %v7358 = vpop.permute.xlu0 %7357
        %7359 = vrot.lane.b32.xlu0 %v7292, 40
        %v7360 = vpop.permute.xlu0 %7359
        %7361 = vrot.lane.b32.xlu0 %v7293, 40
        %v7362 = vpop.permute.xlu0 %7361
        %7363 = vrot.lane.b32.xlu0 %v7294, 40
        %v7364 = vpop.permute.xlu0 %7363
        %7365 = vrot.lane.b32.xlu0 %v7295, 40
        %v7366 = vpop.permute.xlu0 %7365
        %7367 = vrot.lane.b32.xlu0 %v7296, 40
        %v7368 = vpop.permute.xlu0 %7367
        %7369 = vrot.lane.b32.xlu0 %v7297, 40
        %v7370 = vpop.permute.xlu0 %7369
        %7371 = vrot.lane.b32.xlu0 %v7298, 40
        %v7372 = vpop.permute.xlu0 %7371
        %7373 = vrot.lane.b32.xlu0 %v7299, 40
        %v7374 = vpop.permute.xlu0 %7373
        %7375 = vrot.lane.b32.xlu0 %v7300, 40
        %v7376 = vpop.permute.xlu0 %7375
        %7377 = vrot.lane.b32.xlu0 %v7301, 40
        %v7378 = vpop.permute.xlu0 %7377
        %7379 = vrot.lane.b32.xlu0 %v7302, 40
        %v7380 = vpop.permute.xlu0 %7379
        %7381 = vrot.lane.b32.xlu0 %v7303, 40
        %v7382 = vpop.permute.xlu0 %7381
        %7383 = vrot.lane.b32.xlu0 %v7304, 40
        %v7384 = vpop.permute.xlu0 %7383
        %7385 = vrot.lane.b32.xlu0 %v7305, 40
        %v7386 = vpop.permute.xlu0 %7385
        %7387 = vrot.lane.b32.xlu0 %v7306, 40
        %v7388 = vpop.permute.xlu0 %7387
        %7389 = vrot.lane.b32.xlu0 %v7307, 40
        %v7390 = vpop.permute.xlu0 %7389
        %7391 = vrot.lane.b32.xlu0 %v7308, 40
        %v7392 = vpop.permute.xlu0 %7391
        %7393 = vrot.lane.b32.xlu0 %v7309, 40
        %v7394 = vpop.permute.xlu0 %7393
        %7395 = vrot.lane.b32.xlu0 %v7310, 40
        %v7396 = vpop.permute.xlu0 %7395
        %7397 = vrot.lane.b32.xlu0 %v7311, 40
        %v7398 = vpop.permute.xlu0 %7397
        %7399 = vrot.lane.b32.xlu0 %v7312, 40
        %v7400 = vpop.permute.xlu0 %7399
        %7401 = vrot.lane.b32.xlu0 %v7313, 40
        %v7402 = vpop.permute.xlu0 %7401
        %7403 = vrot.lane.b32.xlu0 %v7314, 40
        %v7404 = vpop.permute.xlu0 %7403
        %7405 = vrot.lane.b32.xlu0 %v7315, 40
        %v7406 = vpop.permute.xlu0 %7405
        %7407 = vrot.lane.b32.xlu0 %v7316, 40
        %v7408 = vpop.permute.xlu0 %7407
        %7409 = vrot.lane.b32.xlu0 %v7317, 40
        %v7410 = vpop.permute.xlu0 %7409
        %7411 = vrot.lane.b32.xlu0 %v7318, 40
        %v7412 = vpop.permute.xlu0 %7411
        %7413 = vrot.lane.b32.xlu0 %v7319, 40
        %v7414 = vpop.permute.xlu0 %7413
        %7415 = vrot.lane.b32.xlu0 %v7320, 40
        %v7416 = vpop.permute.xlu0 %7415
        %7449 = vst.msk [vmem:[#allocation6] sm:$0xff] %vm1728, %v7354
        %7450 = vst.msk [vmem:[#allocation6 + $0x8] sm:$0xff] %vm1728, %v7356
        %7451 = vst.msk [vmem:[#allocation6 + $0x10] sm:$0xff] %vm1728, %v7358
        %7452 = vst.msk [vmem:[#allocation6 + $0x18] sm:$0xff] %vm1728, %v7360
        %7453 = vst.msk [vmem:[#allocation6 + $0x20] sm:$0xff] %vm1728, %v7362
        %7454 = vst.msk [vmem:[#allocation6 + $0x28] sm:$0xff] %vm1728, %v7364
        %7455 = vst.msk [vmem:[#allocation6 + $0x30] sm:$0xff] %vm1728, %v7366
        %7456 = vst.msk [vmem:[#allocation6 + $0x38] sm:$0xff] %vm1728, %v7368
        %7457 = vst.msk [vmem:[#allocation6 + $0x40] sm:$0xff] %vm1728, %v7370
        %7458 = vst.msk [vmem:[#allocation6 + $0x48] sm:$0xff] %vm1728, %v7372
        %7459 = vst.msk [vmem:[#allocation6 + $0x50] sm:$0xff] %vm1728, %v7374
        %7460 = vst.msk [vmem:[#allocation6 + $0x58] sm:$0xff] %vm1728, %v7376
        %7461 = vst.msk [vmem:[#allocation6 + $0x60] sm:$0xff] %vm1728, %v7378
        %7462 = vst.msk [vmem:[#allocation6 + $0x68] sm:$0xff] %vm1728, %v7380
        %7463 = vst.msk [vmem:[#allocation6 + $0x70] sm:$0xff] %vm1728, %v7382
        %7464 = vst.msk [vmem:[#allocation6 + $0x78] sm:$0xff] %vm1728, %v7384
        %7465 = vst.msk [vmem:[#allocation6 + $0x80] sm:$0xff] %vm1728, %v7386
        %7466 = vst.msk [vmem:[#allocation6 + $0x88] sm:$0xff] %vm1728, %v7388
        %7467 = vst.msk [vmem:[#allocation6 + $0x90] sm:$0xff] %vm1728, %v7390
        %7468 = vst.msk [vmem:[#allocation6 + $0x98] sm:$0xff] %vm1728, %v7392
        %7469 = vst.msk [vmem:[#allocation6 + $0xa0] sm:$0xff] %vm1728, %v7394
        %7470 = vst.msk [vmem:[#allocation6 + $0xa8] sm:$0xff] %vm1728, %v7396
        %7471 = vst.msk [vmem:[#allocation6 + $0xb0] sm:$0xff] %vm1728, %v7398
        %7472 = vst.msk [vmem:[#allocation6 + $0xb8] sm:$0xff] %vm1728, %v7400
        %7473 = vst.msk [vmem:[#allocation6 + $0xc0] sm:$0xff] %vm1728, %v7402
        %7474 = vst.msk [vmem:[#allocation6 + $0xc8] sm:$0xff] %vm1728, %v7404
        %7475 = vst.msk [vmem:[#allocation6 + $0xd0] sm:$0xff] %vm1728, %v7406
        %7476 = vst.msk [vmem:[#allocation6 + $0xd8] sm:$0xff] %vm1728, %v7408
        %7477 = vst.msk [vmem:[#allocation6 + $0xe0] sm:$0xff] %vm1728, %v7410
        %7478 = vst.msk [vmem:[#allocation6 + $0xe8] sm:$0xff] %vm1728, %v7412
        %7479 = vst.msk [vmem:[#allocation6 + $0xf0] sm:$0xff] %vm1728, %v7414
        %7480 = vst.msk [vmem:[#allocation6 + $0xf8] sm:$0xff] %vm1728, %v7416
        %s7481 = scalar_lea.vmem [#allocation4], 384
        %v7482 = vld [vmem:[%s7481] sm:$0xff]
        %v7483 = vld [vmem:[%s7481 + $0x8] sm:$0xff]
        %v7484 = vld [vmem:[%s7481 + $0x20] sm:$0xff]
        %v7485 = vld [vmem:[%s7481 + $0x28] sm:$0xff]
        %v7486 = vld [vmem:[%s7481 + $0x40] sm:$0xff]
        %v7487 = vld [vmem:[%s7481 + $0x48] sm:$0xff]
        %v7488 = vld [vmem:[%s7481 + $0x60] sm:$0xff]
        %v7489 = vld [vmem:[%s7481 + $0x68] sm:$0xff]
        %v7490 = vld [vmem:[%s7481 + $0x80] sm:$0xff]
        %v7491 = vld [vmem:[%s7481 + $0x88] sm:$0xff]
        %v7492 = vld [vmem:[%s7481 + $0xa0] sm:$0xff]
        %v7493 = vld [vmem:[%s7481 + $0xa8] sm:$0xff]
        %v7494 = vld [vmem:[%s7481 + $0xc0] sm:$0xff]
        %v7495 = vld [vmem:[%s7481 + $0xc8] sm:$0xff]
        %v7496 = vld [vmem:[%s7481 + $0xe0] sm:$0xff]
        %v7497 = vld [vmem:[%s7481 + $0xe8] sm:$0xff]
        %v7498 = vld [vmem:[%s7481 + $0x100] sm:$0xff]
        %v7499 = vld [vmem:[%s7481 + $0x108] sm:$0xff]
        %v7500 = vld [vmem:[%s7481 + $0x120] sm:$0xff]
        %v7501 = vld [vmem:[%s7481 + $0x128] sm:$0xff]
        %v7502 = vld [vmem:[%s7481 + $0x140] sm:$0xff]
        %v7503 = vld [vmem:[%s7481 + $0x148] sm:$0xff]
        %v7504 = vld [vmem:[%s7481 + $0x160] sm:$0xff]
        %v7505 = vld [vmem:[%s7481 + $0x168] sm:$0xff]
        %v7506 = vld [vmem:[%s7481 + $0x180] sm:$0xff]
        %v7507 = vld [vmem:[%s7481 + $0x188] sm:$0xff]
        %v7508 = vld [vmem:[%s7481 + $0x1a0] sm:$0xff]
        %v7509 = vld [vmem:[%s7481 + $0x1a8] sm:$0xff]
        %v7510 = vld [vmem:[%s7481 + $0x1c0] sm:$0xff]
        %v7511 = vld [vmem:[%s7481 + $0x1c8] sm:$0xff]
        %v7512 = vld [vmem:[%s7481 + $0x1e0] sm:$0xff]
        %v7513 = vld [vmem:[%s7481 + $0x1e8] sm:$0xff]
        %7546 = vrot.lane.b32.xlu0 %v7482, 48
        %v7547 = vpop.permute.xlu0 %7546
        %7548 = vrot.lane.b32.xlu0 %v7483, 48
        %v7549 = vpop.permute.xlu0 %7548
        %7550 = vrot.lane.b32.xlu0 %v7484, 48
        %v7551 = vpop.permute.xlu0 %7550
        %7552 = vrot.lane.b32.xlu0 %v7485, 48
        %v7553 = vpop.permute.xlu0 %7552
        %7554 = vrot.lane.b32.xlu0 %v7486, 48
        %v7555 = vpop.permute.xlu0 %7554
        %7556 = vrot.lane.b32.xlu0 %v7487, 48
        %v7557 = vpop.permute.xlu0 %7556
        %7558 = vrot.lane.b32.xlu0 %v7488, 48
        %v7559 = vpop.permute.xlu0 %7558
        %7560 = vrot.lane.b32.xlu0 %v7489, 48
        %v7561 = vpop.permute.xlu0 %7560
        %7562 = vrot.lane.b32.xlu0 %v7490, 48
        %v7563 = vpop.permute.xlu0 %7562
        %7564 = vrot.lane.b32.xlu0 %v7491, 48
        %v7565 = vpop.permute.xlu0 %7564
        %7566 = vrot.lane.b32.xlu0 %v7492, 48
        %v7567 = vpop.permute.xlu0 %7566
        %7568 = vrot.lane.b32.xlu0 %v7493, 48
        %v7569 = vpop.permute.xlu0 %7568
        %7570 = vrot.lane.b32.xlu0 %v7494, 48
        %v7571 = vpop.permute.xlu0 %7570
        %7572 = vrot.lane.b32.xlu0 %v7495, 48
        %v7573 = vpop.permute.xlu0 %7572
        %7574 = vrot.lane.b32.xlu0 %v7496, 48
        %v7575 = vpop.permute.xlu0 %7574
        %7576 = vrot.lane.b32.xlu0 %v7497, 48
        %v7577 = vpop.permute.xlu0 %7576
        %7578 = vrot.lane.b32.xlu0 %v7498, 48
        %v7579 = vpop.permute.xlu0 %7578
        %7580 = vrot.lane.b32.xlu0 %v7499, 48
        %v7581 = vpop.permute.xlu0 %7580
        %7582 = vrot.lane.b32.xlu0 %v7500, 48
        %v7583 = vpop.permute.xlu0 %7582
        %7584 = vrot.lane.b32.xlu0 %v7501, 48
        %v7585 = vpop.permute.xlu0 %7584
        %7586 = vrot.lane.b32.xlu0 %v7502, 48
        %v7587 = vpop.permute.xlu0 %7586
        %7588 = vrot.lane.b32.xlu0 %v7503, 48
        %v7589 = vpop.permute.xlu0 %7588
        %7590 = vrot.lane.b32.xlu0 %v7504, 48
        %v7591 = vpop.permute.xlu0 %7590
        %7592 = vrot.lane.b32.xlu0 %v7505, 48
        %v7593 = vpop.permute.xlu0 %7592
        %7594 = vrot.lane.b32.xlu0 %v7506, 48
        %v7595 = vpop.permute.xlu0 %7594
        %7596 = vrot.lane.b32.xlu0 %v7507, 48
        %v7597 = vpop.permute.xlu0 %7596
        %7598 = vrot.lane.b32.xlu0 %v7508, 48
        %v7599 = vpop.permute.xlu0 %7598
        %7600 = vrot.lane.b32.xlu0 %v7509, 48
        %v7601 = vpop.permute.xlu0 %7600
        %7602 = vrot.lane.b32.xlu0 %v7510, 48
        %v7603 = vpop.permute.xlu0 %7602
        %7604 = vrot.lane.b32.xlu0 %v7511, 48
        %v7605 = vpop.permute.xlu0 %7604
        %7606 = vrot.lane.b32.xlu0 %v7512, 48
        %v7607 = vpop.permute.xlu0 %7606
        %7608 = vrot.lane.b32.xlu0 %v7513, 48
        %v7609 = vpop.permute.xlu0 %7608
        %7642 = vst.msk [vmem:[#allocation6] sm:$0xff] %vm1922, %v7547
        %7643 = vst.msk [vmem:[#allocation6 + $0x8] sm:$0xff] %vm1922, %v7549
        %7644 = vst.msk [vmem:[#allocation6 + $0x10] sm:$0xff] %vm1922, %v7551
        %7645 = vst.msk [vmem:[#allocation6 + $0x18] sm:$0xff] %vm1922, %v7553
        %7646 = vst.msk [vmem:[#allocation6 + $0x20] sm:$0xff] %vm1922, %v7555
        %7647 = vst.msk [vmem:[#allocation6 + $0x28] sm:$0xff] %vm1922, %v7557
        %7648 = vst.msk [vmem:[#allocation6 + $0x30] sm:$0xff] %vm1922, %v7559
        %7649 = vst.msk [vmem:[#allocation6 + $0x38] sm:$0xff] %vm1922, %v7561
        %7650 = vst.msk [vmem:[#allocation6 + $0x40] sm:$0xff] %vm1922, %v7563
        %7651 = vst.msk [vmem:[#allocation6 + $0x48] sm:$0xff] %vm1922, %v7565
        %7652 = vst.msk [vmem:[#allocation6 + $0x50] sm:$0xff] %vm1922, %v7567
        %7653 = vst.msk [vmem:[#allocation6 + $0x58] sm:$0xff] %vm1922, %v7569
        %7654 = vst.msk [vmem:[#allocation6 + $0x60] sm:$0xff] %vm1922, %v7571
        %7655 = vst.msk [vmem:[#allocation6 + $0x68] sm:$0xff] %vm1922, %v7573
        %7656 = vst.msk [vmem:[#allocation6 + $0x70] sm:$0xff] %vm1922, %v7575
        %7657 = vst.msk [vmem:[#allocation6 + $0x78] sm:$0xff] %vm1922, %v7577
        %7658 = vst.msk [vmem:[#allocation6 + $0x80] sm:$0xff] %vm1922, %v7579
        %7659 = vst.msk [vmem:[#allocation6 + $0x88] sm:$0xff] %vm1922, %v7581
        %7660 = vst.msk [vmem:[#allocation6 + $0x90] sm:$0xff] %vm1922, %v7583
        %7661 = vst.msk [vmem:[#allocation6 + $0x98] sm:$0xff] %vm1922, %v7585
        %7662 = vst.msk [vmem:[#allocation6 + $0xa0] sm:$0xff] %vm1922, %v7587
        %7663 = vst.msk [vmem:[#allocation6 + $0xa8] sm:$0xff] %vm1922, %v7589
        %7664 = vst.msk [vmem:[#allocation6 + $0xb0] sm:$0xff] %vm1922, %v7591
        %7665 = vst.msk [vmem:[#allocation6 + $0xb8] sm:$0xff] %vm1922, %v7593
        %7666 = vst.msk [vmem:[#allocation6 + $0xc0] sm:$0xff] %vm1922, %v7595
        %7667 = vst.msk [vmem:[#allocation6 + $0xc8] sm:$0xff] %vm1922, %v7597
        %7668 = vst.msk [vmem:[#allocation6 + $0xd0] sm:$0xff] %vm1922, %v7599
        %7669 = vst.msk [vmem:[#allocation6 + $0xd8] sm:$0xff] %vm1922, %v7601
        %7670 = vst.msk [vmem:[#allocation6 + $0xe0] sm:$0xff] %vm1922, %v7603
        %7671 = vst.msk [vmem:[#allocation6 + $0xe8] sm:$0xff] %vm1922, %v7605
        %7672 = vst.msk [vmem:[#allocation6 + $0xf0] sm:$0xff] %vm1922, %v7607
        %7673 = vst.msk [vmem:[#allocation6 + $0xf8] sm:$0xff] %vm1922, %v7609
        %v7674 = vld [vmem:[%s7481 + $0x6] sm:$0xff]
        %v7675 = vld [vmem:[%s7481 + $0xe] sm:$0xff]
        %v7676 = vld [vmem:[%s7481 + $0x26] sm:$0xff]
        %v7677 = vld [vmem:[%s7481 + $0x2e] sm:$0xff]
        %v7678 = vld [vmem:[%s7481 + $0x46] sm:$0xff]
        %v7679 = vld [vmem:[%s7481 + $0x4e] sm:$0xff]
        %v7680 = vld [vmem:[%s7481 + $0x66] sm:$0xff]
        %v7681 = vld [vmem:[%s7481 + $0x6e] sm:$0xff]
        %v7682 = vld [vmem:[%s7481 + $0x86] sm:$0xff]
        %v7683 = vld [vmem:[%s7481 + $0x8e] sm:$0xff]
        %v7684 = vld [vmem:[%s7481 + $0xa6] sm:$0xff]
        %v7685 = vld [vmem:[%s7481 + $0xae] sm:$0xff]
        %v7686 = vld [vmem:[%s7481 + $0xc6] sm:$0xff]
        %v7687 = vld [vmem:[%s7481 + $0xce] sm:$0xff]
        %v7688 = vld [vmem:[%s7481 + $0xe6] sm:$0xff]
        %v7689 = vld [vmem:[%s7481 + $0xee] sm:$0xff]
        %v7690 = vld [vmem:[%s7481 + $0x106] sm:$0xff]
        %v7691 = vld [vmem:[%s7481 + $0x10e] sm:$0xff]
        %v7692 = vld [vmem:[%s7481 + $0x126] sm:$0xff]
        %v7693 = vld [vmem:[%s7481 + $0x12e] sm:$0xff]
        %v7694 = vld [vmem:[%s7481 + $0x146] sm:$0xff]
        %v7695 = vld [vmem:[%s7481 + $0x14e] sm:$0xff]
        %v7696 = vld [vmem:[%s7481 + $0x166] sm:$0xff]
        %v7697 = vld [vmem:[%s7481 + $0x16e] sm:$0xff]
        %v7698 = vld [vmem:[%s7481 + $0x186] sm:$0xff]
        %v7699 = vld [vmem:[%s7481 + $0x18e] sm:$0xff]
        %v7700 = vld [vmem:[%s7481 + $0x1a6] sm:$0xff]
        %v7701 = vld [vmem:[%s7481 + $0x1ae] sm:$0xff]
        %v7702 = vld [vmem:[%s7481 + $0x1c6] sm:$0xff]
        %v7703 = vld [vmem:[%s7481 + $0x1ce] sm:$0xff]
        %v7704 = vld [vmem:[%s7481 + $0x1e6] sm:$0xff]
        %v7705 = vld [vmem:[%s7481 + $0x1ee] sm:$0xff]
        %7738 = vrot.lane.b32.xlu0 %v7674, 56
        %v7739 = vpop.permute.xlu0 %7738
        %7740 = vrot.lane.b32.xlu0 %v7675, 56
        %v7741 = vpop.permute.xlu0 %7740
        %7742 = vrot.lane.b32.xlu0 %v7676, 56
        %v7743 = vpop.permute.xlu0 %7742
        %7744 = vrot.lane.b32.xlu0 %v7677, 56
        %v7745 = vpop.permute.xlu0 %7744
        %7746 = vrot.lane.b32.xlu0 %v7678, 56
        %v7747 = vpop.permute.xlu0 %7746
        %7748 = vrot.lane.b32.xlu0 %v7679, 56
        %v7749 = vpop.permute.xlu0 %7748
        %7750 = vrot.lane.b32.xlu0 %v7680, 56
        %v7751 = vpop.permute.xlu0 %7750
        %7752 = vrot.lane.b32.xlu0 %v7681, 56
        %v7753 = vpop.permute.xlu0 %7752
        %7754 = vrot.lane.b32.xlu0 %v7682, 56
        %v7755 = vpop.permute.xlu0 %7754
        %7756 = vrot.lane.b32.xlu0 %v7683, 56
        %v7757 = vpop.permute.xlu0 %7756
        %7758 = vrot.lane.b32.xlu0 %v7684, 56
        %v7759 = vpop.permute.xlu0 %7758
        %7760 = vrot.lane.b32.xlu0 %v7685, 56
        %v7761 = vpop.permute.xlu0 %7760
        %7762 = vrot.lane.b32.xlu0 %v7686, 56
        %v7763 = vpop.permute.xlu0 %7762
        %7764 = vrot.lane.b32.xlu0 %v7687, 56
        %v7765 = vpop.permute.xlu0 %7764
        %7766 = vrot.lane.b32.xlu0 %v7688, 56
        %v7767 = vpop.permute.xlu0 %7766
        %7768 = vrot.lane.b32.xlu0 %v7689, 56
        %v7769 = vpop.permute.xlu0 %7768
        %7770 = vrot.lane.b32.xlu0 %v7690, 56
        %v7771 = vpop.permute.xlu0 %7770
        %7772 = vrot.lane.b32.xlu0 %v7691, 56
        %v7773 = vpop.permute.xlu0 %7772
        %7774 = vrot.lane.b32.xlu0 %v7692, 56
        %v7775 = vpop.permute.xlu0 %7774
        %7776 = vrot.lane.b32.xlu0 %v7693, 56
        %v7777 = vpop.permute.xlu0 %7776
        %7778 = vrot.lane.b32.xlu0 %v7694, 56
        %v7779 = vpop.permute.xlu0 %7778
        %7780 = vrot.lane.b32.xlu0 %v7695, 56
        %v7781 = vpop.permute.xlu0 %7780
        %7782 = vrot.lane.b32.xlu0 %v7696, 56
        %v7783 = vpop.permute.xlu0 %7782
        %7784 = vrot.lane.b32.xlu0 %v7697, 56
        %v7785 = vpop.permute.xlu0 %7784
        %7786 = vrot.lane.b32.xlu0 %v7698, 56
        %v7787 = vpop.permute.xlu0 %7786
        %7788 = vrot.lane.b32.xlu0 %v7699, 56
        %v7789 = vpop.permute.xlu0 %7788
        %7790 = vrot.lane.b32.xlu0 %v7700, 56
        %v7791 = vpop.permute.xlu0 %7790
        %7792 = vrot.lane.b32.xlu0 %v7701, 56
        %v7793 = vpop.permute.xlu0 %7792
        %7794 = vrot.lane.b32.xlu0 %v7702, 56
        %v7795 = vpop.permute.xlu0 %7794
        %7796 = vrot.lane.b32.xlu0 %v7703, 56
        %v7797 = vpop.permute.xlu0 %7796
        %7798 = vrot.lane.b32.xlu0 %v7704, 56
        %v7799 = vpop.permute.xlu0 %7798
        %7800 = vrot.lane.b32.xlu0 %v7705, 56
        %v7801 = vpop.permute.xlu0 %7800
        %7834 = vst.msk [vmem:[#allocation6] sm:$0xff] %vm2115, %v7739
        %7835 = vst.msk [vmem:[#allocation6 + $0x8] sm:$0xff] %vm2115, %v7741
        %7836 = vst.msk [vmem:[#allocation6 + $0x10] sm:$0xff] %vm2115, %v7743
        %7837 = vst.msk [vmem:[#allocation6 + $0x18] sm:$0xff] %vm2115, %v7745
        %7838 = vst.msk [vmem:[#allocation6 + $0x20] sm:$0xff] %vm2115, %v7747
        %7839 = vst.msk [vmem:[#allocation6 + $0x28] sm:$0xff] %vm2115, %v7749
        %7840 = vst.msk [vmem:[#allocation6 + $0x30] sm:$0xff] %vm2115, %v7751
        %7841 = vst.msk [vmem:[#allocation6 + $0x38] sm:$0xff] %vm2115, %v7753
        %7842 = vst.msk [vmem:[#allocation6 + $0x40] sm:$0xff] %vm2115, %v7755
        %7843 = vst.msk [vmem:[#allocation6 + $0x48] sm:$0xff] %vm2115, %v7757
        %7844 = vst.msk [vmem:[#allocation6 + $0x50] sm:$0xff] %vm2115, %v7759
        %7845 = vst.msk [vmem:[#allocation6 + $0x58] sm:$0xff] %vm2115, %v7761
        %7846 = vst.msk [vmem:[#allocation6 + $0x60] sm:$0xff] %vm2115, %v7763
        %7847 = vst.msk [vmem:[#allocation6 + $0x68] sm:$0xff] %vm2115, %v7765
        %7848 = vst.msk [vmem:[#allocation6 + $0x70] sm:$0xff] %vm2115, %v7767
        %7849 = vst.msk [vmem:[#allocation6 + $0x78] sm:$0xff] %vm2115, %v7769
        %7850 = vst.msk [vmem:[#allocation6 + $0x80] sm:$0xff] %vm2115, %v7771
        %7851 = vst.msk [vmem:[#allocation6 + $0x88] sm:$0xff] %vm2115, %v7773
        %7852 = vst.msk [vmem:[#allocation6 + $0x90] sm:$0xff] %vm2115, %v7775
        %7853 = vst.msk [vmem:[#allocation6 + $0x98] sm:$0xff] %vm2115, %v7777
        %7854 = vst.msk [vmem:[#allocation6 + $0xa0] sm:$0xff] %vm2115, %v7779
        %7855 = vst.msk [vmem:[#allocation6 + $0xa8] sm:$0xff] %vm2115, %v7781
        %7856 = vst.msk [vmem:[#allocation6 + $0xb0] sm:$0xff] %vm2115, %v7783
        %7857 = vst.msk [vmem:[#allocation6 + $0xb8] sm:$0xff] %vm2115, %v7785
        %7858 = vst.msk [vmem:[#allocation6 + $0xc0] sm:$0xff] %vm2115, %v7787
        %7859 = vst.msk [vmem:[#allocation6 + $0xc8] sm:$0xff] %vm2115, %v7789
        %7860 = vst.msk [vmem:[#allocation6 + $0xd0] sm:$0xff] %vm2115, %v7791
        %7861 = vst.msk [vmem:[#allocation6 + $0xd8] sm:$0xff] %vm2115, %v7793
        %7862 = vst.msk [vmem:[#allocation6 + $0xe0] sm:$0xff] %vm2115, %v7795
        %7863 = vst.msk [vmem:[#allocation6 + $0xe8] sm:$0xff] %vm2115, %v7797
        %7864 = vst.msk [vmem:[#allocation6 + $0xf0] sm:$0xff] %vm2115, %v7799
        %7865 = vst.msk [vmem:[#allocation6 + $0xf8] sm:$0xff] %vm2115, %v7801
        %v7866 = vld [vmem:[%s7481 + $0xc] sm:$0xff]
        %v7867 = vld [vmem:[%s7481 + $0x14] sm:$0xff]
        %v7868 = vld [vmem:[%s7481 + $0x2c] sm:$0xff]
        %v7869 = vld [vmem:[%s7481 + $0x34] sm:$0xff]
        %v7870 = vld [vmem:[%s7481 + $0x4c] sm:$0xff]
        %v7871 = vld [vmem:[%s7481 + $0x54] sm:$0xff]
        %v7872 = vld [vmem:[%s7481 + $0x6c] sm:$0xff]
        %v7873 = vld [vmem:[%s7481 + $0x74] sm:$0xff]
        %v7874 = vld [vmem:[%s7481 + $0x8c] sm:$0xff]
        %v7875 = vld [vmem:[%s7481 + $0x94] sm:$0xff]
        %v7876 = vld [vmem:[%s7481 + $0xac] sm:$0xff]
        %v7877 = vld [vmem:[%s7481 + $0xb4] sm:$0xff]
        %v7878 = vld [vmem:[%s7481 + $0xcc] sm:$0xff]
        %v7879 = vld [vmem:[%s7481 + $0xd4] sm:$0xff]
        %v7880 = vld [vmem:[%s7481 + $0xec] sm:$0xff]
        %v7881 = vld [vmem:[%s7481 + $0xf4] sm:$0xff]
        %v7882 = vld [vmem:[%s7481 + $0x10c] sm:$0xff]
        %v7883 = vld [vmem:[%s7481 + $0x114] sm:$0xff]
        %v7884 = vld [vmem:[%s7481 + $0x12c] sm:$0xff]
        %v7885 = vld [vmem:[%s7481 + $0x134] sm:$0xff]
        %v7886 = vld [vmem:[%s7481 + $0x14c] sm:$0xff]
        %v7887 = vld [vmem:[%s7481 + $0x154] sm:$0xff]
        %v7888 = vld [vmem:[%s7481 + $0x16c] sm:$0xff]
        %v7889 = vld [vmem:[%s7481 + $0x174] sm:$0xff]
        %v7890 = vld [vmem:[%s7481 + $0x18c] sm:$0xff]
        %v7891 = vld [vmem:[%s7481 + $0x194] sm:$0xff]
        %v7892 = vld [vmem:[%s7481 + $0x1ac] sm:$0xff]
        %v7893 = vld [vmem:[%s7481 + $0x1b4] sm:$0xff]
        %v7894 = vld [vmem:[%s7481 + $0x1cc] sm:$0xff]
        %v7895 = vld [vmem:[%s7481 + $0x1d4] sm:$0xff]
        %v7896 = vld [vmem:[%s7481 + $0x1ec] sm:$0xff]
        %v7897 = vld [vmem:[%s7481 + $0x1f4] sm:$0xff]
        %7930 = vrot.lane.b32.xlu0 %v7866, 64
        %v7931 = vpop.permute.xlu0 %7930
        %7932 = vrot.lane.b32.xlu0 %v7867, 64
        %v7933 = vpop.permute.xlu0 %7932
        %7934 = vrot.lane.b32.xlu0 %v7868, 64
        %v7935 = vpop.permute.xlu0 %7934
        %7936 = vrot.lane.b32.xlu0 %v7869, 64
        %v7937 = vpop.permute.xlu0 %7936
        %7938 = vrot.lane.b32.xlu0 %v7870, 64
        %v7939 = vpop.permute.xlu0 %7938
        %7940 = vrot.lane.b32.xlu0 %v7871, 64
        %v7941 = vpop.permute.xlu0 %7940
        %7942 = vrot.lane.b32.xlu0 %v7872, 64
        %v7943 = vpop.permute.xlu0 %7942
        %7944 = vrot.lane.b32.xlu0 %v7873, 64
        %v7945 = vpop.permute.xlu0 %7944
        %7946 = vrot.lane.b32.xlu0 %v7874, 64
        %v7947 = vpop.permute.xlu0 %7946
        %7948 = vrot.lane.b32.xlu0 %v7875, 64
        %v7949 = vpop.permute.xlu0 %7948
        %7950 = vrot.lane.b32.xlu0 %v7876, 64
        %v7951 = vpop.permute.xlu0 %7950
        %7952 = vrot.lane.b32.xlu0 %v7877, 64
        %v7953 = vpop.permute.xlu0 %7952
        %7954 = vrot.lane.b32.xlu0 %v7878, 64
        %v7955 = vpop.permute.xlu0 %7954
        %7956 = vrot.lane.b32.xlu0 %v7879, 64
        %v7957 = vpop.permute.xlu0 %7956
        %7958 = vrot.lane.b32.xlu0 %v7880, 64
        %v7959 = vpop.permute.xlu0 %7958
        %7960 = vrot.lane.b32.xlu0 %v7881, 64
        %v7961 = vpop.permute.xlu0 %7960
        %7962 = vrot.lane.b32.xlu0 %v7882, 64
        %v7963 = vpop.permute.xlu0 %7962
        %7964 = vrot.lane.b32.xlu0 %v7883, 64
        %v7965 = vpop.permute.xlu0 %7964
        %7966 = vrot.lane.b32.xlu0 %v7884, 64
        %v7967 = vpop.permute.xlu0 %7966
        %7968 = vrot.lane.b32.xlu0 %v7885, 64
        %v7969 = vpop.permute.xlu0 %7968
        %7970 = vrot.lane.b32.xlu0 %v7886, 64
        %v7971 = vpop.permute.xlu0 %7970
        %7972 = vrot.lane.b32.xlu0 %v7887, 64
        %v7973 = vpop.permute.xlu0 %7972
        %7974 = vrot.lane.b32.xlu0 %v7888, 64
        %v7975 = vpop.permute.xlu0 %7974
        %7976 = vrot.lane.b32.xlu0 %v7889, 64
        %v7977 = vpop.permute.xlu0 %7976
        %7978 = vrot.lane.b32.xlu0 %v7890, 64
        %v7979 = vpop.permute.xlu0 %7978
        %7980 = vrot.lane.b32.xlu0 %v7891, 64
        %v7981 = vpop.permute.xlu0 %7980
        %7982 = vrot.lane.b32.xlu0 %v7892, 64
        %v7983 = vpop.permute.xlu0 %7982
        %7984 = vrot.lane.b32.xlu0 %v7893, 64
        %v7985 = vpop.permute.xlu0 %7984
        %7986 = vrot.lane.b32.xlu0 %v7894, 64
        %v7987 = vpop.permute.xlu0 %7986
        %7988 = vrot.lane.b32.xlu0 %v7895, 64
        %v7989 = vpop.permute.xlu0 %7988
        %7990 = vrot.lane.b32.xlu0 %v7896, 64
        %v7991 = vpop.permute.xlu0 %7990
        %7992 = vrot.lane.b32.xlu0 %v7897, 64
        %v7993 = vpop.permute.xlu0 %7992
        %8026 = vst.msk [vmem:[#allocation6] sm:$0xff] %vm2308, %v7931
        %8027 = vst.msk [vmem:[#allocation6 + $0x8] sm:$0xff] %vm2308, %v7933
        %8028 = vst.msk [vmem:[#allocation6 + $0x10] sm:$0xff] %vm2308, %v7935
        %8029 = vst.msk [vmem:[#allocation6 + $0x18] sm:$0xff] %vm2308, %v7937
        %8030 = vst.msk [vmem:[#allocation6 + $0x20] sm:$0xff] %vm2308, %v7939
        %8031 = vst.msk [vmem:[#allocation6 + $0x28] sm:$0xff] %vm2308, %v7941
        %8032 = vst.msk [vmem:[#allocation6 + $0x30] sm:$0xff] %vm2308, %v7943
        %8033 = vst.msk [vmem:[#allocation6 + $0x38] sm:$0xff] %vm2308, %v7945
        %8034 = vst.msk [vmem:[#allocation6 + $0x40] sm:$0xff] %vm2308, %v7947
        %8035 = vst.msk [vmem:[#allocation6 + $0x48] sm:$0xff] %vm2308, %v7949
        %8036 = vst.msk [vmem:[#allocation6 + $0x50] sm:$0xff] %vm2308, %v7951
        %8037 = vst.msk [vmem:[#allocation6 + $0x58] sm:$0xff] %vm2308, %v7953
        %8038 = vst.msk [vmem:[#allocation6 + $0x60] sm:$0xff] %vm2308, %v7955
        %8039 = vst.msk [vmem:[#allocation6 + $0x68] sm:$0xff] %vm2308, %v7957
        %8040 = vst.msk [vmem:[#allocation6 + $0x70] sm:$0xff] %vm2308, %v7959
        %8041 = vst.msk [vmem:[#allocation6 + $0x78] sm:$0xff] %vm2308, %v7961
        %8042 = vst.msk [vmem:[#allocation6 + $0x80] sm:$0xff] %vm2308, %v7963
        %8043 = vst.msk [vmem:[#allocation6 + $0x88] sm:$0xff] %vm2308, %v7965
        %8044 = vst.msk [vmem:[#allocation6 + $0x90] sm:$0xff] %vm2308, %v7967
        %8045 = vst.msk [vmem:[#allocation6 + $0x98] sm:$0xff] %vm2308, %v7969
        %8046 = vst.msk [vmem:[#allocation6 + $0xa0] sm:$0xff] %vm2308, %v7971
        %8047 = vst.msk [vmem:[#allocation6 + $0xa8] sm:$0xff] %vm2308, %v7973
        %8048 = vst.msk [vmem:[#allocation6 + $0xb0] sm:$0xff] %vm2308, %v7975
        %8049 = vst.msk [vmem:[#allocation6 + $0xb8] sm:$0xff] %vm2308, %v7977
        %8050 = vst.msk [vmem:[#allocation6 + $0xc0] sm:$0xff] %vm2308, %v7979
        %8051 = vst.msk [vmem:[#allocation6 + $0xc8] sm:$0xff] %vm2308, %v7981
        %8052 = vst.msk [vmem:[#allocation6 + $0xd0] sm:$0xff] %vm2308, %v7983
        %8053 = vst.msk [vmem:[#allocation6 + $0xd8] sm:$0xff] %vm2308, %v7985
        %8054 = vst.msk [vmem:[#allocation6 + $0xe0] sm:$0xff] %vm2308, %v7987
        %8055 = vst.msk [vmem:[#allocation6 + $0xe8] sm:$0xff] %vm2308, %v7989
        %8056 = vst.msk [vmem:[#allocation6 + $0xf0] sm:$0xff] %vm2308, %v7991
        %8057 = vst.msk [vmem:[#allocation6 + $0xf8] sm:$0xff] %vm2308, %v7993
        %v8058 = vld [vmem:[#allocation6] sm:$0xff]
        %v8059 = vld [vmem:[#allocation6 + $0x8] sm:$0xff]
        %v8060 = vld [vmem:[#allocation6 + $0x10] sm:$0xff]
        %v8061 = vld [vmem:[#allocation6 + $0x18] sm:$0xff]
        %v8062 = vld [vmem:[#allocation6 + $0x20] sm:$0xff]
        %v8063 = vld [vmem:[#allocation6 + $0x28] sm:$0xff]
        %v8064 = vld [vmem:[#allocation6 + $0x30] sm:$0xff]
        %v8065 = vld [vmem:[#allocation6 + $0x38] sm:$0xff]
        %v8066 = vld [vmem:[#allocation6 + $0x40] sm:$0xff]
        %v8067 = vld [vmem:[#allocation6 + $0x48] sm:$0xff]
        %v8068 = vld [vmem:[#allocation6 + $0x50] sm:$0xff]
        %v8069 = vld [vmem:[#allocation6 + $0x58] sm:$0xff]
        %v8070 = vld [vmem:[#allocation6 + $0x60] sm:$0xff]
        %v8071 = vld [vmem:[#allocation6 + $0x68] sm:$0xff]
        %v8072 = vld [vmem:[#allocation6 + $0x70] sm:$0xff]
        %v8073 = vld [vmem:[#allocation6 + $0x78] sm:$0xff]
        %v8074 = vld [vmem:[#allocation6 + $0x80] sm:$0xff]
        %v8075 = vld [vmem:[#allocation6 + $0x88] sm:$0xff]
        %v8076 = vld [vmem:[#allocation6 + $0x90] sm:$0xff]
        %v8077 = vld [vmem:[#allocation6 + $0x98] sm:$0xff]
        %v8078 = vld [vmem:[#allocation6 + $0xa0] sm:$0xff]
        %v8079 = vld [vmem:[#allocation6 + $0xa8] sm:$0xff]
        %v8080 = vld [vmem:[#allocation6 + $0xb0] sm:$0xff]
        %v8081 = vld [vmem:[#allocation6 + $0xb8] sm:$0xff]
        %v8082 = vld [vmem:[#allocation6 + $0xc0] sm:$0xff]
        %v8083 = vld [vmem:[#allocation6 + $0xc8] sm:$0xff]
        %v8084 = vld [vmem:[#allocation6 + $0xd0] sm:$0xff]
        %v8085 = vld [vmem:[#allocation6 + $0xd8] sm:$0xff]
        %v8086 = vld [vmem:[#allocation6 + $0xe0] sm:$0xff]
        %v8087 = vld [vmem:[#allocation6 + $0xe8] sm:$0xff]
        %v8088 = vld [vmem:[#allocation6 + $0xf0] sm:$0xff]
        %v8089 = vld [vmem:[#allocation6 + $0xf8] sm:$0xff]
        %s8090 = scalar_lea.vmem %s3, 144
        %v8091 = vld [vmem:[%s8090] sm:$0xff]
        %v8092 = vld [vmem:[%s8090 + $0x8] sm:$0xff]
        %v8093 = vld [vmem:[%s8090 + $0x10] sm:$0xff]
        %v8094 = vld [vmem:[%s8090 + $0x18] sm:$0xff]
        %v8095 = vld [vmem:[%s8090 + $0x20] sm:$0xff]
        %v8096 = vld [vmem:[%s8090 + $0x28] sm:$0xff]
        %v8097 = vld [vmem:[%s8090 + $0x30] sm:$0xff]
        %v8098 = vld [vmem:[%s8090 + $0x38] sm:$0xff]
        %v8099 = vld [vmem:[%s8090 + $0x40] sm:$0xff]
        %v8100 = vld [vmem:[%s4 + $0x2] sm:$0x1]
        %v8101 = vlaneseq
        %v8102 = vshrl.u32 %v8101, 7
        %v8103 = vsub.s32 0, %v8102
        %v8104 = vrot.slane %v8100, %v8103
        %v8106 = vsel %vm2387, %v8058, 0
        %v8109 = vsel %vm2387, %v8059, 0
        %v8112 = vsel %vm2387, %v8060, 0
        %v8115 = vsel %vm2387, %v8061, 0
        %v8118 = vsel %vm2387, %v8062, 0
        %v8121 = vsel %vm2387, %v8063, 0
        %v8124 = vsel %vm2387, %v8064, 0
        %v8127 = vsel %vm2387, %v8065, 0
        %v8130 = vsel %vm2387, %v8066, 0
        %v8133 = vsel %vm2387, %v8067, 0
        %v8136 = vsel %vm2387, %v8068, 0
        %v8139 = vsel %vm2387, %v8069, 0
        %v8142 = vsel %vm2387, %v8070, 0
        %v8145 = vsel %vm2387, %v8071, 0
        %v8148 = vsel %vm2387, %v8072, 0
        %v8151 = vsel %vm2387, %v8073, 0
        %v8154 = vsel %vm2387, %v8074, 0
        %v8157 = vsel %vm2387, %v8075, 0
        %v8160 = vsel %vm2387, %v8076, 0
        %v8163 = vsel %vm2387, %v8077, 0
        %v8166 = vsel %vm2387, %v8078, 0
        %v8169 = vsel %vm2387, %v8079, 0
        %v8172 = vsel %vm2387, %v8080, 0
        %v8175 = vsel %vm2387, %v8081, 0
        %v8178 = vsel %vm2387, %v8082, 0
        %v8181 = vsel %vm2387, %v8083, 0
        %v8184 = vsel %vm2387, %v8084, 0
        %v8187 = vsel %vm2387, %v8085, 0
        %v8190 = vsel %vm2387, %v8086, 0
        %v8193 = vsel %vm2387, %v8087, 0
        %v8196 = vsel %vm2387, %v8088, 0
        %v8199 = vsel %vm2387, %v8089, 0
        %8201 = vmatprep.subr.mxu0 0.0
        %8202 = vmatpush1.msra.mxu0 %v8091
        %8203 = vmatprep.subr.mxu0 0.0
        %8204 = vmatpush1.msra.mxu0 %v8092
        %8205 = vmatprep.subr.mxu0 0.0
        %8206 = vmatpush1.msra.mxu0 %v8093
        %8207 = vmatprep.subr.mxu0 0.0
        %8208 = vmatpush1.msra.mxu0 %v8094
        %8209 = vmatprep.subr.mxu0 0.0
        %8210 = vmatpush1.msra.mxu0 %v8095
        %8211 = vmatprep.subr.mxu0 0.0
        %8212 = vmatpush1.msra.mxu0 %v8096
        %8213 = vmatprep.subr.mxu0 0.0
        %8214 = vmatpush1.msra.mxu0 %v8097
        %8215 = vmatprep.subr.mxu0 0.0
        %8216 = vmatpush1.msra.mxu0 %v8098
        %8217 = vmatprep.subr.mxu0 0.0
        %8218 = vmatpush1.msra.mxu0 %v8099
        %8219 = vmatprep.subr.mxu0 0.0
        %8220 = vmatpush1.msra.mxu0 0.0
        %8221 = vmatprep.subr.mxu0 0.0
        %8222 = vmatpush1.msra.mxu0 0.0
        %8223 = vmatprep.subr.mxu0 0.0
        %8224 = vmatpush1.msra.mxu0 0.0
        %8225 = vmatprep.subr.mxu0 0.0
        %8226 = vmatpush1.msra.mxu0 0.0
        %8227 = vmatprep.subr.mxu0 0.0
        %8228 = vmatpush1.msra.mxu0 0.0
        %8229 = vmatprep.subr.mxu0 0.0
        %8230 = vmatpush1.msra.mxu0 0.0
        %8231 = vmatprep.subr.mxu0 0.0
        %8232 = vmatpush1.msra.mxu0 0.0
        %8233 = vmatprep.subr.mxu0 0.0
        %8234 = vmatpush1.msra.mxu0 0.0
        %8235 = vmatprep.subr.mxu0 0.0
        %8236 = vmatpush1.msra.mxu0 0.0
        %8237 = vmatprep.subr.mxu0 0.0
        %8238 = vmatpush1.msra.mxu0 0.0
        %8239 = vmatprep.subr.mxu0 0.0
        %8240 = vmatpush1.msra.mxu0 0.0
        %8241 = vmatprep.subr.mxu0 0.0
        %8242 = vmatpush1.msra.mxu0 0.0
        %8243 = vmatprep.subr.mxu0 0.0
        %8244 = vmatpush1.msra.mxu0 0.0
        %8245 = vmatprep.subr.mxu0 0.0
        %8246 = vmatpush1.msra.mxu0 0.0
        %8247 = vmatprep.subr.mxu0 0.0
        %8248 = vmatpush1.msra.mxu0 0.0
        %8249 = vmatprep.subr.mxu0 0.0
        %8250 = vmatpush1.msra.mxu0 0.0
        %8251 = vmatprep.subr.mxu0 0.0
        %8252 = vmatpush1.msra.mxu0 0.0
        %8253 = vmatprep.subr.mxu0 0.0
        %8254 = vmatpush1.msra.mxu0 0.0
        %8255 = vmatprep.subr.mxu0 0.0
        %8256 = vmatpush1.msra.mxu0 0.0
        %8257 = vmatprep.subr.mxu0 0.0
        %8258 = vmatpush1.msra.mxu0 0.0
        %8259 = vmatprep.subr.mxu0 0.0
        %8260 = vmatpush1.msra.mxu0 0.0
        %8261 = vmatprep.subr.mxu0 0.0
        %8262 = vmatpush1.msra.mxu0 0.0
        %8263 = vmatprep.subr.mxu0 0.0
        %8264 = vmatpush1.msra.mxu0 0.0
        %8265 = vmatprep.mubr.f32.mxu0 0.0
        %8266 = vmatmul.mubr.f32.gmra.mrb[0].mxu0 %v8106
        %v8267 = vpop.f32.mrb[0].mxu0
        %v8268 = vadd.f32 %v8104, %v8267
        %v8269 = vpop.f32.mrb[0].mxu0
        %8270 = vmatprep.mubr.f32.mxu0 0.0
        %8271 = vmatmul.mubr.f32.gmra.mrb[0].mxu0 %v8109
        %v8272 = vpop.f32.mrb[0].mxu0
        %v8273 = vadd.f32 %v8104, %v8272
        %v8274 = vpop.f32.mrb[0].mxu0
        %8275 = vmatprep.mubr.f32.mxu0 0.0
        %8276 = vmatmul.mubr.f32.gmra.mrb[0].mxu0 %v8112
        %v8277 = vpop.f32.mrb[0].mxu0
        %v8278 = vadd.f32 %v8104, %v8277
        %v8279 = vpop.f32.mrb[0].mxu0
        %8280 = vmatprep.mubr.f32.mxu0 0.0
        %8281 = vmatmul.mubr.f32.gmra.mrb[0].mxu0 %v8115
        %v8282 = vpop.f32.mrb[0].mxu0
        %v8283 = vadd.f32 %v8104, %v8282
        %v8284 = vpop.f32.mrb[0].mxu0
        %8285 = vmatprep.mubr.f32.mxu0 0.0
        %8286 = vmatmul.mubr.f32.gmra.mrb[0].mxu0 %v8118
        %v8287 = vpop.f32.mrb[0].mxu0
        %v8288 = vadd.f32 %v8104, %v8287
        %v8289 = vpop.f32.mrb[0].mxu0
        %8290 = vmatprep.mubr.f32.mxu0 0.0
        %8291 = vmatmul.mubr.f32.gmra.mrb[0].mxu0 %v8121
        %v8292 = vpop.f32.mrb[0].mxu0
        %v8293 = vadd.f32 %v8104, %v8292
        %v8294 = vpop.f32.mrb[0].mxu0
        %8295 = vmatprep.mubr.f32.mxu0 0.0
        %8296 = vmatmul.mubr.f32.gmra.mrb[0].mxu0 %v8124
        %v8297 = vpop.f32.mrb[0].mxu0
        %v8298 = vadd.f32 %v8104, %v8297
        %v8299 = vpop.f32.mrb[0].mxu0
        %8300 = vmatprep.mubr.f32.mxu0 0.0
        %8301 = vmatmul.mubr.f32.gmra.mrb[0].mxu0 %v8127
        %v8302 = vpop.f32.mrb[0].mxu0
        %v8303 = vadd.f32 %v8104, %v8302
        %v8304 = vpop.f32.mrb[0].mxu0
        %8305 = vmatprep.mubr.f32.mxu0 0.0
        %8306 = vmatmul.mubr.f32.gmra.mrb[0].mxu0 %v8130
        %v8307 = vpop.f32.mrb[0].mxu0
        %v8308 = vadd.f32 %v8104, %v8307
        %v8309 = vpop.f32.mrb[0].mxu0
        %8310 = vmatprep.mubr.f32.mxu0 0.0
        %8311 = vmatmul.mubr.f32.gmra.mrb[0].mxu0 %v8133
        %v8312 = vpop.f32.mrb[0].mxu0
        %v8313 = vadd.f32 %v8104, %v8312
        %v8314 = vpop.f32.mrb[0].mxu0
        %8315 = vmatprep.mubr.f32.mxu0 0.0
        %8316 = vmatmul.mubr.f32.gmra.mrb[0].mxu0 %v8136
        %v8317 = vpop.f32.mrb[0].mxu0
        %v8318 = vadd.f32 %v8104, %v8317
        %v8319 = vpop.f32.mrb[0].mxu0
        %8320 = vmatprep.mubr.f32.mxu0 0.0
        %8321 = vmatmul.mubr.f32.gmra.mrb[0].mxu0 %v8139
        %v8322 = vpop.f32.mrb[0].mxu0
        %v8323 = vadd.f32 %v8104, %v8322
        %v8324 = vpop.f32.mrb[0].mxu0
        %8325 = vmatprep.mubr.f32.mxu0 0.0
        %8326 = vmatmul.mubr.f32.gmra.mrb[0].mxu0 %v8142
        %v8327 = vpop.f32.mrb[0].mxu0
        %v8328 = vadd.f32 %v8104, %v8327
        %v8329 = vpop.f32.mrb[0].mxu0
        %8330 = vmatprep.mubr.f32.mxu0 0.0
        %8331 = vmatmul.mubr.f32.gmra.mrb[0].mxu0 %v8145
        %v8332 = vpop.f32.mrb[0].mxu0
        %v8333 = vadd.f32 %v8104, %v8332
        %v8334 = vpop.f32.mrb[0].mxu0
        %8335 = vmatprep.mubr.f32.mxu0 0.0
        %8336 = vmatmul.mubr.f32.gmra.mrb[0].mxu0 %v8148
        %v8337 = vpop.f32.mrb[0].mxu0
        %v8338 = vadd.f32 %v8104, %v8337
        %v8339 = vpop.f32.mrb[0].mxu0
        %8340 = vmatprep.mubr.f32.mxu0 0.0
        %8341 = vmatmul.mubr.f32.gmra.mrb[0].mxu0 %v8151
        %v8342 = vpop.f32.mrb[0].mxu0
        %v8343 = vadd.f32 %v8104, %v8342
        %v8344 = vpop.f32.mrb[0].mxu0
        %8345 = vmatprep.mubr.f32.mxu0 0.0
        %8346 = vmatmul.mubr.f32.gmra.mrb[0].mxu0 %v8154
        %v8347 = vpop.f32.mrb[0].mxu0
        %v8348 = vadd.f32 %v8104, %v8347
        %v8349 = vpop.f32.mrb[0].mxu0
        %8350 = vmatprep.mubr.f32.mxu0 0.0
        %8351 = vmatmul.mubr.f32.gmra.mrb[0].mxu0 %v8157
        %v8352 = vpop.f32.mrb[0].mxu0
        %v8353 = vadd.f32 %v8104, %v8352
        %v8354 = vpop.f32.mrb[0].mxu0
        %8355 = vmatprep.mubr.f32.mxu0 0.0
        %8356 = vmatmul.mubr.f32.gmra.mrb[0].mxu0 %v8160
        %v8357 = vpop.f32.mrb[0].mxu0
        %v8358 = vadd.f32 %v8104, %v8357
        %v8359 = vpop.f32.mrb[0].mxu0
        %8360 = vmatprep.mubr.f32.mxu0 0.0
        %8361 = vmatmul.mubr.f32.gmra.mrb[0].mxu0 %v8163
        %v8362 = vpop.f32.mrb[0].mxu0
        %v8363 = vadd.f32 %v8104, %v8362
        %v8364 = vpop.f32.mrb[0].mxu0
        %8365 = vmatprep.mubr.f32.mxu0 0.0
        %8366 = vmatmul.mubr.f32.gmra.mrb[0].mxu0 %v8166
        %v8367 = vpop.f32.mrb[0].mxu0
        %v8368 = vadd.f32 %v8104, %v8367
        %v8369 = vpop.f32.mrb[0].mxu0
        %8370 = vmatprep.mubr.f32.mxu0 0.0
        %8371 = vmatmul.mubr.f32.gmra.mrb[0].mxu0 %v8169
        %v8372 = vpop.f32.mrb[0].mxu0
        %v8373 = vadd.f32 %v8104, %v8372
        %v8374 = vpop.f32.mrb[0].mxu0
        %8375 = vmatprep.mubr.f32.mxu0 0.0
        %8376 = vmatmul.mubr.f32.gmra.mrb[0].mxu0 %v8172
        %v8377 = vpop.f32.mrb[0].mxu0
        %v8378 = vadd.f32 %v8104, %v8377
        %v8379 = vpop.f32.mrb[0].mxu0
        %8380 = vmatprep.mubr.f32.mxu0 0.0
        %8381 = vmatmul.mubr.f32.gmra.mrb[0].mxu0 %v8175
        %v8382 = vpop.f32.mrb[0].mxu0
        %v8383 = vadd.f32 %v8104, %v8382
        %v8384 = vpop.f32.mrb[0].mxu0
        %8385 = vmatprep.mubr.f32.mxu0 0.0
        %8386 = vmatmul.mubr.f32.gmra.mrb[0].mxu0 %v8178
        %v8387 = vpop.f32.mrb[0].mxu0
        %v8388 = vadd.f32 %v8104, %v8387
        %v8389 = vpop.f32.mrb[0].mxu0
        %8390 = vmatprep.mubr.f32.mxu0 0.0
        %8391 = vmatmul.mubr.f32.gmra.mrb[0].mxu0 %v8181
        %v8392 = vpop.f32.mrb[0].mxu0
        %v8393 = vadd.f32 %v8104, %v8392
        %v8394 = vpop.f32.mrb[0].mxu0
        %8395 = vmatprep.mubr.f32.mxu0 0.0
        %8396 = vmatmul.mubr.f32.gmra.mrb[0].mxu0 %v8184
        %v8397 = vpop.f32.mrb[0].mxu0
        %v8398 = vadd.f32 %v8104, %v8397
        %v8399 = vpop.f32.mrb[0].mxu0
        %8400 = vmatprep.mubr.f32.mxu0 0.0
        %8401 = vmatmul.mubr.f32.gmra.mrb[0].mxu0 %v8187
        %v8402 = vpop.f32.mrb[0].mxu0
        %v8403 = vadd.f32 %v8104, %v8402
        %v8404 = vpop.f32.mrb[0].mxu0
        %8405 = vmatprep.mubr.f32.mxu0 0.0
        %8406 = vmatmul.mubr.f32.gmra.mrb[0].mxu0 %v8190
        %v8407 = vpop.f32.mrb[0].mxu0
        %v8408 = vadd.f32 %v8104, %v8407
        %v8409 = vpop.f32.mrb[0].mxu0
        %8410 = vmatprep.mubr.f32.mxu0 0.0
        %8411 = vmatmul.mubr.f32.gmra.mrb[0].mxu0 %v8193
        %v8412 = vpop.f32.mrb[0].mxu0
        %v8413 = vadd.f32 %v8104, %v8412
        %v8414 = vpop.f32.mrb[0].mxu0
        %8415 = vmatprep.mubr.f32.mxu0 0.0
        %8416 = vmatmul.mubr.f32.gmra.mrb[0].mxu0 %v8196
        %v8417 = vpop.f32.mrb[0].mxu0
        %v8418 = vadd.f32 %v8104, %v8417
        %v8419 = vpop.f32.mrb[0].mxu0
        %8420 = vmatprep.mubr.f32.mxu0 0.0
        %8421 = vmatmul.mubr.f32.gmra.mrb[0].mxu0 %v8199
        %v8422 = vpop.f32.mrb[0].mxu0
        %v8423 = vadd.f32 %v8104, %v8422
        %v8424 = vpop.f32.mrb[0].mxu0
        %8425 = vdwg.mxu0
        %v8426 = vld [vmem:[%s5 + $0x2] sm:$0x1]
        %v8427 = vlaneseq
        %v8428 = vshrl.u32 %v8427, 7
        %v8429 = vsub.s32 0, %v8428
        %v8430 = vrot.slane %v8426, %v8429
        %v8431 = vmul.f32 %v8268, %v8430
        %v8432 = vmul.f32 %v8273, %v8430
        %v8433 = vmul.f32 %v8278, %v8430
        %v8434 = vmul.f32 %v8283, %v8430
        %v8435 = vmul.f32 %v8288, %v8430
        %v8436 = vmul.f32 %v8293, %v8430
        %v8437 = vmul.f32 %v8298, %v8430
        %v8438 = vmul.f32 %v8303, %v8430
        %v8439 = vmul.f32 %v8308, %v8430
        %v8440 = vmul.f32 %v8313, %v8430
        %v8441 = vmul.f32 %v8318, %v8430
        %v8442 = vmul.f32 %v8323, %v8430
        %v8443 = vmul.f32 %v8328, %v8430
        %v8444 = vmul.f32 %v8333, %v8430
        %v8445 = vmul.f32 %v8338, %v8430
        %v8446 = vmul.f32 %v8343, %v8430
        %v8447 = vmul.f32 %v8348, %v8430
        %v8448 = vmul.f32 %v8353, %v8430
        %v8449 = vmul.f32 %v8358, %v8430
        %v8450 = vmul.f32 %v8363, %v8430
        %v8451 = vmul.f32 %v8368, %v8430
        %v8452 = vmul.f32 %v8373, %v8430
        %v8453 = vmul.f32 %v8378, %v8430
        %v8454 = vmul.f32 %v8383, %v8430
        %v8455 = vmul.f32 %v8388, %v8430
        %v8456 = vmul.f32 %v8393, %v8430
        %v8457 = vmul.f32 %v8398, %v8430
        %v8458 = vmul.f32 %v8403, %v8430
        %v8459 = vmul.f32 %v8408, %v8430
        %v8460 = vmul.f32 %v8413, %v8430
        %v8461 = vmul.f32 %v8418, %v8430
        %v8462 = vmul.f32 %v8423, %v8430
        %v8463 = vld [vmem:[%s6 + $0x2] sm:$0x1]
        %v8464 = vlaneseq
        %v8465 = vshrl.u32 %v8464, 7
        %v8466 = vsub.s32 0, %v8465
        %v8467 = vrot.slane %v8463, %v8466
        %v8468 = vadd.f32 %v8431, %v8467
        %v8469 = vadd.f32 %v8432, %v8467
        %v8470 = vadd.f32 %v8433, %v8467
        %v8471 = vadd.f32 %v8434, %v8467
        %v8472 = vadd.f32 %v8435, %v8467
        %v8473 = vadd.f32 %v8436, %v8467
        %v8474 = vadd.f32 %v8437, %v8467
        %v8475 = vadd.f32 %v8438, %v8467
        %v8476 = vadd.f32 %v8439, %v8467
        %v8477 = vadd.f32 %v8440, %v8467
        %v8478 = vadd.f32 %v8441, %v8467
        %v8479 = vadd.f32 %v8442, %v8467
        %v8480 = vadd.f32 %v8443, %v8467
        %v8481 = vadd.f32 %v8444, %v8467
        %v8482 = vadd.f32 %v8445, %v8467
        %v8483 = vadd.f32 %v8446, %v8467
        %v8484 = vadd.f32 %v8447, %v8467
        %v8485 = vadd.f32 %v8448, %v8467
        %v8486 = vadd.f32 %v8449, %v8467
        %v8487 = vadd.f32 %v8450, %v8467
        %v8488 = vadd.f32 %v8451, %v8467
        %v8489 = vadd.f32 %v8452, %v8467
        %v8490 = vadd.f32 %v8453, %v8467
        %v8491 = vadd.f32 %v8454, %v8467
        %v8492 = vadd.f32 %v8455, %v8467
        %v8493 = vadd.f32 %v8456, %v8467
        %v8494 = vadd.f32 %v8457, %v8467
        %v8495 = vadd.f32 %v8458, %v8467
        %v8496 = vadd.f32 %v8459, %v8467
        %v8497 = vadd.f32 %v8460, %v8467
        %v8498 = vadd.f32 %v8461, %v8467
        %v8499 = vadd.f32 %v8462, %v8467
        %v8500 = vmax.f32 %v8468, 0.0
        %v8501 = vmax.f32 %v8469, 0.0
        %v8502 = vmax.f32 %v8470, 0.0
        %v8503 = vmax.f32 %v8471, 0.0
        %v8504 = vmax.f32 %v8472, 0.0
        %v8505 = vmax.f32 %v8473, 0.0
        %v8506 = vmax.f32 %v8474, 0.0
        %v8507 = vmax.f32 %v8475, 0.0
        %v8508 = vmax.f32 %v8476, 0.0
        %v8509 = vmax.f32 %v8477, 0.0
        %v8510 = vmax.f32 %v8478, 0.0
        %v8511 = vmax.f32 %v8479, 0.0
        %v8512 = vmax.f32 %v8480, 0.0
        %v8513 = vmax.f32 %v8481, 0.0
        %v8514 = vmax.f32 %v8482, 0.0
        %v8515 = vmax.f32 %v8483, 0.0
        %v8516 = vmax.f32 %v8484, 0.0
        %v8517 = vmax.f32 %v8485, 0.0
        %v8518 = vmax.f32 %v8486, 0.0
        %v8519 = vmax.f32 %v8487, 0.0
        %v8520 = vmax.f32 %v8488, 0.0
        %v8521 = vmax.f32 %v8489, 0.0
        %v8522 = vmax.f32 %v8490, 0.0
        %v8523 = vmax.f32 %v8491, 0.0
        %v8524 = vmax.f32 %v8492, 0.0
        %v8525 = vmax.f32 %v8493, 0.0
        %v8526 = vmax.f32 %v8494, 0.0
        %v8527 = vmax.f32 %v8495, 0.0
        %v8528 = vmax.f32 %v8496, 0.0
        %v8529 = vmax.f32 %v8497, 0.0
        %v8530 = vmax.f32 %v8498, 0.0
        %v8531 = vmax.f32 %v8499, 0.0
        %8532 = vst.msk [vmem:[%s528 + $0x1] sm:$0xff] %vm331, %v8500
        %8533 = vst.msk [vmem:[%s528 + $0x9] sm:$0xff] %vm331, %v8501
        %8534 = vst.msk [vmem:[%s528 + $0x19] sm:$0xff] %vm331, %v8502
        %8535 = vst.msk [vmem:[%s528 + $0x21] sm:$0xff] %vm331, %v8503
        %8536 = vst.msk [vmem:[%s528 + $0x31] sm:$0xff] %vm331, %v8504
        %8537 = vst.msk [vmem:[%s528 + $0x39] sm:$0xff] %vm331, %v8505
        %8538 = vst.msk [vmem:[%s528 + $0x49] sm:$0xff] %vm331, %v8506
        %8539 = vst.msk [vmem:[%s528 + $0x51] sm:$0xff] %vm331, %v8507
        %8540 = vst.msk [vmem:[%s528 + $0x61] sm:$0xff] %vm331, %v8508
        %8541 = vst.msk [vmem:[%s528 + $0x69] sm:$0xff] %vm331, %v8509
        %8542 = vst.msk [vmem:[%s528 + $0x79] sm:$0xff] %vm331, %v8510
        %8543 = vst.msk [vmem:[%s528 + $0x81] sm:$0xff] %vm331, %v8511
        %8544 = vst.msk [vmem:[%s528 + $0x91] sm:$0xff] %vm331, %v8512
        %8545 = vst.msk [vmem:[%s528 + $0x99] sm:$0xff] %vm331, %v8513
        %8546 = vst.msk [vmem:[%s528 + $0xa9] sm:$0xff] %vm331, %v8514
        %8547 = vst.msk [vmem:[%s528 + $0xb1] sm:$0xff] %vm331, %v8515
        %8548 = vst.msk [vmem:[%s528 + $0xc1] sm:$0xff] %vm331, %v8516
        %8549 = vst.msk [vmem:[%s528 + $0xc9] sm:$0xff] %vm331, %v8517
        %8550 = vst.msk [vmem:[%s528 + $0xd9] sm:$0xff] %vm331, %v8518
        %8551 = vst.msk [vmem:[%s528 + $0xe1] sm:$0xff] %vm331, %v8519
        %8552 = vst.msk [vmem:[%s528 + $0xf1] sm:$0xff] %vm331, %v8520
        %8553 = vst.msk [vmem:[%s528 + $0xf9] sm:$0xff] %vm331, %v8521
        %8554 = vst.msk [vmem:[%s528 + $0x109] sm:$0xff] %vm331, %v8522
        %8555 = vst.msk [vmem:[%s528 + $0x111] sm:$0xff] %vm331, %v8523
        %8556 = vst.msk [vmem:[%s528 + $0x121] sm:$0xff] %vm331, %v8524
        %8557 = vst.msk [vmem:[%s528 + $0x129] sm:$0xff] %vm331, %v8525
        %8558 = vst.msk [vmem:[%s528 + $0x139] sm:$0xff] %vm331, %v8526
        %8559 = vst.msk [vmem:[%s528 + $0x141] sm:$0xff] %vm331, %v8527
        %8560 = vst.msk [vmem:[%s528 + $0x151] sm:$0xff] %vm331, %v8528
        %8561 = vst.msk [vmem:[%s528 + $0x159] sm:$0xff] %vm331, %v8529
        %8562 = vst.msk [vmem:[%s528 + $0x169] sm:$0xff] %vm331, %v8530
        %8563 = vst.msk [vmem:[%s528 + $0x171] sm:$0xff] %vm331, %v8531
        %v8564 = vld [vmem:[#allocation5] ss:$2 sm:$0xff]
        %v8565 = vld [vmem:[%s2848] ss:$2 sm:$0xff]
        %v8566 = vld [vmem:[%s2850] ss:$2 sm:$0xff]
        %v8567 = vld [vmem:[%s2852] ss:$2 sm:$0xff]
        %v8568 = vld [vmem:[%s2854] ss:$2 sm:$0xff]
        %v8569 = vld [vmem:[%s2856] ss:$2 sm:$0xff]
        %v8570 = vld [vmem:[%s2858] ss:$2 sm:$0xff]
        %v8571 = vld [vmem:[%s2860] ss:$2 sm:$0xff]
        %8572 = vst.msk [vmem:[#allocation7] sm:$0xff] %vm331, %v8564
        %8573 = vst.msk [vmem:[#allocation7 + $0x8] sm:$0xff] %vm331, %v8565
        %8574 = vst.msk [vmem:[#allocation7 + $0x10] sm:$0xff] %vm331, %v8566
        %8575 = vst.msk [vmem:[#allocation7 + $0x18] sm:$0xff] %vm331, %v8567
        %8576 = vst.msk [vmem:[#allocation7 + $0x20] sm:$0xff] %vm331, %v8568
        %8577 = vst.msk [vmem:[#allocation7 + $0x28] sm:$0xff] %vm331, %v8569
        %8578 = vst.msk [vmem:[#allocation7 + $0x30] sm:$0xff] %vm331, %v8570
        %8579 = vst.msk [vmem:[#allocation7 + $0x38] sm:$0xff] %vm331, %v8571
        %v8580 = vld [vmem:[%s2870] ss:$2 sm:$0xff]
        %v8581 = vld [vmem:[%s2872] ss:$2 sm:$0xff]
        %v8582 = vld [vmem:[%s2874] ss:$2 sm:$0xff]
        %v8583 = vld [vmem:[%s2876] ss:$2 sm:$0xff]
        %v8584 = vld [vmem:[%s2878] ss:$2 sm:$0xff]
        %v8585 = vld [vmem:[%s2880] ss:$2 sm:$0xff]
        %v8586 = vld [vmem:[%s2882] ss:$2 sm:$0xff]
        %v8587 = vld [vmem:[%s2884] ss:$2 sm:$0xff]
        %8596 = vrot.lane.b32.xlu0 %v8580, 8
        %v8597 = vpop.permute.xlu0 %8596
        %8598 = vrot.lane.b32.xlu0 %v8581, 8
        %v8599 = vpop.permute.xlu0 %8598
        %8600 = vrot.lane.b32.xlu0 %v8582, 8
        %v8601 = vpop.permute.xlu0 %8600
        %8602 = vrot.lane.b32.xlu0 %v8583, 8
        %v8603 = vpop.permute.xlu0 %8602
        %8604 = vrot.lane.b32.xlu0 %v8584, 8
        %v8605 = vpop.permute.xlu0 %8604
        %8606 = vrot.lane.b32.xlu0 %v8585, 8
        %v8607 = vpop.permute.xlu0 %8606
        %8608 = vrot.lane.b32.xlu0 %v8586, 8
        %v8609 = vpop.permute.xlu0 %8608
        %8610 = vrot.lane.b32.xlu0 %v8587, 8
        %v8611 = vpop.permute.xlu0 %8610
        %8620 = vst.msk [vmem:[#allocation7] sm:$0xff] %vm956, %v8597
        %8621 = vst.msk [vmem:[#allocation7 + $0x8] sm:$0xff] %vm956, %v8599
        %8622 = vst.msk [vmem:[#allocation7 + $0x10] sm:$0xff] %vm956, %v8601
        %8623 = vst.msk [vmem:[#allocation7 + $0x18] sm:$0xff] %vm956, %v8603
        %8624 = vst.msk [vmem:[#allocation7 + $0x20] sm:$0xff] %vm956, %v8605
        %8625 = vst.msk [vmem:[#allocation7 + $0x28] sm:$0xff] %vm956, %v8607
        %8626 = vst.msk [vmem:[#allocation7 + $0x30] sm:$0xff] %vm956, %v8609
        %8627 = vst.msk [vmem:[#allocation7 + $0x38] sm:$0xff] %vm956, %v8611
        %v8628 = vld [vmem:[%s2926] ss:$2 sm:$0xff]
        %v8629 = vld [vmem:[%s2928] ss:$2 sm:$0xff]
        %v8630 = vld [vmem:[%s2930] ss:$2 sm:$0xff]
        %v8631 = vld [vmem:[%s2932] ss:$2 sm:$0xff]
        %v8632 = vld [vmem:[%s2934] ss:$2 sm:$0xff]
        %v8633 = vld [vmem:[%s2936] ss:$2 sm:$0xff]
        %v8634 = vld [vmem:[%s2938] ss:$2 sm:$0xff]
        %v8635 = vld [vmem:[%s2940] ss:$2 sm:$0xff]
        %8644 = vrot.lane.b32.xlu0 %v8628, 16
        %v8645 = vpop.permute.xlu0 %8644
        %8646 = vrot.lane.b32.xlu0 %v8629, 16
        %v8647 = vpop.permute.xlu0 %8646
        %8648 = vrot.lane.b32.xlu0 %v8630, 16
        %v8649 = vpop.permute.xlu0 %8648
        %8650 = vrot.lane.b32.xlu0 %v8631, 16
        %v8651 = vpop.permute.xlu0 %8650
        %8652 = vrot.lane.b32.xlu0 %v8632, 16
        %v8653 = vpop.permute.xlu0 %8652
        %8654 = vrot.lane.b32.xlu0 %v8633, 16
        %v8655 = vpop.permute.xlu0 %8654
        %8656 = vrot.lane.b32.xlu0 %v8634, 16
        %v8657 = vpop.permute.xlu0 %8656
        %8658 = vrot.lane.b32.xlu0 %v8635, 16
        %v8659 = vpop.permute.xlu0 %8658
        %8668 = vst.msk [vmem:[#allocation7] sm:$0xff] %vm1149, %v8645
        %8669 = vst.msk [vmem:[#allocation7 + $0x8] sm:$0xff] %vm1149, %v8647
        %8670 = vst.msk [vmem:[#allocation7 + $0x10] sm:$0xff] %vm1149, %v8649
        %8671 = vst.msk [vmem:[#allocation7 + $0x18] sm:$0xff] %vm1149, %v8651
        %8672 = vst.msk [vmem:[#allocation7 + $0x20] sm:$0xff] %vm1149, %v8653
        %8673 = vst.msk [vmem:[#allocation7 + $0x28] sm:$0xff] %vm1149, %v8655
        %8674 = vst.msk [vmem:[#allocation7 + $0x30] sm:$0xff] %vm1149, %v8657
        %8675 = vst.msk [vmem:[#allocation7 + $0x38] sm:$0xff] %vm1149, %v8659
        %v8676 = vld [vmem:[%s528] ss:$2 sm:$0xff]
        %v8677 = vld [vmem:[%s2983] ss:$2 sm:$0xff]
        %v8678 = vld [vmem:[%s2985] ss:$2 sm:$0xff]
        %v8679 = vld [vmem:[%s2987] ss:$2 sm:$0xff]
        %v8680 = vld [vmem:[%s2989] ss:$2 sm:$0xff]
        %v8681 = vld [vmem:[%s2991] ss:$2 sm:$0xff]
        %v8682 = vld [vmem:[%s2993] ss:$2 sm:$0xff]
        %v8683 = vld [vmem:[%s2995] ss:$2 sm:$0xff]
        %8692 = vrot.lane.b32.xlu0 %v8676, 24
        %v8693 = vpop.permute.xlu0 %8692
        %8694 = vrot.lane.b32.xlu0 %v8677, 24
        %v8695 = vpop.permute.xlu0 %8694
        %8696 = vrot.lane.b32.xlu0 %v8678, 24
        %v8697 = vpop.permute.xlu0 %8696
        %8698 = vrot.lane.b32.xlu0 %v8679, 24
        %v8699 = vpop.permute.xlu0 %8698
        %8700 = vrot.lane.b32.xlu0 %v8680, 24
        %v8701 = vpop.permute.xlu0 %8700
        %8702 = vrot.lane.b32.xlu0 %v8681, 24
        %v8703 = vpop.permute.xlu0 %8702
        %8704 = vrot.lane.b32.xlu0 %v8682, 24
        %v8705 = vpop.permute.xlu0 %8704
        %8706 = vrot.lane.b32.xlu0 %v8683, 24
        %v8707 = vpop.permute.xlu0 %8706
        %8716 = vst.msk [vmem:[#allocation7] sm:$0xff] %vm1342, %v8693
        %8717 = vst.msk [vmem:[#allocation7 + $0x8] sm:$0xff] %vm1342, %v8695
        %8718 = vst.msk [vmem:[#allocation7 + $0x10] sm:$0xff] %vm1342, %v8697
        %8719 = vst.msk [vmem:[#allocation7 + $0x18] sm:$0xff] %vm1342, %v8699
        %8720 = vst.msk [vmem:[#allocation7 + $0x20] sm:$0xff] %vm1342, %v8701
        %8721 = vst.msk [vmem:[#allocation7 + $0x28] sm:$0xff] %vm1342, %v8703
        %8722 = vst.msk [vmem:[#allocation7 + $0x30] sm:$0xff] %vm1342, %v8705
        %8723 = vst.msk [vmem:[#allocation7 + $0x38] sm:$0xff] %vm1342, %v8707
        %v8724 = vld [vmem:[%s3037] ss:$2 sm:$0xff]
        %v8725 = vld [vmem:[%s3039] ss:$2 sm:$0xff]
        %v8726 = vld [vmem:[%s3041] ss:$2 sm:$0xff]
        %v8727 = vld [vmem:[%s3043] ss:$2 sm:$0xff]
        %v8728 = vld [vmem:[%s3045] ss:$2 sm:$0xff]
        %v8729 = vld [vmem:[%s3047] ss:$2 sm:$0xff]
        %v8730 = vld [vmem:[%s3049] ss:$2 sm:$0xff]
        %v8731 = vld [vmem:[%s3051] ss:$2 sm:$0xff]
        %8740 = vrot.lane.b32.xlu0 %v8724, 32
        %v8741 = vpop.permute.xlu0 %8740
        %8742 = vrot.lane.b32.xlu0 %v8725, 32
        %v8743 = vpop.permute.xlu0 %8742
        %8744 = vrot.lane.b32.xlu0 %v8726, 32
        %v8745 = vpop.permute.xlu0 %8744
        %8746 = vrot.lane.b32.xlu0 %v8727, 32
        %v8747 = vpop.permute.xlu0 %8746
        %8748 = vrot.lane.b32.xlu0 %v8728, 32
        %v8749 = vpop.permute.xlu0 %8748
        %8750 = vrot.lane.b32.xlu0 %v8729, 32
        %v8751 = vpop.permute.xlu0 %8750
        %8752 = vrot.lane.b32.xlu0 %v8730, 32
        %v8753 = vpop.permute.xlu0 %8752
        %8754 = vrot.lane.b32.xlu0 %v8731, 32
        %v8755 = vpop.permute.xlu0 %8754
        %8764 = vst.msk [vmem:[#allocation7] sm:$0xff] %vm1535, %v8741
        %8765 = vst.msk [vmem:[#allocation7 + $0x8] sm:$0xff] %vm1535, %v8743
        %8766 = vst.msk [vmem:[#allocation7 + $0x10] sm:$0xff] %vm1535, %v8745
        %8767 = vst.msk [vmem:[#allocation7 + $0x18] sm:$0xff] %vm1535, %v8747
        %8768 = vst.msk [vmem:[#allocation7 + $0x20] sm:$0xff] %vm1535, %v8749
        %8769 = vst.msk [vmem:[#allocation7 + $0x28] sm:$0xff] %vm1535, %v8751
        %8770 = vst.msk [vmem:[#allocation7 + $0x30] sm:$0xff] %vm1535, %v8753
        %8771 = vst.msk [vmem:[#allocation7 + $0x38] sm:$0xff] %vm1535, %v8755
        %v8772 = vld [vmem:[%s3093] ss:$2 sm:$0xff]
        %v8773 = vld [vmem:[%s3095] ss:$2 sm:$0xff]
        %v8774 = vld [vmem:[%s3097] ss:$2 sm:$0xff]
        %v8775 = vld [vmem:[%s3099] ss:$2 sm:$0xff]
        %v8776 = vld [vmem:[%s3101] ss:$2 sm:$0xff]
        %v8777 = vld [vmem:[%s3103] ss:$2 sm:$0xff]
        %v8778 = vld [vmem:[%s3105] ss:$2 sm:$0xff]
        %v8779 = vld [vmem:[%s3107] ss:$2 sm:$0xff]
        %8788 = vrot.lane.b32.xlu0 %v8772, 40
        %v8789 = vpop.permute.xlu0 %8788
        %8790 = vrot.lane.b32.xlu0 %v8773, 40
        %v8791 = vpop.permute.xlu0 %8790
        %8792 = vrot.lane.b32.xlu0 %v8774, 40
        %v8793 = vpop.permute.xlu0 %8792
        %8794 = vrot.lane.b32.xlu0 %v8775, 40
        %v8795 = vpop.permute.xlu0 %8794
        %8796 = vrot.lane.b32.xlu0 %v8776, 40
        %v8797 = vpop.permute.xlu0 %8796
        %8798 = vrot.lane.b32.xlu0 %v8777, 40
        %v8799 = vpop.permute.xlu0 %8798
        %8800 = vrot.lane.b32.xlu0 %v8778, 40
        %v8801 = vpop.permute.xlu0 %8800
        %8802 = vrot.lane.b32.xlu0 %v8779, 40
        %v8803 = vpop.permute.xlu0 %8802
        %8812 = vst.msk [vmem:[#allocation7] sm:$0xff] %vm1728, %v8789
        %8813 = vst.msk [vmem:[#allocation7 + $0x8] sm:$0xff] %vm1728, %v8791
        %8814 = vst.msk [vmem:[#allocation7 + $0x10] sm:$0xff] %vm1728, %v8793
        %8815 = vst.msk [vmem:[#allocation7 + $0x18] sm:$0xff] %vm1728, %v8795
        %8816 = vst.msk [vmem:[#allocation7 + $0x20] sm:$0xff] %vm1728, %v8797
        %8817 = vst.msk [vmem:[#allocation7 + $0x28] sm:$0xff] %vm1728, %v8799
        %8818 = vst.msk [vmem:[#allocation7 + $0x30] sm:$0xff] %vm1728, %v8801
        %8819 = vst.msk [vmem:[#allocation7 + $0x38] sm:$0xff] %vm1728, %v8803
        %v8820 = vld [vmem:[%s3149] ss:$2 sm:$0xff]
        %v8821 = vld [vmem:[%s3151] ss:$2 sm:$0xff]
        %v8822 = vld [vmem:[%s3153] ss:$2 sm:$0xff]
        %v8823 = vld [vmem:[%s3155] ss:$2 sm:$0xff]
        %v8824 = vld [vmem:[%s3157] ss:$2 sm:$0xff]
        %v8825 = vld [vmem:[%s3159] ss:$2 sm:$0xff]
        %v8826 = vld [vmem:[%s3161] ss:$2 sm:$0xff]
        %v8827 = vld [vmem:[%s3163] ss:$2 sm:$0xff]
        %8836 = vrot.lane.b32.xlu0 %v8820, 48
        %v8837 = vpop.permute.xlu0 %8836
        %8838 = vrot.lane.b32.xlu0 %v8821, 48
        %v8839 = vpop.permute.xlu0 %8838
        %8840 = vrot.lane.b32.xlu0 %v8822, 48
        %v8841 = vpop.permute.xlu0 %8840
        %8842 = vrot.lane.b32.xlu0 %v8823, 48
        %v8843 = vpop.permute.xlu0 %8842
        %8844 = vrot.lane.b32.xlu0 %v8824, 48
        %v8845 = vpop.permute.xlu0 %8844
        %8846 = vrot.lane.b32.xlu0 %v8825, 48
        %v8847 = vpop.permute.xlu0 %8846
        %8848 = vrot.lane.b32.xlu0 %v8826, 48
        %v8849 = vpop.permute.xlu0 %8848
        %8850 = vrot.lane.b32.xlu0 %v8827, 48
        %v8851 = vpop.permute.xlu0 %8850
        %8860 = vst.msk [vmem:[#allocation7] sm:$0xff] %vm1922, %v8837
        %8861 = vst.msk [vmem:[#allocation7 + $0x8] sm:$0xff] %vm1922, %v8839
        %8862 = vst.msk [vmem:[#allocation7 + $0x10] sm:$0xff] %vm1922, %v8841
        %8863 = vst.msk [vmem:[#allocation7 + $0x18] sm:$0xff] %vm1922, %v8843
        %8864 = vst.msk [vmem:[#allocation7 + $0x20] sm:$0xff] %vm1922, %v8845
        %8865 = vst.msk [vmem:[#allocation7 + $0x28] sm:$0xff] %vm1922, %v8847
        %8866 = vst.msk [vmem:[#allocation7 + $0x30] sm:$0xff] %vm1922, %v8849
        %8867 = vst.msk [vmem:[#allocation7 + $0x38] sm:$0xff] %vm1922, %v8851
        %v8868 = vld [vmem:[%s3205] ss:$2 sm:$0xff]
        %v8869 = vld [vmem:[%s3207] ss:$2 sm:$0xff]
        %v8870 = vld [vmem:[%s3209] ss:$2 sm:$0xff]
        %v8871 = vld [vmem:[%s3211] ss:$2 sm:$0xff]
        %v8872 = vld [vmem:[%s3213] ss:$2 sm:$0xff]
        %v8873 = vld [vmem:[%s3215] ss:$2 sm:$0xff]
        %v8874 = vld [vmem:[%s3217] ss:$2 sm:$0xff]
        %v8875 = vld [vmem:[%s3219] ss:$2 sm:$0xff]
        %8884 = vrot.lane.b32.xlu0 %v8868, 56
        %v8885 = vpop.permute.xlu0 %8884
        %8886 = vrot.lane.b32.xlu0 %v8869, 56
        %v8887 = vpop.permute.xlu0 %8886
        %8888 = vrot.lane.b32.xlu0 %v8870, 56
        %v8889 = vpop.permute.xlu0 %8888
        %8890 = vrot.lane.b32.xlu0 %v8871, 56
        %v8891 = vpop.permute.xlu0 %8890
        %8892 = vrot.lane.b32.xlu0 %v8872, 56
        %v8893 = vpop.permute.xlu0 %8892
        %8894 = vrot.lane.b32.xlu0 %v8873, 56
        %v8895 = vpop.permute.xlu0 %8894
        %8896 = vrot.lane.b32.xlu0 %v8874, 56
        %v8897 = vpop.permute.xlu0 %8896
        %8898 = vrot.lane.b32.xlu0 %v8875, 56
        %v8899 = vpop.permute.xlu0 %8898
        %8908 = vst.msk [vmem:[#allocation7] sm:$0xff] %vm2115, %v8885
        %8909 = vst.msk [vmem:[#allocation7 + $0x8] sm:$0xff] %vm2115, %v8887
        %8910 = vst.msk [vmem:[#allocation7 + $0x10] sm:$0xff] %vm2115, %v8889
        %8911 = vst.msk [vmem:[#allocation7 + $0x18] sm:$0xff] %vm2115, %v8891
        %8912 = vst.msk [vmem:[#allocation7 + $0x20] sm:$0xff] %vm2115, %v8893
        %8913 = vst.msk [vmem:[#allocation7 + $0x28] sm:$0xff] %vm2115, %v8895
        %8914 = vst.msk [vmem:[#allocation7 + $0x30] sm:$0xff] %vm2115, %v8897
        %8915 = vst.msk [vmem:[#allocation7 + $0x38] sm:$0xff] %vm2115, %v8899
        %v8916 = vld [vmem:[%s3261] ss:$2 sm:$0xff]
        %v8917 = vld [vmem:[%s3263] ss:$2 sm:$0xff]
        %v8918 = vld [vmem:[%s3265] ss:$2 sm:$0xff]
        %v8919 = vld [vmem:[%s3267] ss:$2 sm:$0xff]
        %v8920 = vld [vmem:[%s3269] ss:$2 sm:$0xff]
        %v8921 = vld [vmem:[%s3271] ss:$2 sm:$0xff]
        %v8922 = vld [vmem:[%s3273] ss:$2 sm:$0xff]
        %v8923 = vld [vmem:[%s3275] ss:$2 sm:$0xff]
        %8932 = vrot.lane.b32.xlu0 %v8916, 64
        %v8933 = vpop.permute.xlu0 %8932
        %8934 = vrot.lane.b32.xlu0 %v8917, 64
        %v8935 = vpop.permute.xlu0 %8934
        %8936 = vrot.lane.b32.xlu0 %v8918, 64
        %v8937 = vpop.permute.xlu0 %8936
        %8938 = vrot.lane.b32.xlu0 %v8919, 64
        %v8939 = vpop.permute.xlu0 %8938
        %8940 = vrot.lane.b32.xlu0 %v8920, 64
        %v8941 = vpop.permute.xlu0 %8940
        %8942 = vrot.lane.b32.xlu0 %v8921, 64
        %v8943 = vpop.permute.xlu0 %8942
        %8944 = vrot.lane.b32.xlu0 %v8922, 64
        %v8945 = vpop.permute.xlu0 %8944
        %8946 = vrot.lane.b32.xlu0 %v8923, 64
        %v8947 = vpop.permute.xlu0 %8946
        %8956 = vst.msk [vmem:[#allocation7] sm:$0xff] %vm2308, %v8933
        %8957 = vst.msk [vmem:[#allocation7 + $0x8] sm:$0xff] %vm2308, %v8935
        %8958 = vst.msk [vmem:[#allocation7 + $0x10] sm:$0xff] %vm2308, %v8937
        %8959 = vst.msk [vmem:[#allocation7 + $0x18] sm:$0xff] %vm2308, %v8939
        %8960 = vst.msk [vmem:[#allocation7 + $0x20] sm:$0xff] %vm2308, %v8941
        %8961 = vst.msk [vmem:[#allocation7 + $0x28] sm:$0xff] %vm2308, %v8943
        %8962 = vst.msk [vmem:[#allocation7 + $0x30] sm:$0xff] %vm2308, %v8945
        %8963 = vst.msk [vmem:[#allocation7 + $0x38] sm:$0xff] %vm2308, %v8947
        %v8964 = vld [vmem:[#allocation7] sm:$0xff]
        %v8965 = vld [vmem:[#allocation7 + $0x8] sm:$0xff]
        %v8966 = vld [vmem:[#allocation7 + $0x10] sm:$0xff]
        %v8967 = vld [vmem:[#allocation7 + $0x18] sm:$0xff]
        %v8968 = vld [vmem:[#allocation7 + $0x20] sm:$0xff]
        %v8969 = vld [vmem:[#allocation7 + $0x28] sm:$0xff]
        %v8970 = vld [vmem:[#allocation7 + $0x30] sm:$0xff]
        %v8971 = vld [vmem:[#allocation7 + $0x38] sm:$0xff]
        %s8972 = scalar_lea.vmem %s7, 144
        %v8973 = vld [vmem:[%s8972] sm:$0xff]
        %v8974 = vld [vmem:[%s8972 + $0x8] sm:$0xff]
        %v8975 = vld [vmem:[%s8972 + $0x10] sm:$0xff]
        %v8976 = vld [vmem:[%s8972 + $0x18] sm:$0xff]
        %v8977 = vld [vmem:[%s8972 + $0x20] sm:$0xff]
        %v8978 = vld [vmem:[%s8972 + $0x28] sm:$0xff]
        %v8979 = vld [vmem:[%s8972 + $0x30] sm:$0xff]
        %v8980 = vld [vmem:[%s8972 + $0x38] sm:$0xff]
        %v8981 = vld [vmem:[%s8972 + $0x40] sm:$0xff]
        %v8983 = vsel %vm2387, %v8964, 0
        %v8986 = vsel %vm2387, %v8965, 0
        %v8989 = vsel %vm2387, %v8966, 0
        %v8992 = vsel %vm2387, %v8967, 0
        %v8995 = vsel %vm2387, %v8968, 0
        %v8998 = vsel %vm2387, %v8969, 0
        %v9001 = vsel %vm2387, %v8970, 0
        %v9004 = vsel %vm2387, %v8971, 0
        %9006 = vmatprep.subr.mxu0 0.0
        %9007 = vmatpush1.msra.mxu0 %v8973
        %9008 = vmatprep.subr.mxu0 0.0
        %9009 = vmatpush1.msra.mxu0 %v8974
        %9010 = vmatprep.subr.mxu0 0.0
        %9011 = vmatpush1.msra.mxu0 %v8975
        %9012 = vmatprep.subr.mxu0 0.0
        %9013 = vmatpush1.msra.mxu0 %v8976
        %9014 = vmatprep.subr.mxu0 0.0
        %9015 = vmatpush1.msra.mxu0 %v8977
        %9016 = vmatprep.subr.mxu0 0.0
        %9017 = vmatpush1.msra.mxu0 %v8978
        %9018 = vmatprep.subr.mxu0 0.0
        %9019 = vmatpush1.msra.mxu0 %v8979
        %9020 = vmatprep.subr.mxu0 0.0
        %9021 = vmatpush1.msra.mxu0 %v8980
        %9022 = vmatprep.subr.mxu0 0.0
        %9023 = vmatpush1.msra.mxu0 %v8981
        %9024 = vmatprep.subr.mxu0 0.0
        %9025 = vmatpush1.msra.mxu0 0.0
        %9026 = vmatprep.subr.mxu0 0.0
        %9027 = vmatpush1.msra.mxu0 0.0
        %9028 = vmatprep.subr.mxu0 0.0
        %9029 = vmatpush1.msra.mxu0 0.0
        %9030 = vmatprep.subr.mxu0 0.0
        %9031 = vmatpush1.msra.mxu0 0.0
        %9032 = vmatprep.subr.mxu0 0.0
        %9033 = vmatpush1.msra.mxu0 0.0
        %9034 = vmatprep.subr.mxu0 0.0
        %9035 = vmatpush1.msra.mxu0 0.0
        %9036 = vmatprep.subr.mxu0 0.0
        %9037 = vmatpush1.msra.mxu0 0.0
        %9038 = vmatprep.subr.mxu0 0.0
        %9039 = vmatpush1.msra.mxu0 0.0
        %9040 = vmatprep.subr.mxu0 0.0
        %9041 = vmatpush1.msra.mxu0 0.0
        %9042 = vmatprep.subr.mxu0 0.0
        %9043 = vmatpush1.msra.mxu0 0.0
        %9044 = vmatprep.subr.mxu0 0.0
        %9045 = vmatpush1.msra.mxu0 0.0
        %9046 = vmatprep.subr.mxu0 0.0
        %9047 = vmatpush1.msra.mxu0 0.0
        %9048 = vmatprep.subr.mxu0 0.0
        %9049 = vmatpush1.msra.mxu0 0.0
        %9050 = vmatprep.subr.mxu0 0.0
        %9051 = vmatpush1.msra.mxu0 0.0
        %9052 = vmatprep.subr.mxu0 0.0
        %9053 = vmatpush1.msra.mxu0 0.0
        %9054 = vmatprep.subr.mxu0 0.0
        %9055 = vmatpush1.msra.mxu0 0.0
        %9056 = vmatprep.subr.mxu0 0.0
        %9057 = vmatpush1.msra.mxu0 0.0
        %9058 = vmatprep.subr.mxu0 0.0
        %9059 = vmatpush1.msra.mxu0 0.0
        %9060 = vmatprep.subr.mxu0 0.0
        %9061 = vmatpush1.msra.mxu0 0.0
        %9062 = vmatprep.subr.mxu0 0.0
        %9063 = vmatpush1.msra.mxu0 0.0
        %9064 = vmatprep.subr.mxu0 0.0
        %9065 = vmatpush1.msra.mxu0 0.0
        %9066 = vmatprep.subr.mxu0 0.0
        %9067 = vmatpush1.msra.mxu0 0.0
        %9068 = vmatprep.subr.mxu0 0.0
        %9069 = vmatpush1.msra.mxu0 0.0
        %9070 = vmatprep.mubr.f32.mxu0 0.0
        %9071 = vmatmul.mubr.f32.gmra.mrb[0].mxu0 %v8983
        %v9072 = vpop.f32.mrb[0].mxu0
        %v9073 = vadd.f32 0.0, %v9072
        %v9074 = vpop.f32.mrb[0].mxu0
        %9075 = vmatprep.mubr.f32.mxu0 0.0
        %9076 = vmatmul.mubr.f32.gmra.mrb[0].mxu0 %v8986
        %v9077 = vpop.f32.mrb[0].mxu0
        %v9078 = vadd.f32 0.0, %v9077
        %v9079 = vpop.f32.mrb[0].mxu0
        %9080 = vmatprep.mubr.f32.mxu0 0.0
        %9081 = vmatmul.mubr.f32.gmra.mrb[0].mxu0 %v8989
        %v9082 = vpop.f32.mrb[0].mxu0
        %v9083 = vadd.f32 0.0, %v9082
        %v9084 = vpop.f32.mrb[0].mxu0
        %9085 = vmatprep.mubr.f32.mxu0 0.0
        %9086 = vmatmul.mubr.f32.gmra.mrb[0].mxu0 %v8992
        %v9087 = vpop.f32.mrb[0].mxu0
        %v9088 = vadd.f32 0.0, %v9087
        %v9089 = vpop.f32.mrb[0].mxu0
        %9090 = vmatprep.mubr.f32.mxu0 0.0
        %9091 = vmatmul.mubr.f32.gmra.mrb[0].mxu0 %v8995
        %v9092 = vpop.f32.mrb[0].mxu0
        %v9093 = vadd.f32 0.0, %v9092
        %v9094 = vpop.f32.mrb[0].mxu0
        %9095 = vmatprep.mubr.f32.mxu0 0.0
        %9096 = vmatmul.mubr.f32.gmra.mrb[0].mxu0 %v8998
        %v9097 = vpop.f32.mrb[0].mxu0
        %v9098 = vadd.f32 0.0, %v9097
        %v9099 = vpop.f32.mrb[0].mxu0
        %9100 = vmatprep.mubr.f32.mxu0 0.0
        %9101 = vmatmul.mubr.f32.gmra.mrb[0].mxu0 %v9001
        %v9102 = vpop.f32.mrb[0].mxu0
        %v9103 = vadd.f32 0.0, %v9102
        %v9104 = vpop.f32.mrb[0].mxu0
        %9105 = vmatprep.mubr.f32.mxu0 0.0
        %9106 = vmatmul.mubr.f32.gmra.mrb[0].mxu0 %v9004
        %v9107 = vpop.f32.mrb[0].mxu0
        %v9108 = vadd.f32 0.0, %v9107
        %v9109 = vpop.f32.mrb[0].mxu0
        %9110 = vdwg.mxu0
        %v9111 = vadd.f32 %v6249, %v9073
        %v9112 = vadd.f32 %v6254, %v9078
        %v9113 = vadd.f32 %v6259, %v9083
        %v9114 = vadd.f32 %v6264, %v9088
        %v9115 = vadd.f32 %v6269, %v9093
        %v9116 = vadd.f32 %v6274, %v9098
        %v9117 = vadd.f32 %v6279, %v9103
        %v9118 = vadd.f32 %v6284, %v9108
        %v9119 = vld [vmem:[%s8] sm:$0x1]
        %v9121 = vlaneseq
        %v9122 = vshrl.u32 %v9121, 7
        %v9123 = vsub.s32 0, %v9122
        %v9124 = vrot.slane %v9119, %v9123
        %v9126 = vadd.f32 %v9111, %v9124
        %v9127 = vadd.f32 %v9112, %v9124
        %v9128 = vadd.f32 %v9113, %v9124
        %v9129 = vadd.f32 %v9114, %v9124
        %v9130 = vadd.f32 %v9115, %v9124
        %v9131 = vadd.f32 %v9116, %v9124
        %v9132 = vadd.f32 %v9117, %v9124
        %v9133 = vadd.f32 %v9118, %v9124
        %9134 = vst.msk [vmem:[%s325] sm:$0xff] %vm331, %v9126
        %9135 = vst.msk [vmem:[%s325 + $0x8] sm:$0xff] %vm331, %v9127
        %9136 = vst.msk [vmem:[%s325 + $0x10] sm:$0xff] %vm331, %v9128
        %9137 = vst.msk [vmem:[%s325 + $0x18] sm:$0xff] %vm331, %v9129
        %9138 = vst.msk [vmem:[%s325 + $0x20] sm:$0xff] %vm331, %v9130
        %9139 = vst.msk [vmem:[%s325 + $0x28] sm:$0xff] %vm331, %v9131
        %9140 = vst.msk [vmem:[%s325 + $0x30] sm:$0xff] %vm331, %v9132
        %9141 = vst.msk [vmem:[%s325 + $0x38] sm:$0xff] %vm331, %v9133
        %s9142 = sand.u32 %s225, 1
        %s9143 = scalar_lea.sflag [#allocation9], %s9142
        %s9144 = sand.u32 %s225, 1
        %s9145 = smul.addr %s9144, 64
        %s9146 = scalar_lea.vmem [#allocation8], %s9145
        // Predicated region
        $region57: #{tpu_custom_call.1} parent=55 // pred_check
          %p9147 = pneg %p235
        $region58: #{tpu_custom_call.1} parent=55 // pred_check_branch
          %9149 = sbr.rel (%p9147) target = $region60
        $region59: #{tpu_custom_call.1} parent=55 // pred_region
          %s9151 = ssub.s32 1024, 1024
          %9152 = vsyncadd %s9143, %s9151
          %s9153 = smul.addr %s23, 8
          %s9154 = smul.addr %s9153, 128
          %s9155 = scalar_lea.hbm %s9, %s9154
          %s9156 = sshll.u32 %s9146, 4
          %s9157 = int_to_ptr.vmem [resolvable:$true] %s9156
          %9162 = dma.vmem_to_hbm [thread:$0]  %s9157, 1024, %s9155, %s9143, 128, 128, 8
        $region60: #{tpu_custom_call.1} parent=55 // pred_fallthru
          _
      $region56: #{tpu_custom_call.1} parent=5 // pred_fallthru
        _
      %p9163 = scmp.le.s32.totalorder 2, %s18
      // Predicated region
      $region61: #{tpu_custom_call.1} parent=5 // pred_check
        %p9164 = pneg %p9163
      $region62: #{tpu_custom_call.1} parent=5 // pred_check_branch
        %9166 = sbr.rel (%p9164) target = $region64
      $region63: #{tpu_custom_call.1} parent=5 // pred_region
        %s9167 = ssub.s32 %s18, 2
        // Predicated region
        $region65: #{tpu_custom_call.1} parent=63 // pred_check
          %p9168 = pneg %p241
        $region66: #{tpu_custom_call.1} parent=63 // pred_check_branch
          %9170 = sbr.rel (%p9168) target = $region68
        $region67: #{tpu_custom_call.1} parent=63 // pred_region
          %s9171 = sand.u32 %s226, 1
          %s9172 = scalar_lea.sflag [#allocation9], %s9171
          %s9173 = sand.u32 %s226, 1
          %s9174 = smul.addr %s9173, 64
          %s9175 = scalar_lea.vmem [#allocation8], %s9174
          %9176 = dma.done %s9172, 1024
        $region68: #{tpu_custom_call.1} parent=63 // pred_fallthru
          _
      $region64: #{tpu_custom_call.1} parent=5 // pred_fallthru
        _
    $region6: #{tpu_custom_call.1} parent=1 // loop_footer
      %s22 = sadd.s32 1, %s18
    $region7: #{tpu_custom_call.1} parent=1 // loop_footer_branch
      %17 = sbr.rel target = $region3
    $region8: #{tpu_custom_call.1} parent=1 // loop_exit
      _
    %9177 = vsyncpa [#allocation9], 1
    %s9178 = scalar_lea.sflag [#allocation9], 1
    %9179 = vsyncpa %s9178, 1

</llo_original>
